<compile_context>
chip_gen: v7x
topology: tpu7x:2x2x1
jax: 0.10.0
libtpu: 0.0.40
codegen_flags: <defaults>
</compile_context>

<pallas_src>
import numpy as np
import jax
import jax.numpy as jnp
from jax.experimental import pallas as pl
from jax.experimental.pallas import tpu as pltpu

TOP_K = 35            # fc output size == conv spatial output height
KH = 3                # conv1 kernel height
H_IN = TOP_K + KH - 1  # input height (37)
C1 = 16               # conv1 out channels
C2 = 32               # conv2 out channels
K_FC = C2 * TOP_K     # fc contraction depth (1120)
K_PAD = 128           # fc output rows padded 35 -> one full lane/sublane group
LANES = 128
MAX_TILE_B = 512      # batch columns per grid step (lane-dense, mult of 128)


def _round_up(n, m):
    return (n + m - 1) // m * m


def cnn_kernel(x_ref, w1_ref, b1_ref, w2_ref, b2_ref, wfc_ref, bfc_ref,
               out_ref, a_ref):
    """conv1(3x1)+ReLU (VPU), conv2(1x1)+ReLU (MXU), fc1 (single MXU matmul).

    Layout: batch sits on the 128-lane axis everywhere.  The per-row conv
    results are assembled lane-dense into the (1120, TILE_B) scratch `a_ref`
    in fc order (row h*32+c), then the fc is one 1120-deep matmul.
    """
    # Tiny weights, hoisted once per grid step.
    w1 = w1_ref[...]                      # (3, 16, 1) f32
    w10, w11, w12 = w1[0], w1[1], w1[2]   # (16, 1) each
    b1 = b1_ref[...]                      # (16, 1) f32
    w2 = w2_ref[...]                      # (32, 16) bf16
    b2 = b2_ref[...]                      # (32, 1) f32

    for h in range(TOP_K):
        # In-kernel im2col: three shifted input rows, batch on lanes.
        x0 = x_ref[h, :]                  # (TB,) f32
        x1 = x_ref[h + 1, :]
        x2 = x_ref[h + 2, :]
        # conv1 as 3 broadcast FMAs per output channel (VPU), f32.
        a1 = x0 * w10 + x1 * w11 + x2 * w12 + b1            # (16, TB)
        a1 = jnp.maximum(a1, 0.0).astype(jnp.bfloat16)
        # conv2 (1x1) as a small MXU matmul, f32 accumulation.
        a2 = jnp.dot(w2, a1, preferred_element_type=jnp.float32) + b2
        a2 = jnp.maximum(a2, 0.0)                            # (32, TB)
        # Lane-dense, sublane-aligned store into the fc operand (row h*32+c).
        a_ref[h * C2:(h + 1) * C2, :] = a2.astype(jnp.bfloat16)

    # fc1: one lane-dense (128, 1120) x (1120, TB) bf16 matmul, f32 accum.
    acc = jnp.dot(wfc_ref[...], a_ref[...],
                  preferred_element_type=jnp.float32)        # (128, TB)
    out_ref[...] = acc + bfc_ref[...]


def build_params(w1, b1, w2, b2, wfc, bfc):
    """PyTorch-shaped params -> un-broadcast, kernel-layout operands."""
    w1_np = np.asarray(w1, np.float32)[:, 0, :, 0]           # (16, 3) [o, kh]
    w2_np = np.asarray(w2, np.float32)[:, :, 0, 0]           # (32, 16) [c, o]
    wfc_np = np.asarray(wfc, np.float32)                     # (35, 1120), col = c*35+h

    # conv1 weight as per-tap sublane columns: w1_p[kh, o, 0] = w1[o, kh]
    w1_p = np.transpose(w1_np)[:, :, None]                   # (3, 16, 1)
    b1_p = np.asarray(b1, np.float32).reshape(C1, 1)
    # conv2 weight stays (32, 16) [c, o]
    w2_p = w2_np
    b2_p = np.asarray(b2, np.float32).reshape(C2, 1)
    # fc weight regrouped [k, c*35+h] -> [k, h*32+c], rows padded 35 -> 128
    wfc_khc = (wfc_np.reshape(TOP_K, C2, TOP_K)
               .transpose(0, 2, 1)
               .reshape(TOP_K, K_FC))
    wfc_p = np.zeros((K_PAD, K_FC), np.float32)
    wfc_p[:TOP_K] = wfc_khc
    bfc_p = np.zeros((K_PAD, 1), np.float32)
    bfc_p[:TOP_K, 0] = np.asarray(bfc, np.float32)

    return (jnp.asarray(w1_p, jnp.float32),
            jnp.asarray(b1_p, jnp.float32),
            jnp.asarray(w2_p, jnp.bfloat16),
            jnp.asarray(b2_p, jnp.float32),
            jnp.asarray(wfc_p, jnp.bfloat16),
            jnp.asarray(bfc_p, jnp.float32))


def cnn_forward_pallas(x_nchw, params):
    w1_p, b1_p, w2_p, b2_p, wfc_p, bfc_p = params
    B = x_nchw.shape[0]

    # Batch on lanes: (B,1,37,1) -> (37, b_pad) f32 (zero-pad the batch).
    x_hb = jnp.transpose(x_nchw[:, 0, :, 0]).astype(jnp.float32)   # (37, B)
    tile_b = min(MAX_TILE_B, _round_up(B, LANES))
    b_pad = _round_up(B, tile_b)
    if b_pad != B:
        x_hb = jnp.pad(x_hb, ((0, 0), (0, b_pad - B)))
    nb = b_pad // tile_b

    out = pl.pallas_call(
        cnn_kernel,
        grid=(nb,),
        in_specs=[
            pl.BlockSpec((H_IN, tile_b), lambda i: (0, i)),        # x rows
            pl.BlockSpec((KH, C1, 1), lambda i: (0, 0, 0)),        # conv1 w
            pl.BlockSpec((C1, 1), lambda i: (0, 0)),               # conv1 b
            pl.BlockSpec((C2, C1), lambda i: (0, 0)),              # conv2 w
            pl.BlockSpec((C2, 1), lambda i: (0, 0)),               # conv2 b
            pl.BlockSpec((K_PAD, K_FC), lambda i: (0, 0)),         # fc w
            pl.BlockSpec((K_PAD, 1), lambda i: (0, 0)),            # fc b
        ],
        out_specs=pl.BlockSpec((K_PAD, tile_b), lambda i: (0, i)),
        out_shape=jax.ShapeDtypeStruct((K_PAD, b_pad), jnp.float32),
        scratch_shapes=[pltpu.VMEM((K_FC, tile_b), jnp.bfloat16)],
        compiler_params=pltpu.CompilerParams(
            dimension_semantics=("parallel",)),
    )(x_hb, w1_p, b1_p, w2_p, b2_p, wfc_p, bfc_p)

    # Back to the PyTorch convention: (B, 35).
    return jnp.transpose(out[:TOP_K, :B])


def ref_forward_np(x, w1, b1, w2, b2, wfc, bfc):
    """Pure numpy reference mirroring the PyTorch forward exactly (f64)."""
    x = np.asarray(x, np.float64)[:, 0, :, 0]            # (B, 37)
    w1 = np.asarray(w1, np.float64)[:, 0, :, 0]          # (16, 3)
    w2 = np.asarray(w2, np.float64)[:, :, 0, 0]          # (32, 16)
    b1 = np.asarray(b1, np.float64)
    b2 = np.asarray(b2, np.float64)
    wfc = np.asarray(wfc, np.float64)
    bfc = np.asarray(bfc, np.float64)
    B = x.shape[0]
    cols = np.stack([x[:, kh:kh + TOP_K] for kh in range(KH)], axis=-1)  # (B,35,3)
    a1 = np.maximum(np.einsum('bhk,ok->bho', cols, w1) + b1, 0.0)        # (B,35,16)
    a2 = np.maximum(np.einsum('bho,co->bhc', a1, w2) + b2, 0.0)          # (B,35,32)
    flat = np.transpose(a2, (0, 2, 1)).reshape(B, -1)                    # c*35 + h
    return flat @ wfc.T + bfc


if __name__ == "__main__":
    B = 2
    key = jax.random.PRNGKey(0)
    ks = jax.random.split(key, 7)

    # Deterministic, synthetic parameters (PyTorch shapes from __init__).
    x = jax.random.normal(ks[0], (B, 1, H_IN, 1), jnp.float32)
    w1 = jax.random.uniform(ks[1], (C1, 1, KH, 1), jnp.float32, -0.5, 0.5)
    b1 = jax.random.uniform(ks[2], (C1,), jnp.float32, -0.5, 0.5)
    w2 = jax.random.uniform(ks[3], (C2, C1, 1, 1), jnp.float32, -0.25, 0.25)
    b2 = jax.random.uniform(ks[4], (C2,), jnp.float32, -0.25, 0.25)
    wfc = jax.random.uniform(ks[5], (TOP_K, K_FC), jnp.float32, -0.03, 0.03)
    bfc = jax.random.uniform(ks[6], (TOP_K,), jnp.float32, -0.03, 0.03)

    params = build_params(w1, b1, w2, b2, wfc, bfc)
    out = jax.block_until_ready(cnn_forward_pallas(x, params))

    ref = ref_forward_np(x, w1, b1, w2, b2, wfc, bfc)
    assert out.shape == (B, TOP_K)
    # bf16 conv2/fc operands with f32 accumulation -> loose-ish tolerance.
    np.testing.assert_allclose(np.asarray(out), ref, rtol=2e-2, atol=2e-2)

    print("KERNEL_OK")
</pallas_src>

<mosaic_0001>
module attributes {stable_mosaic.version = 11 : i64} {
  func.func @cnn_kernel(%arg0: i32, %arg1: memref<37x128xf32, #tpu.memory_space<vmem>>, %arg2: memref<3x16x1xf32, #tpu.memory_space<vmem>>, %arg3: memref<16x1xf32, #tpu.memory_space<vmem>>, %arg4: memref<32x16xbf16, #tpu.memory_space<vmem>>, %arg5: memref<32x1xf32, #tpu.memory_space<vmem>>, %arg6: memref<128x1120xbf16, #tpu.memory_space<vmem>>, %arg7: memref<128x1xf32, #tpu.memory_space<vmem>>, %arg8: memref<128x128xf32, #tpu.memory_space<vmem>>, %arg9: memref<1120x128xbf16, #tpu.memory_space<vmem>>) attributes {dimension_semantics = [#tpu.dimension_semantics<parallel>], iteration_bounds = array<i64: 1>, scalar_prefetch = 0 : i64, scratch_operands = 1 : i64, tpu.core_type = #tpu.core_type<tc>, window_params = [{transform_indices = @transform_0, window_bounds = array<i64: 37, 128>}, {pipeline_mode = #tpu.pipeline_mode<synchronous>, transform_indices = @transform_1, window_bounds = array<i64: 3, 16, 1>}, {pipeline_mode = #tpu.pipeline_mode<synchronous>, transform_indices = @transform_2, window_bounds = array<i64: 16, 1>}, {pipeline_mode = #tpu.pipeline_mode<synchronous>, transform_indices = @transform_3, window_bounds = array<i64: 32, 16>}, {pipeline_mode = #tpu.pipeline_mode<synchronous>, transform_indices = @transform_4, window_bounds = array<i64: 32, 1>}, {pipeline_mode = #tpu.pipeline_mode<synchronous>, transform_indices = @transform_5, window_bounds = array<i64: 128, 1120>}, {pipeline_mode = #tpu.pipeline_mode<synchronous>, transform_indices = @transform_6, window_bounds = array<i64: 128, 1>}, {transform_indices = @transform_7, window_bounds = array<i64: 128, 128>}]} {
    %c0 = arith.constant 0 : index
    %c0_0 = arith.constant 0 : index
    %c0_1 = arith.constant 0 : index
    %0 = vector.load %arg2[%c0, %c0_0, %c0_1] : memref<3x16x1xf32, #tpu.memory_space<vmem>>, vector<3x16x1xf32>
    %1 = vector.extract_strided_slice %0 {offsets = [0, 0, 0], sizes = [1, 16, 1], strides = [1, 1, 1]} : vector<3x16x1xf32> to vector<1x16x1xf32>
    %2 = vector.shape_cast %1 : vector<1x16x1xf32> to vector<16x1xf32>
    %3 = vector.extract_strided_slice %0 {offsets = [1, 0, 0], sizes = [1, 16, 1], strides = [1, 1, 1]} : vector<3x16x1xf32> to vector<1x16x1xf32>
    %4 = vector.shape_cast %3 : vector<1x16x1xf32> to vector<16x1xf32>
    %5 = vector.extract_strided_slice %0 {offsets = [2, 0, 0], sizes = [1, 16, 1], strides = [1, 1, 1]} : vector<3x16x1xf32> to vector<1x16x1xf32>
    %6 = vector.shape_cast %5 : vector<1x16x1xf32> to vector<16x1xf32>
    %c0_2 = arith.constant 0 : index
    %c0_3 = arith.constant 0 : index
    %7 = vector.load %arg3[%c0_2, %c0_3] : memref<16x1xf32, #tpu.memory_space<vmem>>, vector<16x1xf32>
    %c0_4 = arith.constant 0 : index
    %c0_5 = arith.constant 0 : index
    %8 = vector.load %arg4[%c0_4, %c0_5] : memref<32x16xbf16, #tpu.memory_space<vmem>>, vector<32x16xbf16>
    %c0_6 = arith.constant 0 : index
    %c0_7 = arith.constant 0 : index
    %9 = vector.load %arg5[%c0_6, %c0_7] : memref<32x1xf32, #tpu.memory_space<vmem>>, vector<32x1xf32>
    %c0_8 = arith.constant 0 : index
    %c0_9 = arith.constant 0 : index
    %10 = vector.load %arg1[%c0_8, %c0_9] : memref<37x128xf32, #tpu.memory_space<vmem>>, vector<1x128xf32>
    %11 = vector.shape_cast %10 : vector<1x128xf32> to vector<128xf32>
    %c1 = arith.constant 1 : index
    %c0_10 = arith.constant 0 : index
    %12 = vector.load %arg1[%c1, %c0_10] : memref<37x128xf32, #tpu.memory_space<vmem>>, vector<1x128xf32>
    %13 = vector.shape_cast %12 : vector<1x128xf32> to vector<128xf32>
    %c2 = arith.constant 2 : index
    %c0_11 = arith.constant 0 : index
    %14 = vector.load %arg1[%c2, %c0_11] : memref<37x128xf32, #tpu.memory_space<vmem>>, vector<1x128xf32>
    %15 = vector.shape_cast %14 : vector<1x128xf32> to vector<128xf32>
    %16 = vector.shape_cast %11 : vector<128xf32> to vector<1x128xf32>
    %17 = vector.broadcast %16 : vector<1x128xf32> to vector<16x128xf32>
    %18 = vector.broadcast %2 : vector<16x1xf32> to vector<16x128xf32>
    %19 = arith.mulf %17, %18 : vector<16x128xf32>
    %20 = vector.shape_cast %13 : vector<128xf32> to vector<1x128xf32>
    %21 = vector.broadcast %20 : vector<1x128xf32> to vector<16x128xf32>
    %22 = vector.broadcast %4 : vector<16x1xf32> to vector<16x128xf32>
    %23 = arith.mulf %21, %22 : vector<16x128xf32>
    %24 = arith.addf %19, %23 : vector<16x128xf32>
    %25 = vector.shape_cast %15 : vector<128xf32> to vector<1x128xf32>
    %26 = vector.broadcast %25 : vector<1x128xf32> to vector<16x128xf32>
    %27 = vector.broadcast %6 : vector<16x1xf32> to vector<16x128xf32>
    %28 = arith.mulf %26, %27 : vector<16x128xf32>
    %29 = arith.addf %24, %28 : vector<16x128xf32>
    %30 = vector.broadcast %7 : vector<16x1xf32> to vector<16x128xf32>
    %31 = arith.addf %29, %30 : vector<16x128xf32>
    %cst = arith.constant 0.000000e+00 : f32
    %32 = vector.broadcast %cst : f32 to vector<16x128xf32>
    %33 = arith.maximumf %31, %32 : vector<16x128xf32>
    %34 = arith.truncf %33 : vector<16x128xf32> to vector<16x128xbf16>
    %cst_12 = arith.constant dense<0.000000e+00> : vector<32x128xf32>
    %35 = tpu.matmul %8, %34, %cst_12 {dimension_numbers = #tpu.dot_dimension_numbers<[1], [0], [0], [1], [0, 0, 1, 1], [], []>} : vector<32x16xbf16>, vector<16x128xbf16>, vector<32x128xf32> -> vector<32x128xf32>
    %36 = vector.broadcast %9 : vector<32x1xf32> to vector<32x128xf32>
    %37 = arith.addf %35, %36 : vector<32x128xf32>
    %cst_13 = arith.constant 0.000000e+00 : f32
    %38 = vector.broadcast %cst_13 : f32 to vector<32x128xf32>
    %39 = arith.maximumf %37, %38 : vector<32x128xf32>
    %40 = arith.truncf %39 : vector<32x128xf32> to vector<32x128xbf16>
    %c0_14 = arith.constant 0 : index
    %c0_15 = arith.constant 0 : index
    %41 = vector.load %arg9[%c0_14, %c0_15] : memref<1120x128xbf16, #tpu.memory_space<vmem>>, vector<32x128xbf16>
    tpu.vector_store %arg9[%c0_14, %c0_15], %40 {strides = array<i32>} : memref<1120x128xbf16, #tpu.memory_space<vmem>>, vector<32x128xbf16>,
    %c1_16 = arith.constant 1 : index
    %c0_17 = arith.constant 0 : index
    %42 = vector.load %arg1[%c1_16, %c0_17] : memref<37x128xf32, #tpu.memory_space<vmem>>, vector<1x128xf32>
    %43 = vector.shape_cast %42 : vector<1x128xf32> to vector<128xf32>
    %c2_18 = arith.constant 2 : index
    %c0_19 = arith.constant 0 : index
    %44 = vector.load %arg1[%c2_18, %c0_19] : memref<37x128xf32, #tpu.memory_space<vmem>>, vector<1x128xf32>
    %45 = vector.shape_cast %44 : vector<1x128xf32> to vector<128xf32>
    %c3 = arith.constant 3 : index
    %c0_20 = arith.constant 0 : index
    %46 = vector.load %arg1[%c3, %c0_20] : memref<37x128xf32, #tpu.memory_space<vmem>>, vector<1x128xf32>
    %47 = vector.shape_cast %46 : vector<1x128xf32> to vector<128xf32>
    %48 = vector.shape_cast %43 : vector<128xf32> to vector<1x128xf32>
    %49 = vector.broadcast %48 : vector<1x128xf32> to vector<16x128xf32>
    %50 = vector.broadcast %2 : vector<16x1xf32> to vector<16x128xf32>
    %51 = arith.mulf %49, %50 : vector<16x128xf32>
    %52 = vector.shape_cast %45 : vector<128xf32> to vector<1x128xf32>
    %53 = vector.broadcast %52 : vector<1x128xf32> to vector<16x128xf32>
    %54 = vector.broadcast %4 : vector<16x1xf32> to vector<16x128xf32>
    %55 = arith.mulf %53, %54 : vector<16x128xf32>
    %56 = arith.addf %51, %55 : vector<16x128xf32>
    %57 = vector.shape_cast %47 : vector<128xf32> to vector<1x128xf32>
    %58 = vector.broadcast %57 : vector<1x128xf32> to vector<16x128xf32>
    %59 = vector.broadcast %6 : vector<16x1xf32> to vector<16x128xf32>
    %60 = arith.mulf %58, %59 : vector<16x128xf32>
    %61 = arith.addf %56, %60 : vector<16x128xf32>
    %62 = vector.broadcast %7 : vector<16x1xf32> to vector<16x128xf32>
    %63 = arith.addf %61, %62 : vector<16x128xf32>
    %cst_21 = arith.constant 0.000000e+00 : f32
    %64 = vector.broadcast %cst_21 : f32 to vector<16x128xf32>
    %65 = arith.maximumf %63, %64 : vector<16x128xf32>
    %66 = arith.truncf %65 : vector<16x128xf32> to vector<16x128xbf16>
    %cst_22 = arith.constant dense<0.000000e+00> : vector<32x128xf32>
    %67 = tpu.matmul %8, %66, %cst_22 {dimension_numbers = #tpu.dot_dimension_numbers<[1], [0], [0], [1], [0, 0, 1, 1], [], []>} : vector<32x16xbf16>, vector<16x128xbf16>, vector<32x128xf32> -> vector<32x128xf32>
    %68 = vector.broadcast %9 : vector<32x1xf32> to vector<32x128xf32>
    %69 = arith.addf %67, %68 : vector<32x128xf32>
    %cst_23 = arith.constant 0.000000e+00 : f32
    %70 = vector.broadcast %cst_23 : f32 to vector<32x128xf32>
    %71 = arith.maximumf %69, %70 : vector<32x128xf32>
    %72 = arith.truncf %71 : vector<32x128xf32> to vector<32x128xbf16>
    %c32 = arith.constant 32 : index
    %c0_24 = arith.constant 0 : index
    %73 = vector.load %arg9[%c32, %c0_24] : memref<1120x128xbf16, #tpu.memory_space<vmem>>, vector<32x128xbf16>
    tpu.vector_store %arg9[%c32, %c0_24], %72 {strides = array<i32>} : memref<1120x128xbf16, #tpu.memory_space<vmem>>, vector<32x128xbf16>,
    %c2_25 = arith.constant 2 : index
    %c0_26 = arith.constant 0 : index
    %74 = vector.load %arg1[%c2_25, %c0_26] : memref<37x128xf32, #tpu.memory_space<vmem>>, vector<1x128xf32>
    %75 = vector.shape_cast %74 : vector<1x128xf32> to vector<128xf32>
    %c3_27 = arith.constant 3 : index
    %c0_28 = arith.constant 0 : index
    %76 = vector.load %arg1[%c3_27, %c0_28] : memref<37x128xf32, #tpu.memory_space<vmem>>, vector<1x128xf32>
    %77 = vector.shape_cast %76 : vector<1x128xf32> to vector<128xf32>
    %c4 = arith.constant 4 : index
    %c0_29 = arith.constant 0 : index
    %78 = vector.load %arg1[%c4, %c0_29] : memref<37x128xf32, #tpu.memory_space<vmem>>, vector<1x128xf32>
    %79 = vector.shape_cast %78 : vector<1x128xf32> to vector<128xf32>
    %80 = vector.shape_cast %75 : vector<128xf32> to vector<1x128xf32>
    %81 = vector.broadcast %80 : vector<1x128xf32> to vector<16x128xf32>
    %82 = vector.broadcast %2 : vector<16x1xf32> to vector<16x128xf32>
    %83 = arith.mulf %81, %82 : vector<16x128xf32>
    %84 = vector.shape_cast %77 : vector<128xf32> to vector<1x128xf32>
    %85 = vector.broadcast %84 : vector<1x128xf32> to vector<16x128xf32>
    %86 = vector.broadcast %4 : vector<16x1xf32> to vector<16x128xf32>
    %87 = arith.mulf %85, %86 : vector<16x128xf32>
    %88 = arith.addf %83, %87 : vector<16x128xf32>
    %89 = vector.shape_cast %79 : vector<128xf32> to vector<1x128xf32>
    %90 = vector.broadcast %89 : vector<1x128xf32> to vector<16x128xf32>
    %91 = vector.broadcast %6 : vector<16x1xf32> to vector<16x128xf32>
    %92 = arith.mulf %90, %91 : vector<16x128xf32>
    %93 = arith.addf %88, %92 : vector<16x128xf32>
    %94 = vector.broadcast %7 : vector<16x1xf32> to vector<16x128xf32>
    %95 = arith.addf %93, %94 : vector<16x128xf32>
    %cst_30 = arith.constant 0.000000e+00 : f32
    %96 = vector.broadcast %cst_30 : f32 to vector<16x128xf32>
    %97 = arith.maximumf %95, %96 : vector<16x128xf32>
    %98 = arith.truncf %97 : vector<16x128xf32> to vector<16x128xbf16>
    %cst_31 = arith.constant dense<0.000000e+00> : vector<32x128xf32>
    %99 = tpu.matmul %8, %98, %cst_31 {dimension_numbers = #tpu.dot_dimension_numbers<[1], [0], [0], [1], [0, 0, 1, 1], [], []>} : vector<32x16xbf16>, vector<16x128xbf16>, vector<32x128xf32> -> vector<32x128xf32>
    %100 = vector.broadcast %9 : vector<32x1xf32> to vector<32x128xf32>
    %101 = arith.addf %99, %100 : vector<32x128xf32>
    %cst_32 = arith.constant 0.000000e+00 : f32
    %102 = vector.broadcast %cst_32 : f32 to vector<32x128xf32>
    %103 = arith.maximumf %101, %102 : vector<32x128xf32>
    %104 = arith.truncf %103 : vector<32x128xf32> to vector<32x128xbf16>
    %c64 = arith.constant 64 : index
    %c0_33 = arith.constant 0 : index
    %105 = vector.load %arg9[%c64, %c0_33] : memref<1120x128xbf16, #tpu.memory_space<vmem>>, vector<32x128xbf16>
    tpu.vector_store %arg9[%c64, %c0_33], %104 {strides = array<i32>} : memref<1120x128xbf16, #tpu.memory_space<vmem>>, vector<32x128xbf16>,
    %c3_34 = arith.constant 3 : index
    %c0_35 = arith.constant 0 : index
    %106 = vector.load %arg1[%c3_34, %c0_35] : memref<37x128xf32, #tpu.memory_space<vmem>>, vector<1x128xf32>
    %107 = vector.shape_cast %106 : vector<1x128xf32> to vector<128xf32>
    %c4_36 = arith.constant 4 : index
    %c0_37 = arith.constant 0 : index
    %108 = vector.load %arg1[%c4_36, %c0_37] : memref<37x128xf32, #tpu.memory_space<vmem>>, vector<1x128xf32>
    %109 = vector.shape_cast %108 : vector<1x128xf32> to vector<128xf32>
    %c5 = arith.constant 5 : index
    %c0_38 = arith.constant 0 : index
    %110 = vector.load %arg1[%c5, %c0_38] : memref<37x128xf32, #tpu.memory_space<vmem>>, vector<1x128xf32>
    %111 = vector.shape_cast %110 : vector<1x128xf32> to vector<128xf32>
    %112 = vector.shape_cast %107 : vector<128xf32> to vector<1x128xf32>
    %113 = vector.broadcast %112 : vector<1x128xf32> to vector<16x128xf32>
    %114 = vector.broadcast %2 : vector<16x1xf32> to vector<16x128xf32>
    %115 = arith.mulf %113, %114 : vector<16x128xf32>
    %116 = vector.shape_cast %109 : vector<128xf32> to vector<1x128xf32>
    %117 = vector.broadcast %116 : vector<1x128xf32> to vector<16x128xf32>
    %118 = vector.broadcast %4 : vector<16x1xf32> to vector<16x128xf32>
    %119 = arith.mulf %117, %118 : vector<16x128xf32>
    %120 = arith.addf %115, %119 : vector<16x128xf32>
    %121 = vector.shape_cast %111 : vector<128xf32> to vector<1x128xf32>
    %122 = vector.broadcast %121 : vector<1x128xf32> to vector<16x128xf32>
    %123 = vector.broadcast %6 : vector<16x1xf32> to vector<16x128xf32>
    %124 = arith.mulf %122, %123 : vector<16x128xf32>
    %125 = arith.addf %120, %124 : vector<16x128xf32>
    %126 = vector.broadcast %7 : vector<16x1xf32> to vector<16x128xf32>
    %127 = arith.addf %125, %126 : vector<16x128xf32>
    %cst_39 = arith.constant 0.000000e+00 : f32
    %128 = vector.broadcast %cst_39 : f32 to vector<16x128xf32>
    %129 = arith.maximumf %127, %128 : vector<16x128xf32>
    %130 = arith.truncf %129 : vector<16x128xf32> to vector<16x128xbf16>
    %cst_40 = arith.constant dense<0.000000e+00> : vector<32x128xf32>
    %131 = tpu.matmul %8, %130, %cst_40 {dimension_numbers = #tpu.dot_dimension_numbers<[1], [0], [0], [1], [0, 0, 1, 1], [], []>} : vector<32x16xbf16>, vector<16x128xbf16>, vector<32x128xf32> -> vector<32x128xf32>
    %132 = vector.broadcast %9 : vector<32x1xf32> to vector<32x128xf32>
    %133 = arith.addf %131, %132 : vector<32x128xf32>
    %cst_41 = arith.constant 0.000000e+00 : f32
    %134 = vector.broadcast %cst_41 : f32 to vector<32x128xf32>
    %135 = arith.maximumf %133, %134 : vector<32x128xf32>
    %136 = arith.truncf %135 : vector<32x128xf32> to vector<32x128xbf16>
    %c96 = arith.constant 96 : index
    %c0_42 = arith.constant 0 : index
    %137 = vector.load %arg9[%c96, %c0_42] : memref<1120x128xbf16, #tpu.memory_space<vmem>>, vector<32x128xbf16>
    tpu.vector_store %arg9[%c96, %c0_42], %136 {strides = array<i32>} : memref<1120x128xbf16, #tpu.memory_space<vmem>>, vector<32x128xbf16>,
    %c4_43 = arith.constant 4 : index
    %c0_44 = arith.constant 0 : index
    %138 = vector.load %arg1[%c4_43, %c0_44] : memref<37x128xf32, #tpu.memory_space<vmem>>, vector<1x128xf32>
    %139 = vector.shape_cast %138 : vector<1x128xf32> to vector<128xf32>
    %c5_45 = arith.constant 5 : index
    %c0_46 = arith.constant 0 : index
    %140 = vector.load %arg1[%c5_45, %c0_46] : memref<37x128xf32, #tpu.memory_space<vmem>>, vector<1x128xf32>
    %141 = vector.shape_cast %140 : vector<1x128xf32> to vector<128xf32>
    %c6 = arith.constant 6 : index
    %c0_47 = arith.constant 0 : index
    %142 = vector.load %arg1[%c6, %c0_47] : memref<37x128xf32, #tpu.memory_space<vmem>>, vector<1x128xf32>
    %143 = vector.shape_cast %142 : vector<1x128xf32> to vector<128xf32>
    %144 = vector.shape_cast %139 : vector<128xf32> to vector<1x128xf32>
    %145 = vector.broadcast %144 : vector<1x128xf32> to vector<16x128xf32>
    %146 = vector.broadcast %2 : vector<16x1xf32> to vector<16x128xf32>
    %147 = arith.mulf %145, %146 : vector<16x128xf32>
    %148 = vector.shape_cast %141 : vector<128xf32> to vector<1x128xf32>
    %149 = vector.broadcast %148 : vector<1x128xf32> to vector<16x128xf32>
    %150 = vector.broadcast %4 : vector<16x1xf32> to vector<16x128xf32>
    %151 = arith.mulf %149, %150 : vector<16x128xf32>
    %152 = arith.addf %147, %151 : vector<16x128xf32>
    %153 = vector.shape_cast %143 : vector<128xf32> to vector<1x128xf32>
    %154 = vector.broadcast %153 : vector<1x128xf32> to vector<16x128xf32>
    %155 = vector.broadcast %6 : vector<16x1xf32> to vector<16x128xf32>
    %156 = arith.mulf %154, %155 : vector<16x128xf32>
    %157 = arith.addf %152, %156 : vector<16x128xf32>
    %158 = vector.broadcast %7 : vector<16x1xf32> to vector<16x128xf32>
    %159 = arith.addf %157, %158 : vector<16x128xf32>
    %cst_48 = arith.constant 0.000000e+00 : f32
    %160 = vector.broadcast %cst_48 : f32 to vector<16x128xf32>
    %161 = arith.maximumf %159, %160 : vector<16x128xf32>
    %162 = arith.truncf %161 : vector<16x128xf32> to vector<16x128xbf16>
    %cst_49 = arith.constant dense<0.000000e+00> : vector<32x128xf32>
    %163 = tpu.matmul %8, %162, %cst_49 {dimension_numbers = #tpu.dot_dimension_numbers<[1], [0], [0], [1], [0, 0, 1, 1], [], []>} : vector<32x16xbf16>, vector<16x128xbf16>, vector<32x128xf32> -> vector<32x128xf32>
    %164 = vector.broadcast %9 : vector<32x1xf32> to vector<32x128xf32>
    %165 = arith.addf %163, %164 : vector<32x128xf32>
    %cst_50 = arith.constant 0.000000e+00 : f32
    %166 = vector.broadcast %cst_50 : f32 to vector<32x128xf32>
    %167 = arith.maximumf %165, %166 : vector<32x128xf32>
    %168 = arith.truncf %167 : vector<32x128xf32> to vector<32x128xbf16>
    %c128 = arith.constant 128 : index
    %c0_51 = arith.constant 0 : index
    %169 = vector.load %arg9[%c128, %c0_51] : memref<1120x128xbf16, #tpu.memory_space<vmem>>, vector<32x128xbf16>
    tpu.vector_store %arg9[%c128, %c0_51], %168 {strides = array<i32>} : memref<1120x128xbf16, #tpu.memory_space<vmem>>, vector<32x128xbf16>,
    %c5_52 = arith.constant 5 : index
    %c0_53 = arith.constant 0 : index
    %170 = vector.load %arg1[%c5_52, %c0_53] : memref<37x128xf32, #tpu.memory_space<vmem>>, vector<1x128xf32>
    %171 = vector.shape_cast %170 : vector<1x128xf32> to vector<128xf32>
    %c6_54 = arith.constant 6 : index
    %c0_55 = arith.constant 0 : index
    %172 = vector.load %arg1[%c6_54, %c0_55] : memref<37x128xf32, #tpu.memory_space<vmem>>, vector<1x128xf32>
    %173 = vector.shape_cast %172 : vector<1x128xf32> to vector<128xf32>
    %c7 = arith.constant 7 : index
    %c0_56 = arith.constant 0 : index
    %174 = vector.load %arg1[%c7, %c0_56] : memref<37x128xf32, #tpu.memory_space<vmem>>, vector<1x128xf32>
    %175 = vector.shape_cast %174 : vector<1x128xf32> to vector<128xf32>
    %176 = vector.shape_cast %171 : vector<128xf32> to vector<1x128xf32>
    %177 = vector.broadcast %176 : vector<1x128xf32> to vector<16x128xf32>
    %178 = vector.broadcast %2 : vector<16x1xf32> to vector<16x128xf32>
    %179 = arith.mulf %177, %178 : vector<16x128xf32>
    %180 = vector.shape_cast %173 : vector<128xf32> to vector<1x128xf32>
    %181 = vector.broadcast %180 : vector<1x128xf32> to vector<16x128xf32>
    %182 = vector.broadcast %4 : vector<16x1xf32> to vector<16x128xf32>
    %183 = arith.mulf %181, %182 : vector<16x128xf32>
    %184 = arith.addf %179, %183 : vector<16x128xf32>
    %185 = vector.shape_cast %175 : vector<128xf32> to vector<1x128xf32>
    %186 = vector.broadcast %185 : vector<1x128xf32> to vector<16x128xf32>
    %187 = vector.broadcast %6 : vector<16x1xf32> to vector<16x128xf32>
    %188 = arith.mulf %186, %187 : vector<16x128xf32>
    %189 = arith.addf %184, %188 : vector<16x128xf32>
    %190 = vector.broadcast %7 : vector<16x1xf32> to vector<16x128xf32>
    %191 = arith.addf %189, %190 : vector<16x128xf32>
    %cst_57 = arith.constant 0.000000e+00 : f32
    %192 = vector.broadcast %cst_57 : f32 to vector<16x128xf32>
    %193 = arith.maximumf %191, %192 : vector<16x128xf32>
    %194 = arith.truncf %193 : vector<16x128xf32> to vector<16x128xbf16>
    %cst_58 = arith.constant dense<0.000000e+00> : vector<32x128xf32>
    %195 = tpu.matmul %8, %194, %cst_58 {dimension_numbers = #tpu.dot_dimension_numbers<[1], [0], [0], [1], [0, 0, 1, 1], [], []>} : vector<32x16xbf16>, vector<16x128xbf16>, vector<32x128xf32> -> vector<32x128xf32>
    %196 = vector.broadcast %9 : vector<32x1xf32> to vector<32x128xf32>
    %197 = arith.addf %195, %196 : vector<32x128xf32>
    %cst_59 = arith.constant 0.000000e+00 : f32
    %198 = vector.broadcast %cst_59 : f32 to vector<32x128xf32>
    %199 = arith.maximumf %197, %198 : vector<32x128xf32>
    %200 = arith.truncf %199 : vector<32x128xf32> to vector<32x128xbf16>
    %c160 = arith.constant 160 : index
    %c0_60 = arith.constant 0 : index
    %201 = vector.load %arg9[%c160, %c0_60] : memref<1120x128xbf16, #tpu.memory_space<vmem>>, vector<32x128xbf16>
    tpu.vector_store %arg9[%c160, %c0_60], %200 {strides = array<i32>} : memref<1120x128xbf16, #tpu.memory_space<vmem>>, vector<32x128xbf16>,
    %c6_61 = arith.constant 6 : index
    %c0_62 = arith.constant 0 : index
    %202 = vector.load %arg1[%c6_61, %c0_62] : memref<37x128xf32, #tpu.memory_space<vmem>>, vector<1x128xf32>
    %203 = vector.shape_cast %202 : vector<1x128xf32> to vector<128xf32>
    %c7_63 = arith.constant 7 : index
    %c0_64 = arith.constant 0 : index
    %204 = vector.load %arg1[%c7_63, %c0_64] : memref<37x128xf32, #tpu.memory_space<vmem>>, vector<1x128xf32>
    %205 = vector.shape_cast %204 : vector<1x128xf32> to vector<128xf32>
    %c8 = arith.constant 8 : index
    %c0_65 = arith.constant 0 : index
    %206 = vector.load %arg1[%c8, %c0_65] : memref<37x128xf32, #tpu.memory_space<vmem>>, vector<1x128xf32>
    %207 = vector.shape_cast %206 : vector<1x128xf32> to vector<128xf32>
    %208 = vector.shape_cast %203 : vector<128xf32> to vector<1x128xf32>
    %209 = vector.broadcast %208 : vector<1x128xf32> to vector<16x128xf32>
    %210 = vector.broadcast %2 : vector<16x1xf32> to vector<16x128xf32>
    %211 = arith.mulf %209, %210 : vector<16x128xf32>
    %212 = vector.shape_cast %205 : vector<128xf32> to vector<1x128xf32>
    %213 = vector.broadcast %212 : vector<1x128xf32> to vector<16x128xf32>
    %214 = vector.broadcast %4 : vector<16x1xf32> to vector<16x128xf32>
    %215 = arith.mulf %213, %214 : vector<16x128xf32>
    %216 = arith.addf %211, %215 : vector<16x128xf32>
    %217 = vector.shape_cast %207 : vector<128xf32> to vector<1x128xf32>
    %218 = vector.broadcast %217 : vector<1x128xf32> to vector<16x128xf32>
    %219 = vector.broadcast %6 : vector<16x1xf32> to vector<16x128xf32>
    %220 = arith.mulf %218, %219 : vector<16x128xf32>
    %221 = arith.addf %216, %220 : vector<16x128xf32>
    %222 = vector.broadcast %7 : vector<16x1xf32> to vector<16x128xf32>
    %223 = arith.addf %221, %222 : vector<16x128xf32>
    %cst_66 = arith.constant 0.000000e+00 : f32
    %224 = vector.broadcast %cst_66 : f32 to vector<16x128xf32>
    %225 = arith.maximumf %223, %224 : vector<16x128xf32>
    %226 = arith.truncf %225 : vector<16x128xf32> to vector<16x128xbf16>
    %cst_67 = arith.constant dense<0.000000e+00> : vector<32x128xf32>
    %227 = tpu.matmul %8, %226, %cst_67 {dimension_numbers = #tpu.dot_dimension_numbers<[1], [0], [0], [1], [0, 0, 1, 1], [], []>} : vector<32x16xbf16>, vector<16x128xbf16>, vector<32x128xf32> -> vector<32x128xf32>
    %228 = vector.broadcast %9 : vector<32x1xf32> to vector<32x128xf32>
    %229 = arith.addf %227, %228 : vector<32x128xf32>
    %cst_68 = arith.constant 0.000000e+00 : f32
    %230 = vector.broadcast %cst_68 : f32 to vector<32x128xf32>
    %231 = arith.maximumf %229, %230 : vector<32x128xf32>
    %232 = arith.truncf %231 : vector<32x128xf32> to vector<32x128xbf16>
    %c192 = arith.constant 192 : index
    %c0_69 = arith.constant 0 : index
    %233 = vector.load %arg9[%c192, %c0_69] : memref<1120x128xbf16, #tpu.memory_space<vmem>>, vector<32x128xbf16>
    tpu.vector_store %arg9[%c192, %c0_69], %232 {strides = array<i32>} : memref<1120x128xbf16, #tpu.memory_space<vmem>>, vector<32x128xbf16>,
    %c7_70 = arith.constant 7 : index
    %c0_71 = arith.constant 0 : index
    %234 = vector.load %arg1[%c7_70, %c0_71] : memref<37x128xf32, #tpu.memory_space<vmem>>, vector<1x128xf32>
    %235 = vector.shape_cast %234 : vector<1x128xf32> to vector<128xf32>
    %c8_72 = arith.constant 8 : index
    %c0_73 = arith.constant 0 : index
    %236 = vector.load %arg1[%c8_72, %c0_73] : memref<37x128xf32, #tpu.memory_space<vmem>>, vector<1x128xf32>
    %237 = vector.shape_cast %236 : vector<1x128xf32> to vector<128xf32>
    %c9 = arith.constant 9 : index
    %c0_74 = arith.constant 0 : index
    %238 = vector.load %arg1[%c9, %c0_74] : memref<37x128xf32, #tpu.memory_space<vmem>>, vector<1x128xf32>
    %239 = vector.shape_cast %238 : vector<1x128xf32> to vector<128xf32>
    %240 = vector.shape_cast %235 : vector<128xf32> to vector<1x128xf32>
    %241 = vector.broadcast %240 : vector<1x128xf32> to vector<16x128xf32>
    %242 = vector.broadcast %2 : vector<16x1xf32> to vector<16x128xf32>
    %243 = arith.mulf %241, %242 : vector<16x128xf32>
    %244 = vector.shape_cast %237 : vector<128xf32> to vector<1x128xf32>
    %245 = vector.broadcast %244 : vector<1x128xf32> to vector<16x128xf32>
    %246 = vector.broadcast %4 : vector<16x1xf32> to vector<16x128xf32>
    %247 = arith.mulf %245, %246 : vector<16x128xf32>
    %248 = arith.addf %243, %247 : vector<16x128xf32>
    %249 = vector.shape_cast %239 : vector<128xf32> to vector<1x128xf32>
    %250 = vector.broadcast %249 : vector<1x128xf32> to vector<16x128xf32>
    %251 = vector.broadcast %6 : vector<16x1xf32> to vector<16x128xf32>
    %252 = arith.mulf %250, %251 : vector<16x128xf32>
    %253 = arith.addf %248, %252 : vector<16x128xf32>
    %254 = vector.broadcast %7 : vector<16x1xf32> to vector<16x128xf32>
    %255 = arith.addf %253, %254 : vector<16x128xf32>
    %cst_75 = arith.constant 0.000000e+00 : f32
    %256 = vector.broadcast %cst_75 : f32 to vector<16x128xf32>
    %257 = arith.maximumf %255, %256 : vector<16x128xf32>
    %258 = arith.truncf %257 : vector<16x128xf32> to vector<16x128xbf16>
    %cst_76 = arith.constant dense<0.000000e+00> : vector<32x128xf32>
    %259 = tpu.matmul %8, %258, %cst_76 {dimension_numbers = #tpu.dot_dimension_numbers<[1], [0], [0], [1], [0, 0, 1, 1], [], []>} : vector<32x16xbf16>, vector<16x128xbf16>, vector<32x128xf32> -> vector<32x128xf32>
    %260 = vector.broadcast %9 : vector<32x1xf32> to vector<32x128xf32>
    %261 = arith.addf %259, %260 : vector<32x128xf32>
    %cst_77 = arith.constant 0.000000e+00 : f32
    %262 = vector.broadcast %cst_77 : f32 to vector<32x128xf32>
    %263 = arith.maximumf %261, %262 : vector<32x128xf32>
    %264 = arith.truncf %263 : vector<32x128xf32> to vector<32x128xbf16>
    %c224 = arith.constant 224 : index
    %c0_78 = arith.constant 0 : index
    %265 = vector.load %arg9[%c224, %c0_78] : memref<1120x128xbf16, #tpu.memory_space<vmem>>, vector<32x128xbf16>
    tpu.vector_store %arg9[%c224, %c0_78], %264 {strides = array<i32>} : memref<1120x128xbf16, #tpu.memory_space<vmem>>, vector<32x128xbf16>,
    %c8_79 = arith.constant 8 : index
    %c0_80 = arith.constant 0 : index
    %266 = vector.load %arg1[%c8_79, %c0_80] : memref<37x128xf32, #tpu.memory_space<vmem>>, vector<1x128xf32>
    %267 = vector.shape_cast %266 : vector<1x128xf32> to vector<128xf32>
    %c9_81 = arith.constant 9 : index
    %c0_82 = arith.constant 0 : index
    %268 = vector.load %arg1[%c9_81, %c0_82] : memref<37x128xf32, #tpu.memory_space<vmem>>, vector<1x128xf32>
    %269 = vector.shape_cast %268 : vector<1x128xf32> to vector<128xf32>
    %c10 = arith.constant 10 : index
    %c0_83 = arith.constant 0 : index
    %270 = vector.load %arg1[%c10, %c0_83] : memref<37x128xf32, #tpu.memory_space<vmem>>, vector<1x128xf32>
    %271 = vector.shape_cast %270 : vector<1x128xf32> to vector<128xf32>
    %272 = vector.shape_cast %267 : vector<128xf32> to vector<1x128xf32>
    %273 = vector.broadcast %272 : vector<1x128xf32> to vector<16x128xf32>
    %274 = vector.broadcast %2 : vector<16x1xf32> to vector<16x128xf32>
    %275 = arith.mulf %273, %274 : vector<16x128xf32>
    %276 = vector.shape_cast %269 : vector<128xf32> to vector<1x128xf32>
    %277 = vector.broadcast %276 : vector<1x128xf32> to vector<16x128xf32>
    %278 = vector.broadcast %4 : vector<16x1xf32> to vector<16x128xf32>
    %279 = arith.mulf %277, %278 : vector<16x128xf32>
    %280 = arith.addf %275, %279 : vector<16x128xf32>
    %281 = vector.shape_cast %271 : vector<128xf32> to vector<1x128xf32>
    %282 = vector.broadcast %281 : vector<1x128xf32> to vector<16x128xf32>
    %283 = vector.broadcast %6 : vector<16x1xf32> to vector<16x128xf32>
    %284 = arith.mulf %282, %283 : vector<16x128xf32>
    %285 = arith.addf %280, %284 : vector<16x128xf32>
    %286 = vector.broadcast %7 : vector<16x1xf32> to vector<16x128xf32>
    %287 = arith.addf %285, %286 : vector<16x128xf32>
    %cst_84 = arith.constant 0.000000e+00 : f32
    %288 = vector.broadcast %cst_84 : f32 to vector<16x128xf32>
    %289 = arith.maximumf %287, %288 : vector<16x128xf32>
    %290 = arith.truncf %289 : vector<16x128xf32> to vector<16x128xbf16>
    %cst_85 = arith.constant dense<0.000000e+00> : vector<32x128xf32>
    %291 = tpu.matmul %8, %290, %cst_85 {dimension_numbers = #tpu.dot_dimension_numbers<[1], [0], [0], [1], [0, 0, 1, 1], [], []>} : vector<32x16xbf16>, vector<16x128xbf16>, vector<32x128xf32> -> vector<32x128xf32>
    %292 = vector.broadcast %9 : vector<32x1xf32> to vector<32x128xf32>
    %293 = arith.addf %291, %292 : vector<32x128xf32>
    %cst_86 = arith.constant 0.000000e+00 : f32
    %294 = vector.broadcast %cst_86 : f32 to vector<32x128xf32>
    %295 = arith.maximumf %293, %294 : vector<32x128xf32>
    %296 = arith.truncf %295 : vector<32x128xf32> to vector<32x128xbf16>
    %c256 = arith.constant 256 : index
    %c0_87 = arith.constant 0 : index
    %297 = vector.load %arg9[%c256, %c0_87] : memref<1120x128xbf16, #tpu.memory_space<vmem>>, vector<32x128xbf16>
    tpu.vector_store %arg9[%c256, %c0_87], %296 {strides = array<i32>} : memref<1120x128xbf16, #tpu.memory_space<vmem>>, vector<32x128xbf16>,
    %c9_88 = arith.constant 9 : index
    %c0_89 = arith.constant 0 : index
    %298 = vector.load %arg1[%c9_88, %c0_89] : memref<37x128xf32, #tpu.memory_space<vmem>>, vector<1x128xf32>
    %299 = vector.shape_cast %298 : vector<1x128xf32> to vector<128xf32>
    %c10_90 = arith.constant 10 : index
    %c0_91 = arith.constant 0 : index
    %300 = vector.load %arg1[%c10_90, %c0_91] : memref<37x128xf32, #tpu.memory_space<vmem>>, vector<1x128xf32>
    %301 = vector.shape_cast %300 : vector<1x128xf32> to vector<128xf32>
    %c11 = arith.constant 11 : index
    %c0_92 = arith.constant 0 : index
    %302 = vector.load %arg1[%c11, %c0_92] : memref<37x128xf32, #tpu.memory_space<vmem>>, vector<1x128xf32>
    %303 = vector.shape_cast %302 : vector<1x128xf32> to vector<128xf32>
    %304 = vector.shape_cast %299 : vector<128xf32> to vector<1x128xf32>
    %305 = vector.broadcast %304 : vector<1x128xf32> to vector<16x128xf32>
    %306 = vector.broadcast %2 : vector<16x1xf32> to vector<16x128xf32>
    %307 = arith.mulf %305, %306 : vector<16x128xf32>
    %308 = vector.shape_cast %301 : vector<128xf32> to vector<1x128xf32>
    %309 = vector.broadcast %308 : vector<1x128xf32> to vector<16x128xf32>
    %310 = vector.broadcast %4 : vector<16x1xf32> to vector<16x128xf32>
    %311 = arith.mulf %309, %310 : vector<16x128xf32>
    %312 = arith.addf %307, %311 : vector<16x128xf32>
    %313 = vector.shape_cast %303 : vector<128xf32> to vector<1x128xf32>
    %314 = vector.broadcast %313 : vector<1x128xf32> to vector<16x128xf32>
    %315 = vector.broadcast %6 : vector<16x1xf32> to vector<16x128xf32>
    %316 = arith.mulf %314, %315 : vector<16x128xf32>
    %317 = arith.addf %312, %316 : vector<16x128xf32>
    %318 = vector.broadcast %7 : vector<16x1xf32> to vector<16x128xf32>
    %319 = arith.addf %317, %318 : vector<16x128xf32>
    %cst_93 = arith.constant 0.000000e+00 : f32
    %320 = vector.broadcast %cst_93 : f32 to vector<16x128xf32>
    %321 = arith.maximumf %319, %320 : vector<16x128xf32>
    %322 = arith.truncf %321 : vector<16x128xf32> to vector<16x128xbf16>
    %cst_94 = arith.constant dense<0.000000e+00> : vector<32x128xf32>
    %323 = tpu.matmul %8, %322, %cst_94 {dimension_numbers = #tpu.dot_dimension_numbers<[1], [0], [0], [1], [0, 0, 1, 1], [], []>} : vector<32x16xbf16>, vector<16x128xbf16>, vector<32x128xf32> -> vector<32x128xf32>
    %324 = vector.broadcast %9 : vector<32x1xf32> to vector<32x128xf32>
    %325 = arith.addf %323, %324 : vector<32x128xf32>
    %cst_95 = arith.constant 0.000000e+00 : f32
    %326 = vector.broadcast %cst_95 : f32 to vector<32x128xf32>
    %327 = arith.maximumf %325, %326 : vector<32x128xf32>
    %328 = arith.truncf %327 : vector<32x128xf32> to vector<32x128xbf16>
    %c288 = arith.constant 288 : index
    %c0_96 = arith.constant 0 : index
    %329 = vector.load %arg9[%c288, %c0_96] : memref<1120x128xbf16, #tpu.memory_space<vmem>>, vector<32x128xbf16>
    tpu.vector_store %arg9[%c288, %c0_96], %328 {strides = array<i32>} : memref<1120x128xbf16, #tpu.memory_space<vmem>>, vector<32x128xbf16>,
    %c10_97 = arith.constant 10 : index
    %c0_98 = arith.constant 0 : index
    %330 = vector.load %arg1[%c10_97, %c0_98] : memref<37x128xf32, #tpu.memory_space<vmem>>, vector<1x128xf32>
    %331 = vector.shape_cast %330 : vector<1x128xf32> to vector<128xf32>
    %c11_99 = arith.constant 11 : index
    %c0_100 = arith.constant 0 : index
    %332 = vector.load %arg1[%c11_99, %c0_100] : memref<37x128xf32, #tpu.memory_space<vmem>>, vector<1x128xf32>
    %333 = vector.shape_cast %332 : vector<1x128xf32> to vector<128xf32>
    %c12 = arith.constant 12 : index
    %c0_101 = arith.constant 0 : index
    %334 = vector.load %arg1[%c12, %c0_101] : memref<37x128xf32, #tpu.memory_space<vmem>>, vector<1x128xf32>
    %335 = vector.shape_cast %334 : vector<1x128xf32> to vector<128xf32>
    %336 = vector.shape_cast %331 : vector<128xf32> to vector<1x128xf32>
    %337 = vector.broadcast %336 : vector<1x128xf32> to vector<16x128xf32>
    %338 = vector.broadcast %2 : vector<16x1xf32> to vector<16x128xf32>
    %339 = arith.mulf %337, %338 : vector<16x128xf32>
    %340 = vector.shape_cast %333 : vector<128xf32> to vector<1x128xf32>
    %341 = vector.broadcast %340 : vector<1x128xf32> to vector<16x128xf32>
    %342 = vector.broadcast %4 : vector<16x1xf32> to vector<16x128xf32>
    %343 = arith.mulf %341, %342 : vector<16x128xf32>
    %344 = arith.addf %339, %343 : vector<16x128xf32>
    %345 = vector.shape_cast %335 : vector<128xf32> to vector<1x128xf32>
    %346 = vector.broadcast %345 : vector<1x128xf32> to vector<16x128xf32>
    %347 = vector.broadcast %6 : vector<16x1xf32> to vector<16x128xf32>
    %348 = arith.mulf %346, %347 : vector<16x128xf32>
    %349 = arith.addf %344, %348 : vector<16x128xf32>
    %350 = vector.broadcast %7 : vector<16x1xf32> to vector<16x128xf32>
    %351 = arith.addf %349, %350 : vector<16x128xf32>
    %cst_102 = arith.constant 0.000000e+00 : f32
    %352 = vector.broadcast %cst_102 : f32 to vector<16x128xf32>
    %353 = arith.maximumf %351, %352 : vector<16x128xf32>
    %354 = arith.truncf %353 : vector<16x128xf32> to vector<16x128xbf16>
    %cst_103 = arith.constant dense<0.000000e+00> : vector<32x128xf32>
    %355 = tpu.matmul %8, %354, %cst_103 {dimension_numbers = #tpu.dot_dimension_numbers<[1], [0], [0], [1], [0, 0, 1, 1], [], []>} : vector<32x16xbf16>, vector<16x128xbf16>, vector<32x128xf32> -> vector<32x128xf32>
    %356 = vector.broadcast %9 : vector<32x1xf32> to vector<32x128xf32>
    %357 = arith.addf %355, %356 : vector<32x128xf32>
    %cst_104 = arith.constant 0.000000e+00 : f32
    %358 = vector.broadcast %cst_104 : f32 to vector<32x128xf32>
    %359 = arith.maximumf %357, %358 : vector<32x128xf32>
    %360 = arith.truncf %359 : vector<32x128xf32> to vector<32x128xbf16>
    %c320 = arith.constant 320 : index
    %c0_105 = arith.constant 0 : index
    %361 = vector.load %arg9[%c320, %c0_105] : memref<1120x128xbf16, #tpu.memory_space<vmem>>, vector<32x128xbf16>
    tpu.vector_store %arg9[%c320, %c0_105], %360 {strides = array<i32>} : memref<1120x128xbf16, #tpu.memory_space<vmem>>, vector<32x128xbf16>,
    %c11_106 = arith.constant 11 : index
    %c0_107 = arith.constant 0 : index
    %362 = vector.load %arg1[%c11_106, %c0_107] : memref<37x128xf32, #tpu.memory_space<vmem>>, vector<1x128xf32>
    %363 = vector.shape_cast %362 : vector<1x128xf32> to vector<128xf32>
    %c12_108 = arith.constant 12 : index
    %c0_109 = arith.constant 0 : index
    %364 = vector.load %arg1[%c12_108, %c0_109] : memref<37x128xf32, #tpu.memory_space<vmem>>, vector<1x128xf32>
    %365 = vector.shape_cast %364 : vector<1x128xf32> to vector<128xf32>
    %c13 = arith.constant 13 : index
    %c0_110 = arith.constant 0 : index
    %366 = vector.load %arg1[%c13, %c0_110] : memref<37x128xf32, #tpu.memory_space<vmem>>, vector<1x128xf32>
    %367 = vector.shape_cast %366 : vector<1x128xf32> to vector<128xf32>
    %368 = vector.shape_cast %363 : vector<128xf32> to vector<1x128xf32>
    %369 = vector.broadcast %368 : vector<1x128xf32> to vector<16x128xf32>
    %370 = vector.broadcast %2 : vector<16x1xf32> to vector<16x128xf32>
    %371 = arith.mulf %369, %370 : vector<16x128xf32>
    %372 = vector.shape_cast %365 : vector<128xf32> to vector<1x128xf32>
    %373 = vector.broadcast %372 : vector<1x128xf32> to vector<16x128xf32>
    %374 = vector.broadcast %4 : vector<16x1xf32> to vector<16x128xf32>
    %375 = arith.mulf %373, %374 : vector<16x128xf32>
    %376 = arith.addf %371, %375 : vector<16x128xf32>
    %377 = vector.shape_cast %367 : vector<128xf32> to vector<1x128xf32>
    %378 = vector.broadcast %377 : vector<1x128xf32> to vector<16x128xf32>
    %379 = vector.broadcast %6 : vector<16x1xf32> to vector<16x128xf32>
    %380 = arith.mulf %378, %379 : vector<16x128xf32>
    %381 = arith.addf %376, %380 : vector<16x128xf32>
    %382 = vector.broadcast %7 : vector<16x1xf32> to vector<16x128xf32>
    %383 = arith.addf %381, %382 : vector<16x128xf32>
    %cst_111 = arith.constant 0.000000e+00 : f32
    %384 = vector.broadcast %cst_111 : f32 to vector<16x128xf32>
    %385 = arith.maximumf %383, %384 : vector<16x128xf32>
    %386 = arith.truncf %385 : vector<16x128xf32> to vector<16x128xbf16>
    %cst_112 = arith.constant dense<0.000000e+00> : vector<32x128xf32>
    %387 = tpu.matmul %8, %386, %cst_112 {dimension_numbers = #tpu.dot_dimension_numbers<[1], [0], [0], [1], [0, 0, 1, 1], [], []>} : vector<32x16xbf16>, vector<16x128xbf16>, vector<32x128xf32> -> vector<32x128xf32>
    %388 = vector.broadcast %9 : vector<32x1xf32> to vector<32x128xf32>
    %389 = arith.addf %387, %388 : vector<32x128xf32>
    %cst_113 = arith.constant 0.000000e+00 : f32
    %390 = vector.broadcast %cst_113 : f32 to vector<32x128xf32>
    %391 = arith.maximumf %389, %390 : vector<32x128xf32>
    %392 = arith.truncf %391 : vector<32x128xf32> to vector<32x128xbf16>
    %c352 = arith.constant 352 : index
    %c0_114 = arith.constant 0 : index
    %393 = vector.load %arg9[%c352, %c0_114] : memref<1120x128xbf16, #tpu.memory_space<vmem>>, vector<32x128xbf16>
    tpu.vector_store %arg9[%c352, %c0_114], %392 {strides = array<i32>} : memref<1120x128xbf16, #tpu.memory_space<vmem>>, vector<32x128xbf16>,
    %c12_115 = arith.constant 12 : index
    %c0_116 = arith.constant 0 : index
    %394 = vector.load %arg1[%c12_115, %c0_116] : memref<37x128xf32, #tpu.memory_space<vmem>>, vector<1x128xf32>
    %395 = vector.shape_cast %394 : vector<1x128xf32> to vector<128xf32>
    %c13_117 = arith.constant 13 : index
    %c0_118 = arith.constant 0 : index
    %396 = vector.load %arg1[%c13_117, %c0_118] : memref<37x128xf32, #tpu.memory_space<vmem>>, vector<1x128xf32>
    %397 = vector.shape_cast %396 : vector<1x128xf32> to vector<128xf32>
    %c14 = arith.constant 14 : index
    %c0_119 = arith.constant 0 : index
    %398 = vector.load %arg1[%c14, %c0_119] : memref<37x128xf32, #tpu.memory_space<vmem>>, vector<1x128xf32>
    %399 = vector.shape_cast %398 : vector<1x128xf32> to vector<128xf32>
    %400 = vector.shape_cast %395 : vector<128xf32> to vector<1x128xf32>
    %401 = vector.broadcast %400 : vector<1x128xf32> to vector<16x128xf32>
    %402 = vector.broadcast %2 : vector<16x1xf32> to vector<16x128xf32>
    %403 = arith.mulf %401, %402 : vector<16x128xf32>
    %404 = vector.shape_cast %397 : vector<128xf32> to vector<1x128xf32>
    %405 = vector.broadcast %404 : vector<1x128xf32> to vector<16x128xf32>
    %406 = vector.broadcast %4 : vector<16x1xf32> to vector<16x128xf32>
    %407 = arith.mulf %405, %406 : vector<16x128xf32>
    %408 = arith.addf %403, %407 : vector<16x128xf32>
    %409 = vector.shape_cast %399 : vector<128xf32> to vector<1x128xf32>
    %410 = vector.broadcast %409 : vector<1x128xf32> to vector<16x128xf32>
    %411 = vector.broadcast %6 : vector<16x1xf32> to vector<16x128xf32>
    %412 = arith.mulf %410, %411 : vector<16x128xf32>
    %413 = arith.addf %408, %412 : vector<16x128xf32>
    %414 = vector.broadcast %7 : vector<16x1xf32> to vector<16x128xf32>
    %415 = arith.addf %413, %414 : vector<16x128xf32>
    %cst_120 = arith.constant 0.000000e+00 : f32
    %416 = vector.broadcast %cst_120 : f32 to vector<16x128xf32>
    %417 = arith.maximumf %415, %416 : vector<16x128xf32>
    %418 = arith.truncf %417 : vector<16x128xf32> to vector<16x128xbf16>
    %cst_121 = arith.constant dense<0.000000e+00> : vector<32x128xf32>
    %419 = tpu.matmul %8, %418, %cst_121 {dimension_numbers = #tpu.dot_dimension_numbers<[1], [0], [0], [1], [0, 0, 1, 1], [], []>} : vector<32x16xbf16>, vector<16x128xbf16>, vector<32x128xf32> -> vector<32x128xf32>
    %420 = vector.broadcast %9 : vector<32x1xf32> to vector<32x128xf32>
    %421 = arith.addf %419, %420 : vector<32x128xf32>
    %cst_122 = arith.constant 0.000000e+00 : f32
    %422 = vector.broadcast %cst_122 : f32 to vector<32x128xf32>
    %423 = arith.maximumf %421, %422 : vector<32x128xf32>
    %424 = arith.truncf %423 : vector<32x128xf32> to vector<32x128xbf16>
    %c384 = arith.constant 384 : index
    %c0_123 = arith.constant 0 : index
    %425 = vector.load %arg9[%c384, %c0_123] : memref<1120x128xbf16, #tpu.memory_space<vmem>>, vector<32x128xbf16>
    tpu.vector_store %arg9[%c384, %c0_123], %424 {strides = array<i32>} : memref<1120x128xbf16, #tpu.memory_space<vmem>>, vector<32x128xbf16>,
    %c13_124 = arith.constant 13 : index
    %c0_125 = arith.constant 0 : index
    %426 = vector.load %arg1[%c13_124, %c0_125] : memref<37x128xf32, #tpu.memory_space<vmem>>, vector<1x128xf32>
    %427 = vector.shape_cast %426 : vector<1x128xf32> to vector<128xf32>
    %c14_126 = arith.constant 14 : index
    %c0_127 = arith.constant 0 : index
    %428 = vector.load %arg1[%c14_126, %c0_127] : memref<37x128xf32, #tpu.memory_space<vmem>>, vector<1x128xf32>
    %429 = vector.shape_cast %428 : vector<1x128xf32> to vector<128xf32>
    %c15 = arith.constant 15 : index
    %c0_128 = arith.constant 0 : index
    %430 = vector.load %arg1[%c15, %c0_128] : memref<37x128xf32, #tpu.memory_space<vmem>>, vector<1x128xf32>
    %431 = vector.shape_cast %430 : vector<1x128xf32> to vector<128xf32>
    %432 = vector.shape_cast %427 : vector<128xf32> to vector<1x128xf32>
    %433 = vector.broadcast %432 : vector<1x128xf32> to vector<16x128xf32>
    %434 = vector.broadcast %2 : vector<16x1xf32> to vector<16x128xf32>
    %435 = arith.mulf %433, %434 : vector<16x128xf32>
    %436 = vector.shape_cast %429 : vector<128xf32> to vector<1x128xf32>
    %437 = vector.broadcast %436 : vector<1x128xf32> to vector<16x128xf32>
    %438 = vector.broadcast %4 : vector<16x1xf32> to vector<16x128xf32>
    %439 = arith.mulf %437, %438 : vector<16x128xf32>
    %440 = arith.addf %435, %439 : vector<16x128xf32>
    %441 = vector.shape_cast %431 : vector<128xf32> to vector<1x128xf32>
    %442 = vector.broadcast %441 : vector<1x128xf32> to vector<16x128xf32>
    %443 = vector.broadcast %6 : vector<16x1xf32> to vector<16x128xf32>
    %444 = arith.mulf %442, %443 : vector<16x128xf32>
    %445 = arith.addf %440, %444 : vector<16x128xf32>
    %446 = vector.broadcast %7 : vector<16x1xf32> to vector<16x128xf32>
    %447 = arith.addf %445, %446 : vector<16x128xf32>
    %cst_129 = arith.constant 0.000000e+00 : f32
    %448 = vector.broadcast %cst_129 : f32 to vector<16x128xf32>
    %449 = arith.maximumf %447, %448 : vector<16x128xf32>
    %450 = arith.truncf %449 : vector<16x128xf32> to vector<16x128xbf16>
    %cst_130 = arith.constant dense<0.000000e+00> : vector<32x128xf32>
    %451 = tpu.matmul %8, %450, %cst_130 {dimension_numbers = #tpu.dot_dimension_numbers<[1], [0], [0], [1], [0, 0, 1, 1], [], []>} : vector<32x16xbf16>, vector<16x128xbf16>, vector<32x128xf32> -> vector<32x128xf32>
    %452 = vector.broadcast %9 : vector<32x1xf32> to vector<32x128xf32>
    %453 = arith.addf %451, %452 : vector<32x128xf32>
    %cst_131 = arith.constant 0.000000e+00 : f32
    %454 = vector.broadcast %cst_131 : f32 to vector<32x128xf32>
    %455 = arith.maximumf %453, %454 : vector<32x128xf32>
    %456 = arith.truncf %455 : vector<32x128xf32> to vector<32x128xbf16>
    %c416 = arith.constant 416 : index
    %c0_132 = arith.constant 0 : index
    %457 = vector.load %arg9[%c416, %c0_132] : memref<1120x128xbf16, #tpu.memory_space<vmem>>, vector<32x128xbf16>
    tpu.vector_store %arg9[%c416, %c0_132], %456 {strides = array<i32>} : memref<1120x128xbf16, #tpu.memory_space<vmem>>, vector<32x128xbf16>,
    %c14_133 = arith.constant 14 : index
    %c0_134 = arith.constant 0 : index
    %458 = vector.load %arg1[%c14_133, %c0_134] : memref<37x128xf32, #tpu.memory_space<vmem>>, vector<1x128xf32>
    %459 = vector.shape_cast %458 : vector<1x128xf32> to vector<128xf32>
    %c15_135 = arith.constant 15 : index
    %c0_136 = arith.constant 0 : index
    %460 = vector.load %arg1[%c15_135, %c0_136] : memref<37x128xf32, #tpu.memory_space<vmem>>, vector<1x128xf32>
    %461 = vector.shape_cast %460 : vector<1x128xf32> to vector<128xf32>
    %c16 = arith.constant 16 : index
    %c0_137 = arith.constant 0 : index
    %462 = vector.load %arg1[%c16, %c0_137] : memref<37x128xf32, #tpu.memory_space<vmem>>, vector<1x128xf32>
    %463 = vector.shape_cast %462 : vector<1x128xf32> to vector<128xf32>
    %464 = vector.shape_cast %459 : vector<128xf32> to vector<1x128xf32>
    %465 = vector.broadcast %464 : vector<1x128xf32> to vector<16x128xf32>
    %466 = vector.broadcast %2 : vector<16x1xf32> to vector<16x128xf32>
    %467 = arith.mulf %465, %466 : vector<16x128xf32>
    %468 = vector.shape_cast %461 : vector<128xf32> to vector<1x128xf32>
    %469 = vector.broadcast %468 : vector<1x128xf32> to vector<16x128xf32>
    %470 = vector.broadcast %4 : vector<16x1xf32> to vector<16x128xf32>
    %471 = arith.mulf %469, %470 : vector<16x128xf32>
    %472 = arith.addf %467, %471 : vector<16x128xf32>
    %473 = vector.shape_cast %463 : vector<128xf32> to vector<1x128xf32>
    %474 = vector.broadcast %473 : vector<1x128xf32> to vector<16x128xf32>
    %475 = vector.broadcast %6 : vector<16x1xf32> to vector<16x128xf32>
    %476 = arith.mulf %474, %475 : vector<16x128xf32>
    %477 = arith.addf %472, %476 : vector<16x128xf32>
    %478 = vector.broadcast %7 : vector<16x1xf32> to vector<16x128xf32>
    %479 = arith.addf %477, %478 : vector<16x128xf32>
    %cst_138 = arith.constant 0.000000e+00 : f32
    %480 = vector.broadcast %cst_138 : f32 to vector<16x128xf32>
    %481 = arith.maximumf %479, %480 : vector<16x128xf32>
    %482 = arith.truncf %481 : vector<16x128xf32> to vector<16x128xbf16>
    %cst_139 = arith.constant dense<0.000000e+00> : vector<32x128xf32>
    %483 = tpu.matmul %8, %482, %cst_139 {dimension_numbers = #tpu.dot_dimension_numbers<[1], [0], [0], [1], [0, 0, 1, 1], [], []>} : vector<32x16xbf16>, vector<16x128xbf16>, vector<32x128xf32> -> vector<32x128xf32>
    %484 = vector.broadcast %9 : vector<32x1xf32> to vector<32x128xf32>
    %485 = arith.addf %483, %484 : vector<32x128xf32>
    %cst_140 = arith.constant 0.000000e+00 : f32
    %486 = vector.broadcast %cst_140 : f32 to vector<32x128xf32>
    %487 = arith.maximumf %485, %486 : vector<32x128xf32>
    %488 = arith.truncf %487 : vector<32x128xf32> to vector<32x128xbf16>
    %c448 = arith.constant 448 : index
    %c0_141 = arith.constant 0 : index
    %489 = vector.load %arg9[%c448, %c0_141] : memref<1120x128xbf16, #tpu.memory_space<vmem>>, vector<32x128xbf16>
    tpu.vector_store %arg9[%c448, %c0_141], %488 {strides = array<i32>} : memref<1120x128xbf16, #tpu.memory_space<vmem>>, vector<32x128xbf16>,
    %c15_142 = arith.constant 15 : index
    %c0_143 = arith.constant 0 : index
    %490 = vector.load %arg1[%c15_142, %c0_143] : memref<37x128xf32, #tpu.memory_space<vmem>>, vector<1x128xf32>
    %491 = vector.shape_cast %490 : vector<1x128xf32> to vector<128xf32>
    %c16_144 = arith.constant 16 : index
    %c0_145 = arith.constant 0 : index
    %492 = vector.load %arg1[%c16_144, %c0_145] : memref<37x128xf32, #tpu.memory_space<vmem>>, vector<1x128xf32>
    %493 = vector.shape_cast %492 : vector<1x128xf32> to vector<128xf32>
    %c17 = arith.constant 17 : index
    %c0_146 = arith.constant 0 : index
    %494 = vector.load %arg1[%c17, %c0_146] : memref<37x128xf32, #tpu.memory_space<vmem>>, vector<1x128xf32>
    %495 = vector.shape_cast %494 : vector<1x128xf32> to vector<128xf32>
    %496 = vector.shape_cast %491 : vector<128xf32> to vector<1x128xf32>
    %497 = vector.broadcast %496 : vector<1x128xf32> to vector<16x128xf32>
    %498 = vector.broadcast %2 : vector<16x1xf32> to vector<16x128xf32>
    %499 = arith.mulf %497, %498 : vector<16x128xf32>
    %500 = vector.shape_cast %493 : vector<128xf32> to vector<1x128xf32>
    %501 = vector.broadcast %500 : vector<1x128xf32> to vector<16x128xf32>
    %502 = vector.broadcast %4 : vector<16x1xf32> to vector<16x128xf32>
    %503 = arith.mulf %501, %502 : vector<16x128xf32>
    %504 = arith.addf %499, %503 : vector<16x128xf32>
    %505 = vector.shape_cast %495 : vector<128xf32> to vector<1x128xf32>
    %506 = vector.broadcast %505 : vector<1x128xf32> to vector<16x128xf32>
    %507 = vector.broadcast %6 : vector<16x1xf32> to vector<16x128xf32>
    %508 = arith.mulf %506, %507 : vector<16x128xf32>
    %509 = arith.addf %504, %508 : vector<16x128xf32>
    %510 = vector.broadcast %7 : vector<16x1xf32> to vector<16x128xf32>
    %511 = arith.addf %509, %510 : vector<16x128xf32>
    %cst_147 = arith.constant 0.000000e+00 : f32
    %512 = vector.broadcast %cst_147 : f32 to vector<16x128xf32>
    %513 = arith.maximumf %511, %512 : vector<16x128xf32>
    %514 = arith.truncf %513 : vector<16x128xf32> to vector<16x128xbf16>
    %cst_148 = arith.constant dense<0.000000e+00> : vector<32x128xf32>
    %515 = tpu.matmul %8, %514, %cst_148 {dimension_numbers = #tpu.dot_dimension_numbers<[1], [0], [0], [1], [0, 0, 1, 1], [], []>} : vector<32x16xbf16>, vector<16x128xbf16>, vector<32x128xf32> -> vector<32x128xf32>
    %516 = vector.broadcast %9 : vector<32x1xf32> to vector<32x128xf32>
    %517 = arith.addf %515, %516 : vector<32x128xf32>
    %cst_149 = arith.constant 0.000000e+00 : f32
    %518 = vector.broadcast %cst_149 : f32 to vector<32x128xf32>
    %519 = arith.maximumf %517, %518 : vector<32x128xf32>
    %520 = arith.truncf %519 : vector<32x128xf32> to vector<32x128xbf16>
    %c480 = arith.constant 480 : index
    %c0_150 = arith.constant 0 : index
    %521 = vector.load %arg9[%c480, %c0_150] : memref<1120x128xbf16, #tpu.memory_space<vmem>>, vector<32x128xbf16>
    tpu.vector_store %arg9[%c480, %c0_150], %520 {strides = array<i32>} : memref<1120x128xbf16, #tpu.memory_space<vmem>>, vector<32x128xbf16>,
    %c16_151 = arith.constant 16 : index
    %c0_152 = arith.constant 0 : index
    %522 = vector.load %arg1[%c16_151, %c0_152] : memref<37x128xf32, #tpu.memory_space<vmem>>, vector<1x128xf32>
    %523 = vector.shape_cast %522 : vector<1x128xf32> to vector<128xf32>
    %c17_153 = arith.constant 17 : index
    %c0_154 = arith.constant 0 : index
    %524 = vector.load %arg1[%c17_153, %c0_154] : memref<37x128xf32, #tpu.memory_space<vmem>>, vector<1x128xf32>
    %525 = vector.shape_cast %524 : vector<1x128xf32> to vector<128xf32>
    %c18 = arith.constant 18 : index
    %c0_155 = arith.constant 0 : index
    %526 = vector.load %arg1[%c18, %c0_155] : memref<37x128xf32, #tpu.memory_space<vmem>>, vector<1x128xf32>
    %527 = vector.shape_cast %526 : vector<1x128xf32> to vector<128xf32>
    %528 = vector.shape_cast %523 : vector<128xf32> to vector<1x128xf32>
    %529 = vector.broadcast %528 : vector<1x128xf32> to vector<16x128xf32>
    %530 = vector.broadcast %2 : vector<16x1xf32> to vector<16x128xf32>
    %531 = arith.mulf %529, %530 : vector<16x128xf32>
    %532 = vector.shape_cast %525 : vector<128xf32> to vector<1x128xf32>
    %533 = vector.broadcast %532 : vector<1x128xf32> to vector<16x128xf32>
    %534 = vector.broadcast %4 : vector<16x1xf32> to vector<16x128xf32>
    %535 = arith.mulf %533, %534 : vector<16x128xf32>
    %536 = arith.addf %531, %535 : vector<16x128xf32>
    %537 = vector.shape_cast %527 : vector<128xf32> to vector<1x128xf32>
    %538 = vector.broadcast %537 : vector<1x128xf32> to vector<16x128xf32>
    %539 = vector.broadcast %6 : vector<16x1xf32> to vector<16x128xf32>
    %540 = arith.mulf %538, %539 : vector<16x128xf32>
    %541 = arith.addf %536, %540 : vector<16x128xf32>
    %542 = vector.broadcast %7 : vector<16x1xf32> to vector<16x128xf32>
    %543 = arith.addf %541, %542 : vector<16x128xf32>
    %cst_156 = arith.constant 0.000000e+00 : f32
    %544 = vector.broadcast %cst_156 : f32 to vector<16x128xf32>
    %545 = arith.maximumf %543, %544 : vector<16x128xf32>
    %546 = arith.truncf %545 : vector<16x128xf32> to vector<16x128xbf16>
    %cst_157 = arith.constant dense<0.000000e+00> : vector<32x128xf32>
    %547 = tpu.matmul %8, %546, %cst_157 {dimension_numbers = #tpu.dot_dimension_numbers<[1], [0], [0], [1], [0, 0, 1, 1], [], []>} : vector<32x16xbf16>, vector<16x128xbf16>, vector<32x128xf32> -> vector<32x128xf32>
    %548 = vector.broadcast %9 : vector<32x1xf32> to vector<32x128xf32>
    %549 = arith.addf %547, %548 : vector<32x128xf32>
    %cst_158 = arith.constant 0.000000e+00 : f32
    %550 = vector.broadcast %cst_158 : f32 to vector<32x128xf32>
    %551 = arith.maximumf %549, %550 : vector<32x128xf32>
    %552 = arith.truncf %551 : vector<32x128xf32> to vector<32x128xbf16>
    %c512 = arith.constant 512 : index
    %c0_159 = arith.constant 0 : index
    %553 = vector.load %arg9[%c512, %c0_159] : memref<1120x128xbf16, #tpu.memory_space<vmem>>, vector<32x128xbf16>
    tpu.vector_store %arg9[%c512, %c0_159], %552 {strides = array<i32>} : memref<1120x128xbf16, #tpu.memory_space<vmem>>, vector<32x128xbf16>,
    %c17_160 = arith.constant 17 : index
    %c0_161 = arith.constant 0 : index
    %554 = vector.load %arg1[%c17_160, %c0_161] : memref<37x128xf32, #tpu.memory_space<vmem>>, vector<1x128xf32>
    %555 = vector.shape_cast %554 : vector<1x128xf32> to vector<128xf32>
    %c18_162 = arith.constant 18 : index
    %c0_163 = arith.constant 0 : index
    %556 = vector.load %arg1[%c18_162, %c0_163] : memref<37x128xf32, #tpu.memory_space<vmem>>, vector<1x128xf32>
    %557 = vector.shape_cast %556 : vector<1x128xf32> to vector<128xf32>
    %c19 = arith.constant 19 : index
    %c0_164 = arith.constant 0 : index
    %558 = vector.load %arg1[%c19, %c0_164] : memref<37x128xf32, #tpu.memory_space<vmem>>, vector<1x128xf32>
    %559 = vector.shape_cast %558 : vector<1x128xf32> to vector<128xf32>
    %560 = vector.shape_cast %555 : vector<128xf32> to vector<1x128xf32>
    %561 = vector.broadcast %560 : vector<1x128xf32> to vector<16x128xf32>
    %562 = vector.broadcast %2 : vector<16x1xf32> to vector<16x128xf32>
    %563 = arith.mulf %561, %562 : vector<16x128xf32>
    %564 = vector.shape_cast %557 : vector<128xf32> to vector<1x128xf32>
    %565 = vector.broadcast %564 : vector<1x128xf32> to vector<16x128xf32>
    %566 = vector.broadcast %4 : vector<16x1xf32> to vector<16x128xf32>
    %567 = arith.mulf %565, %566 : vector<16x128xf32>
    %568 = arith.addf %563, %567 : vector<16x128xf32>
    %569 = vector.shape_cast %559 : vector<128xf32> to vector<1x128xf32>
    %570 = vector.broadcast %569 : vector<1x128xf32> to vector<16x128xf32>
    %571 = vector.broadcast %6 : vector<16x1xf32> to vector<16x128xf32>
    %572 = arith.mulf %570, %571 : vector<16x128xf32>
    %573 = arith.addf %568, %572 : vector<16x128xf32>
    %574 = vector.broadcast %7 : vector<16x1xf32> to vector<16x128xf32>
    %575 = arith.addf %573, %574 : vector<16x128xf32>
    %cst_165 = arith.constant 0.000000e+00 : f32
    %576 = vector.broadcast %cst_165 : f32 to vector<16x128xf32>
    %577 = arith.maximumf %575, %576 : vector<16x128xf32>
    %578 = arith.truncf %577 : vector<16x128xf32> to vector<16x128xbf16>
    %cst_166 = arith.constant dense<0.000000e+00> : vector<32x128xf32>
    %579 = tpu.matmul %8, %578, %cst_166 {dimension_numbers = #tpu.dot_dimension_numbers<[1], [0], [0], [1], [0, 0, 1, 1], [], []>} : vector<32x16xbf16>, vector<16x128xbf16>, vector<32x128xf32> -> vector<32x128xf32>
    %580 = vector.broadcast %9 : vector<32x1xf32> to vector<32x128xf32>
    %581 = arith.addf %579, %580 : vector<32x128xf32>
    %cst_167 = arith.constant 0.000000e+00 : f32
    %582 = vector.broadcast %cst_167 : f32 to vector<32x128xf32>
    %583 = arith.maximumf %581, %582 : vector<32x128xf32>
    %584 = arith.truncf %583 : vector<32x128xf32> to vector<32x128xbf16>
    %c544 = arith.constant 544 : index
    %c0_168 = arith.constant 0 : index
    %585 = vector.load %arg9[%c544, %c0_168] : memref<1120x128xbf16, #tpu.memory_space<vmem>>, vector<32x128xbf16>
    tpu.vector_store %arg9[%c544, %c0_168], %584 {strides = array<i32>} : memref<1120x128xbf16, #tpu.memory_space<vmem>>, vector<32x128xbf16>,
    %c18_169 = arith.constant 18 : index
    %c0_170 = arith.constant 0 : index
    %586 = vector.load %arg1[%c18_169, %c0_170] : memref<37x128xf32, #tpu.memory_space<vmem>>, vector<1x128xf32>
    %587 = vector.shape_cast %586 : vector<1x128xf32> to vector<128xf32>
    %c19_171 = arith.constant 19 : index
    %c0_172 = arith.constant 0 : index
    %588 = vector.load %arg1[%c19_171, %c0_172] : memref<37x128xf32, #tpu.memory_space<vmem>>, vector<1x128xf32>
    %589 = vector.shape_cast %588 : vector<1x128xf32> to vector<128xf32>
    %c20 = arith.constant 20 : index
    %c0_173 = arith.constant 0 : index
    %590 = vector.load %arg1[%c20, %c0_173] : memref<37x128xf32, #tpu.memory_space<vmem>>, vector<1x128xf32>
    %591 = vector.shape_cast %590 : vector<1x128xf32> to vector<128xf32>
    %592 = vector.shape_cast %587 : vector<128xf32> to vector<1x128xf32>
    %593 = vector.broadcast %592 : vector<1x128xf32> to vector<16x128xf32>
    %594 = vector.broadcast %2 : vector<16x1xf32> to vector<16x128xf32>
    %595 = arith.mulf %593, %594 : vector<16x128xf32>
    %596 = vector.shape_cast %589 : vector<128xf32> to vector<1x128xf32>
    %597 = vector.broadcast %596 : vector<1x128xf32> to vector<16x128xf32>
    %598 = vector.broadcast %4 : vector<16x1xf32> to vector<16x128xf32>
    %599 = arith.mulf %597, %598 : vector<16x128xf32>
    %600 = arith.addf %595, %599 : vector<16x128xf32>
    %601 = vector.shape_cast %591 : vector<128xf32> to vector<1x128xf32>
    %602 = vector.broadcast %601 : vector<1x128xf32> to vector<16x128xf32>
    %603 = vector.broadcast %6 : vector<16x1xf32> to vector<16x128xf32>
    %604 = arith.mulf %602, %603 : vector<16x128xf32>
    %605 = arith.addf %600, %604 : vector<16x128xf32>
    %606 = vector.broadcast %7 : vector<16x1xf32> to vector<16x128xf32>
    %607 = arith.addf %605, %606 : vector<16x128xf32>
    %cst_174 = arith.constant 0.000000e+00 : f32
    %608 = vector.broadcast %cst_174 : f32 to vector<16x128xf32>
    %609 = arith.maximumf %607, %608 : vector<16x128xf32>
    %610 = arith.truncf %609 : vector<16x128xf32> to vector<16x128xbf16>
    %cst_175 = arith.constant dense<0.000000e+00> : vector<32x128xf32>
    %611 = tpu.matmul %8, %610, %cst_175 {dimension_numbers = #tpu.dot_dimension_numbers<[1], [0], [0], [1], [0, 0, 1, 1], [], []>} : vector<32x16xbf16>, vector<16x128xbf16>, vector<32x128xf32> -> vector<32x128xf32>
    %612 = vector.broadcast %9 : vector<32x1xf32> to vector<32x128xf32>
    %613 = arith.addf %611, %612 : vector<32x128xf32>
    %cst_176 = arith.constant 0.000000e+00 : f32
    %614 = vector.broadcast %cst_176 : f32 to vector<32x128xf32>
    %615 = arith.maximumf %613, %614 : vector<32x128xf32>
    %616 = arith.truncf %615 : vector<32x128xf32> to vector<32x128xbf16>
    %c576 = arith.constant 576 : index
    %c0_177 = arith.constant 0 : index
    %617 = vector.load %arg9[%c576, %c0_177] : memref<1120x128xbf16, #tpu.memory_space<vmem>>, vector<32x128xbf16>
    tpu.vector_store %arg9[%c576, %c0_177], %616 {strides = array<i32>} : memref<1120x128xbf16, #tpu.memory_space<vmem>>, vector<32x128xbf16>,
    %c19_178 = arith.constant 19 : index
    %c0_179 = arith.constant 0 : index
    %618 = vector.load %arg1[%c19_178, %c0_179] : memref<37x128xf32, #tpu.memory_space<vmem>>, vector<1x128xf32>
    %619 = vector.shape_cast %618 : vector<1x128xf32> to vector<128xf32>
    %c20_180 = arith.constant 20 : index
    %c0_181 = arith.constant 0 : index
    %620 = vector.load %arg1[%c20_180, %c0_181] : memref<37x128xf32, #tpu.memory_space<vmem>>, vector<1x128xf32>
    %621 = vector.shape_cast %620 : vector<1x128xf32> to vector<128xf32>
    %c21 = arith.constant 21 : index
    %c0_182 = arith.constant 0 : index
    %622 = vector.load %arg1[%c21, %c0_182] : memref<37x128xf32, #tpu.memory_space<vmem>>, vector<1x128xf32>
    %623 = vector.shape_cast %622 : vector<1x128xf32> to vector<128xf32>
    %624 = vector.shape_cast %619 : vector<128xf32> to vector<1x128xf32>
    %625 = vector.broadcast %624 : vector<1x128xf32> to vector<16x128xf32>
    %626 = vector.broadcast %2 : vector<16x1xf32> to vector<16x128xf32>
    %627 = arith.mulf %625, %626 : vector<16x128xf32>
    %628 = vector.shape_cast %621 : vector<128xf32> to vector<1x128xf32>
    %629 = vector.broadcast %628 : vector<1x128xf32> to vector<16x128xf32>
    %630 = vector.broadcast %4 : vector<16x1xf32> to vector<16x128xf32>
    %631 = arith.mulf %629, %630 : vector<16x128xf32>
    %632 = arith.addf %627, %631 : vector<16x128xf32>
    %633 = vector.shape_cast %623 : vector<128xf32> to vector<1x128xf32>
    %634 = vector.broadcast %633 : vector<1x128xf32> to vector<16x128xf32>
    %635 = vector.broadcast %6 : vector<16x1xf32> to vector<16x128xf32>
    %636 = arith.mulf %634, %635 : vector<16x128xf32>
    %637 = arith.addf %632, %636 : vector<16x128xf32>
    %638 = vector.broadcast %7 : vector<16x1xf32> to vector<16x128xf32>
    %639 = arith.addf %637, %638 : vector<16x128xf32>
    %cst_183 = arith.constant 0.000000e+00 : f32
    %640 = vector.broadcast %cst_183 : f32 to vector<16x128xf32>
    %641 = arith.maximumf %639, %640 : vector<16x128xf32>
    %642 = arith.truncf %641 : vector<16x128xf32> to vector<16x128xbf16>
    %cst_184 = arith.constant dense<0.000000e+00> : vector<32x128xf32>
    %643 = tpu.matmul %8, %642, %cst_184 {dimension_numbers = #tpu.dot_dimension_numbers<[1], [0], [0], [1], [0, 0, 1, 1], [], []>} : vector<32x16xbf16>, vector<16x128xbf16>, vector<32x128xf32> -> vector<32x128xf32>
    %644 = vector.broadcast %9 : vector<32x1xf32> to vector<32x128xf32>
    %645 = arith.addf %643, %644 : vector<32x128xf32>
    %cst_185 = arith.constant 0.000000e+00 : f32
    %646 = vector.broadcast %cst_185 : f32 to vector<32x128xf32>
    %647 = arith.maximumf %645, %646 : vector<32x128xf32>
    %648 = arith.truncf %647 : vector<32x128xf32> to vector<32x128xbf16>
    %c608 = arith.constant 608 : index
    %c0_186 = arith.constant 0 : index
    %649 = vector.load %arg9[%c608, %c0_186] : memref<1120x128xbf16, #tpu.memory_space<vmem>>, vector<32x128xbf16>
    tpu.vector_store %arg9[%c608, %c0_186], %648 {strides = array<i32>} : memref<1120x128xbf16, #tpu.memory_space<vmem>>, vector<32x128xbf16>,
    %c20_187 = arith.constant 20 : index
    %c0_188 = arith.constant 0 : index
    %650 = vector.load %arg1[%c20_187, %c0_188] : memref<37x128xf32, #tpu.memory_space<vmem>>, vector<1x128xf32>
    %651 = vector.shape_cast %650 : vector<1x128xf32> to vector<128xf32>
    %c21_189 = arith.constant 21 : index
    %c0_190 = arith.constant 0 : index
    %652 = vector.load %arg1[%c21_189, %c0_190] : memref<37x128xf32, #tpu.memory_space<vmem>>, vector<1x128xf32>
    %653 = vector.shape_cast %652 : vector<1x128xf32> to vector<128xf32>
    %c22 = arith.constant 22 : index
    %c0_191 = arith.constant 0 : index
    %654 = vector.load %arg1[%c22, %c0_191] : memref<37x128xf32, #tpu.memory_space<vmem>>, vector<1x128xf32>
    %655 = vector.shape_cast %654 : vector<1x128xf32> to vector<128xf32>
    %656 = vector.shape_cast %651 : vector<128xf32> to vector<1x128xf32>
    %657 = vector.broadcast %656 : vector<1x128xf32> to vector<16x128xf32>
    %658 = vector.broadcast %2 : vector<16x1xf32> to vector<16x128xf32>
    %659 = arith.mulf %657, %658 : vector<16x128xf32>
    %660 = vector.shape_cast %653 : vector<128xf32> to vector<1x128xf32>
    %661 = vector.broadcast %660 : vector<1x128xf32> to vector<16x128xf32>
    %662 = vector.broadcast %4 : vector<16x1xf32> to vector<16x128xf32>
    %663 = arith.mulf %661, %662 : vector<16x128xf32>
    %664 = arith.addf %659, %663 : vector<16x128xf32>
    %665 = vector.shape_cast %655 : vector<128xf32> to vector<1x128xf32>
    %666 = vector.broadcast %665 : vector<1x128xf32> to vector<16x128xf32>
    %667 = vector.broadcast %6 : vector<16x1xf32> to vector<16x128xf32>
    %668 = arith.mulf %666, %667 : vector<16x128xf32>
    %669 = arith.addf %664, %668 : vector<16x128xf32>
    %670 = vector.broadcast %7 : vector<16x1xf32> to vector<16x128xf32>
    %671 = arith.addf %669, %670 : vector<16x128xf32>
    %cst_192 = arith.constant 0.000000e+00 : f32
    %672 = vector.broadcast %cst_192 : f32 to vector<16x128xf32>
    %673 = arith.maximumf %671, %672 : vector<16x128xf32>
    %674 = arith.truncf %673 : vector<16x128xf32> to vector<16x128xbf16>
    %cst_193 = arith.constant dense<0.000000e+00> : vector<32x128xf32>
    %675 = tpu.matmul %8, %674, %cst_193 {dimension_numbers = #tpu.dot_dimension_numbers<[1], [0], [0], [1], [0, 0, 1, 1], [], []>} : vector<32x16xbf16>, vector<16x128xbf16>, vector<32x128xf32> -> vector<32x128xf32>
    %676 = vector.broadcast %9 : vector<32x1xf32> to vector<32x128xf32>
    %677 = arith.addf %675, %676 : vector<32x128xf32>
    %cst_194 = arith.constant 0.000000e+00 : f32
    %678 = vector.broadcast %cst_194 : f32 to vector<32x128xf32>
    %679 = arith.maximumf %677, %678 : vector<32x128xf32>
    %680 = arith.truncf %679 : vector<32x128xf32> to vector<32x128xbf16>
    %c640 = arith.constant 640 : index
    %c0_195 = arith.constant 0 : index
    %681 = vector.load %arg9[%c640, %c0_195] : memref<1120x128xbf16, #tpu.memory_space<vmem>>, vector<32x128xbf16>
    tpu.vector_store %arg9[%c640, %c0_195], %680 {strides = array<i32>} : memref<1120x128xbf16, #tpu.memory_space<vmem>>, vector<32x128xbf16>,
    %c21_196 = arith.constant 21 : index
    %c0_197 = arith.constant 0 : index
    %682 = vector.load %arg1[%c21_196, %c0_197] : memref<37x128xf32, #tpu.memory_space<vmem>>, vector<1x128xf32>
    %683 = vector.shape_cast %682 : vector<1x128xf32> to vector<128xf32>
    %c22_198 = arith.constant 22 : index
    %c0_199 = arith.constant 0 : index
    %684 = vector.load %arg1[%c22_198, %c0_199] : memref<37x128xf32, #tpu.memory_space<vmem>>, vector<1x128xf32>
    %685 = vector.shape_cast %684 : vector<1x128xf32> to vector<128xf32>
    %c23 = arith.constant 23 : index
    %c0_200 = arith.constant 0 : index
    %686 = vector.load %arg1[%c23, %c0_200] : memref<37x128xf32, #tpu.memory_space<vmem>>, vector<1x128xf32>
    %687 = vector.shape_cast %686 : vector<1x128xf32> to vector<128xf32>
    %688 = vector.shape_cast %683 : vector<128xf32> to vector<1x128xf32>
    %689 = vector.broadcast %688 : vector<1x128xf32> to vector<16x128xf32>
    %690 = vector.broadcast %2 : vector<16x1xf32> to vector<16x128xf32>
    %691 = arith.mulf %689, %690 : vector<16x128xf32>
    %692 = vector.shape_cast %685 : vector<128xf32> to vector<1x128xf32>
    %693 = vector.broadcast %692 : vector<1x128xf32> to vector<16x128xf32>
    %694 = vector.broadcast %4 : vector<16x1xf32> to vector<16x128xf32>
    %695 = arith.mulf %693, %694 : vector<16x128xf32>
    %696 = arith.addf %691, %695 : vector<16x128xf32>
    %697 = vector.shape_cast %687 : vector<128xf32> to vector<1x128xf32>
    %698 = vector.broadcast %697 : vector<1x128xf32> to vector<16x128xf32>
    %699 = vector.broadcast %6 : vector<16x1xf32> to vector<16x128xf32>
    %700 = arith.mulf %698, %699 : vector<16x128xf32>
    %701 = arith.addf %696, %700 : vector<16x128xf32>
    %702 = vector.broadcast %7 : vector<16x1xf32> to vector<16x128xf32>
    %703 = arith.addf %701, %702 : vector<16x128xf32>
    %cst_201 = arith.constant 0.000000e+00 : f32
    %704 = vector.broadcast %cst_201 : f32 to vector<16x128xf32>
    %705 = arith.maximumf %703, %704 : vector<16x128xf32>
    %706 = arith.truncf %705 : vector<16x128xf32> to vector<16x128xbf16>
    %cst_202 = arith.constant dense<0.000000e+00> : vector<32x128xf32>
    %707 = tpu.matmul %8, %706, %cst_202 {dimension_numbers = #tpu.dot_dimension_numbers<[1], [0], [0], [1], [0, 0, 1, 1], [], []>} : vector<32x16xbf16>, vector<16x128xbf16>, vector<32x128xf32> -> vector<32x128xf32>
    %708 = vector.broadcast %9 : vector<32x1xf32> to vector<32x128xf32>
    %709 = arith.addf %707, %708 : vector<32x128xf32>
    %cst_203 = arith.constant 0.000000e+00 : f32
    %710 = vector.broadcast %cst_203 : f32 to vector<32x128xf32>
    %711 = arith.maximumf %709, %710 : vector<32x128xf32>
    %712 = arith.truncf %711 : vector<32x128xf32> to vector<32x128xbf16>
    %c672 = arith.constant 672 : index
    %c0_204 = arith.constant 0 : index
    %713 = vector.load %arg9[%c672, %c0_204] : memref<1120x128xbf16, #tpu.memory_space<vmem>>, vector<32x128xbf16>
    tpu.vector_store %arg9[%c672, %c0_204], %712 {strides = array<i32>} : memref<1120x128xbf16, #tpu.memory_space<vmem>>, vector<32x128xbf16>,
    %c22_205 = arith.constant 22 : index
    %c0_206 = arith.constant 0 : index
    %714 = vector.load %arg1[%c22_205, %c0_206] : memref<37x128xf32, #tpu.memory_space<vmem>>, vector<1x128xf32>
    %715 = vector.shape_cast %714 : vector<1x128xf32> to vector<128xf32>
    %c23_207 = arith.constant 23 : index
    %c0_208 = arith.constant 0 : index
    %716 = vector.load %arg1[%c23_207, %c0_208] : memref<37x128xf32, #tpu.memory_space<vmem>>, vector<1x128xf32>
    %717 = vector.shape_cast %716 : vector<1x128xf32> to vector<128xf32>
    %c24 = arith.constant 24 : index
    %c0_209 = arith.constant 0 : index
    %718 = vector.load %arg1[%c24, %c0_209] : memref<37x128xf32, #tpu.memory_space<vmem>>, vector<1x128xf32>
    %719 = vector.shape_cast %718 : vector<1x128xf32> to vector<128xf32>
    %720 = vector.shape_cast %715 : vector<128xf32> to vector<1x128xf32>
    %721 = vector.broadcast %720 : vector<1x128xf32> to vector<16x128xf32>
    %722 = vector.broadcast %2 : vector<16x1xf32> to vector<16x128xf32>
    %723 = arith.mulf %721, %722 : vector<16x128xf32>
    %724 = vector.shape_cast %717 : vector<128xf32> to vector<1x128xf32>
    %725 = vector.broadcast %724 : vector<1x128xf32> to vector<16x128xf32>
    %726 = vector.broadcast %4 : vector<16x1xf32> to vector<16x128xf32>
    %727 = arith.mulf %725, %726 : vector<16x128xf32>
    %728 = arith.addf %723, %727 : vector<16x128xf32>
    %729 = vector.shape_cast %719 : vector<128xf32> to vector<1x128xf32>
    %730 = vector.broadcast %729 : vector<1x128xf32> to vector<16x128xf32>
    %731 = vector.broadcast %6 : vector<16x1xf32> to vector<16x128xf32>
    %732 = arith.mulf %730, %731 : vector<16x128xf32>
    %733 = arith.addf %728, %732 : vector<16x128xf32>
    %734 = vector.broadcast %7 : vector<16x1xf32> to vector<16x128xf32>
    %735 = arith.addf %733, %734 : vector<16x128xf32>
    %cst_210 = arith.constant 0.000000e+00 : f32
    %736 = vector.broadcast %cst_210 : f32 to vector<16x128xf32>
    %737 = arith.maximumf %735, %736 : vector<16x128xf32>
    %738 = arith.truncf %737 : vector<16x128xf32> to vector<16x128xbf16>
    %cst_211 = arith.constant dense<0.000000e+00> : vector<32x128xf32>
    %739 = tpu.matmul %8, %738, %cst_211 {dimension_numbers = #tpu.dot_dimension_numbers<[1], [0], [0], [1], [0, 0, 1, 1], [], []>} : vector<32x16xbf16>, vector<16x128xbf16>, vector<32x128xf32> -> vector<32x128xf32>
    %740 = vector.broadcast %9 : vector<32x1xf32> to vector<32x128xf32>
    %741 = arith.addf %739, %740 : vector<32x128xf32>
    %cst_212 = arith.constant 0.000000e+00 : f32
    %742 = vector.broadcast %cst_212 : f32 to vector<32x128xf32>
    %743 = arith.maximumf %741, %742 : vector<32x128xf32>
    %744 = arith.truncf %743 : vector<32x128xf32> to vector<32x128xbf16>
    %c704 = arith.constant 704 : index
    %c0_213 = arith.constant 0 : index
    %745 = vector.load %arg9[%c704, %c0_213] : memref<1120x128xbf16, #tpu.memory_space<vmem>>, vector<32x128xbf16>
    tpu.vector_store %arg9[%c704, %c0_213], %744 {strides = array<i32>} : memref<1120x128xbf16, #tpu.memory_space<vmem>>, vector<32x128xbf16>,
    %c23_214 = arith.constant 23 : index
    %c0_215 = arith.constant 0 : index
    %746 = vector.load %arg1[%c23_214, %c0_215] : memref<37x128xf32, #tpu.memory_space<vmem>>, vector<1x128xf32>
    %747 = vector.shape_cast %746 : vector<1x128xf32> to vector<128xf32>
    %c24_216 = arith.constant 24 : index
    %c0_217 = arith.constant 0 : index
    %748 = vector.load %arg1[%c24_216, %c0_217] : memref<37x128xf32, #tpu.memory_space<vmem>>, vector<1x128xf32>
    %749 = vector.shape_cast %748 : vector<1x128xf32> to vector<128xf32>
    %c25 = arith.constant 25 : index
    %c0_218 = arith.constant 0 : index
    %750 = vector.load %arg1[%c25, %c0_218] : memref<37x128xf32, #tpu.memory_space<vmem>>, vector<1x128xf32>
    %751 = vector.shape_cast %750 : vector<1x128xf32> to vector<128xf32>
    %752 = vector.shape_cast %747 : vector<128xf32> to vector<1x128xf32>
    %753 = vector.broadcast %752 : vector<1x128xf32> to vector<16x128xf32>
    %754 = vector.broadcast %2 : vector<16x1xf32> to vector<16x128xf32>
    %755 = arith.mulf %753, %754 : vector<16x128xf32>
    %756 = vector.shape_cast %749 : vector<128xf32> to vector<1x128xf32>
    %757 = vector.broadcast %756 : vector<1x128xf32> to vector<16x128xf32>
    %758 = vector.broadcast %4 : vector<16x1xf32> to vector<16x128xf32>
    %759 = arith.mulf %757, %758 : vector<16x128xf32>
    %760 = arith.addf %755, %759 : vector<16x128xf32>
    %761 = vector.shape_cast %751 : vector<128xf32> to vector<1x128xf32>
    %762 = vector.broadcast %761 : vector<1x128xf32> to vector<16x128xf32>
    %763 = vector.broadcast %6 : vector<16x1xf32> to vector<16x128xf32>
    %764 = arith.mulf %762, %763 : vector<16x128xf32>
    %765 = arith.addf %760, %764 : vector<16x128xf32>
    %766 = vector.broadcast %7 : vector<16x1xf32> to vector<16x128xf32>
    %767 = arith.addf %765, %766 : vector<16x128xf32>
    %cst_219 = arith.constant 0.000000e+00 : f32
    %768 = vector.broadcast %cst_219 : f32 to vector<16x128xf32>
    %769 = arith.maximumf %767, %768 : vector<16x128xf32>
    %770 = arith.truncf %769 : vector<16x128xf32> to vector<16x128xbf16>
    %cst_220 = arith.constant dense<0.000000e+00> : vector<32x128xf32>
    %771 = tpu.matmul %8, %770, %cst_220 {dimension_numbers = #tpu.dot_dimension_numbers<[1], [0], [0], [1], [0, 0, 1, 1], [], []>} : vector<32x16xbf16>, vector<16x128xbf16>, vector<32x128xf32> -> vector<32x128xf32>
    %772 = vector.broadcast %9 : vector<32x1xf32> to vector<32x128xf32>
    %773 = arith.addf %771, %772 : vector<32x128xf32>
    %cst_221 = arith.constant 0.000000e+00 : f32
    %774 = vector.broadcast %cst_221 : f32 to vector<32x128xf32>
    %775 = arith.maximumf %773, %774 : vector<32x128xf32>
    %776 = arith.truncf %775 : vector<32x128xf32> to vector<32x128xbf16>
    %c736 = arith.constant 736 : index
    %c0_222 = arith.constant 0 : index
    %777 = vector.load %arg9[%c736, %c0_222] : memref<1120x128xbf16, #tpu.memory_space<vmem>>, vector<32x128xbf16>
    tpu.vector_store %arg9[%c736, %c0_222], %776 {strides = array<i32>} : memref<1120x128xbf16, #tpu.memory_space<vmem>>, vector<32x128xbf16>,
    %c24_223 = arith.constant 24 : index
    %c0_224 = arith.constant 0 : index
    %778 = vector.load %arg1[%c24_223, %c0_224] : memref<37x128xf32, #tpu.memory_space<vmem>>, vector<1x128xf32>
    %779 = vector.shape_cast %778 : vector<1x128xf32> to vector<128xf32>
    %c25_225 = arith.constant 25 : index
    %c0_226 = arith.constant 0 : index
    %780 = vector.load %arg1[%c25_225, %c0_226] : memref<37x128xf32, #tpu.memory_space<vmem>>, vector<1x128xf32>
    %781 = vector.shape_cast %780 : vector<1x128xf32> to vector<128xf32>
    %c26 = arith.constant 26 : index
    %c0_227 = arith.constant 0 : index
    %782 = vector.load %arg1[%c26, %c0_227] : memref<37x128xf32, #tpu.memory_space<vmem>>, vector<1x128xf32>
    %783 = vector.shape_cast %782 : vector<1x128xf32> to vector<128xf32>
    %784 = vector.shape_cast %779 : vector<128xf32> to vector<1x128xf32>
    %785 = vector.broadcast %784 : vector<1x128xf32> to vector<16x128xf32>
    %786 = vector.broadcast %2 : vector<16x1xf32> to vector<16x128xf32>
    %787 = arith.mulf %785, %786 : vector<16x128xf32>
    %788 = vector.shape_cast %781 : vector<128xf32> to vector<1x128xf32>
    %789 = vector.broadcast %788 : vector<1x128xf32> to vector<16x128xf32>
    %790 = vector.broadcast %4 : vector<16x1xf32> to vector<16x128xf32>
    %791 = arith.mulf %789, %790 : vector<16x128xf32>
    %792 = arith.addf %787, %791 : vector<16x128xf32>
    %793 = vector.shape_cast %783 : vector<128xf32> to vector<1x128xf32>
    %794 = vector.broadcast %793 : vector<1x128xf32> to vector<16x128xf32>
    %795 = vector.broadcast %6 : vector<16x1xf32> to vector<16x128xf32>
    %796 = arith.mulf %794, %795 : vector<16x128xf32>
    %797 = arith.addf %792, %796 : vector<16x128xf32>
    %798 = vector.broadcast %7 : vector<16x1xf32> to vector<16x128xf32>
    %799 = arith.addf %797, %798 : vector<16x128xf32>
    %cst_228 = arith.constant 0.000000e+00 : f32
    %800 = vector.broadcast %cst_228 : f32 to vector<16x128xf32>
    %801 = arith.maximumf %799, %800 : vector<16x128xf32>
    %802 = arith.truncf %801 : vector<16x128xf32> to vector<16x128xbf16>
    %cst_229 = arith.constant dense<0.000000e+00> : vector<32x128xf32>
    %803 = tpu.matmul %8, %802, %cst_229 {dimension_numbers = #tpu.dot_dimension_numbers<[1], [0], [0], [1], [0, 0, 1, 1], [], []>} : vector<32x16xbf16>, vector<16x128xbf16>, vector<32x128xf32> -> vector<32x128xf32>
    %804 = vector.broadcast %9 : vector<32x1xf32> to vector<32x128xf32>
    %805 = arith.addf %803, %804 : vector<32x128xf32>
    %cst_230 = arith.constant 0.000000e+00 : f32
    %806 = vector.broadcast %cst_230 : f32 to vector<32x128xf32>
    %807 = arith.maximumf %805, %806 : vector<32x128xf32>
    %808 = arith.truncf %807 : vector<32x128xf32> to vector<32x128xbf16>
    %c768 = arith.constant 768 : index
    %c0_231 = arith.constant 0 : index
    %809 = vector.load %arg9[%c768, %c0_231] : memref<1120x128xbf16, #tpu.memory_space<vmem>>, vector<32x128xbf16>
    tpu.vector_store %arg9[%c768, %c0_231], %808 {strides = array<i32>} : memref<1120x128xbf16, #tpu.memory_space<vmem>>, vector<32x128xbf16>,
    %c25_232 = arith.constant 25 : index
    %c0_233 = arith.constant 0 : index
    %810 = vector.load %arg1[%c25_232, %c0_233] : memref<37x128xf32, #tpu.memory_space<vmem>>, vector<1x128xf32>
    %811 = vector.shape_cast %810 : vector<1x128xf32> to vector<128xf32>
    %c26_234 = arith.constant 26 : index
    %c0_235 = arith.constant 0 : index
    %812 = vector.load %arg1[%c26_234, %c0_235] : memref<37x128xf32, #tpu.memory_space<vmem>>, vector<1x128xf32>
    %813 = vector.shape_cast %812 : vector<1x128xf32> to vector<128xf32>
    %c27 = arith.constant 27 : index
    %c0_236 = arith.constant 0 : index
    %814 = vector.load %arg1[%c27, %c0_236] : memref<37x128xf32, #tpu.memory_space<vmem>>, vector<1x128xf32>
    %815 = vector.shape_cast %814 : vector<1x128xf32> to vector<128xf32>
    %816 = vector.shape_cast %811 : vector<128xf32> to vector<1x128xf32>
    %817 = vector.broadcast %816 : vector<1x128xf32> to vector<16x128xf32>
    %818 = vector.broadcast %2 : vector<16x1xf32> to vector<16x128xf32>
    %819 = arith.mulf %817, %818 : vector<16x128xf32>
    %820 = vector.shape_cast %813 : vector<128xf32> to vector<1x128xf32>
    %821 = vector.broadcast %820 : vector<1x128xf32> to vector<16x128xf32>
    %822 = vector.broadcast %4 : vector<16x1xf32> to vector<16x128xf32>
    %823 = arith.mulf %821, %822 : vector<16x128xf32>
    %824 = arith.addf %819, %823 : vector<16x128xf32>
    %825 = vector.shape_cast %815 : vector<128xf32> to vector<1x128xf32>
    %826 = vector.broadcast %825 : vector<1x128xf32> to vector<16x128xf32>
    %827 = vector.broadcast %6 : vector<16x1xf32> to vector<16x128xf32>
    %828 = arith.mulf %826, %827 : vector<16x128xf32>
    %829 = arith.addf %824, %828 : vector<16x128xf32>
    %830 = vector.broadcast %7 : vector<16x1xf32> to vector<16x128xf32>
    %831 = arith.addf %829, %830 : vector<16x128xf32>
    %cst_237 = arith.constant 0.000000e+00 : f32
    %832 = vector.broadcast %cst_237 : f32 to vector<16x128xf32>
    %833 = arith.maximumf %831, %832 : vector<16x128xf32>
    %834 = arith.truncf %833 : vector<16x128xf32> to vector<16x128xbf16>
    %cst_238 = arith.constant dense<0.000000e+00> : vector<32x128xf32>
    %835 = tpu.matmul %8, %834, %cst_238 {dimension_numbers = #tpu.dot_dimension_numbers<[1], [0], [0], [1], [0, 0, 1, 1], [], []>} : vector<32x16xbf16>, vector<16x128xbf16>, vector<32x128xf32> -> vector<32x128xf32>
    %836 = vector.broadcast %9 : vector<32x1xf32> to vector<32x128xf32>
    %837 = arith.addf %835, %836 : vector<32x128xf32>
    %cst_239 = arith.constant 0.000000e+00 : f32
    %838 = vector.broadcast %cst_239 : f32 to vector<32x128xf32>
    %839 = arith.maximumf %837, %838 : vector<32x128xf32>
    %840 = arith.truncf %839 : vector<32x128xf32> to vector<32x128xbf16>
    %c800 = arith.constant 800 : index
    %c0_240 = arith.constant 0 : index
    %841 = vector.load %arg9[%c800, %c0_240] : memref<1120x128xbf16, #tpu.memory_space<vmem>>, vector<32x128xbf16>
    tpu.vector_store %arg9[%c800, %c0_240], %840 {strides = array<i32>} : memref<1120x128xbf16, #tpu.memory_space<vmem>>, vector<32x128xbf16>,
    %c26_241 = arith.constant 26 : index
    %c0_242 = arith.constant 0 : index
    %842 = vector.load %arg1[%c26_241, %c0_242] : memref<37x128xf32, #tpu.memory_space<vmem>>, vector<1x128xf32>
    %843 = vector.shape_cast %842 : vector<1x128xf32> to vector<128xf32>
    %c27_243 = arith.constant 27 : index
    %c0_244 = arith.constant 0 : index
    %844 = vector.load %arg1[%c27_243, %c0_244] : memref<37x128xf32, #tpu.memory_space<vmem>>, vector<1x128xf32>
    %845 = vector.shape_cast %844 : vector<1x128xf32> to vector<128xf32>
    %c28 = arith.constant 28 : index
    %c0_245 = arith.constant 0 : index
    %846 = vector.load %arg1[%c28, %c0_245] : memref<37x128xf32, #tpu.memory_space<vmem>>, vector<1x128xf32>
    %847 = vector.shape_cast %846 : vector<1x128xf32> to vector<128xf32>
    %848 = vector.shape_cast %843 : vector<128xf32> to vector<1x128xf32>
    %849 = vector.broadcast %848 : vector<1x128xf32> to vector<16x128xf32>
    %850 = vector.broadcast %2 : vector<16x1xf32> to vector<16x128xf32>
    %851 = arith.mulf %849, %850 : vector<16x128xf32>
    %852 = vector.shape_cast %845 : vector<128xf32> to vector<1x128xf32>
    %853 = vector.broadcast %852 : vector<1x128xf32> to vector<16x128xf32>
    %854 = vector.broadcast %4 : vector<16x1xf32> to vector<16x128xf32>
    %855 = arith.mulf %853, %854 : vector<16x128xf32>
    %856 = arith.addf %851, %855 : vector<16x128xf32>
    %857 = vector.shape_cast %847 : vector<128xf32> to vector<1x128xf32>
    %858 = vector.broadcast %857 : vector<1x128xf32> to vector<16x128xf32>
    %859 = vector.broadcast %6 : vector<16x1xf32> to vector<16x128xf32>
    %860 = arith.mulf %858, %859 : vector<16x128xf32>
    %861 = arith.addf %856, %860 : vector<16x128xf32>
    %862 = vector.broadcast %7 : vector<16x1xf32> to vector<16x128xf32>
    %863 = arith.addf %861, %862 : vector<16x128xf32>
    %cst_246 = arith.constant 0.000000e+00 : f32
    %864 = vector.broadcast %cst_246 : f32 to vector<16x128xf32>
    %865 = arith.maximumf %863, %864 : vector<16x128xf32>
    %866 = arith.truncf %865 : vector<16x128xf32> to vector<16x128xbf16>
    %cst_247 = arith.constant dense<0.000000e+00> : vector<32x128xf32>
    %867 = tpu.matmul %8, %866, %cst_247 {dimension_numbers = #tpu.dot_dimension_numbers<[1], [0], [0], [1], [0, 0, 1, 1], [], []>} : vector<32x16xbf16>, vector<16x128xbf16>, vector<32x128xf32> -> vector<32x128xf32>
    %868 = vector.broadcast %9 : vector<32x1xf32> to vector<32x128xf32>
    %869 = arith.addf %867, %868 : vector<32x128xf32>
    %cst_248 = arith.constant 0.000000e+00 : f32
    %870 = vector.broadcast %cst_248 : f32 to vector<32x128xf32>
    %871 = arith.maximumf %869, %870 : vector<32x128xf32>
    %872 = arith.truncf %871 : vector<32x128xf32> to vector<32x128xbf16>
    %c832 = arith.constant 832 : index
    %c0_249 = arith.constant 0 : index
    %873 = vector.load %arg9[%c832, %c0_249] : memref<1120x128xbf16, #tpu.memory_space<vmem>>, vector<32x128xbf16>
    tpu.vector_store %arg9[%c832, %c0_249], %872 {strides = array<i32>} : memref<1120x128xbf16, #tpu.memory_space<vmem>>, vector<32x128xbf16>,
    %c27_250 = arith.constant 27 : index
    %c0_251 = arith.constant 0 : index
    %874 = vector.load %arg1[%c27_250, %c0_251] : memref<37x128xf32, #tpu.memory_space<vmem>>, vector<1x128xf32>
    %875 = vector.shape_cast %874 : vector<1x128xf32> to vector<128xf32>
    %c28_252 = arith.constant 28 : index
    %c0_253 = arith.constant 0 : index
    %876 = vector.load %arg1[%c28_252, %c0_253] : memref<37x128xf32, #tpu.memory_space<vmem>>, vector<1x128xf32>
    %877 = vector.shape_cast %876 : vector<1x128xf32> to vector<128xf32>
    %c29 = arith.constant 29 : index
    %c0_254 = arith.constant 0 : index
    %878 = vector.load %arg1[%c29, %c0_254] : memref<37x128xf32, #tpu.memory_space<vmem>>, vector<1x128xf32>
    %879 = vector.shape_cast %878 : vector<1x128xf32> to vector<128xf32>
    %880 = vector.shape_cast %875 : vector<128xf32> to vector<1x128xf32>
    %881 = vector.broadcast %880 : vector<1x128xf32> to vector<16x128xf32>
    %882 = vector.broadcast %2 : vector<16x1xf32> to vector<16x128xf32>
    %883 = arith.mulf %881, %882 : vector<16x128xf32>
    %884 = vector.shape_cast %877 : vector<128xf32> to vector<1x128xf32>
    %885 = vector.broadcast %884 : vector<1x128xf32> to vector<16x128xf32>
    %886 = vector.broadcast %4 : vector<16x1xf32> to vector<16x128xf32>
    %887 = arith.mulf %885, %886 : vector<16x128xf32>
    %888 = arith.addf %883, %887 : vector<16x128xf32>
    %889 = vector.shape_cast %879 : vector<128xf32> to vector<1x128xf32>
    %890 = vector.broadcast %889 : vector<1x128xf32> to vector<16x128xf32>
    %891 = vector.broadcast %6 : vector<16x1xf32> to vector<16x128xf32>
    %892 = arith.mulf %890, %891 : vector<16x128xf32>
    %893 = arith.addf %888, %892 : vector<16x128xf32>
    %894 = vector.broadcast %7 : vector<16x1xf32> to vector<16x128xf32>
    %895 = arith.addf %893, %894 : vector<16x128xf32>
    %cst_255 = arith.constant 0.000000e+00 : f32
    %896 = vector.broadcast %cst_255 : f32 to vector<16x128xf32>
    %897 = arith.maximumf %895, %896 : vector<16x128xf32>
    %898 = arith.truncf %897 : vector<16x128xf32> to vector<16x128xbf16>
    %cst_256 = arith.constant dense<0.000000e+00> : vector<32x128xf32>
    %899 = tpu.matmul %8, %898, %cst_256 {dimension_numbers = #tpu.dot_dimension_numbers<[1], [0], [0], [1], [0, 0, 1, 1], [], []>} : vector<32x16xbf16>, vector<16x128xbf16>, vector<32x128xf32> -> vector<32x128xf32>
    %900 = vector.broadcast %9 : vector<32x1xf32> to vector<32x128xf32>
    %901 = arith.addf %899, %900 : vector<32x128xf32>
    %cst_257 = arith.constant 0.000000e+00 : f32
    %902 = vector.broadcast %cst_257 : f32 to vector<32x128xf32>
    %903 = arith.maximumf %901, %902 : vector<32x128xf32>
    %904 = arith.truncf %903 : vector<32x128xf32> to vector<32x128xbf16>
    %c864 = arith.constant 864 : index
    %c0_258 = arith.constant 0 : index
    %905 = vector.load %arg9[%c864, %c0_258] : memref<1120x128xbf16, #tpu.memory_space<vmem>>, vector<32x128xbf16>
    tpu.vector_store %arg9[%c864, %c0_258], %904 {strides = array<i32>} : memref<1120x128xbf16, #tpu.memory_space<vmem>>, vector<32x128xbf16>,
    %c28_259 = arith.constant 28 : index
    %c0_260 = arith.constant 0 : index
    %906 = vector.load %arg1[%c28_259, %c0_260] : memref<37x128xf32, #tpu.memory_space<vmem>>, vector<1x128xf32>
    %907 = vector.shape_cast %906 : vector<1x128xf32> to vector<128xf32>
    %c29_261 = arith.constant 29 : index
    %c0_262 = arith.constant 0 : index
    %908 = vector.load %arg1[%c29_261, %c0_262] : memref<37x128xf32, #tpu.memory_space<vmem>>, vector<1x128xf32>
    %909 = vector.shape_cast %908 : vector<1x128xf32> to vector<128xf32>
    %c30 = arith.constant 30 : index
    %c0_263 = arith.constant 0 : index
    %910 = vector.load %arg1[%c30, %c0_263] : memref<37x128xf32, #tpu.memory_space<vmem>>, vector<1x128xf32>
    %911 = vector.shape_cast %910 : vector<1x128xf32> to vector<128xf32>
    %912 = vector.shape_cast %907 : vector<128xf32> to vector<1x128xf32>
    %913 = vector.broadcast %912 : vector<1x128xf32> to vector<16x128xf32>
    %914 = vector.broadcast %2 : vector<16x1xf32> to vector<16x128xf32>
    %915 = arith.mulf %913, %914 : vector<16x128xf32>
    %916 = vector.shape_cast %909 : vector<128xf32> to vector<1x128xf32>
    %917 = vector.broadcast %916 : vector<1x128xf32> to vector<16x128xf32>
    %918 = vector.broadcast %4 : vector<16x1xf32> to vector<16x128xf32>
    %919 = arith.mulf %917, %918 : vector<16x128xf32>
    %920 = arith.addf %915, %919 : vector<16x128xf32>
    %921 = vector.shape_cast %911 : vector<128xf32> to vector<1x128xf32>
    %922 = vector.broadcast %921 : vector<1x128xf32> to vector<16x128xf32>
    %923 = vector.broadcast %6 : vector<16x1xf32> to vector<16x128xf32>
    %924 = arith.mulf %922, %923 : vector<16x128xf32>
    %925 = arith.addf %920, %924 : vector<16x128xf32>
    %926 = vector.broadcast %7 : vector<16x1xf32> to vector<16x128xf32>
    %927 = arith.addf %925, %926 : vector<16x128xf32>
    %cst_264 = arith.constant 0.000000e+00 : f32
    %928 = vector.broadcast %cst_264 : f32 to vector<16x128xf32>
    %929 = arith.maximumf %927, %928 : vector<16x128xf32>
    %930 = arith.truncf %929 : vector<16x128xf32> to vector<16x128xbf16>
    %cst_265 = arith.constant dense<0.000000e+00> : vector<32x128xf32>
    %931 = tpu.matmul %8, %930, %cst_265 {dimension_numbers = #tpu.dot_dimension_numbers<[1], [0], [0], [1], [0, 0, 1, 1], [], []>} : vector<32x16xbf16>, vector<16x128xbf16>, vector<32x128xf32> -> vector<32x128xf32>
    %932 = vector.broadcast %9 : vector<32x1xf32> to vector<32x128xf32>
    %933 = arith.addf %931, %932 : vector<32x128xf32>
    %cst_266 = arith.constant 0.000000e+00 : f32
    %934 = vector.broadcast %cst_266 : f32 to vector<32x128xf32>
    %935 = arith.maximumf %933, %934 : vector<32x128xf32>
    %936 = arith.truncf %935 : vector<32x128xf32> to vector<32x128xbf16>
    %c896 = arith.constant 896 : index
    %c0_267 = arith.constant 0 : index
    %937 = vector.load %arg9[%c896, %c0_267] : memref<1120x128xbf16, #tpu.memory_space<vmem>>, vector<32x128xbf16>
    tpu.vector_store %arg9[%c896, %c0_267], %936 {strides = array<i32>} : memref<1120x128xbf16, #tpu.memory_space<vmem>>, vector<32x128xbf16>,
    %c29_268 = arith.constant 29 : index
    %c0_269 = arith.constant 0 : index
    %938 = vector.load %arg1[%c29_268, %c0_269] : memref<37x128xf32, #tpu.memory_space<vmem>>, vector<1x128xf32>
    %939 = vector.shape_cast %938 : vector<1x128xf32> to vector<128xf32>
    %c30_270 = arith.constant 30 : index
    %c0_271 = arith.constant 0 : index
    %940 = vector.load %arg1[%c30_270, %c0_271] : memref<37x128xf32, #tpu.memory_space<vmem>>, vector<1x128xf32>
    %941 = vector.shape_cast %940 : vector<1x128xf32> to vector<128xf32>
    %c31 = arith.constant 31 : index
    %c0_272 = arith.constant 0 : index
    %942 = vector.load %arg1[%c31, %c0_272] : memref<37x128xf32, #tpu.memory_space<vmem>>, vector<1x128xf32>
    %943 = vector.shape_cast %942 : vector<1x128xf32> to vector<128xf32>
    %944 = vector.shape_cast %939 : vector<128xf32> to vector<1x128xf32>
    %945 = vector.broadcast %944 : vector<1x128xf32> to vector<16x128xf32>
    %946 = vector.broadcast %2 : vector<16x1xf32> to vector<16x128xf32>
    %947 = arith.mulf %945, %946 : vector<16x128xf32>
    %948 = vector.shape_cast %941 : vector<128xf32> to vector<1x128xf32>
    %949 = vector.broadcast %948 : vector<1x128xf32> to vector<16x128xf32>
    %950 = vector.broadcast %4 : vector<16x1xf32> to vector<16x128xf32>
    %951 = arith.mulf %949, %950 : vector<16x128xf32>
    %952 = arith.addf %947, %951 : vector<16x128xf32>
    %953 = vector.shape_cast %943 : vector<128xf32> to vector<1x128xf32>
    %954 = vector.broadcast %953 : vector<1x128xf32> to vector<16x128xf32>
    %955 = vector.broadcast %6 : vector<16x1xf32> to vector<16x128xf32>
    %956 = arith.mulf %954, %955 : vector<16x128xf32>
    %957 = arith.addf %952, %956 : vector<16x128xf32>
    %958 = vector.broadcast %7 : vector<16x1xf32> to vector<16x128xf32>
    %959 = arith.addf %957, %958 : vector<16x128xf32>
    %cst_273 = arith.constant 0.000000e+00 : f32
    %960 = vector.broadcast %cst_273 : f32 to vector<16x128xf32>
    %961 = arith.maximumf %959, %960 : vector<16x128xf32>
    %962 = arith.truncf %961 : vector<16x128xf32> to vector<16x128xbf16>
    %cst_274 = arith.constant dense<0.000000e+00> : vector<32x128xf32>
    %963 = tpu.matmul %8, %962, %cst_274 {dimension_numbers = #tpu.dot_dimension_numbers<[1], [0], [0], [1], [0, 0, 1, 1], [], []>} : vector<32x16xbf16>, vector<16x128xbf16>, vector<32x128xf32> -> vector<32x128xf32>
    %964 = vector.broadcast %9 : vector<32x1xf32> to vector<32x128xf32>
    %965 = arith.addf %963, %964 : vector<32x128xf32>
    %cst_275 = arith.constant 0.000000e+00 : f32
    %966 = vector.broadcast %cst_275 : f32 to vector<32x128xf32>
    %967 = arith.maximumf %965, %966 : vector<32x128xf32>
    %968 = arith.truncf %967 : vector<32x128xf32> to vector<32x128xbf16>
    %c928 = arith.constant 928 : index
    %c0_276 = arith.constant 0 : index
    %969 = vector.load %arg9[%c928, %c0_276] : memref<1120x128xbf16, #tpu.memory_space<vmem>>, vector<32x128xbf16>
    tpu.vector_store %arg9[%c928, %c0_276], %968 {strides = array<i32>} : memref<1120x128xbf16, #tpu.memory_space<vmem>>, vector<32x128xbf16>,
    %c30_277 = arith.constant 30 : index
    %c0_278 = arith.constant 0 : index
    %970 = vector.load %arg1[%c30_277, %c0_278] : memref<37x128xf32, #tpu.memory_space<vmem>>, vector<1x128xf32>
    %971 = vector.shape_cast %970 : vector<1x128xf32> to vector<128xf32>
    %c31_279 = arith.constant 31 : index
    %c0_280 = arith.constant 0 : index
    %972 = vector.load %arg1[%c31_279, %c0_280] : memref<37x128xf32, #tpu.memory_space<vmem>>, vector<1x128xf32>
    %973 = vector.shape_cast %972 : vector<1x128xf32> to vector<128xf32>
    %c32_281 = arith.constant 32 : index
    %c0_282 = arith.constant 0 : index
    %974 = vector.load %arg1[%c32_281, %c0_282] : memref<37x128xf32, #tpu.memory_space<vmem>>, vector<1x128xf32>
    %975 = vector.shape_cast %974 : vector<1x128xf32> to vector<128xf32>
    %976 = vector.shape_cast %971 : vector<128xf32> to vector<1x128xf32>
    %977 = vector.broadcast %976 : vector<1x128xf32> to vector<16x128xf32>
    %978 = vector.broadcast %2 : vector<16x1xf32> to vector<16x128xf32>
    %979 = arith.mulf %977, %978 : vector<16x128xf32>
    %980 = vector.shape_cast %973 : vector<128xf32> to vector<1x128xf32>
    %981 = vector.broadcast %980 : vector<1x128xf32> to vector<16x128xf32>
    %982 = vector.broadcast %4 : vector<16x1xf32> to vector<16x128xf32>
    %983 = arith.mulf %981, %982 : vector<16x128xf32>
    %984 = arith.addf %979, %983 : vector<16x128xf32>
    %985 = vector.shape_cast %975 : vector<128xf32> to vector<1x128xf32>
    %986 = vector.broadcast %985 : vector<1x128xf32> to vector<16x128xf32>
    %987 = vector.broadcast %6 : vector<16x1xf32> to vector<16x128xf32>
    %988 = arith.mulf %986, %987 : vector<16x128xf32>
    %989 = arith.addf %984, %988 : vector<16x128xf32>
    %990 = vector.broadcast %7 : vector<16x1xf32> to vector<16x128xf32>
    %991 = arith.addf %989, %990 : vector<16x128xf32>
    %cst_283 = arith.constant 0.000000e+00 : f32
    %992 = vector.broadcast %cst_283 : f32 to vector<16x128xf32>
    %993 = arith.maximumf %991, %992 : vector<16x128xf32>
    %994 = arith.truncf %993 : vector<16x128xf32> to vector<16x128xbf16>
    %cst_284 = arith.constant dense<0.000000e+00> : vector<32x128xf32>
    %995 = tpu.matmul %8, %994, %cst_284 {dimension_numbers = #tpu.dot_dimension_numbers<[1], [0], [0], [1], [0, 0, 1, 1], [], []>} : vector<32x16xbf16>, vector<16x128xbf16>, vector<32x128xf32> -> vector<32x128xf32>
    %996 = vector.broadcast %9 : vector<32x1xf32> to vector<32x128xf32>
    %997 = arith.addf %995, %996 : vector<32x128xf32>
    %cst_285 = arith.constant 0.000000e+00 : f32
    %998 = vector.broadcast %cst_285 : f32 to vector<32x128xf32>
    %999 = arith.maximumf %997, %998 : vector<32x128xf32>
    %1000 = arith.truncf %999 : vector<32x128xf32> to vector<32x128xbf16>
    %c960 = arith.constant 960 : index
    %c0_286 = arith.constant 0 : index
    %1001 = vector.load %arg9[%c960, %c0_286] : memref<1120x128xbf16, #tpu.memory_space<vmem>>, vector<32x128xbf16>
    tpu.vector_store %arg9[%c960, %c0_286], %1000 {strides = array<i32>} : memref<1120x128xbf16, #tpu.memory_space<vmem>>, vector<32x128xbf16>,
    %c31_287 = arith.constant 31 : index
    %c0_288 = arith.constant 0 : index
    %1002 = vector.load %arg1[%c31_287, %c0_288] : memref<37x128xf32, #tpu.memory_space<vmem>>, vector<1x128xf32>
    %1003 = vector.shape_cast %1002 : vector<1x128xf32> to vector<128xf32>
    %c32_289 = arith.constant 32 : index
    %c0_290 = arith.constant 0 : index
    %1004 = vector.load %arg1[%c32_289, %c0_290] : memref<37x128xf32, #tpu.memory_space<vmem>>, vector<1x128xf32>
    %1005 = vector.shape_cast %1004 : vector<1x128xf32> to vector<128xf32>
    %c33 = arith.constant 33 : index
    %c0_291 = arith.constant 0 : index
    %1006 = vector.load %arg1[%c33, %c0_291] : memref<37x128xf32, #tpu.memory_space<vmem>>, vector<1x128xf32>
    %1007 = vector.shape_cast %1006 : vector<1x128xf32> to vector<128xf32>
    %1008 = vector.shape_cast %1003 : vector<128xf32> to vector<1x128xf32>
    %1009 = vector.broadcast %1008 : vector<1x128xf32> to vector<16x128xf32>
    %1010 = vector.broadcast %2 : vector<16x1xf32> to vector<16x128xf32>
    %1011 = arith.mulf %1009, %1010 : vector<16x128xf32>
    %1012 = vector.shape_cast %1005 : vector<128xf32> to vector<1x128xf32>
    %1013 = vector.broadcast %1012 : vector<1x128xf32> to vector<16x128xf32>
    %1014 = vector.broadcast %4 : vector<16x1xf32> to vector<16x128xf32>
    %1015 = arith.mulf %1013, %1014 : vector<16x128xf32>
    %1016 = arith.addf %1011, %1015 : vector<16x128xf32>
    %1017 = vector.shape_cast %1007 : vector<128xf32> to vector<1x128xf32>
    %1018 = vector.broadcast %1017 : vector<1x128xf32> to vector<16x128xf32>
    %1019 = vector.broadcast %6 : vector<16x1xf32> to vector<16x128xf32>
    %1020 = arith.mulf %1018, %1019 : vector<16x128xf32>
    %1021 = arith.addf %1016, %1020 : vector<16x128xf32>
    %1022 = vector.broadcast %7 : vector<16x1xf32> to vector<16x128xf32>
    %1023 = arith.addf %1021, %1022 : vector<16x128xf32>
    %cst_292 = arith.constant 0.000000e+00 : f32
    %1024 = vector.broadcast %cst_292 : f32 to vector<16x128xf32>
    %1025 = arith.maximumf %1023, %1024 : vector<16x128xf32>
    %1026 = arith.truncf %1025 : vector<16x128xf32> to vector<16x128xbf16>
    %cst_293 = arith.constant dense<0.000000e+00> : vector<32x128xf32>
    %1027 = tpu.matmul %8, %1026, %cst_293 {dimension_numbers = #tpu.dot_dimension_numbers<[1], [0], [0], [1], [0, 0, 1, 1], [], []>} : vector<32x16xbf16>, vector<16x128xbf16>, vector<32x128xf32> -> vector<32x128xf32>
    %1028 = vector.broadcast %9 : vector<32x1xf32> to vector<32x128xf32>
    %1029 = arith.addf %1027, %1028 : vector<32x128xf32>
    %cst_294 = arith.constant 0.000000e+00 : f32
    %1030 = vector.broadcast %cst_294 : f32 to vector<32x128xf32>
    %1031 = arith.maximumf %1029, %1030 : vector<32x128xf32>
    %1032 = arith.truncf %1031 : vector<32x128xf32> to vector<32x128xbf16>
    %c992 = arith.constant 992 : index
    %c0_295 = arith.constant 0 : index
    %1033 = vector.load %arg9[%c992, %c0_295] : memref<1120x128xbf16, #tpu.memory_space<vmem>>, vector<32x128xbf16>
    tpu.vector_store %arg9[%c992, %c0_295], %1032 {strides = array<i32>} : memref<1120x128xbf16, #tpu.memory_space<vmem>>, vector<32x128xbf16>,
    %c32_296 = arith.constant 32 : index
    %c0_297 = arith.constant 0 : index
    %1034 = vector.load %arg1[%c32_296, %c0_297] : memref<37x128xf32, #tpu.memory_space<vmem>>, vector<1x128xf32>
    %1035 = vector.shape_cast %1034 : vector<1x128xf32> to vector<128xf32>
    %c33_298 = arith.constant 33 : index
    %c0_299 = arith.constant 0 : index
    %1036 = vector.load %arg1[%c33_298, %c0_299] : memref<37x128xf32, #tpu.memory_space<vmem>>, vector<1x128xf32>
    %1037 = vector.shape_cast %1036 : vector<1x128xf32> to vector<128xf32>
    %c34 = arith.constant 34 : index
    %c0_300 = arith.constant 0 : index
    %1038 = vector.load %arg1[%c34, %c0_300] : memref<37x128xf32, #tpu.memory_space<vmem>>, vector<1x128xf32>
    %1039 = vector.shape_cast %1038 : vector<1x128xf32> to vector<128xf32>
    %1040 = vector.shape_cast %1035 : vector<128xf32> to vector<1x128xf32>
    %1041 = vector.broadcast %1040 : vector<1x128xf32> to vector<16x128xf32>
    %1042 = vector.broadcast %2 : vector<16x1xf32> to vector<16x128xf32>
    %1043 = arith.mulf %1041, %1042 : vector<16x128xf32>
    %1044 = vector.shape_cast %1037 : vector<128xf32> to vector<1x128xf32>
    %1045 = vector.broadcast %1044 : vector<1x128xf32> to vector<16x128xf32>
    %1046 = vector.broadcast %4 : vector<16x1xf32> to vector<16x128xf32>
    %1047 = arith.mulf %1045, %1046 : vector<16x128xf32>
    %1048 = arith.addf %1043, %1047 : vector<16x128xf32>
    %1049 = vector.shape_cast %1039 : vector<128xf32> to vector<1x128xf32>
    %1050 = vector.broadcast %1049 : vector<1x128xf32> to vector<16x128xf32>
    %1051 = vector.broadcast %6 : vector<16x1xf32> to vector<16x128xf32>
    %1052 = arith.mulf %1050, %1051 : vector<16x128xf32>
    %1053 = arith.addf %1048, %1052 : vector<16x128xf32>
    %1054 = vector.broadcast %7 : vector<16x1xf32> to vector<16x128xf32>
    %1055 = arith.addf %1053, %1054 : vector<16x128xf32>
    %cst_301 = arith.constant 0.000000e+00 : f32
    %1056 = vector.broadcast %cst_301 : f32 to vector<16x128xf32>
    %1057 = arith.maximumf %1055, %1056 : vector<16x128xf32>
    %1058 = arith.truncf %1057 : vector<16x128xf32> to vector<16x128xbf16>
    %cst_302 = arith.constant dense<0.000000e+00> : vector<32x128xf32>
    %1059 = tpu.matmul %8, %1058, %cst_302 {dimension_numbers = #tpu.dot_dimension_numbers<[1], [0], [0], [1], [0, 0, 1, 1], [], []>} : vector<32x16xbf16>, vector<16x128xbf16>, vector<32x128xf32> -> vector<32x128xf32>
    %1060 = vector.broadcast %9 : vector<32x1xf32> to vector<32x128xf32>
    %1061 = arith.addf %1059, %1060 : vector<32x128xf32>
    %cst_303 = arith.constant 0.000000e+00 : f32
    %1062 = vector.broadcast %cst_303 : f32 to vector<32x128xf32>
    %1063 = arith.maximumf %1061, %1062 : vector<32x128xf32>
    %1064 = arith.truncf %1063 : vector<32x128xf32> to vector<32x128xbf16>
    %c1024 = arith.constant 1024 : index
    %c0_304 = arith.constant 0 : index
    %1065 = vector.load %arg9[%c1024, %c0_304] : memref<1120x128xbf16, #tpu.memory_space<vmem>>, vector<32x128xbf16>
    tpu.vector_store %arg9[%c1024, %c0_304], %1064 {strides = array<i32>} : memref<1120x128xbf16, #tpu.memory_space<vmem>>, vector<32x128xbf16>,
    %c33_305 = arith.constant 33 : index
    %c0_306 = arith.constant 0 : index
    %1066 = vector.load %arg1[%c33_305, %c0_306] : memref<37x128xf32, #tpu.memory_space<vmem>>, vector<1x128xf32>
    %1067 = vector.shape_cast %1066 : vector<1x128xf32> to vector<128xf32>
    %c34_307 = arith.constant 34 : index
    %c0_308 = arith.constant 0 : index
    %1068 = vector.load %arg1[%c34_307, %c0_308] : memref<37x128xf32, #tpu.memory_space<vmem>>, vector<1x128xf32>
    %1069 = vector.shape_cast %1068 : vector<1x128xf32> to vector<128xf32>
    %c35 = arith.constant 35 : index
    %c0_309 = arith.constant 0 : index
    %1070 = vector.load %arg1[%c35, %c0_309] : memref<37x128xf32, #tpu.memory_space<vmem>>, vector<1x128xf32>
    %1071 = vector.shape_cast %1070 : vector<1x128xf32> to vector<128xf32>
    %1072 = vector.shape_cast %1067 : vector<128xf32> to vector<1x128xf32>
    %1073 = vector.broadcast %1072 : vector<1x128xf32> to vector<16x128xf32>
    %1074 = vector.broadcast %2 : vector<16x1xf32> to vector<16x128xf32>
    %1075 = arith.mulf %1073, %1074 : vector<16x128xf32>
    %1076 = vector.shape_cast %1069 : vector<128xf32> to vector<1x128xf32>
    %1077 = vector.broadcast %1076 : vector<1x128xf32> to vector<16x128xf32>
    %1078 = vector.broadcast %4 : vector<16x1xf32> to vector<16x128xf32>
    %1079 = arith.mulf %1077, %1078 : vector<16x128xf32>
    %1080 = arith.addf %1075, %1079 : vector<16x128xf32>
    %1081 = vector.shape_cast %1071 : vector<128xf32> to vector<1x128xf32>
    %1082 = vector.broadcast %1081 : vector<1x128xf32> to vector<16x128xf32>
    %1083 = vector.broadcast %6 : vector<16x1xf32> to vector<16x128xf32>
    %1084 = arith.mulf %1082, %1083 : vector<16x128xf32>
    %1085 = arith.addf %1080, %1084 : vector<16x128xf32>
    %1086 = vector.broadcast %7 : vector<16x1xf32> to vector<16x128xf32>
    %1087 = arith.addf %1085, %1086 : vector<16x128xf32>
    %cst_310 = arith.constant 0.000000e+00 : f32
    %1088 = vector.broadcast %cst_310 : f32 to vector<16x128xf32>
    %1089 = arith.maximumf %1087, %1088 : vector<16x128xf32>
    %1090 = arith.truncf %1089 : vector<16x128xf32> to vector<16x128xbf16>
    %cst_311 = arith.constant dense<0.000000e+00> : vector<32x128xf32>
    %1091 = tpu.matmul %8, %1090, %cst_311 {dimension_numbers = #tpu.dot_dimension_numbers<[1], [0], [0], [1], [0, 0, 1, 1], [], []>} : vector<32x16xbf16>, vector<16x128xbf16>, vector<32x128xf32> -> vector<32x128xf32>
    %1092 = vector.broadcast %9 : vector<32x1xf32> to vector<32x128xf32>
    %1093 = arith.addf %1091, %1092 : vector<32x128xf32>
    %cst_312 = arith.constant 0.000000e+00 : f32
    %1094 = vector.broadcast %cst_312 : f32 to vector<32x128xf32>
    %1095 = arith.maximumf %1093, %1094 : vector<32x128xf32>
    %1096 = arith.truncf %1095 : vector<32x128xf32> to vector<32x128xbf16>
    %c1056 = arith.constant 1056 : index
    %c0_313 = arith.constant 0 : index
    %1097 = vector.load %arg9[%c1056, %c0_313] : memref<1120x128xbf16, #tpu.memory_space<vmem>>, vector<32x128xbf16>
    tpu.vector_store %arg9[%c1056, %c0_313], %1096 {strides = array<i32>} : memref<1120x128xbf16, #tpu.memory_space<vmem>>, vector<32x128xbf16>,
    %c34_314 = arith.constant 34 : index
    %c0_315 = arith.constant 0 : index
    %1098 = vector.load %arg1[%c34_314, %c0_315] : memref<37x128xf32, #tpu.memory_space<vmem>>, vector<1x128xf32>
    %1099 = vector.shape_cast %1098 : vector<1x128xf32> to vector<128xf32>
    %c35_316 = arith.constant 35 : index
    %c0_317 = arith.constant 0 : index
    %1100 = vector.load %arg1[%c35_316, %c0_317] : memref<37x128xf32, #tpu.memory_space<vmem>>, vector<1x128xf32>
    %1101 = vector.shape_cast %1100 : vector<1x128xf32> to vector<128xf32>
    %c36 = arith.constant 36 : index
    %c0_318 = arith.constant 0 : index
    %1102 = vector.load %arg1[%c36, %c0_318] : memref<37x128xf32, #tpu.memory_space<vmem>>, vector<1x128xf32>
    %1103 = vector.shape_cast %1102 : vector<1x128xf32> to vector<128xf32>
    %1104 = vector.shape_cast %1099 : vector<128xf32> to vector<1x128xf32>
    %1105 = vector.broadcast %1104 : vector<1x128xf32> to vector<16x128xf32>
    %1106 = vector.broadcast %2 : vector<16x1xf32> to vector<16x128xf32>
    %1107 = arith.mulf %1105, %1106 : vector<16x128xf32>
    %1108 = vector.shape_cast %1101 : vector<128xf32> to vector<1x128xf32>
    %1109 = vector.broadcast %1108 : vector<1x128xf32> to vector<16x128xf32>
    %1110 = vector.broadcast %4 : vector<16x1xf32> to vector<16x128xf32>
    %1111 = arith.mulf %1109, %1110 : vector<16x128xf32>
    %1112 = arith.addf %1107, %1111 : vector<16x128xf32>
    %1113 = vector.shape_cast %1103 : vector<128xf32> to vector<1x128xf32>
    %1114 = vector.broadcast %1113 : vector<1x128xf32> to vector<16x128xf32>
    %1115 = vector.broadcast %6 : vector<16x1xf32> to vector<16x128xf32>
    %1116 = arith.mulf %1114, %1115 : vector<16x128xf32>
    %1117 = arith.addf %1112, %1116 : vector<16x128xf32>
    %1118 = vector.broadcast %7 : vector<16x1xf32> to vector<16x128xf32>
    %1119 = arith.addf %1117, %1118 : vector<16x128xf32>
    %cst_319 = arith.constant 0.000000e+00 : f32
    %1120 = vector.broadcast %cst_319 : f32 to vector<16x128xf32>
    %1121 = arith.maximumf %1119, %1120 : vector<16x128xf32>
    %1122 = arith.truncf %1121 : vector<16x128xf32> to vector<16x128xbf16>
    %cst_320 = arith.constant dense<0.000000e+00> : vector<32x128xf32>
    %1123 = tpu.matmul %8, %1122, %cst_320 {dimension_numbers = #tpu.dot_dimension_numbers<[1], [0], [0], [1], [0, 0, 1, 1], [], []>} : vector<32x16xbf16>, vector<16x128xbf16>, vector<32x128xf32> -> vector<32x128xf32>
    %1124 = vector.broadcast %9 : vector<32x1xf32> to vector<32x128xf32>
    %1125 = arith.addf %1123, %1124 : vector<32x128xf32>
    %cst_321 = arith.constant 0.000000e+00 : f32
    %1126 = vector.broadcast %cst_321 : f32 to vector<32x128xf32>
    %1127 = arith.maximumf %1125, %1126 : vector<32x128xf32>
    %1128 = arith.truncf %1127 : vector<32x128xf32> to vector<32x128xbf16>
    %c1088 = arith.constant 1088 : index
    %c0_322 = arith.constant 0 : index
    %1129 = vector.load %arg9[%c1088, %c0_322] : memref<1120x128xbf16, #tpu.memory_space<vmem>>, vector<32x128xbf16>
    tpu.vector_store %arg9[%c1088, %c0_322], %1128 {strides = array<i32>} : memref<1120x128xbf16, #tpu.memory_space<vmem>>, vector<32x128xbf16>,
    %c0_323 = arith.constant 0 : index
    %c0_324 = arith.constant 0 : index
    %1130 = vector.load %arg6[%c0_323, %c0_324] : memref<128x1120xbf16, #tpu.memory_space<vmem>>, vector<128x1120xbf16>
    %c0_325 = arith.constant 0 : index
    %c0_326 = arith.constant 0 : index
    %1131 = vector.load %arg9[%c0_325, %c0_326] : memref<1120x128xbf16, #tpu.memory_space<vmem>>, vector<1120x128xbf16>
    %cst_327 = arith.constant dense<0.000000e+00> : vector<128x128xf32>
    %1132 = tpu.matmul %1130, %1131, %cst_327 {dimension_numbers = #tpu.dot_dimension_numbers<[1], [0], [0], [1], [0, 0, 1, 1], [], []>} : vector<128x1120xbf16>, vector<1120x128xbf16>, vector<128x128xf32> -> vector<128x128xf32>
    %c0_328 = arith.constant 0 : index
    %c0_329 = arith.constant 0 : index
    %1133 = vector.load %arg7[%c0_328, %c0_329] : memref<128x1xf32, #tpu.memory_space<vmem>>, vector<128x1xf32>
    %1134 = vector.broadcast %1133 : vector<128x1xf32> to vector<128x128xf32>
    %1135 = arith.addf %1132, %1134 : vector<128x128xf32>
    %c0_330 = arith.constant 0 : index
    %c0_331 = arith.constant 0 : index
    %1136 = vector.load %arg8[%c0_330, %c0_331] : memref<128x128xf32, #tpu.memory_space<vmem>>, vector<128x128xf32>
    tpu.vector_store %arg8[%c0_330, %c0_331], %1135 {strides = array<i32>} : memref<128x128xf32, #tpu.memory_space<vmem>>, vector<128x128xf32>,
    return
  }
  func.func @transform_0(%arg0: i32) -> (i32, i32) {
    %c0_i32 = arith.constant 0 : i32
    %c0_i32_0 = arith.constant 0 : i32
    return %c0_i32, %arg0 : i32, i32
  }
  func.func @transform_1(%arg0: i32) -> (i32, i32, i32) {
    %c0_i32 = arith.constant 0 : i32
    %c0_i32_0 = arith.constant 0 : i32
    %c0_i32_1 = arith.constant 0 : i32
    %c0_i32_2 = arith.constant 0 : i32
    return %c0_i32, %c0_i32_0, %c0_i32_1 : i32, i32, i32
  }
  func.func @transform_2(%arg0: i32) -> (i32, i32) {
    %c0_i32 = arith.constant 0 : i32
    %c0_i32_0 = arith.constant 0 : i32
    %c0_i32_1 = arith.constant 0 : i32
    return %c0_i32, %c0_i32_0 : i32, i32
  }
  func.func @transform_3(%arg0: i32) -> (i32, i32) {
    %c0_i32 = arith.constant 0 : i32
    %c0_i32_0 = arith.constant 0 : i32
    %c0_i32_1 = arith.constant 0 : i32
    return %c0_i32, %c0_i32_0 : i32, i32
  }
  func.func @transform_4(%arg0: i32) -> (i32, i32) {
    %c0_i32 = arith.constant 0 : i32
    %c0_i32_0 = arith.constant 0 : i32
    %c0_i32_1 = arith.constant 0 : i32
    return %c0_i32, %c0_i32_0 : i32, i32
  }
  func.func @transform_5(%arg0: i32) -> (i32, i32) {
    %c0_i32 = arith.constant 0 : i32
    %c0_i32_0 = arith.constant 0 : i32
    %c0_i32_1 = arith.constant 0 : i32
    return %c0_i32, %c0_i32_0 : i32, i32
  }
  func.func @transform_6(%arg0: i32) -> (i32, i32) {
    %c0_i32 = arith.constant 0 : i32
    %c0_i32_0 = arith.constant 0 : i32
    %c0_i32_1 = arith.constant 0 : i32
    return %c0_i32, %c0_i32_0 : i32, i32
  }
  func.func @transform_7(%arg0: i32) -> (i32, i32) {
    %c0_i32 = arith.constant 0 : i32
    %c0_i32_0 = arith.constant 0 : i32
    return %c0_i32, %arg0 : i32, i32
  }
}

</mosaic_0001>

<llo_original>
// kernel: tpu_custom_call.1
$region0: #{tpu_custom_call.1}
  #allocation0 [shape = 'u32[]', space=smem, size = 0x4, offset = 0x4, fixed_abs, tag = 'smem constant byte address 0x4 - core index']
  #allocation1 [shape = 'u32[144,128]{1,0:T(1,128)}', space=vmem, size = 0x12000, scoped, tag = 'internal scratch']
  #allocation2 [shape = 'bf16[1120,128]{1,0:T(16,128)(2,1)}', space=vmem, size = 0x46000, scoped, tag = 'scratch operand']
  %s0 = inlined_call_operand.vmem [shape: f32[37,128], index: 0, kind: input, shape index: {}]
  %s1 = inlined_call_operand.vmem [shape: f32[3,16,1], index: 1, kind: input, shape index: {}]
  %s2 = inlined_call_operand.vmem [shape: f32[16,1], index: 2, kind: input, shape index: {}]
  %s3 = inlined_call_operand.vmem [shape: bf16[32,16], index: 3, kind: input, shape index: {}]
  %s4 = inlined_call_operand.vmem [shape: f32[32,1], index: 4, kind: input, shape index: {}]
  %s5 = inlined_call_operand.vmem [shape: bf16[128,1120], index: 5, kind: input, shape index: {}]
  %s6 = inlined_call_operand.vmem [shape: f32[128,1], index: 6, kind: input, shape index: {}]
  %s7 = inlined_call_operand.hbm [shape: f32[128,128], index: 7, kind: output, shape index: {}]
  %s8 = sld [smem:[#allocation0]]
  $region38: #{tpu_custom_call.1} parent=0
    _
  %s10 = ssub.s32 1, %s8
  %s11 = scalar_select 0, %s10, %s8
  $region1: #{tpu_custom_call.1} parent=0
    #allocation3 [shape = 'u8[65536]{0}', space=vmem, size = 0x10000, scoped, tag = 'output window, operand 0, single buffered']
    #allocation4 [shape = 's32[1]{0}', space=sflag, size = 0x4, scoped, tag = 'scoped memory for tpu_custom_call.1']
    %12 = vsyncpa [#allocation4], 0
    // Predicated region
    $region2: #{tpu_custom_call.1} parent=1 // pred_check
      _
    $region3: #{tpu_custom_call.1} parent=1 // pred_check_branch
      %14 = sbr.rel (0) target = $region5
    $region4: #{tpu_custom_call.1} parent=1 // pred_region
      _
    $region5: #{tpu_custom_call.1} parent=1 // pred_fallthru
      _
    // Predicated region
    $region6: #{tpu_custom_call.1} parent=1 // pred_check
      _
    $region7: #{tpu_custom_call.1} parent=1 // pred_check_branch
      %16 = sbr.rel (0) target = $region9
    $region8: #{tpu_custom_call.1} parent=1 // pred_region
      _
    $region9: #{tpu_custom_call.1} parent=1 // pred_fallthru
      _
    // Predicated region
    $region10: #{tpu_custom_call.1} parent=1 // pred_check
      _
    $region11: #{tpu_custom_call.1} parent=1 // pred_check_branch
      %18 = sbr.rel (0) target = $region13
    $region12: #{tpu_custom_call.1} parent=1 // pred_region
      _
    $region13: #{tpu_custom_call.1} parent=1 // pred_fallthru
      _
    // Predicated region
    $region14: #{tpu_custom_call.1} parent=1 // pred_check
      _
    $region15: #{tpu_custom_call.1} parent=1 // pred_check_branch
      %20 = sbr.rel (0) target = $region17
    $region16: #{tpu_custom_call.1} parent=1 // pred_region
      _
    $region17: #{tpu_custom_call.1} parent=1 // pred_fallthru
      _
    // Predicated region
    $region18: #{tpu_custom_call.1} parent=1 // pred_check
      _
    $region19: #{tpu_custom_call.1} parent=1 // pred_check_branch
      %22 = sbr.rel (0) target = $region21
    $region20: #{tpu_custom_call.1} parent=1 // pred_region
      _
    $region21: #{tpu_custom_call.1} parent=1 // pred_fallthru
      _
    // Predicated region
    $region22: #{tpu_custom_call.1} parent=1 // pred_check
      _
    $region23: #{tpu_custom_call.1} parent=1 // pred_check_branch
      %24 = sbr.rel (0) target = $region25
    $region24: #{tpu_custom_call.1} parent=1 // pred_region
      _
    $region25: #{tpu_custom_call.1} parent=1 // pred_fallthru
      _
    // Predicated region
    $region26: #{tpu_custom_call.1} parent=1 // pred_check
      _
    $region27: #{tpu_custom_call.1} parent=1 // pred_check_branch
      %26 = sbr.rel (0) target = $region29
    $region28: #{tpu_custom_call.1} parent=1 // pred_region
      _
    $region29: #{tpu_custom_call.1} parent=1 // pred_fallthru
      _
    %v28 = vld [vmem:[%s1] sm:$0xff]
    %v29 = vld [vmem:[%s1 + $0x8] sm:$0xff]
    %v30 = vld [vmem:[%s1 + $0x10] sm:$0xff]
    %v31 = vld [vmem:[%s1 + $0x18] sm:$0xff]
    %v32 = vld [vmem:[%s1 + $0x20] sm:$0xff]
    %v33 = vld [vmem:[%s1 + $0x28] sm:$0xff]
    %v34 = vld [vmem:[%s2] sm:$0xff]
    %v35 = vld [vmem:[%s2 + $0x8] sm:$0xff]
    %v36 = vld [vmem:[%s3] sm:$0xf]
    %v37 = vld [vmem:[%s3 + $0x4] sm:$0xf]
    %v38 = vld [vmem:[%s3 + $0x8] sm:$0xf]
    %v39 = vld [vmem:[%s3 + $0xc] sm:$0xf]
    %v40 = vld [vmem:[%s4] sm:$0xff]
    %v41 = vld [vmem:[%s4 + $0x8] sm:$0xff]
    %v42 = vld [vmem:[%s4 + $0x10] sm:$0xff]
    %v43 = vld [vmem:[%s4 + $0x18] sm:$0xff]
    %v44 = vld [vmem:[%s0] sm:$0x1]
    %v45 = vld [vmem:[%s0 + $0x1] sm:$0x1]
    %v46 = vld [vmem:[%s0 + $0x2] sm:$0x1]
    %v47 = vlaneseq
    %v48 = vshrl.u32 %v47, 7
    %v49 = vsub.s32 0, %v48
    %v50 = vrot.slane %v44, %v49
    %52 = vset.pattern.permute.xlu0 0
    %53 = vperm.xlu0 %52, %v28
    %v54 = vpop.permute.xlu0 %53
    %57 = vset.pattern.permute.xlu0 0
    %58 = vperm.xlu0 %57, %v29
    %v59 = vpop.permute.xlu0 %58
    %v61 = vmul.f32 %v50, %v54
    %v62 = vmul.f32 %v50, %v59
    %v63 = vlaneseq
    %v64 = vshrl.u32 %v63, 7
    %v65 = vsub.s32 0, %v64
    %v66 = vrot.slane %v45, %v65
    %68 = vset.pattern.permute.xlu0 0
    %69 = vperm.xlu0 %68, %v30
    %v70 = vpop.permute.xlu0 %69
    %73 = vset.pattern.permute.xlu0 0
    %74 = vperm.xlu0 %73, %v31
    %v75 = vpop.permute.xlu0 %74
    %v77 = vmul.f32 %v66, %v70
    %v78 = vmul.f32 %v66, %v75
    %v79 = vadd.f32 %v61, %v77
    %v80 = vadd.f32 %v62, %v78
    %v81 = vlaneseq
    %v82 = vshrl.u32 %v81, 7
    %v83 = vsub.s32 0, %v82
    %v84 = vrot.slane %v46, %v83
    %86 = vset.pattern.permute.xlu0 0
    %87 = vperm.xlu0 %86, %v32
    %v88 = vpop.permute.xlu0 %87
    %91 = vset.pattern.permute.xlu0 0
    %92 = vperm.xlu0 %91, %v33
    %v93 = vpop.permute.xlu0 %92
    %v95 = vmul.f32 %v84, %v88
    %v96 = vmul.f32 %v84, %v93
    %v97 = vadd.f32 %v79, %v95
    %v98 = vadd.f32 %v80, %v96
    %100 = vset.pattern.permute.xlu0 0
    %101 = vperm.xlu0 %100, %v34
    %v102 = vpop.permute.xlu0 %101
    %105 = vset.pattern.permute.xlu0 0
    %106 = vperm.xlu0 %105, %v35
    %v107 = vpop.permute.xlu0 %106
    %v109 = vadd.f32 %v97, %v102
    %v110 = vadd.f32 %v98, %v107
    %v111 = vmax.f32 %v109, 0.0
    %v112 = vmax.f32 %v110, 0.0
    %v113 = vpack.c.bf16 %v112, %v111
    %115 = vset.pattern.permute.xlu0 0
    %116 = vperm.xlu0 %115, %v40
    %v117 = vpop.permute.xlu0 %116
    %120 = vset.pattern.permute.xlu0 0
    %121 = vperm.xlu0 %120, %v41
    %v122 = vpop.permute.xlu0 %121
    %125 = vset.pattern.permute.xlu0 0
    %126 = vperm.xlu0 %125, %v42
    %v127 = vpop.permute.xlu0 %126
    %130 = vset.pattern.permute.xlu0 0
    %131 = vperm.xlu0 %130, %v43
    %v132 = vpop.permute.xlu0 %131
    %v138 = vunpack.c.l.b16 %v36
    %v139 = vunpack.c.l.b16 %v37
    %v140 = vunpack.c.l.b16 %v38
    %v141 = vunpack.c.l.b16 %v39
    %v142 = vpack.c.b16 %v139, %v138
    %v143 = vpack.c.b16 %v141, %v140
    %vm144 = vcmask 130048
    %v146 = vsel %vm144, %v142, 0
    %v149 = vsel %vm144, %v143, 0
    %151 = vmatprep.subr.bf16.mxu0 0
    %152 = vmatpush1.bf16.msra.mxu0 %v113
    %153 = vmatprep.subr.bf16.mxu0 0
    %154 = vmatpush1.bf16.msra.mxu0 0
    %155 = vmatprep.subr.bf16.mxu0 0
    %156 = vmatpush1.bf16.msra.mxu0 0
    %157 = vmatprep.subr.bf16.mxu0 0
    %158 = vmatpush1.bf16.msra.mxu0 0
    %159 = vmatprep.subr.bf16.mxu0 0
    %160 = vmatpush1.bf16.msra.mxu0 0
    %161 = vmatprep.subr.bf16.mxu0 0
    %162 = vmatpush1.bf16.msra.mxu0 0
    %163 = vmatprep.subr.bf16.mxu0 0
    %164 = vmatpush1.bf16.msra.mxu0 0
    %165 = vmatprep.subr.bf16.mxu0 0
    %166 = vmatpush1.bf16.msra.mxu0 0
    %167 = vmatprep.subr.bf16.mxu0 0
    %168 = vmatpush1.bf16.msra.mxu0 0
    %169 = vmatprep.subr.bf16.mxu0 0
    %170 = vmatpush1.bf16.msra.mxu0 0
    %171 = vmatprep.subr.bf16.mxu0 0
    %172 = vmatpush1.bf16.msra.mxu0 0
    %173 = vmatprep.subr.bf16.mxu0 0
    %174 = vmatpush1.bf16.msra.mxu0 0
    %175 = vmatprep.subr.bf16.mxu0 0
    %176 = vmatpush1.bf16.msra.mxu0 0
    %177 = vmatprep.subr.bf16.mxu0 0
    %178 = vmatpush1.bf16.msra.mxu0 0
    %179 = vmatprep.subr.bf16.mxu0 0
    %180 = vmatpush1.bf16.msra.mxu0 0
    %181 = vmatprep.subr.bf16.mxu0 0
    %182 = vmatpush1.bf16.msra.mxu0 0
    %183 = vmatprep.mubr.bf16.mxu0 0
    %184 = vmatmul.mubr.bf16.gmra.mrb[0].mxu0 %v146
    %v185 = vpop.f32.mrb[0].mxu0
    %v186 = vadd.f32 %v117, %v185
    %v187 = vpop.f32.mrb[0].mxu0
    %v188 = vpop.f32.mrb[0].mxu0
    %v189 = vadd.f32 %v122, %v188
    %v190 = vpop.f32.mrb[0].mxu0
    %191 = vmatprep.mubr.bf16.mxu0 0
    %192 = vmatmul.mubr.bf16.gmra.mrb[0].mxu0 %v149
    %v193 = vpop.f32.mrb[0].mxu0
    %v194 = vadd.f32 %v127, %v193
    %v195 = vpop.f32.mrb[0].mxu0
    %v196 = vpop.f32.mrb[0].mxu0
    %v197 = vadd.f32 %v132, %v196
    %v198 = vpop.f32.mrb[0].mxu0
    %199 = vdwg.mxu0
    %v200 = vmax.f32 %v186, 0.0
    %v201 = vmax.f32 %v189, 0.0
    %v202 = vmax.f32 %v194, 0.0
    %v203 = vmax.f32 %v197, 0.0
    %v204 = vpack.c.bf16 %v201, %v200
    %v205 = vpack.c.bf16 %v203, %v202
    %206 = vst [vmem:[#allocation2] sm:$0xff] %v204
    %207 = vst [vmem:[#allocation2 + $0x8] sm:$0xff] %v205
    %v208 = vld [vmem:[%s0 + $0x1] sm:$0x1]
    %v209 = vld [vmem:[%s0 + $0x2] sm:$0x1]
    %v210 = vld [vmem:[%s0 + $0x3] sm:$0x1]
    %v211 = vlaneseq
    %v212 = vshrl.u32 %v211, 7
    %v213 = vsub.s32 0, %v212
    %v214 = vrot.slane %v208, %v213
    %v215 = vmul.f32 %v214, %v54
    %v216 = vmul.f32 %v214, %v59
    %v217 = vlaneseq
    %v218 = vshrl.u32 %v217, 7
    %v219 = vsub.s32 0, %v218
    %v220 = vrot.slane %v209, %v219
    %v221 = vmul.f32 %v220, %v70
    %v222 = vmul.f32 %v220, %v75
    %v223 = vadd.f32 %v215, %v221
    %v224 = vadd.f32 %v216, %v222
    %v225 = vlaneseq
    %v226 = vshrl.u32 %v225, 7
    %v227 = vsub.s32 0, %v226
    %v228 = vrot.slane %v210, %v227
    %v229 = vmul.f32 %v228, %v88
    %v230 = vmul.f32 %v228, %v93
    %v231 = vadd.f32 %v223, %v229
    %v232 = vadd.f32 %v224, %v230
    %v233 = vadd.f32 %v231, %v102
    %v234 = vadd.f32 %v232, %v107
    %v235 = vmax.f32 %v233, 0.0
    %v236 = vmax.f32 %v234, 0.0
    %v237 = vpack.c.bf16 %v236, %v235
    %238 = vmatprep.subr.bf16.mxu0 0
    %239 = vmatpush1.bf16.msra.mxu0 %v237
    %240 = vmatprep.subr.bf16.mxu0 0
    %241 = vmatpush1.bf16.msra.mxu0 0
    %242 = vmatprep.subr.bf16.mxu0 0
    %243 = vmatpush1.bf16.msra.mxu0 0
    %244 = vmatprep.subr.bf16.mxu0 0
    %245 = vmatpush1.bf16.msra.mxu0 0
    %246 = vmatprep.subr.bf16.mxu0 0
    %247 = vmatpush1.bf16.msra.mxu0 0
    %248 = vmatprep.subr.bf16.mxu0 0
    %249 = vmatpush1.bf16.msra.mxu0 0
    %250 = vmatprep.subr.bf16.mxu0 0
    %251 = vmatpush1.bf16.msra.mxu0 0
    %252 = vmatprep.subr.bf16.mxu0 0
    %253 = vmatpush1.bf16.msra.mxu0 0
    %254 = vmatprep.subr.bf16.mxu0 0
    %255 = vmatpush1.bf16.msra.mxu0 0
    %256 = vmatprep.subr.bf16.mxu0 0
    %257 = vmatpush1.bf16.msra.mxu0 0
    %258 = vmatprep.subr.bf16.mxu0 0
    %259 = vmatpush1.bf16.msra.mxu0 0
    %260 = vmatprep.subr.bf16.mxu0 0
    %261 = vmatpush1.bf16.msra.mxu0 0
    %262 = vmatprep.subr.bf16.mxu0 0
    %263 = vmatpush1.bf16.msra.mxu0 0
    %264 = vmatprep.subr.bf16.mxu0 0
    %265 = vmatpush1.bf16.msra.mxu0 0
    %266 = vmatprep.subr.bf16.mxu0 0
    %267 = vmatpush1.bf16.msra.mxu0 0
    %268 = vmatprep.subr.bf16.mxu0 0
    %269 = vmatpush1.bf16.msra.mxu0 0
    %270 = vmatprep.mubr.bf16.mxu0 0
    %271 = vmatmul.mubr.bf16.gmra.mrb[0].mxu0 %v146
    %v272 = vpop.f32.mrb[0].mxu0
    %v273 = vadd.f32 %v117, %v272
    %v274 = vpop.f32.mrb[0].mxu0
    %v275 = vpop.f32.mrb[0].mxu0
    %v276 = vadd.f32 %v122, %v275
    %v277 = vpop.f32.mrb[0].mxu0
    %278 = vmatprep.mubr.bf16.mxu0 0
    %279 = vmatmul.mubr.bf16.gmra.mrb[0].mxu0 %v149
    %v280 = vpop.f32.mrb[0].mxu0
    %v281 = vadd.f32 %v127, %v280
    %v282 = vpop.f32.mrb[0].mxu0
    %v283 = vpop.f32.mrb[0].mxu0
    %v284 = vadd.f32 %v132, %v283
    %v285 = vpop.f32.mrb[0].mxu0
    %286 = vdwg.mxu0
    %v287 = vmax.f32 %v273, 0.0
    %v288 = vmax.f32 %v276, 0.0
    %v289 = vmax.f32 %v281, 0.0
    %v290 = vmax.f32 %v284, 0.0
    %v291 = vpack.c.bf16 %v288, %v287
    %v292 = vpack.c.bf16 %v290, %v289
    %293 = vst [vmem:[#allocation2 + $0x10] sm:$0xff] %v291
    %294 = vst [vmem:[#allocation2 + $0x18] sm:$0xff] %v292
    %v295 = vld [vmem:[%s0 + $0x2] sm:$0x1]
    %v296 = vld [vmem:[%s0 + $0x3] sm:$0x1]
    %v297 = vld [vmem:[%s0 + $0x4] sm:$0x1]
    %v298 = vlaneseq
    %v299 = vshrl.u32 %v298, 7
    %v300 = vsub.s32 0, %v299
    %v301 = vrot.slane %v295, %v300
    %v302 = vmul.f32 %v301, %v54
    %v303 = vmul.f32 %v301, %v59
    %v304 = vlaneseq
    %v305 = vshrl.u32 %v304, 7
    %v306 = vsub.s32 0, %v305
    %v307 = vrot.slane %v296, %v306
    %v308 = vmul.f32 %v307, %v70
    %v309 = vmul.f32 %v307, %v75
    %v310 = vadd.f32 %v302, %v308
    %v311 = vadd.f32 %v303, %v309
    %v312 = vlaneseq
    %v313 = vshrl.u32 %v312, 7
    %v314 = vsub.s32 0, %v313
    %v315 = vrot.slane %v297, %v314
    %v316 = vmul.f32 %v315, %v88
    %v317 = vmul.f32 %v315, %v93
    %v318 = vadd.f32 %v310, %v316
    %v319 = vadd.f32 %v311, %v317
    %v320 = vadd.f32 %v318, %v102
    %v321 = vadd.f32 %v319, %v107
    %v322 = vmax.f32 %v320, 0.0
    %v323 = vmax.f32 %v321, 0.0
    %v324 = vpack.c.bf16 %v323, %v322
    %325 = vmatprep.subr.bf16.mxu0 0
    %326 = vmatpush1.bf16.msra.mxu0 %v324
    %327 = vmatprep.subr.bf16.mxu0 0
    %328 = vmatpush1.bf16.msra.mxu0 0
    %329 = vmatprep.subr.bf16.mxu0 0
    %330 = vmatpush1.bf16.msra.mxu0 0
    %331 = vmatprep.subr.bf16.mxu0 0
    %332 = vmatpush1.bf16.msra.mxu0 0
    %333 = vmatprep.subr.bf16.mxu0 0
    %334 = vmatpush1.bf16.msra.mxu0 0
    %335 = vmatprep.subr.bf16.mxu0 0
    %336 = vmatpush1.bf16.msra.mxu0 0
    %337 = vmatprep.subr.bf16.mxu0 0
    %338 = vmatpush1.bf16.msra.mxu0 0
    %339 = vmatprep.subr.bf16.mxu0 0
    %340 = vmatpush1.bf16.msra.mxu0 0
    %341 = vmatprep.subr.bf16.mxu0 0
    %342 = vmatpush1.bf16.msra.mxu0 0
    %343 = vmatprep.subr.bf16.mxu0 0
    %344 = vmatpush1.bf16.msra.mxu0 0
    %345 = vmatprep.subr.bf16.mxu0 0
    %346 = vmatpush1.bf16.msra.mxu0 0
    %347 = vmatprep.subr.bf16.mxu0 0
    %348 = vmatpush1.bf16.msra.mxu0 0
    %349 = vmatprep.subr.bf16.mxu0 0
    %350 = vmatpush1.bf16.msra.mxu0 0
    %351 = vmatprep.subr.bf16.mxu0 0
    %352 = vmatpush1.bf16.msra.mxu0 0
    %353 = vmatprep.subr.bf16.mxu0 0
    %354 = vmatpush1.bf16.msra.mxu0 0
    %355 = vmatprep.subr.bf16.mxu0 0
    %356 = vmatpush1.bf16.msra.mxu0 0
    %357 = vmatprep.mubr.bf16.mxu0 0
    %358 = vmatmul.mubr.bf16.gmra.mrb[0].mxu0 %v146
    %v359 = vpop.f32.mrb[0].mxu0
    %v360 = vadd.f32 %v117, %v359
    %v361 = vpop.f32.mrb[0].mxu0
    %v362 = vpop.f32.mrb[0].mxu0
    %v363 = vadd.f32 %v122, %v362
    %v364 = vpop.f32.mrb[0].mxu0
    %365 = vmatprep.mubr.bf16.mxu0 0
    %366 = vmatmul.mubr.bf16.gmra.mrb[0].mxu0 %v149
    %v367 = vpop.f32.mrb[0].mxu0
    %v368 = vadd.f32 %v127, %v367
    %v369 = vpop.f32.mrb[0].mxu0
    %v370 = vpop.f32.mrb[0].mxu0
    %v371 = vadd.f32 %v132, %v370
    %v372 = vpop.f32.mrb[0].mxu0
    %373 = vdwg.mxu0
    %v374 = vmax.f32 %v360, 0.0
    %v375 = vmax.f32 %v363, 0.0
    %v376 = vmax.f32 %v368, 0.0
    %v377 = vmax.f32 %v371, 0.0
    %v378 = vpack.c.bf16 %v375, %v374
    %v379 = vpack.c.bf16 %v377, %v376
    %380 = vst [vmem:[#allocation2 + $0x20] sm:$0xff] %v378
    %381 = vst [vmem:[#allocation2 + $0x28] sm:$0xff] %v379
    %v382 = vld [vmem:[%s0 + $0x3] sm:$0x1]
    %v383 = vld [vmem:[%s0 + $0x4] sm:$0x1]
    %v384 = vld [vmem:[%s0 + $0x5] sm:$0x1]
    %v385 = vlaneseq
    %v386 = vshrl.u32 %v385, 7
    %v387 = vsub.s32 0, %v386
    %v388 = vrot.slane %v382, %v387
    %v389 = vmul.f32 %v388, %v54
    %v390 = vmul.f32 %v388, %v59
    %v391 = vlaneseq
    %v392 = vshrl.u32 %v391, 7
    %v393 = vsub.s32 0, %v392
    %v394 = vrot.slane %v383, %v393
    %v395 = vmul.f32 %v394, %v70
    %v396 = vmul.f32 %v394, %v75
    %v397 = vadd.f32 %v389, %v395
    %v398 = vadd.f32 %v390, %v396
    %v399 = vlaneseq
    %v400 = vshrl.u32 %v399, 7
    %v401 = vsub.s32 0, %v400
    %v402 = vrot.slane %v384, %v401
    %v403 = vmul.f32 %v402, %v88
    %v404 = vmul.f32 %v402, %v93
    %v405 = vadd.f32 %v397, %v403
    %v406 = vadd.f32 %v398, %v404
    %v407 = vadd.f32 %v405, %v102
    %v408 = vadd.f32 %v406, %v107
    %v409 = vmax.f32 %v407, 0.0
    %v410 = vmax.f32 %v408, 0.0
    %v411 = vpack.c.bf16 %v410, %v409
    %412 = vmatprep.subr.bf16.mxu0 0
    %413 = vmatpush1.bf16.msra.mxu0 %v411
    %414 = vmatprep.subr.bf16.mxu0 0
    %415 = vmatpush1.bf16.msra.mxu0 0
    %416 = vmatprep.subr.bf16.mxu0 0
    %417 = vmatpush1.bf16.msra.mxu0 0
    %418 = vmatprep.subr.bf16.mxu0 0
    %419 = vmatpush1.bf16.msra.mxu0 0
    %420 = vmatprep.subr.bf16.mxu0 0
    %421 = vmatpush1.bf16.msra.mxu0 0
    %422 = vmatprep.subr.bf16.mxu0 0
    %423 = vmatpush1.bf16.msra.mxu0 0
    %424 = vmatprep.subr.bf16.mxu0 0
    %425 = vmatpush1.bf16.msra.mxu0 0
    %426 = vmatprep.subr.bf16.mxu0 0
    %427 = vmatpush1.bf16.msra.mxu0 0
    %428 = vmatprep.subr.bf16.mxu0 0
    %429 = vmatpush1.bf16.msra.mxu0 0
    %430 = vmatprep.subr.bf16.mxu0 0
    %431 = vmatpush1.bf16.msra.mxu0 0
    %432 = vmatprep.subr.bf16.mxu0 0
    %433 = vmatpush1.bf16.msra.mxu0 0
    %434 = vmatprep.subr.bf16.mxu0 0
    %435 = vmatpush1.bf16.msra.mxu0 0
    %436 = vmatprep.subr.bf16.mxu0 0
    %437 = vmatpush1.bf16.msra.mxu0 0
    %438 = vmatprep.subr.bf16.mxu0 0
    %439 = vmatpush1.bf16.msra.mxu0 0
    %440 = vmatprep.subr.bf16.mxu0 0
    %441 = vmatpush1.bf16.msra.mxu0 0
    %442 = vmatprep.subr.bf16.mxu0 0
    %443 = vmatpush1.bf16.msra.mxu0 0
    %444 = vmatprep.mubr.bf16.mxu0 0
    %445 = vmatmul.mubr.bf16.gmra.mrb[0].mxu0 %v146
    %v446 = vpop.f32.mrb[0].mxu0
    %v447 = vadd.f32 %v117, %v446
    %v448 = vpop.f32.mrb[0].mxu0
    %v449 = vpop.f32.mrb[0].mxu0
    %v450 = vadd.f32 %v122, %v449
    %v451 = vpop.f32.mrb[0].mxu0
    %452 = vmatprep.mubr.bf16.mxu0 0
    %453 = vmatmul.mubr.bf16.gmra.mrb[0].mxu0 %v149
    %v454 = vpop.f32.mrb[0].mxu0
    %v455 = vadd.f32 %v127, %v454
    %v456 = vpop.f32.mrb[0].mxu0
    %v457 = vpop.f32.mrb[0].mxu0
    %v458 = vadd.f32 %v132, %v457
    %v459 = vpop.f32.mrb[0].mxu0
    %460 = vdwg.mxu0
    %v461 = vmax.f32 %v447, 0.0
    %v462 = vmax.f32 %v450, 0.0
    %v463 = vmax.f32 %v455, 0.0
    %v464 = vmax.f32 %v458, 0.0
    %v465 = vpack.c.bf16 %v462, %v461
    %v466 = vpack.c.bf16 %v464, %v463
    %467 = vst [vmem:[#allocation2 + $0x30] sm:$0xff] %v465
    %468 = vst [vmem:[#allocation2 + $0x38] sm:$0xff] %v466
    %v469 = vld [vmem:[%s0 + $0x4] sm:$0x1]
    %v470 = vld [vmem:[%s0 + $0x5] sm:$0x1]
    %v471 = vld [vmem:[%s0 + $0x6] sm:$0x1]
    %v472 = vlaneseq
    %v473 = vshrl.u32 %v472, 7
    %v474 = vsub.s32 0, %v473
    %v475 = vrot.slane %v469, %v474
    %v476 = vmul.f32 %v475, %v54
    %v477 = vmul.f32 %v475, %v59
    %v478 = vlaneseq
    %v479 = vshrl.u32 %v478, 7
    %v480 = vsub.s32 0, %v479
    %v481 = vrot.slane %v470, %v480
    %v482 = vmul.f32 %v481, %v70
    %v483 = vmul.f32 %v481, %v75
    %v484 = vadd.f32 %v476, %v482
    %v485 = vadd.f32 %v477, %v483
    %v486 = vlaneseq
    %v487 = vshrl.u32 %v486, 7
    %v488 = vsub.s32 0, %v487
    %v489 = vrot.slane %v471, %v488
    %v490 = vmul.f32 %v489, %v88
    %v491 = vmul.f32 %v489, %v93
    %v492 = vadd.f32 %v484, %v490
    %v493 = vadd.f32 %v485, %v491
    %v494 = vadd.f32 %v492, %v102
    %v495 = vadd.f32 %v493, %v107
    %v496 = vmax.f32 %v494, 0.0
    %v497 = vmax.f32 %v495, 0.0
    %v498 = vpack.c.bf16 %v497, %v496
    %499 = vmatprep.subr.bf16.mxu0 0
    %500 = vmatpush1.bf16.msra.mxu0 %v498
    %501 = vmatprep.subr.bf16.mxu0 0
    %502 = vmatpush1.bf16.msra.mxu0 0
    %503 = vmatprep.subr.bf16.mxu0 0
    %504 = vmatpush1.bf16.msra.mxu0 0
    %505 = vmatprep.subr.bf16.mxu0 0
    %506 = vmatpush1.bf16.msra.mxu0 0
    %507 = vmatprep.subr.bf16.mxu0 0
    %508 = vmatpush1.bf16.msra.mxu0 0
    %509 = vmatprep.subr.bf16.mxu0 0
    %510 = vmatpush1.bf16.msra.mxu0 0
    %511 = vmatprep.subr.bf16.mxu0 0
    %512 = vmatpush1.bf16.msra.mxu0 0
    %513 = vmatprep.subr.bf16.mxu0 0
    %514 = vmatpush1.bf16.msra.mxu0 0
    %515 = vmatprep.subr.bf16.mxu0 0
    %516 = vmatpush1.bf16.msra.mxu0 0
    %517 = vmatprep.subr.bf16.mxu0 0
    %518 = vmatpush1.bf16.msra.mxu0 0
    %519 = vmatprep.subr.bf16.mxu0 0
    %520 = vmatpush1.bf16.msra.mxu0 0
    %521 = vmatprep.subr.bf16.mxu0 0
    %522 = vmatpush1.bf16.msra.mxu0 0
    %523 = vmatprep.subr.bf16.mxu0 0
    %524 = vmatpush1.bf16.msra.mxu0 0
    %525 = vmatprep.subr.bf16.mxu0 0
    %526 = vmatpush1.bf16.msra.mxu0 0
    %527 = vmatprep.subr.bf16.mxu0 0
    %528 = vmatpush1.bf16.msra.mxu0 0
    %529 = vmatprep.subr.bf16.mxu0 0
    %530 = vmatpush1.bf16.msra.mxu0 0
    %531 = vmatprep.mubr.bf16.mxu0 0
    %532 = vmatmul.mubr.bf16.gmra.mrb[0].mxu0 %v146
    %v533 = vpop.f32.mrb[0].mxu0
    %v534 = vadd.f32 %v117, %v533
    %v535 = vpop.f32.mrb[0].mxu0
    %v536 = vpop.f32.mrb[0].mxu0
    %v537 = vadd.f32 %v122, %v536
    %v538 = vpop.f32.mrb[0].mxu0
    %539 = vmatprep.mubr.bf16.mxu0 0
    %540 = vmatmul.mubr.bf16.gmra.mrb[0].mxu0 %v149
    %v541 = vpop.f32.mrb[0].mxu0
    %v542 = vadd.f32 %v127, %v541
    %v543 = vpop.f32.mrb[0].mxu0
    %v544 = vpop.f32.mrb[0].mxu0
    %v545 = vadd.f32 %v132, %v544
    %v546 = vpop.f32.mrb[0].mxu0
    %547 = vdwg.mxu0
    %v548 = vmax.f32 %v534, 0.0
    %v549 = vmax.f32 %v537, 0.0
    %v550 = vmax.f32 %v542, 0.0
    %v551 = vmax.f32 %v545, 0.0
    %v552 = vpack.c.bf16 %v549, %v548
    %v553 = vpack.c.bf16 %v551, %v550
    %554 = vst [vmem:[#allocation2 + $0x40] sm:$0xff] %v552
    %555 = vst [vmem:[#allocation2 + $0x48] sm:$0xff] %v553
    %v556 = vld [vmem:[%s0 + $0x5] sm:$0x1]
    %v557 = vld [vmem:[%s0 + $0x6] sm:$0x1]
    %v558 = vld [vmem:[%s0 + $0x7] sm:$0x1]
    %v559 = vlaneseq
    %v560 = vshrl.u32 %v559, 7
    %v561 = vsub.s32 0, %v560
    %v562 = vrot.slane %v556, %v561
    %v563 = vmul.f32 %v562, %v54
    %v564 = vmul.f32 %v562, %v59
    %v565 = vlaneseq
    %v566 = vshrl.u32 %v565, 7
    %v567 = vsub.s32 0, %v566
    %v568 = vrot.slane %v557, %v567
    %v569 = vmul.f32 %v568, %v70
    %v570 = vmul.f32 %v568, %v75
    %v571 = vadd.f32 %v563, %v569
    %v572 = vadd.f32 %v564, %v570
    %v573 = vlaneseq
    %v574 = vshrl.u32 %v573, 7
    %v575 = vsub.s32 0, %v574
    %v576 = vrot.slane %v558, %v575
    %v577 = vmul.f32 %v576, %v88
    %v578 = vmul.f32 %v576, %v93
    %v579 = vadd.f32 %v571, %v577
    %v580 = vadd.f32 %v572, %v578
    %v581 = vadd.f32 %v579, %v102
    %v582 = vadd.f32 %v580, %v107
    %v583 = vmax.f32 %v581, 0.0
    %v584 = vmax.f32 %v582, 0.0
    %v585 = vpack.c.bf16 %v584, %v583
    %586 = vmatprep.subr.bf16.mxu0 0
    %587 = vmatpush1.bf16.msra.mxu0 %v585
    %588 = vmatprep.subr.bf16.mxu0 0
    %589 = vmatpush1.bf16.msra.mxu0 0
    %590 = vmatprep.subr.bf16.mxu0 0
    %591 = vmatpush1.bf16.msra.mxu0 0
    %592 = vmatprep.subr.bf16.mxu0 0
    %593 = vmatpush1.bf16.msra.mxu0 0
    %594 = vmatprep.subr.bf16.mxu0 0
    %595 = vmatpush1.bf16.msra.mxu0 0
    %596 = vmatprep.subr.bf16.mxu0 0
    %597 = vmatpush1.bf16.msra.mxu0 0
    %598 = vmatprep.subr.bf16.mxu0 0
    %599 = vmatpush1.bf16.msra.mxu0 0
    %600 = vmatprep.subr.bf16.mxu0 0
    %601 = vmatpush1.bf16.msra.mxu0 0
    %602 = vmatprep.subr.bf16.mxu0 0
    %603 = vmatpush1.bf16.msra.mxu0 0
    %604 = vmatprep.subr.bf16.mxu0 0
    %605 = vmatpush1.bf16.msra.mxu0 0
    %606 = vmatprep.subr.bf16.mxu0 0
    %607 = vmatpush1.bf16.msra.mxu0 0
    %608 = vmatprep.subr.bf16.mxu0 0
    %609 = vmatpush1.bf16.msra.mxu0 0
    %610 = vmatprep.subr.bf16.mxu0 0
    %611 = vmatpush1.bf16.msra.mxu0 0
    %612 = vmatprep.subr.bf16.mxu0 0
    %613 = vmatpush1.bf16.msra.mxu0 0
    %614 = vmatprep.subr.bf16.mxu0 0
    %615 = vmatpush1.bf16.msra.mxu0 0
    %616 = vmatprep.subr.bf16.mxu0 0
    %617 = vmatpush1.bf16.msra.mxu0 0
    %618 = vmatprep.mubr.bf16.mxu0 0
    %619 = vmatmul.mubr.bf16.gmra.mrb[0].mxu0 %v146
    %v620 = vpop.f32.mrb[0].mxu0
    %v621 = vadd.f32 %v117, %v620
    %v622 = vpop.f32.mrb[0].mxu0
    %v623 = vpop.f32.mrb[0].mxu0
    %v624 = vadd.f32 %v122, %v623
    %v625 = vpop.f32.mrb[0].mxu0
    %626 = vmatprep.mubr.bf16.mxu0 0
    %627 = vmatmul.mubr.bf16.gmra.mrb[0].mxu0 %v149
    %v628 = vpop.f32.mrb[0].mxu0
    %v629 = vadd.f32 %v127, %v628
    %v630 = vpop.f32.mrb[0].mxu0
    %v631 = vpop.f32.mrb[0].mxu0
    %v632 = vadd.f32 %v132, %v631
    %v633 = vpop.f32.mrb[0].mxu0
    %634 = vdwg.mxu0
    %v635 = vmax.f32 %v621, 0.0
    %v636 = vmax.f32 %v624, 0.0
    %v637 = vmax.f32 %v629, 0.0
    %v638 = vmax.f32 %v632, 0.0
    %v639 = vpack.c.bf16 %v636, %v635
    %v640 = vpack.c.bf16 %v638, %v637
    %641 = vst [vmem:[#allocation2 + $0x50] sm:$0xff] %v639
    %642 = vst [vmem:[#allocation2 + $0x58] sm:$0xff] %v640
    %v643 = vld [vmem:[%s0 + $0x6] sm:$0x1]
    %v644 = vld [vmem:[%s0 + $0x7] sm:$0x1]
    %v645 = vld [vmem:[%s0 + $0x8] sm:$0x1]
    %v646 = vlaneseq
    %v647 = vshrl.u32 %v646, 7
    %v648 = vsub.s32 0, %v647
    %v649 = vrot.slane %v643, %v648
    %v650 = vmul.f32 %v649, %v54
    %v651 = vmul.f32 %v649, %v59
    %v652 = vlaneseq
    %v653 = vshrl.u32 %v652, 7
    %v654 = vsub.s32 0, %v653
    %v655 = vrot.slane %v644, %v654
    %v656 = vmul.f32 %v655, %v70
    %v657 = vmul.f32 %v655, %v75
    %v658 = vadd.f32 %v650, %v656
    %v659 = vadd.f32 %v651, %v657
    %v660 = vlaneseq
    %v661 = vshrl.u32 %v660, 7
    %v662 = vsub.s32 0, %v661
    %v663 = vrot.slane %v645, %v662
    %v664 = vmul.f32 %v663, %v88
    %v665 = vmul.f32 %v663, %v93
    %v666 = vadd.f32 %v658, %v664
    %v667 = vadd.f32 %v659, %v665
    %v668 = vadd.f32 %v666, %v102
    %v669 = vadd.f32 %v667, %v107
    %v670 = vmax.f32 %v668, 0.0
    %v671 = vmax.f32 %v669, 0.0
    %v672 = vpack.c.bf16 %v671, %v670
    %673 = vmatprep.subr.bf16.mxu0 0
    %674 = vmatpush1.bf16.msra.mxu0 %v672
    %675 = vmatprep.subr.bf16.mxu0 0
    %676 = vmatpush1.bf16.msra.mxu0 0
    %677 = vmatprep.subr.bf16.mxu0 0
    %678 = vmatpush1.bf16.msra.mxu0 0
    %679 = vmatprep.subr.bf16.mxu0 0
    %680 = vmatpush1.bf16.msra.mxu0 0
    %681 = vmatprep.subr.bf16.mxu0 0
    %682 = vmatpush1.bf16.msra.mxu0 0
    %683 = vmatprep.subr.bf16.mxu0 0
    %684 = vmatpush1.bf16.msra.mxu0 0
    %685 = vmatprep.subr.bf16.mxu0 0
    %686 = vmatpush1.bf16.msra.mxu0 0
    %687 = vmatprep.subr.bf16.mxu0 0
    %688 = vmatpush1.bf16.msra.mxu0 0
    %689 = vmatprep.subr.bf16.mxu0 0
    %690 = vmatpush1.bf16.msra.mxu0 0
    %691 = vmatprep.subr.bf16.mxu0 0
    %692 = vmatpush1.bf16.msra.mxu0 0
    %693 = vmatprep.subr.bf16.mxu0 0
    %694 = vmatpush1.bf16.msra.mxu0 0
    %695 = vmatprep.subr.bf16.mxu0 0
    %696 = vmatpush1.bf16.msra.mxu0 0
    %697 = vmatprep.subr.bf16.mxu0 0
    %698 = vmatpush1.bf16.msra.mxu0 0
    %699 = vmatprep.subr.bf16.mxu0 0
    %700 = vmatpush1.bf16.msra.mxu0 0
    %701 = vmatprep.subr.bf16.mxu0 0
    %702 = vmatpush1.bf16.msra.mxu0 0
    %703 = vmatprep.subr.bf16.mxu0 0
    %704 = vmatpush1.bf16.msra.mxu0 0
    %705 = vmatprep.mubr.bf16.mxu0 0
    %706 = vmatmul.mubr.bf16.gmra.mrb[0].mxu0 %v146
    %v707 = vpop.f32.mrb[0].mxu0
    %v708 = vadd.f32 %v117, %v707
    %v709 = vpop.f32.mrb[0].mxu0
    %v710 = vpop.f32.mrb[0].mxu0
    %v711 = vadd.f32 %v122, %v710
    %v712 = vpop.f32.mrb[0].mxu0
    %713 = vmatprep.mubr.bf16.mxu0 0
    %714 = vmatmul.mubr.bf16.gmra.mrb[0].mxu0 %v149
    %v715 = vpop.f32.mrb[0].mxu0
    %v716 = vadd.f32 %v127, %v715
    %v717 = vpop.f32.mrb[0].mxu0
    %v718 = vpop.f32.mrb[0].mxu0
    %v719 = vadd.f32 %v132, %v718
    %v720 = vpop.f32.mrb[0].mxu0
    %721 = vdwg.mxu0
    %v722 = vmax.f32 %v708, 0.0
    %v723 = vmax.f32 %v711, 0.0
    %v724 = vmax.f32 %v716, 0.0
    %v725 = vmax.f32 %v719, 0.0
    %v726 = vpack.c.bf16 %v723, %v722
    %v727 = vpack.c.bf16 %v725, %v724
    %728 = vst [vmem:[#allocation2 + $0x60] sm:$0xff] %v726
    %729 = vst [vmem:[#allocation2 + $0x68] sm:$0xff] %v727
    %v730 = vld [vmem:[%s0 + $0x7] sm:$0x1]
    %v731 = vld [vmem:[%s0 + $0x8] sm:$0x1]
    %v732 = vld [vmem:[%s0 + $0x9] sm:$0x1]
    %v733 = vlaneseq
    %v734 = vshrl.u32 %v733, 7
    %v735 = vsub.s32 0, %v734
    %v736 = vrot.slane %v730, %v735
    %v737 = vmul.f32 %v736, %v54
    %v738 = vmul.f32 %v736, %v59
    %v739 = vlaneseq
    %v740 = vshrl.u32 %v739, 7
    %v741 = vsub.s32 0, %v740
    %v742 = vrot.slane %v731, %v741
    %v743 = vmul.f32 %v742, %v70
    %v744 = vmul.f32 %v742, %v75
    %v745 = vadd.f32 %v737, %v743
    %v746 = vadd.f32 %v738, %v744
    %v747 = vlaneseq
    %v748 = vshrl.u32 %v747, 7
    %v749 = vsub.s32 0, %v748
    %v750 = vrot.slane %v732, %v749
    %v751 = vmul.f32 %v750, %v88
    %v752 = vmul.f32 %v750, %v93
    %v753 = vadd.f32 %v745, %v751
    %v754 = vadd.f32 %v746, %v752
    %v755 = vadd.f32 %v753, %v102
    %v756 = vadd.f32 %v754, %v107
    %v757 = vmax.f32 %v755, 0.0
    %v758 = vmax.f32 %v756, 0.0
    %v759 = vpack.c.bf16 %v758, %v757
    %760 = vmatprep.subr.bf16.mxu0 0
    %761 = vmatpush1.bf16.msra.mxu0 %v759
    %762 = vmatprep.subr.bf16.mxu0 0
    %763 = vmatpush1.bf16.msra.mxu0 0
    %764 = vmatprep.subr.bf16.mxu0 0
    %765 = vmatpush1.bf16.msra.mxu0 0
    %766 = vmatprep.subr.bf16.mxu0 0
    %767 = vmatpush1.bf16.msra.mxu0 0
    %768 = vmatprep.subr.bf16.mxu0 0
    %769 = vmatpush1.bf16.msra.mxu0 0
    %770 = vmatprep.subr.bf16.mxu0 0
    %771 = vmatpush1.bf16.msra.mxu0 0
    %772 = vmatprep.subr.bf16.mxu0 0
    %773 = vmatpush1.bf16.msra.mxu0 0
    %774 = vmatprep.subr.bf16.mxu0 0
    %775 = vmatpush1.bf16.msra.mxu0 0
    %776 = vmatprep.subr.bf16.mxu0 0
    %777 = vmatpush1.bf16.msra.mxu0 0
    %778 = vmatprep.subr.bf16.mxu0 0
    %779 = vmatpush1.bf16.msra.mxu0 0
    %780 = vmatprep.subr.bf16.mxu0 0
    %781 = vmatpush1.bf16.msra.mxu0 0
    %782 = vmatprep.subr.bf16.mxu0 0
    %783 = vmatpush1.bf16.msra.mxu0 0
    %784 = vmatprep.subr.bf16.mxu0 0
    %785 = vmatpush1.bf16.msra.mxu0 0
    %786 = vmatprep.subr.bf16.mxu0 0
    %787 = vmatpush1.bf16.msra.mxu0 0
    %788 = vmatprep.subr.bf16.mxu0 0
    %789 = vmatpush1.bf16.msra.mxu0 0
    %790 = vmatprep.subr.bf16.mxu0 0
    %791 = vmatpush1.bf16.msra.mxu0 0
    %792 = vmatprep.mubr.bf16.mxu0 0
    %793 = vmatmul.mubr.bf16.gmra.mrb[0].mxu0 %v146
    %v794 = vpop.f32.mrb[0].mxu0
    %v795 = vadd.f32 %v117, %v794
    %v796 = vpop.f32.mrb[0].mxu0
    %v797 = vpop.f32.mrb[0].mxu0
    %v798 = vadd.f32 %v122, %v797
    %v799 = vpop.f32.mrb[0].mxu0
    %800 = vmatprep.mubr.bf16.mxu0 0
    %801 = vmatmul.mubr.bf16.gmra.mrb[0].mxu0 %v149
    %v802 = vpop.f32.mrb[0].mxu0
    %v803 = vadd.f32 %v127, %v802
    %v804 = vpop.f32.mrb[0].mxu0
    %v805 = vpop.f32.mrb[0].mxu0
    %v806 = vadd.f32 %v132, %v805
    %v807 = vpop.f32.mrb[0].mxu0
    %808 = vdwg.mxu0
    %v809 = vmax.f32 %v795, 0.0
    %v810 = vmax.f32 %v798, 0.0
    %v811 = vmax.f32 %v803, 0.0
    %v812 = vmax.f32 %v806, 0.0
    %v813 = vpack.c.bf16 %v810, %v809
    %v814 = vpack.c.bf16 %v812, %v811
    %815 = vst [vmem:[#allocation2 + $0x70] sm:$0xff] %v813
    %816 = vst [vmem:[#allocation2 + $0x78] sm:$0xff] %v814
    %v817 = vld [vmem:[%s0 + $0x8] sm:$0x1]
    %v818 = vld [vmem:[%s0 + $0x9] sm:$0x1]
    %v819 = vld [vmem:[%s0 + $0xa] sm:$0x1]
    %v820 = vlaneseq
    %v821 = vshrl.u32 %v820, 7
    %v822 = vsub.s32 0, %v821
    %v823 = vrot.slane %v817, %v822
    %v824 = vmul.f32 %v823, %v54
    %v825 = vmul.f32 %v823, %v59
    %v826 = vlaneseq
    %v827 = vshrl.u32 %v826, 7
    %v828 = vsub.s32 0, %v827
    %v829 = vrot.slane %v818, %v828
    %v830 = vmul.f32 %v829, %v70
    %v831 = vmul.f32 %v829, %v75
    %v832 = vadd.f32 %v824, %v830
    %v833 = vadd.f32 %v825, %v831
    %v834 = vlaneseq
    %v835 = vshrl.u32 %v834, 7
    %v836 = vsub.s32 0, %v835
    %v837 = vrot.slane %v819, %v836
    %v838 = vmul.f32 %v837, %v88
    %v839 = vmul.f32 %v837, %v93
    %v840 = vadd.f32 %v832, %v838
    %v841 = vadd.f32 %v833, %v839
    %v842 = vadd.f32 %v840, %v102
    %v843 = vadd.f32 %v841, %v107
    %v844 = vmax.f32 %v842, 0.0
    %v845 = vmax.f32 %v843, 0.0
    %v846 = vpack.c.bf16 %v845, %v844
    %847 = vmatprep.subr.bf16.mxu0 0
    %848 = vmatpush1.bf16.msra.mxu0 %v846
    %849 = vmatprep.subr.bf16.mxu0 0
    %850 = vmatpush1.bf16.msra.mxu0 0
    %851 = vmatprep.subr.bf16.mxu0 0
    %852 = vmatpush1.bf16.msra.mxu0 0
    %853 = vmatprep.subr.bf16.mxu0 0
    %854 = vmatpush1.bf16.msra.mxu0 0
    %855 = vmatprep.subr.bf16.mxu0 0
    %856 = vmatpush1.bf16.msra.mxu0 0
    %857 = vmatprep.subr.bf16.mxu0 0
    %858 = vmatpush1.bf16.msra.mxu0 0
    %859 = vmatprep.subr.bf16.mxu0 0
    %860 = vmatpush1.bf16.msra.mxu0 0
    %861 = vmatprep.subr.bf16.mxu0 0
    %862 = vmatpush1.bf16.msra.mxu0 0
    %863 = vmatprep.subr.bf16.mxu0 0
    %864 = vmatpush1.bf16.msra.mxu0 0
    %865 = vmatprep.subr.bf16.mxu0 0
    %866 = vmatpush1.bf16.msra.mxu0 0
    %867 = vmatprep.subr.bf16.mxu0 0
    %868 = vmatpush1.bf16.msra.mxu0 0
    %869 = vmatprep.subr.bf16.mxu0 0
    %870 = vmatpush1.bf16.msra.mxu0 0
    %871 = vmatprep.subr.bf16.mxu0 0
    %872 = vmatpush1.bf16.msra.mxu0 0
    %873 = vmatprep.subr.bf16.mxu0 0
    %874 = vmatpush1.bf16.msra.mxu0 0
    %875 = vmatprep.subr.bf16.mxu0 0
    %876 = vmatpush1.bf16.msra.mxu0 0
    %877 = vmatprep.subr.bf16.mxu0 0
    %878 = vmatpush1.bf16.msra.mxu0 0
    %879 = vmatprep.mubr.bf16.mxu0 0
    %880 = vmatmul.mubr.bf16.gmra.mrb[0].mxu0 %v146
    %v881 = vpop.f32.mrb[0].mxu0
    %v882 = vadd.f32 %v117, %v881
    %v883 = vpop.f32.mrb[0].mxu0
    %v884 = vpop.f32.mrb[0].mxu0
    %v885 = vadd.f32 %v122, %v884
    %v886 = vpop.f32.mrb[0].mxu0
    %887 = vmatprep.mubr.bf16.mxu0 0
    %888 = vmatmul.mubr.bf16.gmra.mrb[0].mxu0 %v149
    %v889 = vpop.f32.mrb[0].mxu0
    %v890 = vadd.f32 %v127, %v889
    %v891 = vpop.f32.mrb[0].mxu0
    %v892 = vpop.f32.mrb[0].mxu0
    %v893 = vadd.f32 %v132, %v892
    %v894 = vpop.f32.mrb[0].mxu0
    %895 = vdwg.mxu0
    %v896 = vmax.f32 %v882, 0.0
    %v897 = vmax.f32 %v885, 0.0
    %v898 = vmax.f32 %v890, 0.0
    %v899 = vmax.f32 %v893, 0.0
    %v900 = vpack.c.bf16 %v897, %v896
    %v901 = vpack.c.bf16 %v899, %v898
    %902 = vst [vmem:[#allocation2 + $0x80] sm:$0xff] %v900
    %903 = vst [vmem:[#allocation2 + $0x88] sm:$0xff] %v901
    %v904 = vld [vmem:[%s0 + $0x9] sm:$0x1]
    %v905 = vld [vmem:[%s0 + $0xa] sm:$0x1]
    %v906 = vld [vmem:[%s0 + $0xb] sm:$0x1]
    %v907 = vlaneseq
    %v908 = vshrl.u32 %v907, 7
    %v909 = vsub.s32 0, %v908
    %v910 = vrot.slane %v904, %v909
    %v911 = vmul.f32 %v910, %v54
    %v912 = vmul.f32 %v910, %v59
    %v913 = vlaneseq
    %v914 = vshrl.u32 %v913, 7
    %v915 = vsub.s32 0, %v914
    %v916 = vrot.slane %v905, %v915
    %v917 = vmul.f32 %v916, %v70
    %v918 = vmul.f32 %v916, %v75
    %v919 = vadd.f32 %v911, %v917
    %v920 = vadd.f32 %v912, %v918
    %v921 = vlaneseq
    %v922 = vshrl.u32 %v921, 7
    %v923 = vsub.s32 0, %v922
    %v924 = vrot.slane %v906, %v923
    %v925 = vmul.f32 %v924, %v88
    %v926 = vmul.f32 %v924, %v93
    %v927 = vadd.f32 %v919, %v925
    %v928 = vadd.f32 %v920, %v926
    %v929 = vadd.f32 %v927, %v102
    %v930 = vadd.f32 %v928, %v107
    %v931 = vmax.f32 %v929, 0.0
    %v932 = vmax.f32 %v930, 0.0
    %v933 = vpack.c.bf16 %v932, %v931
    %934 = vmatprep.subr.bf16.mxu0 0
    %935 = vmatpush1.bf16.msra.mxu0 %v933
    %936 = vmatprep.subr.bf16.mxu0 0
    %937 = vmatpush1.bf16.msra.mxu0 0
    %938 = vmatprep.subr.bf16.mxu0 0
    %939 = vmatpush1.bf16.msra.mxu0 0
    %940 = vmatprep.subr.bf16.mxu0 0
    %941 = vmatpush1.bf16.msra.mxu0 0
    %942 = vmatprep.subr.bf16.mxu0 0
    %943 = vmatpush1.bf16.msra.mxu0 0
    %944 = vmatprep.subr.bf16.mxu0 0
    %945 = vmatpush1.bf16.msra.mxu0 0
    %946 = vmatprep.subr.bf16.mxu0 0
    %947 = vmatpush1.bf16.msra.mxu0 0
    %948 = vmatprep.subr.bf16.mxu0 0
    %949 = vmatpush1.bf16.msra.mxu0 0
    %950 = vmatprep.subr.bf16.mxu0 0
    %951 = vmatpush1.bf16.msra.mxu0 0
    %952 = vmatprep.subr.bf16.mxu0 0
    %953 = vmatpush1.bf16.msra.mxu0 0
    %954 = vmatprep.subr.bf16.mxu0 0
    %955 = vmatpush1.bf16.msra.mxu0 0
    %956 = vmatprep.subr.bf16.mxu0 0
    %957 = vmatpush1.bf16.msra.mxu0 0
    %958 = vmatprep.subr.bf16.mxu0 0
    %959 = vmatpush1.bf16.msra.mxu0 0
    %960 = vmatprep.subr.bf16.mxu0 0
    %961 = vmatpush1.bf16.msra.mxu0 0
    %962 = vmatprep.subr.bf16.mxu0 0
    %963 = vmatpush1.bf16.msra.mxu0 0
    %964 = vmatprep.subr.bf16.mxu0 0
    %965 = vmatpush1.bf16.msra.mxu0 0
    %966 = vmatprep.mubr.bf16.mxu0 0
    %967 = vmatmul.mubr.bf16.gmra.mrb[0].mxu0 %v146
    %v968 = vpop.f32.mrb[0].mxu0
    %v969 = vadd.f32 %v117, %v968
    %v970 = vpop.f32.mrb[0].mxu0
    %v971 = vpop.f32.mrb[0].mxu0
    %v972 = vadd.f32 %v122, %v971
    %v973 = vpop.f32.mrb[0].mxu0
    %974 = vmatprep.mubr.bf16.mxu0 0
    %975 = vmatmul.mubr.bf16.gmra.mrb[0].mxu0 %v149
    %v976 = vpop.f32.mrb[0].mxu0
    %v977 = vadd.f32 %v127, %v976
    %v978 = vpop.f32.mrb[0].mxu0
    %v979 = vpop.f32.mrb[0].mxu0
    %v980 = vadd.f32 %v132, %v979
    %v981 = vpop.f32.mrb[0].mxu0
    %982 = vdwg.mxu0
    %v983 = vmax.f32 %v969, 0.0
    %v984 = vmax.f32 %v972, 0.0
    %v985 = vmax.f32 %v977, 0.0
    %v986 = vmax.f32 %v980, 0.0
    %v987 = vpack.c.bf16 %v984, %v983
    %v988 = vpack.c.bf16 %v986, %v985
    %989 = vst [vmem:[#allocation2 + $0x90] sm:$0xff] %v987
    %990 = vst [vmem:[#allocation2 + $0x98] sm:$0xff] %v988
    %v991 = vld [vmem:[%s0 + $0xa] sm:$0x1]
    %v992 = vld [vmem:[%s0 + $0xb] sm:$0x1]
    %v993 = vld [vmem:[%s0 + $0xc] sm:$0x1]
    %v994 = vlaneseq
    %v995 = vshrl.u32 %v994, 7
    %v996 = vsub.s32 0, %v995
    %v997 = vrot.slane %v991, %v996
    %v998 = vmul.f32 %v997, %v54
    %v999 = vmul.f32 %v997, %v59
    %v1000 = vlaneseq
    %v1001 = vshrl.u32 %v1000, 7
    %v1002 = vsub.s32 0, %v1001
    %v1003 = vrot.slane %v992, %v1002
    %v1004 = vmul.f32 %v1003, %v70
    %v1005 = vmul.f32 %v1003, %v75
    %v1006 = vadd.f32 %v998, %v1004
    %v1007 = vadd.f32 %v999, %v1005
    %v1008 = vlaneseq
    %v1009 = vshrl.u32 %v1008, 7
    %v1010 = vsub.s32 0, %v1009
    %v1011 = vrot.slane %v993, %v1010
    %v1012 = vmul.f32 %v1011, %v88
    %v1013 = vmul.f32 %v1011, %v93
    %v1014 = vadd.f32 %v1006, %v1012
    %v1015 = vadd.f32 %v1007, %v1013
    %v1016 = vadd.f32 %v1014, %v102
    %v1017 = vadd.f32 %v1015, %v107
    %v1018 = vmax.f32 %v1016, 0.0
    %v1019 = vmax.f32 %v1017, 0.0
    %v1020 = vpack.c.bf16 %v1019, %v1018
    %1021 = vmatprep.subr.bf16.mxu0 0
    %1022 = vmatpush1.bf16.msra.mxu0 %v1020
    %1023 = vmatprep.subr.bf16.mxu0 0
    %1024 = vmatpush1.bf16.msra.mxu0 0
    %1025 = vmatprep.subr.bf16.mxu0 0
    %1026 = vmatpush1.bf16.msra.mxu0 0
    %1027 = vmatprep.subr.bf16.mxu0 0
    %1028 = vmatpush1.bf16.msra.mxu0 0
    %1029 = vmatprep.subr.bf16.mxu0 0
    %1030 = vmatpush1.bf16.msra.mxu0 0
    %1031 = vmatprep.subr.bf16.mxu0 0
    %1032 = vmatpush1.bf16.msra.mxu0 0
    %1033 = vmatprep.subr.bf16.mxu0 0
    %1034 = vmatpush1.bf16.msra.mxu0 0
    %1035 = vmatprep.subr.bf16.mxu0 0
    %1036 = vmatpush1.bf16.msra.mxu0 0
    %1037 = vmatprep.subr.bf16.mxu0 0
    %1038 = vmatpush1.bf16.msra.mxu0 0
    %1039 = vmatprep.subr.bf16.mxu0 0
    %1040 = vmatpush1.bf16.msra.mxu0 0
    %1041 = vmatprep.subr.bf16.mxu0 0
    %1042 = vmatpush1.bf16.msra.mxu0 0
    %1043 = vmatprep.subr.bf16.mxu0 0
    %1044 = vmatpush1.bf16.msra.mxu0 0
    %1045 = vmatprep.subr.bf16.mxu0 0
    %1046 = vmatpush1.bf16.msra.mxu0 0
    %1047 = vmatprep.subr.bf16.mxu0 0
    %1048 = vmatpush1.bf16.msra.mxu0 0
    %1049 = vmatprep.subr.bf16.mxu0 0
    %1050 = vmatpush1.bf16.msra.mxu0 0
    %1051 = vmatprep.subr.bf16.mxu0 0
    %1052 = vmatpush1.bf16.msra.mxu0 0
    %1053 = vmatprep.mubr.bf16.mxu0 0
    %1054 = vmatmul.mubr.bf16.gmra.mrb[0].mxu0 %v146
    %v1055 = vpop.f32.mrb[0].mxu0
    %v1056 = vadd.f32 %v117, %v1055
    %v1057 = vpop.f32.mrb[0].mxu0
    %v1058 = vpop.f32.mrb[0].mxu0
    %v1059 = vadd.f32 %v122, %v1058
    %v1060 = vpop.f32.mrb[0].mxu0
    %1061 = vmatprep.mubr.bf16.mxu0 0
    %1062 = vmatmul.mubr.bf16.gmra.mrb[0].mxu0 %v149
    %v1063 = vpop.f32.mrb[0].mxu0
    %v1064 = vadd.f32 %v127, %v1063
    %v1065 = vpop.f32.mrb[0].mxu0
    %v1066 = vpop.f32.mrb[0].mxu0
    %v1067 = vadd.f32 %v132, %v1066
    %v1068 = vpop.f32.mrb[0].mxu0
    %1069 = vdwg.mxu0
    %v1070 = vmax.f32 %v1056, 0.0
    %v1071 = vmax.f32 %v1059, 0.0
    %v1072 = vmax.f32 %v1064, 0.0
    %v1073 = vmax.f32 %v1067, 0.0
    %v1074 = vpack.c.bf16 %v1071, %v1070
    %v1075 = vpack.c.bf16 %v1073, %v1072
    %1076 = vst [vmem:[#allocation2 + $0xa0] sm:$0xff] %v1074
    %1077 = vst [vmem:[#allocation2 + $0xa8] sm:$0xff] %v1075
    %v1078 = vld [vmem:[%s0 + $0xb] sm:$0x1]
    %v1079 = vld [vmem:[%s0 + $0xc] sm:$0x1]
    %v1080 = vld [vmem:[%s0 + $0xd] sm:$0x1]
    %v1081 = vlaneseq
    %v1082 = vshrl.u32 %v1081, 7
    %v1083 = vsub.s32 0, %v1082
    %v1084 = vrot.slane %v1078, %v1083
    %v1085 = vmul.f32 %v1084, %v54
    %v1086 = vmul.f32 %v1084, %v59
    %v1087 = vlaneseq
    %v1088 = vshrl.u32 %v1087, 7
    %v1089 = vsub.s32 0, %v1088
    %v1090 = vrot.slane %v1079, %v1089
    %v1091 = vmul.f32 %v1090, %v70
    %v1092 = vmul.f32 %v1090, %v75
    %v1093 = vadd.f32 %v1085, %v1091
    %v1094 = vadd.f32 %v1086, %v1092
    %v1095 = vlaneseq
    %v1096 = vshrl.u32 %v1095, 7
    %v1097 = vsub.s32 0, %v1096
    %v1098 = vrot.slane %v1080, %v1097
    %v1099 = vmul.f32 %v1098, %v88
    %v1100 = vmul.f32 %v1098, %v93
    %v1101 = vadd.f32 %v1093, %v1099
    %v1102 = vadd.f32 %v1094, %v1100
    %v1103 = vadd.f32 %v1101, %v102
    %v1104 = vadd.f32 %v1102, %v107
    %v1105 = vmax.f32 %v1103, 0.0
    %v1106 = vmax.f32 %v1104, 0.0
    %v1107 = vpack.c.bf16 %v1106, %v1105
    %1108 = vmatprep.subr.bf16.mxu0 0
    %1109 = vmatpush1.bf16.msra.mxu0 %v1107
    %1110 = vmatprep.subr.bf16.mxu0 0
    %1111 = vmatpush1.bf16.msra.mxu0 0
    %1112 = vmatprep.subr.bf16.mxu0 0
    %1113 = vmatpush1.bf16.msra.mxu0 0
    %1114 = vmatprep.subr.bf16.mxu0 0
    %1115 = vmatpush1.bf16.msra.mxu0 0
    %1116 = vmatprep.subr.bf16.mxu0 0
    %1117 = vmatpush1.bf16.msra.mxu0 0
    %1118 = vmatprep.subr.bf16.mxu0 0
    %1119 = vmatpush1.bf16.msra.mxu0 0
    %1120 = vmatprep.subr.bf16.mxu0 0
    %1121 = vmatpush1.bf16.msra.mxu0 0
    %1122 = vmatprep.subr.bf16.mxu0 0
    %1123 = vmatpush1.bf16.msra.mxu0 0
    %1124 = vmatprep.subr.bf16.mxu0 0
    %1125 = vmatpush1.bf16.msra.mxu0 0
    %1126 = vmatprep.subr.bf16.mxu0 0
    %1127 = vmatpush1.bf16.msra.mxu0 0
    %1128 = vmatprep.subr.bf16.mxu0 0
    %1129 = vmatpush1.bf16.msra.mxu0 0
    %1130 = vmatprep.subr.bf16.mxu0 0
    %1131 = vmatpush1.bf16.msra.mxu0 0
    %1132 = vmatprep.subr.bf16.mxu0 0
    %1133 = vmatpush1.bf16.msra.mxu0 0
    %1134 = vmatprep.subr.bf16.mxu0 0
    %1135 = vmatpush1.bf16.msra.mxu0 0
    %1136 = vmatprep.subr.bf16.mxu0 0
    %1137 = vmatpush1.bf16.msra.mxu0 0
    %1138 = vmatprep.subr.bf16.mxu0 0
    %1139 = vmatpush1.bf16.msra.mxu0 0
    %1140 = vmatprep.mubr.bf16.mxu0 0
    %1141 = vmatmul.mubr.bf16.gmra.mrb[0].mxu0 %v146
    %v1142 = vpop.f32.mrb[0].mxu0
    %v1143 = vadd.f32 %v117, %v1142
    %v1144 = vpop.f32.mrb[0].mxu0
    %v1145 = vpop.f32.mrb[0].mxu0
    %v1146 = vadd.f32 %v122, %v1145
    %v1147 = vpop.f32.mrb[0].mxu0
    %1148 = vmatprep.mubr.bf16.mxu0 0
    %1149 = vmatmul.mubr.bf16.gmra.mrb[0].mxu0 %v149
    %v1150 = vpop.f32.mrb[0].mxu0
    %v1151 = vadd.f32 %v127, %v1150
    %v1152 = vpop.f32.mrb[0].mxu0
    %v1153 = vpop.f32.mrb[0].mxu0
    %v1154 = vadd.f32 %v132, %v1153
    %v1155 = vpop.f32.mrb[0].mxu0
    %1156 = vdwg.mxu0
    %v1157 = vmax.f32 %v1143, 0.0
    %v1158 = vmax.f32 %v1146, 0.0
    %v1159 = vmax.f32 %v1151, 0.0
    %v1160 = vmax.f32 %v1154, 0.0
    %v1161 = vpack.c.bf16 %v1158, %v1157
    %v1162 = vpack.c.bf16 %v1160, %v1159
    %1163 = vst [vmem:[#allocation2 + $0xb0] sm:$0xff] %v1161
    %1164 = vst [vmem:[#allocation2 + $0xb8] sm:$0xff] %v1162
    %v1165 = vld [vmem:[%s0 + $0xc] sm:$0x1]
    %v1166 = vld [vmem:[%s0 + $0xd] sm:$0x1]
    %v1167 = vld [vmem:[%s0 + $0xe] sm:$0x1]
    %v1168 = vlaneseq
    %v1169 = vshrl.u32 %v1168, 7
    %v1170 = vsub.s32 0, %v1169
    %v1171 = vrot.slane %v1165, %v1170
    %v1172 = vmul.f32 %v1171, %v54
    %v1173 = vmul.f32 %v1171, %v59
    %v1174 = vlaneseq
    %v1175 = vshrl.u32 %v1174, 7
    %v1176 = vsub.s32 0, %v1175
    %v1177 = vrot.slane %v1166, %v1176
    %v1178 = vmul.f32 %v1177, %v70
    %v1179 = vmul.f32 %v1177, %v75
    %v1180 = vadd.f32 %v1172, %v1178
    %v1181 = vadd.f32 %v1173, %v1179
    %v1182 = vlaneseq
    %v1183 = vshrl.u32 %v1182, 7
    %v1184 = vsub.s32 0, %v1183
    %v1185 = vrot.slane %v1167, %v1184
    %v1186 = vmul.f32 %v1185, %v88
    %v1187 = vmul.f32 %v1185, %v93
    %v1188 = vadd.f32 %v1180, %v1186
    %v1189 = vadd.f32 %v1181, %v1187
    %v1190 = vadd.f32 %v1188, %v102
    %v1191 = vadd.f32 %v1189, %v107
    %v1192 = vmax.f32 %v1190, 0.0
    %v1193 = vmax.f32 %v1191, 0.0
    %v1194 = vpack.c.bf16 %v1193, %v1192
    %1195 = vmatprep.subr.bf16.mxu0 0
    %1196 = vmatpush1.bf16.msra.mxu0 %v1194
    %1197 = vmatprep.subr.bf16.mxu0 0
    %1198 = vmatpush1.bf16.msra.mxu0 0
    %1199 = vmatprep.subr.bf16.mxu0 0
    %1200 = vmatpush1.bf16.msra.mxu0 0
    %1201 = vmatprep.subr.bf16.mxu0 0
    %1202 = vmatpush1.bf16.msra.mxu0 0
    %1203 = vmatprep.subr.bf16.mxu0 0
    %1204 = vmatpush1.bf16.msra.mxu0 0
    %1205 = vmatprep.subr.bf16.mxu0 0
    %1206 = vmatpush1.bf16.msra.mxu0 0
    %1207 = vmatprep.subr.bf16.mxu0 0
    %1208 = vmatpush1.bf16.msra.mxu0 0
    %1209 = vmatprep.subr.bf16.mxu0 0
    %1210 = vmatpush1.bf16.msra.mxu0 0
    %1211 = vmatprep.subr.bf16.mxu0 0
    %1212 = vmatpush1.bf16.msra.mxu0 0
    %1213 = vmatprep.subr.bf16.mxu0 0
    %1214 = vmatpush1.bf16.msra.mxu0 0
    %1215 = vmatprep.subr.bf16.mxu0 0
    %1216 = vmatpush1.bf16.msra.mxu0 0
    %1217 = vmatprep.subr.bf16.mxu0 0
    %1218 = vmatpush1.bf16.msra.mxu0 0
    %1219 = vmatprep.subr.bf16.mxu0 0
    %1220 = vmatpush1.bf16.msra.mxu0 0
    %1221 = vmatprep.subr.bf16.mxu0 0
    %1222 = vmatpush1.bf16.msra.mxu0 0
    %1223 = vmatprep.subr.bf16.mxu0 0
    %1224 = vmatpush1.bf16.msra.mxu0 0
    %1225 = vmatprep.subr.bf16.mxu0 0
    %1226 = vmatpush1.bf16.msra.mxu0 0
    %1227 = vmatprep.mubr.bf16.mxu0 0
    %1228 = vmatmul.mubr.bf16.gmra.mrb[0].mxu0 %v146
    %v1229 = vpop.f32.mrb[0].mxu0
    %v1230 = vadd.f32 %v117, %v1229
    %v1231 = vpop.f32.mrb[0].mxu0
    %v1232 = vpop.f32.mrb[0].mxu0
    %v1233 = vadd.f32 %v122, %v1232
    %v1234 = vpop.f32.mrb[0].mxu0
    %1235 = vmatprep.mubr.bf16.mxu0 0
    %1236 = vmatmul.mubr.bf16.gmra.mrb[0].mxu0 %v149
    %v1237 = vpop.f32.mrb[0].mxu0
    %v1238 = vadd.f32 %v127, %v1237
    %v1239 = vpop.f32.mrb[0].mxu0
    %v1240 = vpop.f32.mrb[0].mxu0
    %v1241 = vadd.f32 %v132, %v1240
    %v1242 = vpop.f32.mrb[0].mxu0
    %1243 = vdwg.mxu0
    %v1244 = vmax.f32 %v1230, 0.0
    %v1245 = vmax.f32 %v1233, 0.0
    %v1246 = vmax.f32 %v1238, 0.0
    %v1247 = vmax.f32 %v1241, 0.0
    %v1248 = vpack.c.bf16 %v1245, %v1244
    %v1249 = vpack.c.bf16 %v1247, %v1246
    %1250 = vst [vmem:[#allocation2 + $0xc0] sm:$0xff] %v1248
    %1251 = vst [vmem:[#allocation2 + $0xc8] sm:$0xff] %v1249
    %v1252 = vld [vmem:[%s0 + $0xd] sm:$0x1]
    %v1253 = vld [vmem:[%s0 + $0xe] sm:$0x1]
    %v1254 = vld [vmem:[%s0 + $0xf] sm:$0x1]
    %v1255 = vlaneseq
    %v1256 = vshrl.u32 %v1255, 7
    %v1257 = vsub.s32 0, %v1256
    %v1258 = vrot.slane %v1252, %v1257
    %v1259 = vmul.f32 %v1258, %v54
    %v1260 = vmul.f32 %v1258, %v59
    %v1261 = vlaneseq
    %v1262 = vshrl.u32 %v1261, 7
    %v1263 = vsub.s32 0, %v1262
    %v1264 = vrot.slane %v1253, %v1263
    %v1265 = vmul.f32 %v1264, %v70
    %v1266 = vmul.f32 %v1264, %v75
    %v1267 = vadd.f32 %v1259, %v1265
    %v1268 = vadd.f32 %v1260, %v1266
    %v1269 = vlaneseq
    %v1270 = vshrl.u32 %v1269, 7
    %v1271 = vsub.s32 0, %v1270
    %v1272 = vrot.slane %v1254, %v1271
    %v1273 = vmul.f32 %v1272, %v88
    %v1274 = vmul.f32 %v1272, %v93
    %v1275 = vadd.f32 %v1267, %v1273
    %v1276 = vadd.f32 %v1268, %v1274
    %v1277 = vadd.f32 %v1275, %v102
    %v1278 = vadd.f32 %v1276, %v107
    %v1279 = vmax.f32 %v1277, 0.0
    %v1280 = vmax.f32 %v1278, 0.0
    %v1281 = vpack.c.bf16 %v1280, %v1279
    %1282 = vmatprep.subr.bf16.mxu0 0
    %1283 = vmatpush1.bf16.msra.mxu0 %v1281
    %1284 = vmatprep.subr.bf16.mxu0 0
    %1285 = vmatpush1.bf16.msra.mxu0 0
    %1286 = vmatprep.subr.bf16.mxu0 0
    %1287 = vmatpush1.bf16.msra.mxu0 0
    %1288 = vmatprep.subr.bf16.mxu0 0
    %1289 = vmatpush1.bf16.msra.mxu0 0
    %1290 = vmatprep.subr.bf16.mxu0 0
    %1291 = vmatpush1.bf16.msra.mxu0 0
    %1292 = vmatprep.subr.bf16.mxu0 0
    %1293 = vmatpush1.bf16.msra.mxu0 0
    %1294 = vmatprep.subr.bf16.mxu0 0
    %1295 = vmatpush1.bf16.msra.mxu0 0
    %1296 = vmatprep.subr.bf16.mxu0 0
    %1297 = vmatpush1.bf16.msra.mxu0 0
    %1298 = vmatprep.subr.bf16.mxu0 0
    %1299 = vmatpush1.bf16.msra.mxu0 0
    %1300 = vmatprep.subr.bf16.mxu0 0
    %1301 = vmatpush1.bf16.msra.mxu0 0
    %1302 = vmatprep.subr.bf16.mxu0 0
    %1303 = vmatpush1.bf16.msra.mxu0 0
    %1304 = vmatprep.subr.bf16.mxu0 0
    %1305 = vmatpush1.bf16.msra.mxu0 0
    %1306 = vmatprep.subr.bf16.mxu0 0
    %1307 = vmatpush1.bf16.msra.mxu0 0
    %1308 = vmatprep.subr.bf16.mxu0 0
    %1309 = vmatpush1.bf16.msra.mxu0 0
    %1310 = vmatprep.subr.bf16.mxu0 0
    %1311 = vmatpush1.bf16.msra.mxu0 0
    %1312 = vmatprep.subr.bf16.mxu0 0
    %1313 = vmatpush1.bf16.msra.mxu0 0
    %1314 = vmatprep.mubr.bf16.mxu0 0
    %1315 = vmatmul.mubr.bf16.gmra.mrb[0].mxu0 %v146
    %v1316 = vpop.f32.mrb[0].mxu0
    %v1317 = vadd.f32 %v117, %v1316
    %v1318 = vpop.f32.mrb[0].mxu0
    %v1319 = vpop.f32.mrb[0].mxu0
    %v1320 = vadd.f32 %v122, %v1319
    %v1321 = vpop.f32.mrb[0].mxu0
    %1322 = vmatprep.mubr.bf16.mxu0 0
    %1323 = vmatmul.mubr.bf16.gmra.mrb[0].mxu0 %v149
    %v1324 = vpop.f32.mrb[0].mxu0
    %v1325 = vadd.f32 %v127, %v1324
    %v1326 = vpop.f32.mrb[0].mxu0
    %v1327 = vpop.f32.mrb[0].mxu0
    %v1328 = vadd.f32 %v132, %v1327
    %v1329 = vpop.f32.mrb[0].mxu0
    %1330 = vdwg.mxu0
    %v1331 = vmax.f32 %v1317, 0.0
    %v1332 = vmax.f32 %v1320, 0.0
    %v1333 = vmax.f32 %v1325, 0.0
    %v1334 = vmax.f32 %v1328, 0.0
    %v1335 = vpack.c.bf16 %v1332, %v1331
    %v1336 = vpack.c.bf16 %v1334, %v1333
    %1337 = vst [vmem:[#allocation2 + $0xd0] sm:$0xff] %v1335
    %1338 = vst [vmem:[#allocation2 + $0xd8] sm:$0xff] %v1336
    %v1339 = vld [vmem:[%s0 + $0xe] sm:$0x1]
    %v1340 = vld [vmem:[%s0 + $0xf] sm:$0x1]
    %v1341 = vld [vmem:[%s0 + $0x10] sm:$0x1]
    %v1342 = vlaneseq
    %v1343 = vshrl.u32 %v1342, 7
    %v1344 = vsub.s32 0, %v1343
    %v1345 = vrot.slane %v1339, %v1344
    %v1346 = vmul.f32 %v1345, %v54
    %v1347 = vmul.f32 %v1345, %v59
    %v1348 = vlaneseq
    %v1349 = vshrl.u32 %v1348, 7
    %v1350 = vsub.s32 0, %v1349
    %v1351 = vrot.slane %v1340, %v1350
    %v1352 = vmul.f32 %v1351, %v70
    %v1353 = vmul.f32 %v1351, %v75
    %v1354 = vadd.f32 %v1346, %v1352
    %v1355 = vadd.f32 %v1347, %v1353
    %v1356 = vlaneseq
    %v1357 = vshrl.u32 %v1356, 7
    %v1358 = vsub.s32 0, %v1357
    %v1359 = vrot.slane %v1341, %v1358
    %v1360 = vmul.f32 %v1359, %v88
    %v1361 = vmul.f32 %v1359, %v93
    %v1362 = vadd.f32 %v1354, %v1360
    %v1363 = vadd.f32 %v1355, %v1361
    %v1364 = vadd.f32 %v1362, %v102
    %v1365 = vadd.f32 %v1363, %v107
    %v1366 = vmax.f32 %v1364, 0.0
    %v1367 = vmax.f32 %v1365, 0.0
    %v1368 = vpack.c.bf16 %v1367, %v1366
    %1369 = vmatprep.subr.bf16.mxu0 0
    %1370 = vmatpush1.bf16.msra.mxu0 %v1368
    %1371 = vmatprep.subr.bf16.mxu0 0
    %1372 = vmatpush1.bf16.msra.mxu0 0
    %1373 = vmatprep.subr.bf16.mxu0 0
    %1374 = vmatpush1.bf16.msra.mxu0 0
    %1375 = vmatprep.subr.bf16.mxu0 0
    %1376 = vmatpush1.bf16.msra.mxu0 0
    %1377 = vmatprep.subr.bf16.mxu0 0
    %1378 = vmatpush1.bf16.msra.mxu0 0
    %1379 = vmatprep.subr.bf16.mxu0 0
    %1380 = vmatpush1.bf16.msra.mxu0 0
    %1381 = vmatprep.subr.bf16.mxu0 0
    %1382 = vmatpush1.bf16.msra.mxu0 0
    %1383 = vmatprep.subr.bf16.mxu0 0
    %1384 = vmatpush1.bf16.msra.mxu0 0
    %1385 = vmatprep.subr.bf16.mxu0 0
    %1386 = vmatpush1.bf16.msra.mxu0 0
    %1387 = vmatprep.subr.bf16.mxu0 0
    %1388 = vmatpush1.bf16.msra.mxu0 0
    %1389 = vmatprep.subr.bf16.mxu0 0
    %1390 = vmatpush1.bf16.msra.mxu0 0
    %1391 = vmatprep.subr.bf16.mxu0 0
    %1392 = vmatpush1.bf16.msra.mxu0 0
    %1393 = vmatprep.subr.bf16.mxu0 0
    %1394 = vmatpush1.bf16.msra.mxu0 0
    %1395 = vmatprep.subr.bf16.mxu0 0
    %1396 = vmatpush1.bf16.msra.mxu0 0
    %1397 = vmatprep.subr.bf16.mxu0 0
    %1398 = vmatpush1.bf16.msra.mxu0 0
    %1399 = vmatprep.subr.bf16.mxu0 0
    %1400 = vmatpush1.bf16.msra.mxu0 0
    %1401 = vmatprep.mubr.bf16.mxu0 0
    %1402 = vmatmul.mubr.bf16.gmra.mrb[0].mxu0 %v146
    %v1403 = vpop.f32.mrb[0].mxu0
    %v1404 = vadd.f32 %v117, %v1403
    %v1405 = vpop.f32.mrb[0].mxu0
    %v1406 = vpop.f32.mrb[0].mxu0
    %v1407 = vadd.f32 %v122, %v1406
    %v1408 = vpop.f32.mrb[0].mxu0
    %1409 = vmatprep.mubr.bf16.mxu0 0
    %1410 = vmatmul.mubr.bf16.gmra.mrb[0].mxu0 %v149
    %v1411 = vpop.f32.mrb[0].mxu0
    %v1412 = vadd.f32 %v127, %v1411
    %v1413 = vpop.f32.mrb[0].mxu0
    %v1414 = vpop.f32.mrb[0].mxu0
    %v1415 = vadd.f32 %v132, %v1414
    %v1416 = vpop.f32.mrb[0].mxu0
    %1417 = vdwg.mxu0
    %v1418 = vmax.f32 %v1404, 0.0
    %v1419 = vmax.f32 %v1407, 0.0
    %v1420 = vmax.f32 %v1412, 0.0
    %v1421 = vmax.f32 %v1415, 0.0
    %v1422 = vpack.c.bf16 %v1419, %v1418
    %v1423 = vpack.c.bf16 %v1421, %v1420
    %1424 = vst [vmem:[#allocation2 + $0xe0] sm:$0xff] %v1422
    %1425 = vst [vmem:[#allocation2 + $0xe8] sm:$0xff] %v1423
    %v1426 = vld [vmem:[%s0 + $0xf] sm:$0x1]
    %v1427 = vld [vmem:[%s0 + $0x10] sm:$0x1]
    %v1428 = vld [vmem:[%s0 + $0x11] sm:$0x1]
    %v1429 = vlaneseq
    %v1430 = vshrl.u32 %v1429, 7
    %v1431 = vsub.s32 0, %v1430
    %v1432 = vrot.slane %v1426, %v1431
    %v1433 = vmul.f32 %v1432, %v54
    %v1434 = vmul.f32 %v1432, %v59
    %v1435 = vlaneseq
    %v1436 = vshrl.u32 %v1435, 7
    %v1437 = vsub.s32 0, %v1436
    %v1438 = vrot.slane %v1427, %v1437
    %v1439 = vmul.f32 %v1438, %v70
    %v1440 = vmul.f32 %v1438, %v75
    %v1441 = vadd.f32 %v1433, %v1439
    %v1442 = vadd.f32 %v1434, %v1440
    %v1443 = vlaneseq
    %v1444 = vshrl.u32 %v1443, 7
    %v1445 = vsub.s32 0, %v1444
    %v1446 = vrot.slane %v1428, %v1445
    %v1447 = vmul.f32 %v1446, %v88
    %v1448 = vmul.f32 %v1446, %v93
    %v1449 = vadd.f32 %v1441, %v1447
    %v1450 = vadd.f32 %v1442, %v1448
    %v1451 = vadd.f32 %v1449, %v102
    %v1452 = vadd.f32 %v1450, %v107
    %v1453 = vmax.f32 %v1451, 0.0
    %v1454 = vmax.f32 %v1452, 0.0
    %v1455 = vpack.c.bf16 %v1454, %v1453
    %1456 = vmatprep.subr.bf16.mxu0 0
    %1457 = vmatpush1.bf16.msra.mxu0 %v1455
    %1458 = vmatprep.subr.bf16.mxu0 0
    %1459 = vmatpush1.bf16.msra.mxu0 0
    %1460 = vmatprep.subr.bf16.mxu0 0
    %1461 = vmatpush1.bf16.msra.mxu0 0
    %1462 = vmatprep.subr.bf16.mxu0 0
    %1463 = vmatpush1.bf16.msra.mxu0 0
    %1464 = vmatprep.subr.bf16.mxu0 0
    %1465 = vmatpush1.bf16.msra.mxu0 0
    %1466 = vmatprep.subr.bf16.mxu0 0
    %1467 = vmatpush1.bf16.msra.mxu0 0
    %1468 = vmatprep.subr.bf16.mxu0 0
    %1469 = vmatpush1.bf16.msra.mxu0 0
    %1470 = vmatprep.subr.bf16.mxu0 0
    %1471 = vmatpush1.bf16.msra.mxu0 0
    %1472 = vmatprep.subr.bf16.mxu0 0
    %1473 = vmatpush1.bf16.msra.mxu0 0
    %1474 = vmatprep.subr.bf16.mxu0 0
    %1475 = vmatpush1.bf16.msra.mxu0 0
    %1476 = vmatprep.subr.bf16.mxu0 0
    %1477 = vmatpush1.bf16.msra.mxu0 0
    %1478 = vmatprep.subr.bf16.mxu0 0
    %1479 = vmatpush1.bf16.msra.mxu0 0
    %1480 = vmatprep.subr.bf16.mxu0 0
    %1481 = vmatpush1.bf16.msra.mxu0 0
    %1482 = vmatprep.subr.bf16.mxu0 0
    %1483 = vmatpush1.bf16.msra.mxu0 0
    %1484 = vmatprep.subr.bf16.mxu0 0
    %1485 = vmatpush1.bf16.msra.mxu0 0
    %1486 = vmatprep.subr.bf16.mxu0 0
    %1487 = vmatpush1.bf16.msra.mxu0 0
    %1488 = vmatprep.mubr.bf16.mxu0 0
    %1489 = vmatmul.mubr.bf16.gmra.mrb[0].mxu0 %v146
    %v1490 = vpop.f32.mrb[0].mxu0
    %v1491 = vadd.f32 %v117, %v1490
    %v1492 = vpop.f32.mrb[0].mxu0
    %v1493 = vpop.f32.mrb[0].mxu0
    %v1494 = vadd.f32 %v122, %v1493
    %v1495 = vpop.f32.mrb[0].mxu0
    %1496 = vmatprep.mubr.bf16.mxu0 0
    %1497 = vmatmul.mubr.bf16.gmra.mrb[0].mxu0 %v149
    %v1498 = vpop.f32.mrb[0].mxu0
    %v1499 = vadd.f32 %v127, %v1498
    %v1500 = vpop.f32.mrb[0].mxu0
    %v1501 = vpop.f32.mrb[0].mxu0
    %v1502 = vadd.f32 %v132, %v1501
    %v1503 = vpop.f32.mrb[0].mxu0
    %1504 = vdwg.mxu0
    %v1505 = vmax.f32 %v1491, 0.0
    %v1506 = vmax.f32 %v1494, 0.0
    %v1507 = vmax.f32 %v1499, 0.0
    %v1508 = vmax.f32 %v1502, 0.0
    %v1509 = vpack.c.bf16 %v1506, %v1505
    %v1510 = vpack.c.bf16 %v1508, %v1507
    %1511 = vst [vmem:[#allocation2 + $0xf0] sm:$0xff] %v1509
    %1512 = vst [vmem:[#allocation2 + $0xf8] sm:$0xff] %v1510
    %v1513 = vld [vmem:[%s0 + $0x10] sm:$0x1]
    %v1514 = vld [vmem:[%s0 + $0x11] sm:$0x1]
    %v1515 = vld [vmem:[%s0 + $0x12] sm:$0x1]
    %v1516 = vlaneseq
    %v1517 = vshrl.u32 %v1516, 7
    %v1518 = vsub.s32 0, %v1517
    %v1519 = vrot.slane %v1513, %v1518
    %v1520 = vmul.f32 %v1519, %v54
    %v1521 = vmul.f32 %v1519, %v59
    %v1522 = vlaneseq
    %v1523 = vshrl.u32 %v1522, 7
    %v1524 = vsub.s32 0, %v1523
    %v1525 = vrot.slane %v1514, %v1524
    %v1526 = vmul.f32 %v1525, %v70
    %v1527 = vmul.f32 %v1525, %v75
    %v1528 = vadd.f32 %v1520, %v1526
    %v1529 = vadd.f32 %v1521, %v1527
    %v1530 = vlaneseq
    %v1531 = vshrl.u32 %v1530, 7
    %v1532 = vsub.s32 0, %v1531
    %v1533 = vrot.slane %v1515, %v1532
    %v1534 = vmul.f32 %v1533, %v88
    %v1535 = vmul.f32 %v1533, %v93
    %v1536 = vadd.f32 %v1528, %v1534
    %v1537 = vadd.f32 %v1529, %v1535
    %v1538 = vadd.f32 %v1536, %v102
    %v1539 = vadd.f32 %v1537, %v107
    %v1540 = vmax.f32 %v1538, 0.0
    %v1541 = vmax.f32 %v1539, 0.0
    %v1542 = vpack.c.bf16 %v1541, %v1540
    %1543 = vmatprep.subr.bf16.mxu0 0
    %1544 = vmatpush1.bf16.msra.mxu0 %v1542
    %1545 = vmatprep.subr.bf16.mxu0 0
    %1546 = vmatpush1.bf16.msra.mxu0 0
    %1547 = vmatprep.subr.bf16.mxu0 0
    %1548 = vmatpush1.bf16.msra.mxu0 0
    %1549 = vmatprep.subr.bf16.mxu0 0
    %1550 = vmatpush1.bf16.msra.mxu0 0
    %1551 = vmatprep.subr.bf16.mxu0 0
    %1552 = vmatpush1.bf16.msra.mxu0 0
    %1553 = vmatprep.subr.bf16.mxu0 0
    %1554 = vmatpush1.bf16.msra.mxu0 0
    %1555 = vmatprep.subr.bf16.mxu0 0
    %1556 = vmatpush1.bf16.msra.mxu0 0
    %1557 = vmatprep.subr.bf16.mxu0 0
    %1558 = vmatpush1.bf16.msra.mxu0 0
    %1559 = vmatprep.subr.bf16.mxu0 0
    %1560 = vmatpush1.bf16.msra.mxu0 0
    %1561 = vmatprep.subr.bf16.mxu0 0
    %1562 = vmatpush1.bf16.msra.mxu0 0
    %1563 = vmatprep.subr.bf16.mxu0 0
    %1564 = vmatpush1.bf16.msra.mxu0 0
    %1565 = vmatprep.subr.bf16.mxu0 0
    %1566 = vmatpush1.bf16.msra.mxu0 0
    %1567 = vmatprep.subr.bf16.mxu0 0
    %1568 = vmatpush1.bf16.msra.mxu0 0
    %1569 = vmatprep.subr.bf16.mxu0 0
    %1570 = vmatpush1.bf16.msra.mxu0 0
    %1571 = vmatprep.subr.bf16.mxu0 0
    %1572 = vmatpush1.bf16.msra.mxu0 0
    %1573 = vmatprep.subr.bf16.mxu0 0
    %1574 = vmatpush1.bf16.msra.mxu0 0
    %1575 = vmatprep.mubr.bf16.mxu0 0
    %1576 = vmatmul.mubr.bf16.gmra.mrb[0].mxu0 %v146
    %v1577 = vpop.f32.mrb[0].mxu0
    %v1578 = vadd.f32 %v117, %v1577
    %v1579 = vpop.f32.mrb[0].mxu0
    %v1580 = vpop.f32.mrb[0].mxu0
    %v1581 = vadd.f32 %v122, %v1580
    %v1582 = vpop.f32.mrb[0].mxu0
    %1583 = vmatprep.mubr.bf16.mxu0 0
    %1584 = vmatmul.mubr.bf16.gmra.mrb[0].mxu0 %v149
    %v1585 = vpop.f32.mrb[0].mxu0
    %v1586 = vadd.f32 %v127, %v1585
    %v1587 = vpop.f32.mrb[0].mxu0
    %v1588 = vpop.f32.mrb[0].mxu0
    %v1589 = vadd.f32 %v132, %v1588
    %v1590 = vpop.f32.mrb[0].mxu0
    %1591 = vdwg.mxu0
    %v1592 = vmax.f32 %v1578, 0.0
    %v1593 = vmax.f32 %v1581, 0.0
    %v1594 = vmax.f32 %v1586, 0.0
    %v1595 = vmax.f32 %v1589, 0.0
    %v1596 = vpack.c.bf16 %v1593, %v1592
    %v1597 = vpack.c.bf16 %v1595, %v1594
    %1598 = vst [vmem:[#allocation2 + $0x100] sm:$0xff] %v1596
    %1599 = vst [vmem:[#allocation2 + $0x108] sm:$0xff] %v1597
    %v1600 = vld [vmem:[%s0 + $0x11] sm:$0x1]
    %v1601 = vld [vmem:[%s0 + $0x12] sm:$0x1]
    %v1602 = vld [vmem:[%s0 + $0x13] sm:$0x1]
    %v1603 = vlaneseq
    %v1604 = vshrl.u32 %v1603, 7
    %v1605 = vsub.s32 0, %v1604
    %v1606 = vrot.slane %v1600, %v1605
    %v1607 = vmul.f32 %v1606, %v54
    %v1608 = vmul.f32 %v1606, %v59
    %v1609 = vlaneseq
    %v1610 = vshrl.u32 %v1609, 7
    %v1611 = vsub.s32 0, %v1610
    %v1612 = vrot.slane %v1601, %v1611
    %v1613 = vmul.f32 %v1612, %v70
    %v1614 = vmul.f32 %v1612, %v75
    %v1615 = vadd.f32 %v1607, %v1613
    %v1616 = vadd.f32 %v1608, %v1614
    %v1617 = vlaneseq
    %v1618 = vshrl.u32 %v1617, 7
    %v1619 = vsub.s32 0, %v1618
    %v1620 = vrot.slane %v1602, %v1619
    %v1621 = vmul.f32 %v1620, %v88
    %v1622 = vmul.f32 %v1620, %v93
    %v1623 = vadd.f32 %v1615, %v1621
    %v1624 = vadd.f32 %v1616, %v1622
    %v1625 = vadd.f32 %v1623, %v102
    %v1626 = vadd.f32 %v1624, %v107
    %v1627 = vmax.f32 %v1625, 0.0
    %v1628 = vmax.f32 %v1626, 0.0
    %v1629 = vpack.c.bf16 %v1628, %v1627
    %1630 = vmatprep.subr.bf16.mxu0 0
    %1631 = vmatpush1.bf16.msra.mxu0 %v1629
    %1632 = vmatprep.subr.bf16.mxu0 0
    %1633 = vmatpush1.bf16.msra.mxu0 0
    %1634 = vmatprep.subr.bf16.mxu0 0
    %1635 = vmatpush1.bf16.msra.mxu0 0
    %1636 = vmatprep.subr.bf16.mxu0 0
    %1637 = vmatpush1.bf16.msra.mxu0 0
    %1638 = vmatprep.subr.bf16.mxu0 0
    %1639 = vmatpush1.bf16.msra.mxu0 0
    %1640 = vmatprep.subr.bf16.mxu0 0
    %1641 = vmatpush1.bf16.msra.mxu0 0
    %1642 = vmatprep.subr.bf16.mxu0 0
    %1643 = vmatpush1.bf16.msra.mxu0 0
    %1644 = vmatprep.subr.bf16.mxu0 0
    %1645 = vmatpush1.bf16.msra.mxu0 0
    %1646 = vmatprep.subr.bf16.mxu0 0
    %1647 = vmatpush1.bf16.msra.mxu0 0
    %1648 = vmatprep.subr.bf16.mxu0 0
    %1649 = vmatpush1.bf16.msra.mxu0 0
    %1650 = vmatprep.subr.bf16.mxu0 0
    %1651 = vmatpush1.bf16.msra.mxu0 0
    %1652 = vmatprep.subr.bf16.mxu0 0
    %1653 = vmatpush1.bf16.msra.mxu0 0
    %1654 = vmatprep.subr.bf16.mxu0 0
    %1655 = vmatpush1.bf16.msra.mxu0 0
    %1656 = vmatprep.subr.bf16.mxu0 0
    %1657 = vmatpush1.bf16.msra.mxu0 0
    %1658 = vmatprep.subr.bf16.mxu0 0
    %1659 = vmatpush1.bf16.msra.mxu0 0
    %1660 = vmatprep.subr.bf16.mxu0 0
    %1661 = vmatpush1.bf16.msra.mxu0 0
    %1662 = vmatprep.mubr.bf16.mxu0 0
    %1663 = vmatmul.mubr.bf16.gmra.mrb[0].mxu0 %v146
    %v1664 = vpop.f32.mrb[0].mxu0
    %v1665 = vadd.f32 %v117, %v1664
    %v1666 = vpop.f32.mrb[0].mxu0
    %v1667 = vpop.f32.mrb[0].mxu0
    %v1668 = vadd.f32 %v122, %v1667
    %v1669 = vpop.f32.mrb[0].mxu0
    %1670 = vmatprep.mubr.bf16.mxu0 0
    %1671 = vmatmul.mubr.bf16.gmra.mrb[0].mxu0 %v149
    %v1672 = vpop.f32.mrb[0].mxu0
    %v1673 = vadd.f32 %v127, %v1672
    %v1674 = vpop.f32.mrb[0].mxu0
    %v1675 = vpop.f32.mrb[0].mxu0
    %v1676 = vadd.f32 %v132, %v1675
    %v1677 = vpop.f32.mrb[0].mxu0
    %1678 = vdwg.mxu0
    %v1679 = vmax.f32 %v1665, 0.0
    %v1680 = vmax.f32 %v1668, 0.0
    %v1681 = vmax.f32 %v1673, 0.0
    %v1682 = vmax.f32 %v1676, 0.0
    %v1683 = vpack.c.bf16 %v1680, %v1679
    %v1684 = vpack.c.bf16 %v1682, %v1681
    %1685 = vst [vmem:[#allocation2 + $0x110] sm:$0xff] %v1683
    %1686 = vst [vmem:[#allocation2 + $0x118] sm:$0xff] %v1684
    %v1687 = vld [vmem:[%s0 + $0x12] sm:$0x1]
    %v1688 = vld [vmem:[%s0 + $0x13] sm:$0x1]
    %v1689 = vld [vmem:[%s0 + $0x14] sm:$0x1]
    %v1690 = vlaneseq
    %v1691 = vshrl.u32 %v1690, 7
    %v1692 = vsub.s32 0, %v1691
    %v1693 = vrot.slane %v1687, %v1692
    %v1694 = vmul.f32 %v1693, %v54
    %v1695 = vmul.f32 %v1693, %v59
    %v1696 = vlaneseq
    %v1697 = vshrl.u32 %v1696, 7
    %v1698 = vsub.s32 0, %v1697
    %v1699 = vrot.slane %v1688, %v1698
    %v1700 = vmul.f32 %v1699, %v70
    %v1701 = vmul.f32 %v1699, %v75
    %v1702 = vadd.f32 %v1694, %v1700
    %v1703 = vadd.f32 %v1695, %v1701
    %v1704 = vlaneseq
    %v1705 = vshrl.u32 %v1704, 7
    %v1706 = vsub.s32 0, %v1705
    %v1707 = vrot.slane %v1689, %v1706
    %v1708 = vmul.f32 %v1707, %v88
    %v1709 = vmul.f32 %v1707, %v93
    %v1710 = vadd.f32 %v1702, %v1708
    %v1711 = vadd.f32 %v1703, %v1709
    %v1712 = vadd.f32 %v1710, %v102
    %v1713 = vadd.f32 %v1711, %v107
    %v1714 = vmax.f32 %v1712, 0.0
    %v1715 = vmax.f32 %v1713, 0.0
    %v1716 = vpack.c.bf16 %v1715, %v1714
    %1717 = vmatprep.subr.bf16.mxu0 0
    %1718 = vmatpush1.bf16.msra.mxu0 %v1716
    %1719 = vmatprep.subr.bf16.mxu0 0
    %1720 = vmatpush1.bf16.msra.mxu0 0
    %1721 = vmatprep.subr.bf16.mxu0 0
    %1722 = vmatpush1.bf16.msra.mxu0 0
    %1723 = vmatprep.subr.bf16.mxu0 0
    %1724 = vmatpush1.bf16.msra.mxu0 0
    %1725 = vmatprep.subr.bf16.mxu0 0
    %1726 = vmatpush1.bf16.msra.mxu0 0
    %1727 = vmatprep.subr.bf16.mxu0 0
    %1728 = vmatpush1.bf16.msra.mxu0 0
    %1729 = vmatprep.subr.bf16.mxu0 0
    %1730 = vmatpush1.bf16.msra.mxu0 0
    %1731 = vmatprep.subr.bf16.mxu0 0
    %1732 = vmatpush1.bf16.msra.mxu0 0
    %1733 = vmatprep.subr.bf16.mxu0 0
    %1734 = vmatpush1.bf16.msra.mxu0 0
    %1735 = vmatprep.subr.bf16.mxu0 0
    %1736 = vmatpush1.bf16.msra.mxu0 0
    %1737 = vmatprep.subr.bf16.mxu0 0
    %1738 = vmatpush1.bf16.msra.mxu0 0
    %1739 = vmatprep.subr.bf16.mxu0 0
    %1740 = vmatpush1.bf16.msra.mxu0 0
    %1741 = vmatprep.subr.bf16.mxu0 0
    %1742 = vmatpush1.bf16.msra.mxu0 0
    %1743 = vmatprep.subr.bf16.mxu0 0
    %1744 = vmatpush1.bf16.msra.mxu0 0
    %1745 = vmatprep.subr.bf16.mxu0 0
    %1746 = vmatpush1.bf16.msra.mxu0 0
    %1747 = vmatprep.subr.bf16.mxu0 0
    %1748 = vmatpush1.bf16.msra.mxu0 0
    %1749 = vmatprep.mubr.bf16.mxu0 0
    %1750 = vmatmul.mubr.bf16.gmra.mrb[0].mxu0 %v146
    %v1751 = vpop.f32.mrb[0].mxu0
    %v1752 = vadd.f32 %v117, %v1751
    %v1753 = vpop.f32.mrb[0].mxu0
    %v1754 = vpop.f32.mrb[0].mxu0
    %v1755 = vadd.f32 %v122, %v1754
    %v1756 = vpop.f32.mrb[0].mxu0
    %1757 = vmatprep.mubr.bf16.mxu0 0
    %1758 = vmatmul.mubr.bf16.gmra.mrb[0].mxu0 %v149
    %v1759 = vpop.f32.mrb[0].mxu0
    %v1760 = vadd.f32 %v127, %v1759
    %v1761 = vpop.f32.mrb[0].mxu0
    %v1762 = vpop.f32.mrb[0].mxu0
    %v1763 = vadd.f32 %v132, %v1762
    %v1764 = vpop.f32.mrb[0].mxu0
    %1765 = vdwg.mxu0
    %v1766 = vmax.f32 %v1752, 0.0
    %v1767 = vmax.f32 %v1755, 0.0
    %v1768 = vmax.f32 %v1760, 0.0
    %v1769 = vmax.f32 %v1763, 0.0
    %v1770 = vpack.c.bf16 %v1767, %v1766
    %v1771 = vpack.c.bf16 %v1769, %v1768
    %1772 = vst [vmem:[#allocation2 + $0x120] sm:$0xff] %v1770
    %1773 = vst [vmem:[#allocation2 + $0x128] sm:$0xff] %v1771
    %v1774 = vld [vmem:[%s0 + $0x13] sm:$0x1]
    %v1775 = vld [vmem:[%s0 + $0x14] sm:$0x1]
    %v1776 = vld [vmem:[%s0 + $0x15] sm:$0x1]
    %v1777 = vlaneseq
    %v1778 = vshrl.u32 %v1777, 7
    %v1779 = vsub.s32 0, %v1778
    %v1780 = vrot.slane %v1774, %v1779
    %v1781 = vmul.f32 %v1780, %v54
    %v1782 = vmul.f32 %v1780, %v59
    %v1783 = vlaneseq
    %v1784 = vshrl.u32 %v1783, 7
    %v1785 = vsub.s32 0, %v1784
    %v1786 = vrot.slane %v1775, %v1785
    %v1787 = vmul.f32 %v1786, %v70
    %v1788 = vmul.f32 %v1786, %v75
    %v1789 = vadd.f32 %v1781, %v1787
    %v1790 = vadd.f32 %v1782, %v1788
    %v1791 = vlaneseq
    %v1792 = vshrl.u32 %v1791, 7
    %v1793 = vsub.s32 0, %v1792
    %v1794 = vrot.slane %v1776, %v1793
    %v1795 = vmul.f32 %v1794, %v88
    %v1796 = vmul.f32 %v1794, %v93
    %v1797 = vadd.f32 %v1789, %v1795
    %v1798 = vadd.f32 %v1790, %v1796
    %v1799 = vadd.f32 %v1797, %v102
    %v1800 = vadd.f32 %v1798, %v107
    %v1801 = vmax.f32 %v1799, 0.0
    %v1802 = vmax.f32 %v1800, 0.0
    %v1803 = vpack.c.bf16 %v1802, %v1801
    %1804 = vmatprep.subr.bf16.mxu0 0
    %1805 = vmatpush1.bf16.msra.mxu0 %v1803
    %1806 = vmatprep.subr.bf16.mxu0 0
    %1807 = vmatpush1.bf16.msra.mxu0 0
    %1808 = vmatprep.subr.bf16.mxu0 0
    %1809 = vmatpush1.bf16.msra.mxu0 0
    %1810 = vmatprep.subr.bf16.mxu0 0
    %1811 = vmatpush1.bf16.msra.mxu0 0
    %1812 = vmatprep.subr.bf16.mxu0 0
    %1813 = vmatpush1.bf16.msra.mxu0 0
    %1814 = vmatprep.subr.bf16.mxu0 0
    %1815 = vmatpush1.bf16.msra.mxu0 0
    %1816 = vmatprep.subr.bf16.mxu0 0
    %1817 = vmatpush1.bf16.msra.mxu0 0
    %1818 = vmatprep.subr.bf16.mxu0 0
    %1819 = vmatpush1.bf16.msra.mxu0 0
    %1820 = vmatprep.subr.bf16.mxu0 0
    %1821 = vmatpush1.bf16.msra.mxu0 0
    %1822 = vmatprep.subr.bf16.mxu0 0
    %1823 = vmatpush1.bf16.msra.mxu0 0
    %1824 = vmatprep.subr.bf16.mxu0 0
    %1825 = vmatpush1.bf16.msra.mxu0 0
    %1826 = vmatprep.subr.bf16.mxu0 0
    %1827 = vmatpush1.bf16.msra.mxu0 0
    %1828 = vmatprep.subr.bf16.mxu0 0
    %1829 = vmatpush1.bf16.msra.mxu0 0
    %1830 = vmatprep.subr.bf16.mxu0 0
    %1831 = vmatpush1.bf16.msra.mxu0 0
    %1832 = vmatprep.subr.bf16.mxu0 0
    %1833 = vmatpush1.bf16.msra.mxu0 0
    %1834 = vmatprep.subr.bf16.mxu0 0
    %1835 = vmatpush1.bf16.msra.mxu0 0
    %1836 = vmatprep.mubr.bf16.mxu0 0
    %1837 = vmatmul.mubr.bf16.gmra.mrb[0].mxu0 %v146
    %v1838 = vpop.f32.mrb[0].mxu0
    %v1839 = vadd.f32 %v117, %v1838
    %v1840 = vpop.f32.mrb[0].mxu0
    %v1841 = vpop.f32.mrb[0].mxu0
    %v1842 = vadd.f32 %v122, %v1841
    %v1843 = vpop.f32.mrb[0].mxu0
    %1844 = vmatprep.mubr.bf16.mxu0 0
    %1845 = vmatmul.mubr.bf16.gmra.mrb[0].mxu0 %v149
    %v1846 = vpop.f32.mrb[0].mxu0
    %v1847 = vadd.f32 %v127, %v1846
    %v1848 = vpop.f32.mrb[0].mxu0
    %v1849 = vpop.f32.mrb[0].mxu0
    %v1850 = vadd.f32 %v132, %v1849
    %v1851 = vpop.f32.mrb[0].mxu0
    %1852 = vdwg.mxu0
    %v1853 = vmax.f32 %v1839, 0.0
    %v1854 = vmax.f32 %v1842, 0.0
    %v1855 = vmax.f32 %v1847, 0.0
    %v1856 = vmax.f32 %v1850, 0.0
    %v1857 = vpack.c.bf16 %v1854, %v1853
    %v1858 = vpack.c.bf16 %v1856, %v1855
    %1859 = vst [vmem:[#allocation2 + $0x130] sm:$0xff] %v1857
    %1860 = vst [vmem:[#allocation2 + $0x138] sm:$0xff] %v1858
    %v1861 = vld [vmem:[%s0 + $0x14] sm:$0x1]
    %v1862 = vld [vmem:[%s0 + $0x15] sm:$0x1]
    %v1863 = vld [vmem:[%s0 + $0x16] sm:$0x1]
    %v1864 = vlaneseq
    %v1865 = vshrl.u32 %v1864, 7
    %v1866 = vsub.s32 0, %v1865
    %v1867 = vrot.slane %v1861, %v1866
    %v1868 = vmul.f32 %v1867, %v54
    %v1869 = vmul.f32 %v1867, %v59
    %v1870 = vlaneseq
    %v1871 = vshrl.u32 %v1870, 7
    %v1872 = vsub.s32 0, %v1871
    %v1873 = vrot.slane %v1862, %v1872
    %v1874 = vmul.f32 %v1873, %v70
    %v1875 = vmul.f32 %v1873, %v75
    %v1876 = vadd.f32 %v1868, %v1874
    %v1877 = vadd.f32 %v1869, %v1875
    %v1878 = vlaneseq
    %v1879 = vshrl.u32 %v1878, 7
    %v1880 = vsub.s32 0, %v1879
    %v1881 = vrot.slane %v1863, %v1880
    %v1882 = vmul.f32 %v1881, %v88
    %v1883 = vmul.f32 %v1881, %v93
    %v1884 = vadd.f32 %v1876, %v1882
    %v1885 = vadd.f32 %v1877, %v1883
    %v1886 = vadd.f32 %v1884, %v102
    %v1887 = vadd.f32 %v1885, %v107
    %v1888 = vmax.f32 %v1886, 0.0
    %v1889 = vmax.f32 %v1887, 0.0
    %v1890 = vpack.c.bf16 %v1889, %v1888
    %1891 = vmatprep.subr.bf16.mxu0 0
    %1892 = vmatpush1.bf16.msra.mxu0 %v1890
    %1893 = vmatprep.subr.bf16.mxu0 0
    %1894 = vmatpush1.bf16.msra.mxu0 0
    %1895 = vmatprep.subr.bf16.mxu0 0
    %1896 = vmatpush1.bf16.msra.mxu0 0
    %1897 = vmatprep.subr.bf16.mxu0 0
    %1898 = vmatpush1.bf16.msra.mxu0 0
    %1899 = vmatprep.subr.bf16.mxu0 0
    %1900 = vmatpush1.bf16.msra.mxu0 0
    %1901 = vmatprep.subr.bf16.mxu0 0
    %1902 = vmatpush1.bf16.msra.mxu0 0
    %1903 = vmatprep.subr.bf16.mxu0 0
    %1904 = vmatpush1.bf16.msra.mxu0 0
    %1905 = vmatprep.subr.bf16.mxu0 0
    %1906 = vmatpush1.bf16.msra.mxu0 0
    %1907 = vmatprep.subr.bf16.mxu0 0
    %1908 = vmatpush1.bf16.msra.mxu0 0
    %1909 = vmatprep.subr.bf16.mxu0 0
    %1910 = vmatpush1.bf16.msra.mxu0 0
    %1911 = vmatprep.subr.bf16.mxu0 0
    %1912 = vmatpush1.bf16.msra.mxu0 0
    %1913 = vmatprep.subr.bf16.mxu0 0
    %1914 = vmatpush1.bf16.msra.mxu0 0
    %1915 = vmatprep.subr.bf16.mxu0 0
    %1916 = vmatpush1.bf16.msra.mxu0 0
    %1917 = vmatprep.subr.bf16.mxu0 0
    %1918 = vmatpush1.bf16.msra.mxu0 0
    %1919 = vmatprep.subr.bf16.mxu0 0
    %1920 = vmatpush1.bf16.msra.mxu0 0
    %1921 = vmatprep.subr.bf16.mxu0 0
    %1922 = vmatpush1.bf16.msra.mxu0 0
    %1923 = vmatprep.mubr.bf16.mxu0 0
    %1924 = vmatmul.mubr.bf16.gmra.mrb[0].mxu0 %v146
    %v1925 = vpop.f32.mrb[0].mxu0
    %v1926 = vadd.f32 %v117, %v1925
    %v1927 = vpop.f32.mrb[0].mxu0
    %v1928 = vpop.f32.mrb[0].mxu0
    %v1929 = vadd.f32 %v122, %v1928
    %v1930 = vpop.f32.mrb[0].mxu0
    %1931 = vmatprep.mubr.bf16.mxu0 0
    %1932 = vmatmul.mubr.bf16.gmra.mrb[0].mxu0 %v149
    %v1933 = vpop.f32.mrb[0].mxu0
    %v1934 = vadd.f32 %v127, %v1933
    %v1935 = vpop.f32.mrb[0].mxu0
    %v1936 = vpop.f32.mrb[0].mxu0
    %v1937 = vadd.f32 %v132, %v1936
    %v1938 = vpop.f32.mrb[0].mxu0
    %1939 = vdwg.mxu0
    %v1940 = vmax.f32 %v1926, 0.0
    %v1941 = vmax.f32 %v1929, 0.0
    %v1942 = vmax.f32 %v1934, 0.0
    %v1943 = vmax.f32 %v1937, 0.0
    %v1944 = vpack.c.bf16 %v1941, %v1940
    %v1945 = vpack.c.bf16 %v1943, %v1942
    %1946 = vst [vmem:[#allocation2 + $0x140] sm:$0xff] %v1944
    %1947 = vst [vmem:[#allocation2 + $0x148] sm:$0xff] %v1945
    %v1948 = vld [vmem:[%s0 + $0x15] sm:$0x1]
    %v1949 = vld [vmem:[%s0 + $0x16] sm:$0x1]
    %v1950 = vld [vmem:[%s0 + $0x17] sm:$0x1]
    %v1951 = vlaneseq
    %v1952 = vshrl.u32 %v1951, 7
    %v1953 = vsub.s32 0, %v1952
    %v1954 = vrot.slane %v1948, %v1953
    %v1955 = vmul.f32 %v1954, %v54
    %v1956 = vmul.f32 %v1954, %v59
    %v1957 = vlaneseq
    %v1958 = vshrl.u32 %v1957, 7
    %v1959 = vsub.s32 0, %v1958
    %v1960 = vrot.slane %v1949, %v1959
    %v1961 = vmul.f32 %v1960, %v70
    %v1962 = vmul.f32 %v1960, %v75
    %v1963 = vadd.f32 %v1955, %v1961
    %v1964 = vadd.f32 %v1956, %v1962
    %v1965 = vlaneseq
    %v1966 = vshrl.u32 %v1965, 7
    %v1967 = vsub.s32 0, %v1966
    %v1968 = vrot.slane %v1950, %v1967
    %v1969 = vmul.f32 %v1968, %v88
    %v1970 = vmul.f32 %v1968, %v93
    %v1971 = vadd.f32 %v1963, %v1969
    %v1972 = vadd.f32 %v1964, %v1970
    %v1973 = vadd.f32 %v1971, %v102
    %v1974 = vadd.f32 %v1972, %v107
    %v1975 = vmax.f32 %v1973, 0.0
    %v1976 = vmax.f32 %v1974, 0.0
    %v1977 = vpack.c.bf16 %v1976, %v1975
    %1978 = vmatprep.subr.bf16.mxu0 0
    %1979 = vmatpush1.bf16.msra.mxu0 %v1977
    %1980 = vmatprep.subr.bf16.mxu0 0
    %1981 = vmatpush1.bf16.msra.mxu0 0
    %1982 = vmatprep.subr.bf16.mxu0 0
    %1983 = vmatpush1.bf16.msra.mxu0 0
    %1984 = vmatprep.subr.bf16.mxu0 0
    %1985 = vmatpush1.bf16.msra.mxu0 0
    %1986 = vmatprep.subr.bf16.mxu0 0
    %1987 = vmatpush1.bf16.msra.mxu0 0
    %1988 = vmatprep.subr.bf16.mxu0 0
    %1989 = vmatpush1.bf16.msra.mxu0 0
    %1990 = vmatprep.subr.bf16.mxu0 0
    %1991 = vmatpush1.bf16.msra.mxu0 0
    %1992 = vmatprep.subr.bf16.mxu0 0
    %1993 = vmatpush1.bf16.msra.mxu0 0
    %1994 = vmatprep.subr.bf16.mxu0 0
    %1995 = vmatpush1.bf16.msra.mxu0 0
    %1996 = vmatprep.subr.bf16.mxu0 0
    %1997 = vmatpush1.bf16.msra.mxu0 0
    %1998 = vmatprep.subr.bf16.mxu0 0
    %1999 = vmatpush1.bf16.msra.mxu0 0
    %2000 = vmatprep.subr.bf16.mxu0 0
    %2001 = vmatpush1.bf16.msra.mxu0 0
    %2002 = vmatprep.subr.bf16.mxu0 0
    %2003 = vmatpush1.bf16.msra.mxu0 0
    %2004 = vmatprep.subr.bf16.mxu0 0
    %2005 = vmatpush1.bf16.msra.mxu0 0
    %2006 = vmatprep.subr.bf16.mxu0 0
    %2007 = vmatpush1.bf16.msra.mxu0 0
    %2008 = vmatprep.subr.bf16.mxu0 0
    %2009 = vmatpush1.bf16.msra.mxu0 0
    %2010 = vmatprep.mubr.bf16.mxu0 0
    %2011 = vmatmul.mubr.bf16.gmra.mrb[0].mxu0 %v146
    %v2012 = vpop.f32.mrb[0].mxu0
    %v2013 = vadd.f32 %v117, %v2012
    %v2014 = vpop.f32.mrb[0].mxu0
    %v2015 = vpop.f32.mrb[0].mxu0
    %v2016 = vadd.f32 %v122, %v2015
    %v2017 = vpop.f32.mrb[0].mxu0
    %2018 = vmatprep.mubr.bf16.mxu0 0
    %2019 = vmatmul.mubr.bf16.gmra.mrb[0].mxu0 %v149
    %v2020 = vpop.f32.mrb[0].mxu0
    %v2021 = vadd.f32 %v127, %v2020
    %v2022 = vpop.f32.mrb[0].mxu0
    %v2023 = vpop.f32.mrb[0].mxu0
    %v2024 = vadd.f32 %v132, %v2023
    %v2025 = vpop.f32.mrb[0].mxu0
    %2026 = vdwg.mxu0
    %v2027 = vmax.f32 %v2013, 0.0
    %v2028 = vmax.f32 %v2016, 0.0
    %v2029 = vmax.f32 %v2021, 0.0
    %v2030 = vmax.f32 %v2024, 0.0
    %v2031 = vpack.c.bf16 %v2028, %v2027
    %v2032 = vpack.c.bf16 %v2030, %v2029
    %2033 = vst [vmem:[#allocation2 + $0x150] sm:$0xff] %v2031
    %2034 = vst [vmem:[#allocation2 + $0x158] sm:$0xff] %v2032
    %v2035 = vld [vmem:[%s0 + $0x16] sm:$0x1]
    %v2036 = vld [vmem:[%s0 + $0x17] sm:$0x1]
    %v2037 = vld [vmem:[%s0 + $0x18] sm:$0x1]
    %v2038 = vlaneseq
    %v2039 = vshrl.u32 %v2038, 7
    %v2040 = vsub.s32 0, %v2039
    %v2041 = vrot.slane %v2035, %v2040
    %v2042 = vmul.f32 %v2041, %v54
    %v2043 = vmul.f32 %v2041, %v59
    %v2044 = vlaneseq
    %v2045 = vshrl.u32 %v2044, 7
    %v2046 = vsub.s32 0, %v2045
    %v2047 = vrot.slane %v2036, %v2046
    %v2048 = vmul.f32 %v2047, %v70
    %v2049 = vmul.f32 %v2047, %v75
    %v2050 = vadd.f32 %v2042, %v2048
    %v2051 = vadd.f32 %v2043, %v2049
    %v2052 = vlaneseq
    %v2053 = vshrl.u32 %v2052, 7
    %v2054 = vsub.s32 0, %v2053
    %v2055 = vrot.slane %v2037, %v2054
    %v2056 = vmul.f32 %v2055, %v88
    %v2057 = vmul.f32 %v2055, %v93
    %v2058 = vadd.f32 %v2050, %v2056
    %v2059 = vadd.f32 %v2051, %v2057
    %v2060 = vadd.f32 %v2058, %v102
    %v2061 = vadd.f32 %v2059, %v107
    %v2062 = vmax.f32 %v2060, 0.0
    %v2063 = vmax.f32 %v2061, 0.0
    %v2064 = vpack.c.bf16 %v2063, %v2062
    %2065 = vmatprep.subr.bf16.mxu0 0
    %2066 = vmatpush1.bf16.msra.mxu0 %v2064
    %2067 = vmatprep.subr.bf16.mxu0 0
    %2068 = vmatpush1.bf16.msra.mxu0 0
    %2069 = vmatprep.subr.bf16.mxu0 0
    %2070 = vmatpush1.bf16.msra.mxu0 0
    %2071 = vmatprep.subr.bf16.mxu0 0
    %2072 = vmatpush1.bf16.msra.mxu0 0
    %2073 = vmatprep.subr.bf16.mxu0 0
    %2074 = vmatpush1.bf16.msra.mxu0 0
    %2075 = vmatprep.subr.bf16.mxu0 0
    %2076 = vmatpush1.bf16.msra.mxu0 0
    %2077 = vmatprep.subr.bf16.mxu0 0
    %2078 = vmatpush1.bf16.msra.mxu0 0
    %2079 = vmatprep.subr.bf16.mxu0 0
    %2080 = vmatpush1.bf16.msra.mxu0 0
    %2081 = vmatprep.subr.bf16.mxu0 0
    %2082 = vmatpush1.bf16.msra.mxu0 0
    %2083 = vmatprep.subr.bf16.mxu0 0
    %2084 = vmatpush1.bf16.msra.mxu0 0
    %2085 = vmatprep.subr.bf16.mxu0 0
    %2086 = vmatpush1.bf16.msra.mxu0 0
    %2087 = vmatprep.subr.bf16.mxu0 0
    %2088 = vmatpush1.bf16.msra.mxu0 0
    %2089 = vmatprep.subr.bf16.mxu0 0
    %2090 = vmatpush1.bf16.msra.mxu0 0
    %2091 = vmatprep.subr.bf16.mxu0 0
    %2092 = vmatpush1.bf16.msra.mxu0 0
    %2093 = vmatprep.subr.bf16.mxu0 0
    %2094 = vmatpush1.bf16.msra.mxu0 0
    %2095 = vmatprep.subr.bf16.mxu0 0
    %2096 = vmatpush1.bf16.msra.mxu0 0
    %2097 = vmatprep.mubr.bf16.mxu0 0
    %2098 = vmatmul.mubr.bf16.gmra.mrb[0].mxu0 %v146
    %v2099 = vpop.f32.mrb[0].mxu0
    %v2100 = vadd.f32 %v117, %v2099
    %v2101 = vpop.f32.mrb[0].mxu0
    %v2102 = vpop.f32.mrb[0].mxu0
    %v2103 = vadd.f32 %v122, %v2102
    %v2104 = vpop.f32.mrb[0].mxu0
    %2105 = vmatprep.mubr.bf16.mxu0 0
    %2106 = vmatmul.mubr.bf16.gmra.mrb[0].mxu0 %v149
    %v2107 = vpop.f32.mrb[0].mxu0
    %v2108 = vadd.f32 %v127, %v2107
    %v2109 = vpop.f32.mrb[0].mxu0
    %v2110 = vpop.f32.mrb[0].mxu0
    %v2111 = vadd.f32 %v132, %v2110
    %v2112 = vpop.f32.mrb[0].mxu0
    %2113 = vdwg.mxu0
    %v2114 = vmax.f32 %v2100, 0.0
    %v2115 = vmax.f32 %v2103, 0.0
    %v2116 = vmax.f32 %v2108, 0.0
    %v2117 = vmax.f32 %v2111, 0.0
    %v2118 = vpack.c.bf16 %v2115, %v2114
    %v2119 = vpack.c.bf16 %v2117, %v2116
    %2120 = vst [vmem:[#allocation2 + $0x160] sm:$0xff] %v2118
    %2121 = vst [vmem:[#allocation2 + $0x168] sm:$0xff] %v2119
    %v2122 = vld [vmem:[%s0 + $0x17] sm:$0x1]
    %v2123 = vld [vmem:[%s0 + $0x18] sm:$0x1]
    %v2124 = vld [vmem:[%s0 + $0x19] sm:$0x1]
    %v2125 = vlaneseq
    %v2126 = vshrl.u32 %v2125, 7
    %v2127 = vsub.s32 0, %v2126
    %v2128 = vrot.slane %v2122, %v2127
    %v2129 = vmul.f32 %v2128, %v54
    %v2130 = vmul.f32 %v2128, %v59
    %v2131 = vlaneseq
    %v2132 = vshrl.u32 %v2131, 7
    %v2133 = vsub.s32 0, %v2132
    %v2134 = vrot.slane %v2123, %v2133
    %v2135 = vmul.f32 %v2134, %v70
    %v2136 = vmul.f32 %v2134, %v75
    %v2137 = vadd.f32 %v2129, %v2135
    %v2138 = vadd.f32 %v2130, %v2136
    %v2139 = vlaneseq
    %v2140 = vshrl.u32 %v2139, 7
    %v2141 = vsub.s32 0, %v2140
    %v2142 = vrot.slane %v2124, %v2141
    %v2143 = vmul.f32 %v2142, %v88
    %v2144 = vmul.f32 %v2142, %v93
    %v2145 = vadd.f32 %v2137, %v2143
    %v2146 = vadd.f32 %v2138, %v2144
    %v2147 = vadd.f32 %v2145, %v102
    %v2148 = vadd.f32 %v2146, %v107
    %v2149 = vmax.f32 %v2147, 0.0
    %v2150 = vmax.f32 %v2148, 0.0
    %v2151 = vpack.c.bf16 %v2150, %v2149
    %2152 = vmatprep.subr.bf16.mxu0 0
    %2153 = vmatpush1.bf16.msra.mxu0 %v2151
    %2154 = vmatprep.subr.bf16.mxu0 0
    %2155 = vmatpush1.bf16.msra.mxu0 0
    %2156 = vmatprep.subr.bf16.mxu0 0
    %2157 = vmatpush1.bf16.msra.mxu0 0
    %2158 = vmatprep.subr.bf16.mxu0 0
    %2159 = vmatpush1.bf16.msra.mxu0 0
    %2160 = vmatprep.subr.bf16.mxu0 0
    %2161 = vmatpush1.bf16.msra.mxu0 0
    %2162 = vmatprep.subr.bf16.mxu0 0
    %2163 = vmatpush1.bf16.msra.mxu0 0
    %2164 = vmatprep.subr.bf16.mxu0 0
    %2165 = vmatpush1.bf16.msra.mxu0 0
    %2166 = vmatprep.subr.bf16.mxu0 0
    %2167 = vmatpush1.bf16.msra.mxu0 0
    %2168 = vmatprep.subr.bf16.mxu0 0
    %2169 = vmatpush1.bf16.msra.mxu0 0
    %2170 = vmatprep.subr.bf16.mxu0 0
    %2171 = vmatpush1.bf16.msra.mxu0 0
    %2172 = vmatprep.subr.bf16.mxu0 0
    %2173 = vmatpush1.bf16.msra.mxu0 0
    %2174 = vmatprep.subr.bf16.mxu0 0
    %2175 = vmatpush1.bf16.msra.mxu0 0
    %2176 = vmatprep.subr.bf16.mxu0 0
    %2177 = vmatpush1.bf16.msra.mxu0 0
    %2178 = vmatprep.subr.bf16.mxu0 0
    %2179 = vmatpush1.bf16.msra.mxu0 0
    %2180 = vmatprep.subr.bf16.mxu0 0
    %2181 = vmatpush1.bf16.msra.mxu0 0
    %2182 = vmatprep.subr.bf16.mxu0 0
    %2183 = vmatpush1.bf16.msra.mxu0 0
    %2184 = vmatprep.mubr.bf16.mxu0 0
    %2185 = vmatmul.mubr.bf16.gmra.mrb[0].mxu0 %v146
    %v2186 = vpop.f32.mrb[0].mxu0
    %v2187 = vadd.f32 %v117, %v2186
    %v2188 = vpop.f32.mrb[0].mxu0
    %v2189 = vpop.f32.mrb[0].mxu0
    %v2190 = vadd.f32 %v122, %v2189
    %v2191 = vpop.f32.mrb[0].mxu0
    %2192 = vmatprep.mubr.bf16.mxu0 0
    %2193 = vmatmul.mubr.bf16.gmra.mrb[0].mxu0 %v149
    %v2194 = vpop.f32.mrb[0].mxu0
    %v2195 = vadd.f32 %v127, %v2194
    %v2196 = vpop.f32.mrb[0].mxu0
    %v2197 = vpop.f32.mrb[0].mxu0
    %v2198 = vadd.f32 %v132, %v2197
    %v2199 = vpop.f32.mrb[0].mxu0
    %2200 = vdwg.mxu0
    %v2201 = vmax.f32 %v2187, 0.0
    %v2202 = vmax.f32 %v2190, 0.0
    %v2203 = vmax.f32 %v2195, 0.0
    %v2204 = vmax.f32 %v2198, 0.0
    %v2205 = vpack.c.bf16 %v2202, %v2201
    %v2206 = vpack.c.bf16 %v2204, %v2203
    %2207 = vst [vmem:[#allocation2 + $0x170] sm:$0xff] %v2205
    %2208 = vst [vmem:[#allocation2 + $0x178] sm:$0xff] %v2206
    %v2209 = vld [vmem:[%s0 + $0x18] sm:$0x1]
    %v2210 = vld [vmem:[%s0 + $0x19] sm:$0x1]
    %v2211 = vld [vmem:[%s0 + $0x1a] sm:$0x1]
    %v2212 = vlaneseq
    %v2213 = vshrl.u32 %v2212, 7
    %v2214 = vsub.s32 0, %v2213
    %v2215 = vrot.slane %v2209, %v2214
    %v2216 = vmul.f32 %v2215, %v54
    %v2217 = vmul.f32 %v2215, %v59
    %v2218 = vlaneseq
    %v2219 = vshrl.u32 %v2218, 7
    %v2220 = vsub.s32 0, %v2219
    %v2221 = vrot.slane %v2210, %v2220
    %v2222 = vmul.f32 %v2221, %v70
    %v2223 = vmul.f32 %v2221, %v75
    %v2224 = vadd.f32 %v2216, %v2222
    %v2225 = vadd.f32 %v2217, %v2223
    %v2226 = vlaneseq
    %v2227 = vshrl.u32 %v2226, 7
    %v2228 = vsub.s32 0, %v2227
    %v2229 = vrot.slane %v2211, %v2228
    %v2230 = vmul.f32 %v2229, %v88
    %v2231 = vmul.f32 %v2229, %v93
    %v2232 = vadd.f32 %v2224, %v2230
    %v2233 = vadd.f32 %v2225, %v2231
    %v2234 = vadd.f32 %v2232, %v102
    %v2235 = vadd.f32 %v2233, %v107
    %v2236 = vmax.f32 %v2234, 0.0
    %v2237 = vmax.f32 %v2235, 0.0
    %v2238 = vpack.c.bf16 %v2237, %v2236
    %2239 = vmatprep.subr.bf16.mxu0 0
    %2240 = vmatpush1.bf16.msra.mxu0 %v2238
    %2241 = vmatprep.subr.bf16.mxu0 0
    %2242 = vmatpush1.bf16.msra.mxu0 0
    %2243 = vmatprep.subr.bf16.mxu0 0
    %2244 = vmatpush1.bf16.msra.mxu0 0
    %2245 = vmatprep.subr.bf16.mxu0 0
    %2246 = vmatpush1.bf16.msra.mxu0 0
    %2247 = vmatprep.subr.bf16.mxu0 0
    %2248 = vmatpush1.bf16.msra.mxu0 0
    %2249 = vmatprep.subr.bf16.mxu0 0
    %2250 = vmatpush1.bf16.msra.mxu0 0
    %2251 = vmatprep.subr.bf16.mxu0 0
    %2252 = vmatpush1.bf16.msra.mxu0 0
    %2253 = vmatprep.subr.bf16.mxu0 0
    %2254 = vmatpush1.bf16.msra.mxu0 0
    %2255 = vmatprep.subr.bf16.mxu0 0
    %2256 = vmatpush1.bf16.msra.mxu0 0
    %2257 = vmatprep.subr.bf16.mxu0 0
    %2258 = vmatpush1.bf16.msra.mxu0 0
    %2259 = vmatprep.subr.bf16.mxu0 0
    %2260 = vmatpush1.bf16.msra.mxu0 0
    %2261 = vmatprep.subr.bf16.mxu0 0
    %2262 = vmatpush1.bf16.msra.mxu0 0
    %2263 = vmatprep.subr.bf16.mxu0 0
    %2264 = vmatpush1.bf16.msra.mxu0 0
    %2265 = vmatprep.subr.bf16.mxu0 0
    %2266 = vmatpush1.bf16.msra.mxu0 0
    %2267 = vmatprep.subr.bf16.mxu0 0
    %2268 = vmatpush1.bf16.msra.mxu0 0
    %2269 = vmatprep.subr.bf16.mxu0 0
    %2270 = vmatpush1.bf16.msra.mxu0 0
    %2271 = vmatprep.mubr.bf16.mxu0 0
    %2272 = vmatmul.mubr.bf16.gmra.mrb[0].mxu0 %v146
    %v2273 = vpop.f32.mrb[0].mxu0
    %v2274 = vadd.f32 %v117, %v2273
    %v2275 = vpop.f32.mrb[0].mxu0
    %v2276 = vpop.f32.mrb[0].mxu0
    %v2277 = vadd.f32 %v122, %v2276
    %v2278 = vpop.f32.mrb[0].mxu0
    %2279 = vmatprep.mubr.bf16.mxu0 0
    %2280 = vmatmul.mubr.bf16.gmra.mrb[0].mxu0 %v149
    %v2281 = vpop.f32.mrb[0].mxu0
    %v2282 = vadd.f32 %v127, %v2281
    %v2283 = vpop.f32.mrb[0].mxu0
    %v2284 = vpop.f32.mrb[0].mxu0
    %v2285 = vadd.f32 %v132, %v2284
    %v2286 = vpop.f32.mrb[0].mxu0
    %2287 = vdwg.mxu0
    %v2288 = vmax.f32 %v2274, 0.0
    %v2289 = vmax.f32 %v2277, 0.0
    %v2290 = vmax.f32 %v2282, 0.0
    %v2291 = vmax.f32 %v2285, 0.0
    %v2292 = vpack.c.bf16 %v2289, %v2288
    %v2293 = vpack.c.bf16 %v2291, %v2290
    %2294 = vst [vmem:[#allocation2 + $0x180] sm:$0xff] %v2292
    %2295 = vst [vmem:[#allocation2 + $0x188] sm:$0xff] %v2293
    %v2296 = vld [vmem:[%s0 + $0x19] sm:$0x1]
    %v2297 = vld [vmem:[%s0 + $0x1a] sm:$0x1]
    %v2298 = vld [vmem:[%s0 + $0x1b] sm:$0x1]
    %v2299 = vlaneseq
    %v2300 = vshrl.u32 %v2299, 7
    %v2301 = vsub.s32 0, %v2300
    %v2302 = vrot.slane %v2296, %v2301
    %v2303 = vmul.f32 %v2302, %v54
    %v2304 = vmul.f32 %v2302, %v59
    %v2305 = vlaneseq
    %v2306 = vshrl.u32 %v2305, 7
    %v2307 = vsub.s32 0, %v2306
    %v2308 = vrot.slane %v2297, %v2307
    %v2309 = vmul.f32 %v2308, %v70
    %v2310 = vmul.f32 %v2308, %v75
    %v2311 = vadd.f32 %v2303, %v2309
    %v2312 = vadd.f32 %v2304, %v2310
    %v2313 = vlaneseq
    %v2314 = vshrl.u32 %v2313, 7
    %v2315 = vsub.s32 0, %v2314
    %v2316 = vrot.slane %v2298, %v2315
    %v2317 = vmul.f32 %v2316, %v88
    %v2318 = vmul.f32 %v2316, %v93
    %v2319 = vadd.f32 %v2311, %v2317
    %v2320 = vadd.f32 %v2312, %v2318
    %v2321 = vadd.f32 %v2319, %v102
    %v2322 = vadd.f32 %v2320, %v107
    %v2323 = vmax.f32 %v2321, 0.0
    %v2324 = vmax.f32 %v2322, 0.0
    %v2325 = vpack.c.bf16 %v2324, %v2323
    %2326 = vmatprep.subr.bf16.mxu0 0
    %2327 = vmatpush1.bf16.msra.mxu0 %v2325
    %2328 = vmatprep.subr.bf16.mxu0 0
    %2329 = vmatpush1.bf16.msra.mxu0 0
    %2330 = vmatprep.subr.bf16.mxu0 0
    %2331 = vmatpush1.bf16.msra.mxu0 0
    %2332 = vmatprep.subr.bf16.mxu0 0
    %2333 = vmatpush1.bf16.msra.mxu0 0
    %2334 = vmatprep.subr.bf16.mxu0 0
    %2335 = vmatpush1.bf16.msra.mxu0 0
    %2336 = vmatprep.subr.bf16.mxu0 0
    %2337 = vmatpush1.bf16.msra.mxu0 0
    %2338 = vmatprep.subr.bf16.mxu0 0
    %2339 = vmatpush1.bf16.msra.mxu0 0
    %2340 = vmatprep.subr.bf16.mxu0 0
    %2341 = vmatpush1.bf16.msra.mxu0 0
    %2342 = vmatprep.subr.bf16.mxu0 0
    %2343 = vmatpush1.bf16.msra.mxu0 0
    %2344 = vmatprep.subr.bf16.mxu0 0
    %2345 = vmatpush1.bf16.msra.mxu0 0
    %2346 = vmatprep.subr.bf16.mxu0 0
    %2347 = vmatpush1.bf16.msra.mxu0 0
    %2348 = vmatprep.subr.bf16.mxu0 0
    %2349 = vmatpush1.bf16.msra.mxu0 0
    %2350 = vmatprep.subr.bf16.mxu0 0
    %2351 = vmatpush1.bf16.msra.mxu0 0
    %2352 = vmatprep.subr.bf16.mxu0 0
    %2353 = vmatpush1.bf16.msra.mxu0 0
    %2354 = vmatprep.subr.bf16.mxu0 0
    %2355 = vmatpush1.bf16.msra.mxu0 0
    %2356 = vmatprep.subr.bf16.mxu0 0
    %2357 = vmatpush1.bf16.msra.mxu0 0
    %2358 = vmatprep.mubr.bf16.mxu0 0
    %2359 = vmatmul.mubr.bf16.gmra.mrb[0].mxu0 %v146
    %v2360 = vpop.f32.mrb[0].mxu0
    %v2361 = vadd.f32 %v117, %v2360
    %v2362 = vpop.f32.mrb[0].mxu0
    %v2363 = vpop.f32.mrb[0].mxu0
    %v2364 = vadd.f32 %v122, %v2363
    %v2365 = vpop.f32.mrb[0].mxu0
    %2366 = vmatprep.mubr.bf16.mxu0 0
    %2367 = vmatmul.mubr.bf16.gmra.mrb[0].mxu0 %v149
    %v2368 = vpop.f32.mrb[0].mxu0
    %v2369 = vadd.f32 %v127, %v2368
    %v2370 = vpop.f32.mrb[0].mxu0
    %v2371 = vpop.f32.mrb[0].mxu0
    %v2372 = vadd.f32 %v132, %v2371
    %v2373 = vpop.f32.mrb[0].mxu0
    %2374 = vdwg.mxu0
    %v2375 = vmax.f32 %v2361, 0.0
    %v2376 = vmax.f32 %v2364, 0.0
    %v2377 = vmax.f32 %v2369, 0.0
    %v2378 = vmax.f32 %v2372, 0.0
    %v2379 = vpack.c.bf16 %v2376, %v2375
    %v2380 = vpack.c.bf16 %v2378, %v2377
    %2381 = vst [vmem:[#allocation2 + $0x190] sm:$0xff] %v2379
    %2382 = vst [vmem:[#allocation2 + $0x198] sm:$0xff] %v2380
    %v2383 = vld [vmem:[%s0 + $0x1a] sm:$0x1]
    %v2384 = vld [vmem:[%s0 + $0x1b] sm:$0x1]
    %v2385 = vld [vmem:[%s0 + $0x1c] sm:$0x1]
    %v2386 = vlaneseq
    %v2387 = vshrl.u32 %v2386, 7
    %v2388 = vsub.s32 0, %v2387
    %v2389 = vrot.slane %v2383, %v2388
    %v2390 = vmul.f32 %v2389, %v54
    %v2391 = vmul.f32 %v2389, %v59
    %v2392 = vlaneseq
    %v2393 = vshrl.u32 %v2392, 7
    %v2394 = vsub.s32 0, %v2393
    %v2395 = vrot.slane %v2384, %v2394
    %v2396 = vmul.f32 %v2395, %v70
    %v2397 = vmul.f32 %v2395, %v75
    %v2398 = vadd.f32 %v2390, %v2396
    %v2399 = vadd.f32 %v2391, %v2397
    %v2400 = vlaneseq
    %v2401 = vshrl.u32 %v2400, 7
    %v2402 = vsub.s32 0, %v2401
    %v2403 = vrot.slane %v2385, %v2402
    %v2404 = vmul.f32 %v2403, %v88
    %v2405 = vmul.f32 %v2403, %v93
    %v2406 = vadd.f32 %v2398, %v2404
    %v2407 = vadd.f32 %v2399, %v2405
    %v2408 = vadd.f32 %v2406, %v102
    %v2409 = vadd.f32 %v2407, %v107
    %v2410 = vmax.f32 %v2408, 0.0
    %v2411 = vmax.f32 %v2409, 0.0
    %v2412 = vpack.c.bf16 %v2411, %v2410
    %2413 = vmatprep.subr.bf16.mxu0 0
    %2414 = vmatpush1.bf16.msra.mxu0 %v2412
    %2415 = vmatprep.subr.bf16.mxu0 0
    %2416 = vmatpush1.bf16.msra.mxu0 0
    %2417 = vmatprep.subr.bf16.mxu0 0
    %2418 = vmatpush1.bf16.msra.mxu0 0
    %2419 = vmatprep.subr.bf16.mxu0 0
    %2420 = vmatpush1.bf16.msra.mxu0 0
    %2421 = vmatprep.subr.bf16.mxu0 0
    %2422 = vmatpush1.bf16.msra.mxu0 0
    %2423 = vmatprep.subr.bf16.mxu0 0
    %2424 = vmatpush1.bf16.msra.mxu0 0
    %2425 = vmatprep.subr.bf16.mxu0 0
    %2426 = vmatpush1.bf16.msra.mxu0 0
    %2427 = vmatprep.subr.bf16.mxu0 0
    %2428 = vmatpush1.bf16.msra.mxu0 0
    %2429 = vmatprep.subr.bf16.mxu0 0
    %2430 = vmatpush1.bf16.msra.mxu0 0
    %2431 = vmatprep.subr.bf16.mxu0 0
    %2432 = vmatpush1.bf16.msra.mxu0 0
    %2433 = vmatprep.subr.bf16.mxu0 0
    %2434 = vmatpush1.bf16.msra.mxu0 0
    %2435 = vmatprep.subr.bf16.mxu0 0
    %2436 = vmatpush1.bf16.msra.mxu0 0
    %2437 = vmatprep.subr.bf16.mxu0 0
    %2438 = vmatpush1.bf16.msra.mxu0 0
    %2439 = vmatprep.subr.bf16.mxu0 0
    %2440 = vmatpush1.bf16.msra.mxu0 0
    %2441 = vmatprep.subr.bf16.mxu0 0
    %2442 = vmatpush1.bf16.msra.mxu0 0
    %2443 = vmatprep.subr.bf16.mxu0 0
    %2444 = vmatpush1.bf16.msra.mxu0 0
    %2445 = vmatprep.mubr.bf16.mxu0 0
    %2446 = vmatmul.mubr.bf16.gmra.mrb[0].mxu0 %v146
    %v2447 = vpop.f32.mrb[0].mxu0
    %v2448 = vadd.f32 %v117, %v2447
    %v2449 = vpop.f32.mrb[0].mxu0
    %v2450 = vpop.f32.mrb[0].mxu0
    %v2451 = vadd.f32 %v122, %v2450
    %v2452 = vpop.f32.mrb[0].mxu0
    %2453 = vmatprep.mubr.bf16.mxu0 0
    %2454 = vmatmul.mubr.bf16.gmra.mrb[0].mxu0 %v149
    %v2455 = vpop.f32.mrb[0].mxu0
    %v2456 = vadd.f32 %v127, %v2455
    %v2457 = vpop.f32.mrb[0].mxu0
    %v2458 = vpop.f32.mrb[0].mxu0
    %v2459 = vadd.f32 %v132, %v2458
    %v2460 = vpop.f32.mrb[0].mxu0
    %2461 = vdwg.mxu0
    %v2462 = vmax.f32 %v2448, 0.0
    %v2463 = vmax.f32 %v2451, 0.0
    %v2464 = vmax.f32 %v2456, 0.0
    %v2465 = vmax.f32 %v2459, 0.0
    %v2466 = vpack.c.bf16 %v2463, %v2462
    %v2467 = vpack.c.bf16 %v2465, %v2464
    %2468 = vst [vmem:[#allocation2 + $0x1a0] sm:$0xff] %v2466
    %2469 = vst [vmem:[#allocation2 + $0x1a8] sm:$0xff] %v2467
    %v2470 = vld [vmem:[%s0 + $0x1b] sm:$0x1]
    %v2471 = vld [vmem:[%s0 + $0x1c] sm:$0x1]
    %v2472 = vld [vmem:[%s0 + $0x1d] sm:$0x1]
    %v2473 = vlaneseq
    %v2474 = vshrl.u32 %v2473, 7
    %v2475 = vsub.s32 0, %v2474
    %v2476 = vrot.slane %v2470, %v2475
    %v2477 = vmul.f32 %v2476, %v54
    %v2478 = vmul.f32 %v2476, %v59
    %v2479 = vlaneseq
    %v2480 = vshrl.u32 %v2479, 7
    %v2481 = vsub.s32 0, %v2480
    %v2482 = vrot.slane %v2471, %v2481
    %v2483 = vmul.f32 %v2482, %v70
    %v2484 = vmul.f32 %v2482, %v75
    %v2485 = vadd.f32 %v2477, %v2483
    %v2486 = vadd.f32 %v2478, %v2484
    %v2487 = vlaneseq
    %v2488 = vshrl.u32 %v2487, 7
    %v2489 = vsub.s32 0, %v2488
    %v2490 = vrot.slane %v2472, %v2489
    %v2491 = vmul.f32 %v2490, %v88
    %v2492 = vmul.f32 %v2490, %v93
    %v2493 = vadd.f32 %v2485, %v2491
    %v2494 = vadd.f32 %v2486, %v2492
    %v2495 = vadd.f32 %v2493, %v102
    %v2496 = vadd.f32 %v2494, %v107
    %v2497 = vmax.f32 %v2495, 0.0
    %v2498 = vmax.f32 %v2496, 0.0
    %v2499 = vpack.c.bf16 %v2498, %v2497
    %2500 = vmatprep.subr.bf16.mxu0 0
    %2501 = vmatpush1.bf16.msra.mxu0 %v2499
    %2502 = vmatprep.subr.bf16.mxu0 0
    %2503 = vmatpush1.bf16.msra.mxu0 0
    %2504 = vmatprep.subr.bf16.mxu0 0
    %2505 = vmatpush1.bf16.msra.mxu0 0
    %2506 = vmatprep.subr.bf16.mxu0 0
    %2507 = vmatpush1.bf16.msra.mxu0 0
    %2508 = vmatprep.subr.bf16.mxu0 0
    %2509 = vmatpush1.bf16.msra.mxu0 0
    %2510 = vmatprep.subr.bf16.mxu0 0
    %2511 = vmatpush1.bf16.msra.mxu0 0
    %2512 = vmatprep.subr.bf16.mxu0 0
    %2513 = vmatpush1.bf16.msra.mxu0 0
    %2514 = vmatprep.subr.bf16.mxu0 0
    %2515 = vmatpush1.bf16.msra.mxu0 0
    %2516 = vmatprep.subr.bf16.mxu0 0
    %2517 = vmatpush1.bf16.msra.mxu0 0
    %2518 = vmatprep.subr.bf16.mxu0 0
    %2519 = vmatpush1.bf16.msra.mxu0 0
    %2520 = vmatprep.subr.bf16.mxu0 0
    %2521 = vmatpush1.bf16.msra.mxu0 0
    %2522 = vmatprep.subr.bf16.mxu0 0
    %2523 = vmatpush1.bf16.msra.mxu0 0
    %2524 = vmatprep.subr.bf16.mxu0 0
    %2525 = vmatpush1.bf16.msra.mxu0 0
    %2526 = vmatprep.subr.bf16.mxu0 0
    %2527 = vmatpush1.bf16.msra.mxu0 0
    %2528 = vmatprep.subr.bf16.mxu0 0
    %2529 = vmatpush1.bf16.msra.mxu0 0
    %2530 = vmatprep.subr.bf16.mxu0 0
    %2531 = vmatpush1.bf16.msra.mxu0 0
    %2532 = vmatprep.mubr.bf16.mxu0 0
    %2533 = vmatmul.mubr.bf16.gmra.mrb[0].mxu0 %v146
    %v2534 = vpop.f32.mrb[0].mxu0
    %v2535 = vadd.f32 %v117, %v2534
    %v2536 = vpop.f32.mrb[0].mxu0
    %v2537 = vpop.f32.mrb[0].mxu0
    %v2538 = vadd.f32 %v122, %v2537
    %v2539 = vpop.f32.mrb[0].mxu0
    %2540 = vmatprep.mubr.bf16.mxu0 0
    %2541 = vmatmul.mubr.bf16.gmra.mrb[0].mxu0 %v149
    %v2542 = vpop.f32.mrb[0].mxu0
    %v2543 = vadd.f32 %v127, %v2542
    %v2544 = vpop.f32.mrb[0].mxu0
    %v2545 = vpop.f32.mrb[0].mxu0
    %v2546 = vadd.f32 %v132, %v2545
    %v2547 = vpop.f32.mrb[0].mxu0
    %2548 = vdwg.mxu0
    %v2549 = vmax.f32 %v2535, 0.0
    %v2550 = vmax.f32 %v2538, 0.0
    %v2551 = vmax.f32 %v2543, 0.0
    %v2552 = vmax.f32 %v2546, 0.0
    %v2553 = vpack.c.bf16 %v2550, %v2549
    %v2554 = vpack.c.bf16 %v2552, %v2551
    %2555 = vst [vmem:[#allocation2 + $0x1b0] sm:$0xff] %v2553
    %2556 = vst [vmem:[#allocation2 + $0x1b8] sm:$0xff] %v2554
    %v2557 = vld [vmem:[%s0 + $0x1c] sm:$0x1]
    %v2558 = vld [vmem:[%s0 + $0x1d] sm:$0x1]
    %v2559 = vld [vmem:[%s0 + $0x1e] sm:$0x1]
    %v2560 = vlaneseq
    %v2561 = vshrl.u32 %v2560, 7
    %v2562 = vsub.s32 0, %v2561
    %v2563 = vrot.slane %v2557, %v2562
    %v2564 = vmul.f32 %v2563, %v54
    %v2565 = vmul.f32 %v2563, %v59
    %v2566 = vlaneseq
    %v2567 = vshrl.u32 %v2566, 7
    %v2568 = vsub.s32 0, %v2567
    %v2569 = vrot.slane %v2558, %v2568
    %v2570 = vmul.f32 %v2569, %v70
    %v2571 = vmul.f32 %v2569, %v75
    %v2572 = vadd.f32 %v2564, %v2570
    %v2573 = vadd.f32 %v2565, %v2571
    %v2574 = vlaneseq
    %v2575 = vshrl.u32 %v2574, 7
    %v2576 = vsub.s32 0, %v2575
    %v2577 = vrot.slane %v2559, %v2576
    %v2578 = vmul.f32 %v2577, %v88
    %v2579 = vmul.f32 %v2577, %v93
    %v2580 = vadd.f32 %v2572, %v2578
    %v2581 = vadd.f32 %v2573, %v2579
    %v2582 = vadd.f32 %v2580, %v102
    %v2583 = vadd.f32 %v2581, %v107
    %v2584 = vmax.f32 %v2582, 0.0
    %v2585 = vmax.f32 %v2583, 0.0
    %v2586 = vpack.c.bf16 %v2585, %v2584
    %2587 = vmatprep.subr.bf16.mxu0 0
    %2588 = vmatpush1.bf16.msra.mxu0 %v2586
    %2589 = vmatprep.subr.bf16.mxu0 0
    %2590 = vmatpush1.bf16.msra.mxu0 0
    %2591 = vmatprep.subr.bf16.mxu0 0
    %2592 = vmatpush1.bf16.msra.mxu0 0
    %2593 = vmatprep.subr.bf16.mxu0 0
    %2594 = vmatpush1.bf16.msra.mxu0 0
    %2595 = vmatprep.subr.bf16.mxu0 0
    %2596 = vmatpush1.bf16.msra.mxu0 0
    %2597 = vmatprep.subr.bf16.mxu0 0
    %2598 = vmatpush1.bf16.msra.mxu0 0
    %2599 = vmatprep.subr.bf16.mxu0 0
    %2600 = vmatpush1.bf16.msra.mxu0 0
    %2601 = vmatprep.subr.bf16.mxu0 0
    %2602 = vmatpush1.bf16.msra.mxu0 0
    %2603 = vmatprep.subr.bf16.mxu0 0
    %2604 = vmatpush1.bf16.msra.mxu0 0
    %2605 = vmatprep.subr.bf16.mxu0 0
    %2606 = vmatpush1.bf16.msra.mxu0 0
    %2607 = vmatprep.subr.bf16.mxu0 0
    %2608 = vmatpush1.bf16.msra.mxu0 0
    %2609 = vmatprep.subr.bf16.mxu0 0
    %2610 = vmatpush1.bf16.msra.mxu0 0
    %2611 = vmatprep.subr.bf16.mxu0 0
    %2612 = vmatpush1.bf16.msra.mxu0 0
    %2613 = vmatprep.subr.bf16.mxu0 0
    %2614 = vmatpush1.bf16.msra.mxu0 0
    %2615 = vmatprep.subr.bf16.mxu0 0
    %2616 = vmatpush1.bf16.msra.mxu0 0
    %2617 = vmatprep.subr.bf16.mxu0 0
    %2618 = vmatpush1.bf16.msra.mxu0 0
    %2619 = vmatprep.mubr.bf16.mxu0 0
    %2620 = vmatmul.mubr.bf16.gmra.mrb[0].mxu0 %v146
    %v2621 = vpop.f32.mrb[0].mxu0
    %v2622 = vadd.f32 %v117, %v2621
    %v2623 = vpop.f32.mrb[0].mxu0
    %v2624 = vpop.f32.mrb[0].mxu0
    %v2625 = vadd.f32 %v122, %v2624
    %v2626 = vpop.f32.mrb[0].mxu0
    %2627 = vmatprep.mubr.bf16.mxu0 0
    %2628 = vmatmul.mubr.bf16.gmra.mrb[0].mxu0 %v149
    %v2629 = vpop.f32.mrb[0].mxu0
    %v2630 = vadd.f32 %v127, %v2629
    %v2631 = vpop.f32.mrb[0].mxu0
    %v2632 = vpop.f32.mrb[0].mxu0
    %v2633 = vadd.f32 %v132, %v2632
    %v2634 = vpop.f32.mrb[0].mxu0
    %2635 = vdwg.mxu0
    %v2636 = vmax.f32 %v2622, 0.0
    %v2637 = vmax.f32 %v2625, 0.0
    %v2638 = vmax.f32 %v2630, 0.0
    %v2639 = vmax.f32 %v2633, 0.0
    %v2640 = vpack.c.bf16 %v2637, %v2636
    %v2641 = vpack.c.bf16 %v2639, %v2638
    %2642 = vst [vmem:[#allocation2 + $0x1c0] sm:$0xff] %v2640
    %2643 = vst [vmem:[#allocation2 + $0x1c8] sm:$0xff] %v2641
    %v2644 = vld [vmem:[%s0 + $0x1d] sm:$0x1]
    %v2645 = vld [vmem:[%s0 + $0x1e] sm:$0x1]
    %v2646 = vld [vmem:[%s0 + $0x1f] sm:$0x1]
    %v2647 = vlaneseq
    %v2648 = vshrl.u32 %v2647, 7
    %v2649 = vsub.s32 0, %v2648
    %v2650 = vrot.slane %v2644, %v2649
    %v2651 = vmul.f32 %v2650, %v54
    %v2652 = vmul.f32 %v2650, %v59
    %v2653 = vlaneseq
    %v2654 = vshrl.u32 %v2653, 7
    %v2655 = vsub.s32 0, %v2654
    %v2656 = vrot.slane %v2645, %v2655
    %v2657 = vmul.f32 %v2656, %v70
    %v2658 = vmul.f32 %v2656, %v75
    %v2659 = vadd.f32 %v2651, %v2657
    %v2660 = vadd.f32 %v2652, %v2658
    %v2661 = vlaneseq
    %v2662 = vshrl.u32 %v2661, 7
    %v2663 = vsub.s32 0, %v2662
    %v2664 = vrot.slane %v2646, %v2663
    %v2665 = vmul.f32 %v2664, %v88
    %v2666 = vmul.f32 %v2664, %v93
    %v2667 = vadd.f32 %v2659, %v2665
    %v2668 = vadd.f32 %v2660, %v2666
    %v2669 = vadd.f32 %v2667, %v102
    %v2670 = vadd.f32 %v2668, %v107
    %v2671 = vmax.f32 %v2669, 0.0
    %v2672 = vmax.f32 %v2670, 0.0
    %v2673 = vpack.c.bf16 %v2672, %v2671
    %2674 = vmatprep.subr.bf16.mxu0 0
    %2675 = vmatpush1.bf16.msra.mxu0 %v2673
    %2676 = vmatprep.subr.bf16.mxu0 0
    %2677 = vmatpush1.bf16.msra.mxu0 0
    %2678 = vmatprep.subr.bf16.mxu0 0
    %2679 = vmatpush1.bf16.msra.mxu0 0
    %2680 = vmatprep.subr.bf16.mxu0 0
    %2681 = vmatpush1.bf16.msra.mxu0 0
    %2682 = vmatprep.subr.bf16.mxu0 0
    %2683 = vmatpush1.bf16.msra.mxu0 0
    %2684 = vmatprep.subr.bf16.mxu0 0
    %2685 = vmatpush1.bf16.msra.mxu0 0
    %2686 = vmatprep.subr.bf16.mxu0 0
    %2687 = vmatpush1.bf16.msra.mxu0 0
    %2688 = vmatprep.subr.bf16.mxu0 0
    %2689 = vmatpush1.bf16.msra.mxu0 0
    %2690 = vmatprep.subr.bf16.mxu0 0
    %2691 = vmatpush1.bf16.msra.mxu0 0
    %2692 = vmatprep.subr.bf16.mxu0 0
    %2693 = vmatpush1.bf16.msra.mxu0 0
    %2694 = vmatprep.subr.bf16.mxu0 0
    %2695 = vmatpush1.bf16.msra.mxu0 0
    %2696 = vmatprep.subr.bf16.mxu0 0
    %2697 = vmatpush1.bf16.msra.mxu0 0
    %2698 = vmatprep.subr.bf16.mxu0 0
    %2699 = vmatpush1.bf16.msra.mxu0 0
    %2700 = vmatprep.subr.bf16.mxu0 0
    %2701 = vmatpush1.bf16.msra.mxu0 0
    %2702 = vmatprep.subr.bf16.mxu0 0
    %2703 = vmatpush1.bf16.msra.mxu0 0
    %2704 = vmatprep.subr.bf16.mxu0 0
    %2705 = vmatpush1.bf16.msra.mxu0 0
    %2706 = vmatprep.mubr.bf16.mxu0 0
    %2707 = vmatmul.mubr.bf16.gmra.mrb[0].mxu0 %v146
    %v2708 = vpop.f32.mrb[0].mxu0
    %v2709 = vadd.f32 %v117, %v2708
    %v2710 = vpop.f32.mrb[0].mxu0
    %v2711 = vpop.f32.mrb[0].mxu0
    %v2712 = vadd.f32 %v122, %v2711
    %v2713 = vpop.f32.mrb[0].mxu0
    %2714 = vmatprep.mubr.bf16.mxu0 0
    %2715 = vmatmul.mubr.bf16.gmra.mrb[0].mxu0 %v149
    %v2716 = vpop.f32.mrb[0].mxu0
    %v2717 = vadd.f32 %v127, %v2716
    %v2718 = vpop.f32.mrb[0].mxu0
    %v2719 = vpop.f32.mrb[0].mxu0
    %v2720 = vadd.f32 %v132, %v2719
    %v2721 = vpop.f32.mrb[0].mxu0
    %2722 = vdwg.mxu0
    %v2723 = vmax.f32 %v2709, 0.0
    %v2724 = vmax.f32 %v2712, 0.0
    %v2725 = vmax.f32 %v2717, 0.0
    %v2726 = vmax.f32 %v2720, 0.0
    %v2727 = vpack.c.bf16 %v2724, %v2723
    %v2728 = vpack.c.bf16 %v2726, %v2725
    %2729 = vst [vmem:[#allocation2 + $0x1d0] sm:$0xff] %v2727
    %2730 = vst [vmem:[#allocation2 + $0x1d8] sm:$0xff] %v2728
    %v2731 = vld [vmem:[%s0 + $0x1e] sm:$0x1]
    %v2732 = vld [vmem:[%s0 + $0x1f] sm:$0x1]
    %v2733 = vld [vmem:[%s0 + $0x20] sm:$0x1]
    %v2734 = vlaneseq
    %v2735 = vshrl.u32 %v2734, 7
    %v2736 = vsub.s32 0, %v2735
    %v2737 = vrot.slane %v2731, %v2736
    %v2738 = vmul.f32 %v2737, %v54
    %v2739 = vmul.f32 %v2737, %v59
    %v2740 = vlaneseq
    %v2741 = vshrl.u32 %v2740, 7
    %v2742 = vsub.s32 0, %v2741
    %v2743 = vrot.slane %v2732, %v2742
    %v2744 = vmul.f32 %v2743, %v70
    %v2745 = vmul.f32 %v2743, %v75
    %v2746 = vadd.f32 %v2738, %v2744
    %v2747 = vadd.f32 %v2739, %v2745
    %v2748 = vlaneseq
    %v2749 = vshrl.u32 %v2748, 7
    %v2750 = vsub.s32 0, %v2749
    %v2751 = vrot.slane %v2733, %v2750
    %v2752 = vmul.f32 %v2751, %v88
    %v2753 = vmul.f32 %v2751, %v93
    %v2754 = vadd.f32 %v2746, %v2752
    %v2755 = vadd.f32 %v2747, %v2753
    %v2756 = vadd.f32 %v2754, %v102
    %v2757 = vadd.f32 %v2755, %v107
    %v2758 = vmax.f32 %v2756, 0.0
    %v2759 = vmax.f32 %v2757, 0.0
    %v2760 = vpack.c.bf16 %v2759, %v2758
    %2761 = vmatprep.subr.bf16.mxu0 0
    %2762 = vmatpush1.bf16.msra.mxu0 %v2760
    %2763 = vmatprep.subr.bf16.mxu0 0
    %2764 = vmatpush1.bf16.msra.mxu0 0
    %2765 = vmatprep.subr.bf16.mxu0 0
    %2766 = vmatpush1.bf16.msra.mxu0 0
    %2767 = vmatprep.subr.bf16.mxu0 0
    %2768 = vmatpush1.bf16.msra.mxu0 0
    %2769 = vmatprep.subr.bf16.mxu0 0
    %2770 = vmatpush1.bf16.msra.mxu0 0
    %2771 = vmatprep.subr.bf16.mxu0 0
    %2772 = vmatpush1.bf16.msra.mxu0 0
    %2773 = vmatprep.subr.bf16.mxu0 0
    %2774 = vmatpush1.bf16.msra.mxu0 0
    %2775 = vmatprep.subr.bf16.mxu0 0
    %2776 = vmatpush1.bf16.msra.mxu0 0
    %2777 = vmatprep.subr.bf16.mxu0 0
    %2778 = vmatpush1.bf16.msra.mxu0 0
    %2779 = vmatprep.subr.bf16.mxu0 0
    %2780 = vmatpush1.bf16.msra.mxu0 0
    %2781 = vmatprep.subr.bf16.mxu0 0
    %2782 = vmatpush1.bf16.msra.mxu0 0
    %2783 = vmatprep.subr.bf16.mxu0 0
    %2784 = vmatpush1.bf16.msra.mxu0 0
    %2785 = vmatprep.subr.bf16.mxu0 0
    %2786 = vmatpush1.bf16.msra.mxu0 0
    %2787 = vmatprep.subr.bf16.mxu0 0
    %2788 = vmatpush1.bf16.msra.mxu0 0
    %2789 = vmatprep.subr.bf16.mxu0 0
    %2790 = vmatpush1.bf16.msra.mxu0 0
    %2791 = vmatprep.subr.bf16.mxu0 0
    %2792 = vmatpush1.bf16.msra.mxu0 0
    %2793 = vmatprep.mubr.bf16.mxu0 0
    %2794 = vmatmul.mubr.bf16.gmra.mrb[0].mxu0 %v146
    %v2795 = vpop.f32.mrb[0].mxu0
    %v2796 = vadd.f32 %v117, %v2795
    %v2797 = vpop.f32.mrb[0].mxu0
    %v2798 = vpop.f32.mrb[0].mxu0
    %v2799 = vadd.f32 %v122, %v2798
    %v2800 = vpop.f32.mrb[0].mxu0
    %2801 = vmatprep.mubr.bf16.mxu0 0
    %2802 = vmatmul.mubr.bf16.gmra.mrb[0].mxu0 %v149
    %v2803 = vpop.f32.mrb[0].mxu0
    %v2804 = vadd.f32 %v127, %v2803
    %v2805 = vpop.f32.mrb[0].mxu0
    %v2806 = vpop.f32.mrb[0].mxu0
    %v2807 = vadd.f32 %v132, %v2806
    %v2808 = vpop.f32.mrb[0].mxu0
    %2809 = vdwg.mxu0
    %v2810 = vmax.f32 %v2796, 0.0
    %v2811 = vmax.f32 %v2799, 0.0
    %v2812 = vmax.f32 %v2804, 0.0
    %v2813 = vmax.f32 %v2807, 0.0
    %v2814 = vpack.c.bf16 %v2811, %v2810
    %v2815 = vpack.c.bf16 %v2813, %v2812
    %2816 = vst [vmem:[#allocation2 + $0x1e0] sm:$0xff] %v2814
    %2817 = vst [vmem:[#allocation2 + $0x1e8] sm:$0xff] %v2815
    %v2818 = vld [vmem:[%s0 + $0x1f] sm:$0x1]
    %v2819 = vld [vmem:[%s0 + $0x20] sm:$0x1]
    %v2820 = vld [vmem:[%s0 + $0x21] sm:$0x1]
    %v2821 = vlaneseq
    %v2822 = vshrl.u32 %v2821, 7
    %v2823 = vsub.s32 0, %v2822
    %v2824 = vrot.slane %v2818, %v2823
    %v2825 = vmul.f32 %v2824, %v54
    %v2826 = vmul.f32 %v2824, %v59
    %v2827 = vlaneseq
    %v2828 = vshrl.u32 %v2827, 7
    %v2829 = vsub.s32 0, %v2828
    %v2830 = vrot.slane %v2819, %v2829
    %v2831 = vmul.f32 %v2830, %v70
    %v2832 = vmul.f32 %v2830, %v75
    %v2833 = vadd.f32 %v2825, %v2831
    %v2834 = vadd.f32 %v2826, %v2832
    %v2835 = vlaneseq
    %v2836 = vshrl.u32 %v2835, 7
    %v2837 = vsub.s32 0, %v2836
    %v2838 = vrot.slane %v2820, %v2837
    %v2839 = vmul.f32 %v2838, %v88
    %v2840 = vmul.f32 %v2838, %v93
    %v2841 = vadd.f32 %v2833, %v2839
    %v2842 = vadd.f32 %v2834, %v2840
    %v2843 = vadd.f32 %v2841, %v102
    %v2844 = vadd.f32 %v2842, %v107
    %v2845 = vmax.f32 %v2843, 0.0
    %v2846 = vmax.f32 %v2844, 0.0
    %v2847 = vpack.c.bf16 %v2846, %v2845
    %2848 = vmatprep.subr.bf16.mxu0 0
    %2849 = vmatpush1.bf16.msra.mxu0 %v2847
    %2850 = vmatprep.subr.bf16.mxu0 0
    %2851 = vmatpush1.bf16.msra.mxu0 0
    %2852 = vmatprep.subr.bf16.mxu0 0
    %2853 = vmatpush1.bf16.msra.mxu0 0
    %2854 = vmatprep.subr.bf16.mxu0 0
    %2855 = vmatpush1.bf16.msra.mxu0 0
    %2856 = vmatprep.subr.bf16.mxu0 0
    %2857 = vmatpush1.bf16.msra.mxu0 0
    %2858 = vmatprep.subr.bf16.mxu0 0
    %2859 = vmatpush1.bf16.msra.mxu0 0
    %2860 = vmatprep.subr.bf16.mxu0 0
    %2861 = vmatpush1.bf16.msra.mxu0 0
    %2862 = vmatprep.subr.bf16.mxu0 0
    %2863 = vmatpush1.bf16.msra.mxu0 0
    %2864 = vmatprep.subr.bf16.mxu0 0
    %2865 = vmatpush1.bf16.msra.mxu0 0
    %2866 = vmatprep.subr.bf16.mxu0 0
    %2867 = vmatpush1.bf16.msra.mxu0 0
    %2868 = vmatprep.subr.bf16.mxu0 0
    %2869 = vmatpush1.bf16.msra.mxu0 0
    %2870 = vmatprep.subr.bf16.mxu0 0
    %2871 = vmatpush1.bf16.msra.mxu0 0
    %2872 = vmatprep.subr.bf16.mxu0 0
    %2873 = vmatpush1.bf16.msra.mxu0 0
    %2874 = vmatprep.subr.bf16.mxu0 0
    %2875 = vmatpush1.bf16.msra.mxu0 0
    %2876 = vmatprep.subr.bf16.mxu0 0
    %2877 = vmatpush1.bf16.msra.mxu0 0
    %2878 = vmatprep.subr.bf16.mxu0 0
    %2879 = vmatpush1.bf16.msra.mxu0 0
    %2880 = vmatprep.mubr.bf16.mxu0 0
    %2881 = vmatmul.mubr.bf16.gmra.mrb[0].mxu0 %v146
    %v2882 = vpop.f32.mrb[0].mxu0
    %v2883 = vadd.f32 %v117, %v2882
    %v2884 = vpop.f32.mrb[0].mxu0
    %v2885 = vpop.f32.mrb[0].mxu0
    %v2886 = vadd.f32 %v122, %v2885
    %v2887 = vpop.f32.mrb[0].mxu0
    %2888 = vmatprep.mubr.bf16.mxu0 0
    %2889 = vmatmul.mubr.bf16.gmra.mrb[0].mxu0 %v149
    %v2890 = vpop.f32.mrb[0].mxu0
    %v2891 = vadd.f32 %v127, %v2890
    %v2892 = vpop.f32.mrb[0].mxu0
    %v2893 = vpop.f32.mrb[0].mxu0
    %v2894 = vadd.f32 %v132, %v2893
    %v2895 = vpop.f32.mrb[0].mxu0
    %2896 = vdwg.mxu0
    %v2897 = vmax.f32 %v2883, 0.0
    %v2898 = vmax.f32 %v2886, 0.0
    %v2899 = vmax.f32 %v2891, 0.0
    %v2900 = vmax.f32 %v2894, 0.0
    %v2901 = vpack.c.bf16 %v2898, %v2897
    %v2902 = vpack.c.bf16 %v2900, %v2899
    %2903 = vst [vmem:[#allocation2 + $0x1f0] sm:$0xff] %v2901
    %2904 = vst [vmem:[#allocation2 + $0x1f8] sm:$0xff] %v2902
    %v2905 = vld [vmem:[%s0 + $0x20] sm:$0x1]
    %v2906 = vld [vmem:[%s0 + $0x21] sm:$0x1]
    %v2907 = vld [vmem:[%s0 + $0x22] sm:$0x1]
    %v2908 = vlaneseq
    %v2909 = vshrl.u32 %v2908, 7
    %v2910 = vsub.s32 0, %v2909
    %v2911 = vrot.slane %v2905, %v2910
    %v2912 = vmul.f32 %v2911, %v54
    %v2913 = vmul.f32 %v2911, %v59
    %v2914 = vlaneseq
    %v2915 = vshrl.u32 %v2914, 7
    %v2916 = vsub.s32 0, %v2915
    %v2917 = vrot.slane %v2906, %v2916
    %v2918 = vmul.f32 %v2917, %v70
    %v2919 = vmul.f32 %v2917, %v75
    %v2920 = vadd.f32 %v2912, %v2918
    %v2921 = vadd.f32 %v2913, %v2919
    %v2922 = vlaneseq
    %v2923 = vshrl.u32 %v2922, 7
    %v2924 = vsub.s32 0, %v2923
    %v2925 = vrot.slane %v2907, %v2924
    %v2926 = vmul.f32 %v2925, %v88
    %v2927 = vmul.f32 %v2925, %v93
    %v2928 = vadd.f32 %v2920, %v2926
    %v2929 = vadd.f32 %v2921, %v2927
    %v2930 = vadd.f32 %v2928, %v102
    %v2931 = vadd.f32 %v2929, %v107
    %v2932 = vmax.f32 %v2930, 0.0
    %v2933 = vmax.f32 %v2931, 0.0
    %v2934 = vpack.c.bf16 %v2933, %v2932
    %2935 = vmatprep.subr.bf16.mxu0 0
    %2936 = vmatpush1.bf16.msra.mxu0 %v2934
    %2937 = vmatprep.subr.bf16.mxu0 0
    %2938 = vmatpush1.bf16.msra.mxu0 0
    %2939 = vmatprep.subr.bf16.mxu0 0
    %2940 = vmatpush1.bf16.msra.mxu0 0
    %2941 = vmatprep.subr.bf16.mxu0 0
    %2942 = vmatpush1.bf16.msra.mxu0 0
    %2943 = vmatprep.subr.bf16.mxu0 0
    %2944 = vmatpush1.bf16.msra.mxu0 0
    %2945 = vmatprep.subr.bf16.mxu0 0
    %2946 = vmatpush1.bf16.msra.mxu0 0
    %2947 = vmatprep.subr.bf16.mxu0 0
    %2948 = vmatpush1.bf16.msra.mxu0 0
    %2949 = vmatprep.subr.bf16.mxu0 0
    %2950 = vmatpush1.bf16.msra.mxu0 0
    %2951 = vmatprep.subr.bf16.mxu0 0
    %2952 = vmatpush1.bf16.msra.mxu0 0
    %2953 = vmatprep.subr.bf16.mxu0 0
    %2954 = vmatpush1.bf16.msra.mxu0 0
    %2955 = vmatprep.subr.bf16.mxu0 0
    %2956 = vmatpush1.bf16.msra.mxu0 0
    %2957 = vmatprep.subr.bf16.mxu0 0
    %2958 = vmatpush1.bf16.msra.mxu0 0
    %2959 = vmatprep.subr.bf16.mxu0 0
    %2960 = vmatpush1.bf16.msra.mxu0 0
    %2961 = vmatprep.subr.bf16.mxu0 0
    %2962 = vmatpush1.bf16.msra.mxu0 0
    %2963 = vmatprep.subr.bf16.mxu0 0
    %2964 = vmatpush1.bf16.msra.mxu0 0
    %2965 = vmatprep.subr.bf16.mxu0 0
    %2966 = vmatpush1.bf16.msra.mxu0 0
    %2967 = vmatprep.mubr.bf16.mxu0 0
    %2968 = vmatmul.mubr.bf16.gmra.mrb[0].mxu0 %v146
    %v2969 = vpop.f32.mrb[0].mxu0
    %v2970 = vadd.f32 %v117, %v2969
    %v2971 = vpop.f32.mrb[0].mxu0
    %v2972 = vpop.f32.mrb[0].mxu0
    %v2973 = vadd.f32 %v122, %v2972
    %v2974 = vpop.f32.mrb[0].mxu0
    %2975 = vmatprep.mubr.bf16.mxu0 0
    %2976 = vmatmul.mubr.bf16.gmra.mrb[0].mxu0 %v149
    %v2977 = vpop.f32.mrb[0].mxu0
    %v2978 = vadd.f32 %v127, %v2977
    %v2979 = vpop.f32.mrb[0].mxu0
    %v2980 = vpop.f32.mrb[0].mxu0
    %v2981 = vadd.f32 %v132, %v2980
    %v2982 = vpop.f32.mrb[0].mxu0
    %2983 = vdwg.mxu0
    %v2984 = vmax.f32 %v2970, 0.0
    %v2985 = vmax.f32 %v2973, 0.0
    %v2986 = vmax.f32 %v2978, 0.0
    %v2987 = vmax.f32 %v2981, 0.0
    %v2988 = vpack.c.bf16 %v2985, %v2984
    %v2989 = vpack.c.bf16 %v2987, %v2986
    %2990 = vst [vmem:[#allocation2 + $0x200] sm:$0xff] %v2988
    %2991 = vst [vmem:[#allocation2 + $0x208] sm:$0xff] %v2989
    %v2992 = vld [vmem:[%s0 + $0x21] sm:$0x1]
    %v2993 = vld [vmem:[%s0 + $0x22] sm:$0x1]
    %v2994 = vld [vmem:[%s0 + $0x23] sm:$0x1]
    %v2995 = vlaneseq
    %v2996 = vshrl.u32 %v2995, 7
    %v2997 = vsub.s32 0, %v2996
    %v2998 = vrot.slane %v2992, %v2997
    %v2999 = vmul.f32 %v2998, %v54
    %v3000 = vmul.f32 %v2998, %v59
    %v3001 = vlaneseq
    %v3002 = vshrl.u32 %v3001, 7
    %v3003 = vsub.s32 0, %v3002
    %v3004 = vrot.slane %v2993, %v3003
    %v3005 = vmul.f32 %v3004, %v70
    %v3006 = vmul.f32 %v3004, %v75
    %v3007 = vadd.f32 %v2999, %v3005
    %v3008 = vadd.f32 %v3000, %v3006
    %v3009 = vlaneseq
    %v3010 = vshrl.u32 %v3009, 7
    %v3011 = vsub.s32 0, %v3010
    %v3012 = vrot.slane %v2994, %v3011
    %v3013 = vmul.f32 %v3012, %v88
    %v3014 = vmul.f32 %v3012, %v93
    %v3015 = vadd.f32 %v3007, %v3013
    %v3016 = vadd.f32 %v3008, %v3014
    %v3017 = vadd.f32 %v3015, %v102
    %v3018 = vadd.f32 %v3016, %v107
    %v3019 = vmax.f32 %v3017, 0.0
    %v3020 = vmax.f32 %v3018, 0.0
    %v3021 = vpack.c.bf16 %v3020, %v3019
    %3022 = vmatprep.subr.bf16.mxu0 0
    %3023 = vmatpush1.bf16.msra.mxu0 %v3021
    %3024 = vmatprep.subr.bf16.mxu0 0
    %3025 = vmatpush1.bf16.msra.mxu0 0
    %3026 = vmatprep.subr.bf16.mxu0 0
    %3027 = vmatpush1.bf16.msra.mxu0 0
    %3028 = vmatprep.subr.bf16.mxu0 0
    %3029 = vmatpush1.bf16.msra.mxu0 0
    %3030 = vmatprep.subr.bf16.mxu0 0
    %3031 = vmatpush1.bf16.msra.mxu0 0
    %3032 = vmatprep.subr.bf16.mxu0 0
    %3033 = vmatpush1.bf16.msra.mxu0 0
    %3034 = vmatprep.subr.bf16.mxu0 0
    %3035 = vmatpush1.bf16.msra.mxu0 0
    %3036 = vmatprep.subr.bf16.mxu0 0
    %3037 = vmatpush1.bf16.msra.mxu0 0
    %3038 = vmatprep.subr.bf16.mxu0 0
    %3039 = vmatpush1.bf16.msra.mxu0 0
    %3040 = vmatprep.subr.bf16.mxu0 0
    %3041 = vmatpush1.bf16.msra.mxu0 0
    %3042 = vmatprep.subr.bf16.mxu0 0
    %3043 = vmatpush1.bf16.msra.mxu0 0
    %3044 = vmatprep.subr.bf16.mxu0 0
    %3045 = vmatpush1.bf16.msra.mxu0 0
    %3046 = vmatprep.subr.bf16.mxu0 0
    %3047 = vmatpush1.bf16.msra.mxu0 0
    %3048 = vmatprep.subr.bf16.mxu0 0
    %3049 = vmatpush1.bf16.msra.mxu0 0
    %3050 = vmatprep.subr.bf16.mxu0 0
    %3051 = vmatpush1.bf16.msra.mxu0 0
    %3052 = vmatprep.subr.bf16.mxu0 0
    %3053 = vmatpush1.bf16.msra.mxu0 0
    %3054 = vmatprep.mubr.bf16.mxu0 0
    %3055 = vmatmul.mubr.bf16.gmra.mrb[0].mxu0 %v146
    %v3056 = vpop.f32.mrb[0].mxu0
    %v3057 = vadd.f32 %v117, %v3056
    %v3058 = vpop.f32.mrb[0].mxu0
    %v3059 = vpop.f32.mrb[0].mxu0
    %v3060 = vadd.f32 %v122, %v3059
    %v3061 = vpop.f32.mrb[0].mxu0
    %3062 = vmatprep.mubr.bf16.mxu0 0
    %3063 = vmatmul.mubr.bf16.gmra.mrb[0].mxu0 %v149
    %v3064 = vpop.f32.mrb[0].mxu0
    %v3065 = vadd.f32 %v127, %v3064
    %v3066 = vpop.f32.mrb[0].mxu0
    %v3067 = vpop.f32.mrb[0].mxu0
    %v3068 = vadd.f32 %v132, %v3067
    %v3069 = vpop.f32.mrb[0].mxu0
    %3070 = vdwg.mxu0
    %v3071 = vmax.f32 %v3057, 0.0
    %v3072 = vmax.f32 %v3060, 0.0
    %v3073 = vmax.f32 %v3065, 0.0
    %v3074 = vmax.f32 %v3068, 0.0
    %v3075 = vpack.c.bf16 %v3072, %v3071
    %v3076 = vpack.c.bf16 %v3074, %v3073
    %3077 = vst [vmem:[#allocation2 + $0x210] sm:$0xff] %v3075
    %3078 = vst [vmem:[#allocation2 + $0x218] sm:$0xff] %v3076
    %v3079 = vld [vmem:[%s0 + $0x22] sm:$0x1]
    %v3080 = vld [vmem:[%s0 + $0x23] sm:$0x1]
    %v3081 = vld [vmem:[%s0 + $0x24] sm:$0x1]
    %v3082 = vlaneseq
    %v3083 = vshrl.u32 %v3082, 7
    %v3084 = vsub.s32 0, %v3083
    %v3085 = vrot.slane %v3079, %v3084
    %v3086 = vmul.f32 %v3085, %v54
    %v3087 = vmul.f32 %v3085, %v59
    %v3088 = vlaneseq
    %v3089 = vshrl.u32 %v3088, 7
    %v3090 = vsub.s32 0, %v3089
    %v3091 = vrot.slane %v3080, %v3090
    %v3092 = vmul.f32 %v3091, %v70
    %v3093 = vmul.f32 %v3091, %v75
    %v3094 = vadd.f32 %v3086, %v3092
    %v3095 = vadd.f32 %v3087, %v3093
    %v3096 = vlaneseq
    %v3097 = vshrl.u32 %v3096, 7
    %v3098 = vsub.s32 0, %v3097
    %v3099 = vrot.slane %v3081, %v3098
    %v3100 = vmul.f32 %v3099, %v88
    %v3101 = vmul.f32 %v3099, %v93
    %v3102 = vadd.f32 %v3094, %v3100
    %v3103 = vadd.f32 %v3095, %v3101
    %v3104 = vadd.f32 %v3102, %v102
    %v3105 = vadd.f32 %v3103, %v107
    %v3106 = vmax.f32 %v3104, 0.0
    %v3107 = vmax.f32 %v3105, 0.0
    %v3108 = vpack.c.bf16 %v3107, %v3106
    %3109 = vmatprep.subr.bf16.mxu0 0
    %3110 = vmatpush1.bf16.msra.mxu0 %v3108
    %3111 = vmatprep.subr.bf16.mxu0 0
    %3112 = vmatpush1.bf16.msra.mxu0 0
    %3113 = vmatprep.subr.bf16.mxu0 0
    %3114 = vmatpush1.bf16.msra.mxu0 0
    %3115 = vmatprep.subr.bf16.mxu0 0
    %3116 = vmatpush1.bf16.msra.mxu0 0
    %3117 = vmatprep.subr.bf16.mxu0 0
    %3118 = vmatpush1.bf16.msra.mxu0 0
    %3119 = vmatprep.subr.bf16.mxu0 0
    %3120 = vmatpush1.bf16.msra.mxu0 0
    %3121 = vmatprep.subr.bf16.mxu0 0
    %3122 = vmatpush1.bf16.msra.mxu0 0
    %3123 = vmatprep.subr.bf16.mxu0 0
    %3124 = vmatpush1.bf16.msra.mxu0 0
    %3125 = vmatprep.subr.bf16.mxu0 0
    %3126 = vmatpush1.bf16.msra.mxu0 0
    %3127 = vmatprep.subr.bf16.mxu0 0
    %3128 = vmatpush1.bf16.msra.mxu0 0
    %3129 = vmatprep.subr.bf16.mxu0 0
    %3130 = vmatpush1.bf16.msra.mxu0 0
    %3131 = vmatprep.subr.bf16.mxu0 0
    %3132 = vmatpush1.bf16.msra.mxu0 0
    %3133 = vmatprep.subr.bf16.mxu0 0
    %3134 = vmatpush1.bf16.msra.mxu0 0
    %3135 = vmatprep.subr.bf16.mxu0 0
    %3136 = vmatpush1.bf16.msra.mxu0 0
    %3137 = vmatprep.subr.bf16.mxu0 0
    %3138 = vmatpush1.bf16.msra.mxu0 0
    %3139 = vmatprep.subr.bf16.mxu0 0
    %3140 = vmatpush1.bf16.msra.mxu0 0
    %3141 = vmatprep.mubr.bf16.mxu0 0
    %3142 = vmatmul.mubr.bf16.gmra.mrb[0].mxu0 %v146
    %v3143 = vpop.f32.mrb[0].mxu0
    %v3144 = vadd.f32 %v117, %v3143
    %v3145 = vpop.f32.mrb[0].mxu0
    %v3146 = vpop.f32.mrb[0].mxu0
    %v3147 = vadd.f32 %v122, %v3146
    %v3148 = vpop.f32.mrb[0].mxu0
    %3149 = vmatprep.mubr.bf16.mxu0 0
    %3150 = vmatmul.mubr.bf16.gmra.mrb[0].mxu0 %v149
    %v3151 = vpop.f32.mrb[0].mxu0
    %v3152 = vadd.f32 %v127, %v3151
    %v3153 = vpop.f32.mrb[0].mxu0
    %v3154 = vpop.f32.mrb[0].mxu0
    %v3155 = vadd.f32 %v132, %v3154
    %v3156 = vpop.f32.mrb[0].mxu0
    %3157 = vdwg.mxu0
    %v3158 = vmax.f32 %v3144, 0.0
    %v3159 = vmax.f32 %v3147, 0.0
    %v3160 = vmax.f32 %v3152, 0.0
    %v3161 = vmax.f32 %v3155, 0.0
    %v3162 = vpack.c.bf16 %v3159, %v3158
    %v3163 = vpack.c.bf16 %v3161, %v3160
    %3164 = vst [vmem:[#allocation2 + $0x220] sm:$0xff] %v3162
    %3165 = vst [vmem:[#allocation2 + $0x228] sm:$0xff] %v3163
    %v3166 = vld [vmem:[%s5] sm:$0xff]
    %v3167 = vld [vmem:[%s5 + $0x8] sm:$0xff]
    %v3168 = vld [vmem:[%s5 + $0x10] sm:$0xff]
    %v3169 = vld [vmem:[%s5 + $0x18] sm:$0xff]
    %v3170 = vld [vmem:[%s5 + $0x20] sm:$0xf]
    %v3171 = vld [vmem:[%s5 + $0x24] sm:$0xff]
    %v3172 = vld [vmem:[%s5 + $0x2c] sm:$0xff]
    %v3173 = vld [vmem:[%s5 + $0x34] sm:$0xff]
    %v3174 = vld [vmem:[%s5 + $0x3c] sm:$0xff]
    %v3175 = vld [vmem:[%s5 + $0x44] sm:$0xf]
    %v3176 = vld [vmem:[%s5 + $0x48] sm:$0xff]
    %v3177 = vld [vmem:[%s5 + $0x50] sm:$0xff]
    %v3178 = vld [vmem:[%s5 + $0x58] sm:$0xff]
    %v3179 = vld [vmem:[%s5 + $0x60] sm:$0xff]
    %v3180 = vld [vmem:[%s5 + $0x68] sm:$0xf]
    %v3181 = vld [vmem:[%s5 + $0x6c] sm:$0xff]
    %v3182 = vld [vmem:[%s5 + $0x74] sm:$0xff]
    %v3183 = vld [vmem:[%s5 + $0x7c] sm:$0xff]
    %v3184 = vld [vmem:[%s5 + $0x84] sm:$0xff]
    %v3185 = vld [vmem:[%s5 + $0x8c] sm:$0xf]
    %v3186 = vld [vmem:[%s5 + $0x90] sm:$0xff]
    %v3187 = vld [vmem:[%s5 + $0x98] sm:$0xff]
    %v3188 = vld [vmem:[%s5 + $0xa0] sm:$0xff]
    %v3189 = vld [vmem:[%s5 + $0xa8] sm:$0xff]
    %v3190 = vld [vmem:[%s5 + $0xb0] sm:$0xf]
    %v3191 = vld [vmem:[%s5 + $0xb4] sm:$0xff]
    %v3192 = vld [vmem:[%s5 + $0xbc] sm:$0xff]
    %v3193 = vld [vmem:[%s5 + $0xc4] sm:$0xff]
    %v3194 = vld [vmem:[%s5 + $0xcc] sm:$0xff]
    %v3195 = vld [vmem:[%s5 + $0xd4] sm:$0xf]
    %v3196 = vld [vmem:[%s5 + $0xd8] sm:$0xff]
    %v3197 = vld [vmem:[%s5 + $0xe0] sm:$0xff]
    %v3198 = vld [vmem:[%s5 + $0xe8] sm:$0xff]
    %v3199 = vld [vmem:[%s5 + $0xf0] sm:$0xff]
    %v3200 = vld [vmem:[%s5 + $0xf8] sm:$0xf]
    %v3201 = vld [vmem:[%s5 + $0xfc] sm:$0xff]
    %v3202 = vld [vmem:[%s5 + $0x104] sm:$0xff]
    %v3203 = vld [vmem:[%s5 + $0x10c] sm:$0xff]
    %v3204 = vld [vmem:[%s5 + $0x114] sm:$0xff]
    %v3205 = vld [vmem:[%s5 + $0x11c] sm:$0xf]
    %v3206 = vld [vmem:[%s5 + $0x120] sm:$0xff]
    %v3207 = vld [vmem:[%s5 + $0x128] sm:$0xff]
    %v3208 = vld [vmem:[%s5 + $0x130] sm:$0xff]
    %v3209 = vld [vmem:[%s5 + $0x138] sm:$0xff]
    %v3210 = vld [vmem:[%s5 + $0x140] sm:$0xf]
    %v3211 = vld [vmem:[%s5 + $0x144] sm:$0xff]
    %v3212 = vld [vmem:[%s5 + $0x14c] sm:$0xff]
    %v3213 = vld [vmem:[%s5 + $0x154] sm:$0xff]
    %v3214 = vld [vmem:[%s5 + $0x15c] sm:$0xff]
    %v3215 = vld [vmem:[%s5 + $0x164] sm:$0xf]
    %v3216 = vld [vmem:[%s5 + $0x168] sm:$0xff]
    %v3217 = vld [vmem:[%s5 + $0x170] sm:$0xff]
    %v3218 = vld [vmem:[%s5 + $0x178] sm:$0xff]
    %v3219 = vld [vmem:[%s5 + $0x180] sm:$0xff]
    %v3220 = vld [vmem:[%s5 + $0x188] sm:$0xf]
    %v3221 = vld [vmem:[%s5 + $0x18c] sm:$0xff]
    %v3222 = vld [vmem:[%s5 + $0x194] sm:$0xff]
    %v3223 = vld [vmem:[%s5 + $0x19c] sm:$0xff]
    %v3224 = vld [vmem:[%s5 + $0x1a4] sm:$0xff]
    %v3225 = vld [vmem:[%s5 + $0x1ac] sm:$0xf]
    %v3226 = vld [vmem:[%s5 + $0x1b0] sm:$0xff]
    %v3227 = vld [vmem:[%s5 + $0x1b8] sm:$0xff]
    %v3228 = vld [vmem:[%s5 + $0x1c0] sm:$0xff]
    %v3229 = vld [vmem:[%s5 + $0x1c8] sm:$0xff]
    %v3230 = vld [vmem:[%s5 + $0x1d0] sm:$0xf]
    %v3231 = vld [vmem:[%s5 + $0x1d4] sm:$0xff]
    %v3232 = vld [vmem:[%s5 + $0x1dc] sm:$0xff]
    %v3233 = vld [vmem:[%s5 + $0x1e4] sm:$0xff]
    %v3234 = vld [vmem:[%s5 + $0x1ec] sm:$0xff]
    %v3235 = vld [vmem:[%s5 + $0x1f4] sm:$0xf]
    %v3236 = vld [vmem:[%s5 + $0x1f8] sm:$0xff]
    %v3237 = vld [vmem:[%s5 + $0x200] sm:$0xff]
    %v3238 = vld [vmem:[%s5 + $0x208] sm:$0xff]
    %v3239 = vld [vmem:[%s5 + $0x210] sm:$0xff]
    %v3240 = vld [vmem:[%s5 + $0x218] sm:$0xf]
    %v3241 = vld [vmem:[%s5 + $0x21c] sm:$0xff]
    %v3242 = vld [vmem:[%s5 + $0x224] sm:$0xff]
    %v3243 = vld [vmem:[%s5 + $0x22c] sm:$0xff]
    %v3244 = vld [vmem:[%s5 + $0x234] sm:$0xff]
    %v3245 = vld [vmem:[%s5 + $0x23c] sm:$0xf]
    %v3246 = vld [vmem:[#allocation2] sm:$0xff]
    %v3247 = vld [vmem:[#allocation2 + $0x8] sm:$0xff]
    %v3248 = vld [vmem:[#allocation2 + $0x10] sm:$0xff]
    %v3249 = vld [vmem:[#allocation2 + $0x18] sm:$0xff]
    %v3250 = vld [vmem:[#allocation2 + $0x20] sm:$0xff]
    %v3251 = vld [vmem:[#allocation2 + $0x28] sm:$0xff]
    %v3252 = vld [vmem:[#allocation2 + $0x30] sm:$0xff]
    %v3253 = vld [vmem:[#allocation2 + $0x38] sm:$0xff]
    %v3254 = vld [vmem:[#allocation2 + $0x40] sm:$0xff]
    %v3255 = vld [vmem:[#allocation2 + $0x48] sm:$0xff]
    %v3256 = vld [vmem:[#allocation2 + $0x50] sm:$0xff]
    %v3257 = vld [vmem:[#allocation2 + $0x58] sm:$0xff]
    %v3258 = vld [vmem:[#allocation2 + $0x60] sm:$0xff]
    %v3259 = vld [vmem:[#allocation2 + $0x68] sm:$0xff]
    %v3260 = vld [vmem:[#allocation2 + $0x70] sm:$0xff]
    %v3261 = vld [vmem:[#allocation2 + $0x78] sm:$0xff]
    %v3262 = vld [vmem:[#allocation2 + $0x80] sm:$0xff]
    %v3263 = vld [vmem:[#allocation2 + $0x88] sm:$0xff]
    %v3264 = vld [vmem:[#allocation2 + $0x90] sm:$0xff]
    %v3265 = vld [vmem:[#allocation2 + $0x98] sm:$0xff]
    %v3266 = vld [vmem:[#allocation2 + $0xa0] sm:$0xff]
    %v3267 = vld [vmem:[#allocation2 + $0xa8] sm:$0xff]
    %v3268 = vld [vmem:[#allocation2 + $0xb0] sm:$0xff]
    %v3269 = vld [vmem:[#allocation2 + $0xb8] sm:$0xff]
    %v3270 = vld [vmem:[#allocation2 + $0xc0] sm:$0xff]
    %v3271 = vld [vmem:[#allocation2 + $0xc8] sm:$0xff]
    %v3272 = vld [vmem:[#allocation2 + $0xd0] sm:$0xff]
    %v3273 = vld [vmem:[#allocation2 + $0xd8] sm:$0xff]
    %v3274 = vld [vmem:[#allocation2 + $0xe0] sm:$0xff]
    %v3275 = vld [vmem:[#allocation2 + $0xe8] sm:$0xff]
    %v3276 = vld [vmem:[#allocation2 + $0xf0] sm:$0xff]
    %v3277 = vld [vmem:[#allocation2 + $0xf8] sm:$0xff]
    %v3278 = vld [vmem:[#allocation2 + $0x100] sm:$0xff]
    %v3279 = vld [vmem:[#allocation2 + $0x108] sm:$0xff]
    %v3280 = vld [vmem:[#allocation2 + $0x110] sm:$0xff]
    %v3281 = vld [vmem:[#allocation2 + $0x118] sm:$0xff]
    %v3282 = vld [vmem:[#allocation2 + $0x120] sm:$0xff]
    %v3283 = vld [vmem:[#allocation2 + $0x128] sm:$0xff]
    %v3284 = vld [vmem:[#allocation2 + $0x130] sm:$0xff]
    %v3285 = vld [vmem:[#allocation2 + $0x138] sm:$0xff]
    %v3286 = vld [vmem:[#allocation2 + $0x140] sm:$0xff]
    %v3287 = vld [vmem:[#allocation2 + $0x148] sm:$0xff]
    %v3288 = vld [vmem:[#allocation2 + $0x150] sm:$0xff]
    %v3289 = vld [vmem:[#allocation2 + $0x158] sm:$0xff]
    %v3290 = vld [vmem:[#allocation2 + $0x160] sm:$0xff]
    %v3291 = vld [vmem:[#allocation2 + $0x168] sm:$0xff]
    %v3292 = vld [vmem:[#allocation2 + $0x170] sm:$0xff]
    %v3293 = vld [vmem:[#allocation2 + $0x178] sm:$0xff]
    %v3294 = vld [vmem:[#allocation2 + $0x180] sm:$0xff]
    %v3295 = vld [vmem:[#allocation2 + $0x188] sm:$0xff]
    %v3296 = vld [vmem:[#allocation2 + $0x190] sm:$0xff]
    %v3297 = vld [vmem:[#allocation2 + $0x198] sm:$0xff]
    %v3298 = vld [vmem:[#allocation2 + $0x1a0] sm:$0xff]
    %v3299 = vld [vmem:[#allocation2 + $0x1a8] sm:$0xff]
    %v3300 = vld [vmem:[#allocation2 + $0x1b0] sm:$0xff]
    %v3301 = vld [vmem:[#allocation2 + $0x1b8] sm:$0xff]
    %v3302 = vld [vmem:[#allocation2 + $0x1c0] sm:$0xff]
    %v3303 = vld [vmem:[#allocation2 + $0x1c8] sm:$0xff]
    %v3304 = vld [vmem:[#allocation2 + $0x1d0] sm:$0xff]
    %v3305 = vld [vmem:[#allocation2 + $0x1d8] sm:$0xff]
    %v3306 = vld [vmem:[#allocation2 + $0x1e0] sm:$0xff]
    %v3307 = vld [vmem:[#allocation2 + $0x1e8] sm:$0xff]
    %v3308 = vld [vmem:[#allocation2 + $0x1f0] sm:$0xff]
    %v3309 = vld [vmem:[#allocation2 + $0x1f8] sm:$0xff]
    %v3310 = vld [vmem:[#allocation2 + $0x200] sm:$0xff]
    %v3311 = vld [vmem:[#allocation2 + $0x208] sm:$0xff]
    %v3312 = vld [vmem:[#allocation2 + $0x210] sm:$0xff]
    %v3313 = vld [vmem:[#allocation2 + $0x218] sm:$0xff]
    %v3314 = vld [vmem:[#allocation2 + $0x220] sm:$0xff]
    %v3315 = vld [vmem:[#allocation2 + $0x228] sm:$0xff]
    %v3316 = vld [vmem:[%s6] sm:$0xff]
    %v3317 = vld [vmem:[%s6 + $0x8] sm:$0xff]
    %v3318 = vld [vmem:[%s6 + $0x10] sm:$0xff]
    %v3319 = vld [vmem:[%s6 + $0x18] sm:$0xff]
    %v3320 = vld [vmem:[%s6 + $0x20] sm:$0xff]
    %v3321 = vld [vmem:[%s6 + $0x28] sm:$0xff]
    %v3322 = vld [vmem:[%s6 + $0x30] sm:$0xff]
    %v3323 = vld [vmem:[%s6 + $0x38] sm:$0xff]
    %v3324 = vld [vmem:[%s6 + $0x40] sm:$0xff]
    %v3325 = vld [vmem:[%s6 + $0x48] sm:$0xff]
    %v3326 = vld [vmem:[%s6 + $0x50] sm:$0xff]
    %v3327 = vld [vmem:[%s6 + $0x58] sm:$0xff]
    %v3328 = vld [vmem:[%s6 + $0x60] sm:$0xff]
    %v3329 = vld [vmem:[%s6 + $0x68] sm:$0xff]
    %v3330 = vld [vmem:[%s6 + $0x70] sm:$0xff]
    %v3331 = vld [vmem:[%s6 + $0x78] sm:$0xff]
    %3333 = vset.pattern.permute.xlu0 0
    %3334 = vperm.xlu0 %3333, %v3316
    %v3335 = vpop.permute.xlu0 %3334
    %3338 = vset.pattern.permute.xlu0 0
    %3339 = vperm.xlu0 %3338, %v3317
    %v3340 = vpop.permute.xlu0 %3339
    %3343 = vset.pattern.permute.xlu0 0
    %3344 = vperm.xlu0 %3343, %v3318
    %v3345 = vpop.permute.xlu0 %3344
    %3348 = vset.pattern.permute.xlu0 0
    %3349 = vperm.xlu0 %3348, %v3319
    %v3350 = vpop.permute.xlu0 %3349
    %3353 = vset.pattern.permute.xlu0 0
    %3354 = vperm.xlu0 %3353, %v3320
    %v3355 = vpop.permute.xlu0 %3354
    %3358 = vset.pattern.permute.xlu0 0
    %3359 = vperm.xlu0 %3358, %v3321
    %v3360 = vpop.permute.xlu0 %3359
    %3363 = vset.pattern.permute.xlu0 0
    %3364 = vperm.xlu0 %3363, %v3322
    %v3365 = vpop.permute.xlu0 %3364
    %3368 = vset.pattern.permute.xlu0 0
    %3369 = vperm.xlu0 %3368, %v3323
    %v3370 = vpop.permute.xlu0 %3369
    %3373 = vset.pattern.permute.xlu0 0
    %3374 = vperm.xlu0 %3373, %v3324
    %v3375 = vpop.permute.xlu0 %3374
    %3378 = vset.pattern.permute.xlu0 0
    %3379 = vperm.xlu0 %3378, %v3325
    %v3380 = vpop.permute.xlu0 %3379
    %3383 = vset.pattern.permute.xlu0 0
    %3384 = vperm.xlu0 %3383, %v3326
    %v3385 = vpop.permute.xlu0 %3384
    %3388 = vset.pattern.permute.xlu0 0
    %3389 = vperm.xlu0 %3388, %v3327
    %v3390 = vpop.permute.xlu0 %3389
    %3393 = vset.pattern.permute.xlu0 0
    %3394 = vperm.xlu0 %3393, %v3328
    %v3395 = vpop.permute.xlu0 %3394
    %3398 = vset.pattern.permute.xlu0 0
    %3399 = vperm.xlu0 %3398, %v3329
    %v3400 = vpop.permute.xlu0 %3399
    %3403 = vset.pattern.permute.xlu0 0
    %3404 = vperm.xlu0 %3403, %v3330
    %v3405 = vpop.permute.xlu0 %3404
    %3408 = vset.pattern.permute.xlu0 0
    %3409 = vperm.xlu0 %3408, %v3331
    %v3410 = vpop.permute.xlu0 %3409
    %v3492 = vunpack.c.l.b16 %v3166
    %v3493 = vunpack.c.h.b16 %v3166
    %v3494 = vunpack.c.l.b16 %v3167
    %v3495 = vunpack.c.h.b16 %v3167
    %v3496 = vunpack.c.l.b16 %v3168
    %v3497 = vunpack.c.h.b16 %v3168
    %v3498 = vunpack.c.l.b16 %v3169
    %v3499 = vunpack.c.h.b16 %v3169
    %v3500 = vunpack.c.l.b16 %v3170
    %v3501 = vunpack.c.l.b16 %v3171
    %v3502 = vunpack.c.h.b16 %v3171
    %v3503 = vunpack.c.l.b16 %v3172
    %v3504 = vunpack.c.h.b16 %v3172
    %v3505 = vunpack.c.l.b16 %v3173
    %v3506 = vunpack.c.h.b16 %v3173
    %v3507 = vunpack.c.l.b16 %v3174
    %v3508 = vunpack.c.h.b16 %v3174
    %v3509 = vunpack.c.l.b16 %v3175
    %v3510 = vunpack.c.l.b16 %v3176
    %v3511 = vunpack.c.h.b16 %v3176
    %v3512 = vunpack.c.l.b16 %v3177
    %v3513 = vunpack.c.h.b16 %v3177
    %v3514 = vunpack.c.l.b16 %v3178
    %v3515 = vunpack.c.h.b16 %v3178
    %v3516 = vunpack.c.l.b16 %v3179
    %v3517 = vunpack.c.h.b16 %v3179
    %v3518 = vunpack.c.l.b16 %v3180
    %v3519 = vunpack.c.l.b16 %v3181
    %v3520 = vunpack.c.h.b16 %v3181
    %v3521 = vunpack.c.l.b16 %v3182
    %v3522 = vunpack.c.h.b16 %v3182
    %v3523 = vunpack.c.l.b16 %v3183
    %v3524 = vunpack.c.h.b16 %v3183
    %v3525 = vunpack.c.l.b16 %v3184
    %v3526 = vunpack.c.h.b16 %v3184
    %v3527 = vunpack.c.l.b16 %v3185
    %v3528 = vunpack.c.l.b16 %v3186
    %v3529 = vunpack.c.h.b16 %v3186
    %v3530 = vunpack.c.l.b16 %v3187
    %v3531 = vunpack.c.h.b16 %v3187
    %v3532 = vunpack.c.l.b16 %v3188
    %v3533 = vunpack.c.h.b16 %v3188
    %v3534 = vunpack.c.l.b16 %v3189
    %v3535 = vunpack.c.h.b16 %v3189
    %v3536 = vunpack.c.l.b16 %v3190
    %v3537 = vunpack.c.l.b16 %v3191
    %v3538 = vunpack.c.h.b16 %v3191
    %v3539 = vunpack.c.l.b16 %v3192
    %v3540 = vunpack.c.h.b16 %v3192
    %v3541 = vunpack.c.l.b16 %v3193
    %v3542 = vunpack.c.h.b16 %v3193
    %v3543 = vunpack.c.l.b16 %v3194
    %v3544 = vunpack.c.h.b16 %v3194
    %v3545 = vunpack.c.l.b16 %v3195
    %v3546 = vunpack.c.l.b16 %v3196
    %v3547 = vunpack.c.h.b16 %v3196
    %v3548 = vunpack.c.l.b16 %v3197
    %v3549 = vunpack.c.h.b16 %v3197
    %v3550 = vunpack.c.l.b16 %v3198
    %v3551 = vunpack.c.h.b16 %v3198
    %v3552 = vunpack.c.l.b16 %v3199
    %v3553 = vunpack.c.h.b16 %v3199
    %v3554 = vunpack.c.l.b16 %v3200
    %v3555 = vunpack.c.l.b16 %v3201
    %v3556 = vunpack.c.h.b16 %v3201
    %v3557 = vunpack.c.l.b16 %v3202
    %v3558 = vunpack.c.h.b16 %v3202
    %v3559 = vunpack.c.l.b16 %v3203
    %v3560 = vunpack.c.h.b16 %v3203
    %v3561 = vunpack.c.l.b16 %v3204
    %v3562 = vunpack.c.h.b16 %v3204
    %v3563 = vunpack.c.l.b16 %v3205
    %v3564 = vunpack.c.l.b16 %v3206
    %v3565 = vunpack.c.h.b16 %v3206
    %v3566 = vunpack.c.l.b16 %v3207
    %v3567 = vunpack.c.h.b16 %v3207
    %v3568 = vunpack.c.l.b16 %v3208
    %v3569 = vunpack.c.h.b16 %v3208
    %v3570 = vunpack.c.l.b16 %v3209
    %v3571 = vunpack.c.h.b16 %v3209
    %v3572 = vunpack.c.l.b16 %v3210
    %v3573 = vunpack.c.l.b16 %v3211
    %v3574 = vunpack.c.h.b16 %v3211
    %v3575 = vunpack.c.l.b16 %v3212
    %v3576 = vunpack.c.h.b16 %v3212
    %v3577 = vunpack.c.l.b16 %v3213
    %v3578 = vunpack.c.h.b16 %v3213
    %v3579 = vunpack.c.l.b16 %v3214
    %v3580 = vunpack.c.h.b16 %v3214
    %v3581 = vunpack.c.l.b16 %v3215
    %v3582 = vunpack.c.l.b16 %v3216
    %v3583 = vunpack.c.h.b16 %v3216
    %v3584 = vunpack.c.l.b16 %v3217
    %v3585 = vunpack.c.h.b16 %v3217
    %v3586 = vunpack.c.l.b16 %v3218
    %v3587 = vunpack.c.h.b16 %v3218
    %v3588 = vunpack.c.l.b16 %v3219
    %v3589 = vunpack.c.h.b16 %v3219
    %v3590 = vunpack.c.l.b16 %v3220
    %v3591 = vunpack.c.l.b16 %v3221
    %v3592 = vunpack.c.h.b16 %v3221
    %v3593 = vunpack.c.l.b16 %v3222
    %v3594 = vunpack.c.h.b16 %v3222
    %v3595 = vunpack.c.l.b16 %v3223
    %v3596 = vunpack.c.h.b16 %v3223
    %v3597 = vunpack.c.l.b16 %v3224
    %v3598 = vunpack.c.h.b16 %v3224
    %v3599 = vunpack.c.l.b16 %v3225
    %v3600 = vunpack.c.l.b16 %v3226
    %v3601 = vunpack.c.h.b16 %v3226
    %v3602 = vunpack.c.l.b16 %v3227
    %v3603 = vunpack.c.h.b16 %v3227
    %v3604 = vunpack.c.l.b16 %v3228
    %v3605 = vunpack.c.h.b16 %v3228
    %v3606 = vunpack.c.l.b16 %v3229
    %v3607 = vunpack.c.h.b16 %v3229
    %v3608 = vunpack.c.l.b16 %v3230
    %v3609 = vunpack.c.l.b16 %v3231
    %v3610 = vunpack.c.h.b16 %v3231
    %v3611 = vunpack.c.l.b16 %v3232
    %v3612 = vunpack.c.h.b16 %v3232
    %v3613 = vunpack.c.l.b16 %v3233
    %v3614 = vunpack.c.h.b16 %v3233
    %v3615 = vunpack.c.l.b16 %v3234
    %v3616 = vunpack.c.h.b16 %v3234
    %v3617 = vunpack.c.l.b16 %v3235
    %v3618 = vunpack.c.l.b16 %v3236
    %v3619 = vunpack.c.h.b16 %v3236
    %v3620 = vunpack.c.l.b16 %v3237
    %v3621 = vunpack.c.h.b16 %v3237
    %v3622 = vunpack.c.l.b16 %v3238
    %v3623 = vunpack.c.h.b16 %v3238
    %v3624 = vunpack.c.l.b16 %v3239
    %v3625 = vunpack.c.h.b16 %v3239
    %v3626 = vunpack.c.l.b16 %v3240
    %v3627 = vunpack.c.l.b16 %v3241
    %v3628 = vunpack.c.h.b16 %v3241
    %v3629 = vunpack.c.l.b16 %v3242
    %v3630 = vunpack.c.h.b16 %v3242
    %v3631 = vunpack.c.l.b16 %v3243
    %v3632 = vunpack.c.h.b16 %v3243
    %v3633 = vunpack.c.l.b16 %v3244
    %v3634 = vunpack.c.h.b16 %v3244
    %v3635 = vunpack.c.l.b16 %v3245
    %v3636 = vpack.c.b16 %v3501, %v3492
    %v3637 = vpack.c.b16 %v3502, %v3493
    %v3638 = vpack.c.b16 %v3503, %v3494
    %v3639 = vpack.c.b16 %v3504, %v3495
    %v3640 = vpack.c.b16 %v3505, %v3496
    %v3641 = vpack.c.b16 %v3506, %v3497
    %v3642 = vpack.c.b16 %v3507, %v3498
    %v3643 = vpack.c.b16 %v3508, %v3499
    %v3644 = vpack.c.b16 %v3509, %v3500
    %v3645 = vpack.c.b16 %v3519, %v3510
    %v3646 = vpack.c.b16 %v3520, %v3511
    %v3647 = vpack.c.b16 %v3521, %v3512
    %v3648 = vpack.c.b16 %v3522, %v3513
    %v3649 = vpack.c.b16 %v3523, %v3514
    %v3650 = vpack.c.b16 %v3524, %v3515
    %v3651 = vpack.c.b16 %v3525, %v3516
    %v3652 = vpack.c.b16 %v3526, %v3517
    %v3653 = vpack.c.b16 %v3527, %v3518
    %v3654 = vpack.c.b16 %v3537, %v3528
    %v3655 = vpack.c.b16 %v3538, %v3529
    %v3656 = vpack.c.b16 %v3539, %v3530
    %v3657 = vpack.c.b16 %v3540, %v3531
    %v3658 = vpack.c.b16 %v3541, %v3532
    %v3659 = vpack.c.b16 %v3542, %v3533
    %v3660 = vpack.c.b16 %v3543, %v3534
    %v3661 = vpack.c.b16 %v3544, %v3535
    %v3662 = vpack.c.b16 %v3545, %v3536
    %v3663 = vpack.c.b16 %v3555, %v3546
    %v3664 = vpack.c.b16 %v3556, %v3547
    %v3665 = vpack.c.b16 %v3557, %v3548
    %v3666 = vpack.c.b16 %v3558, %v3549
    %v3667 = vpack.c.b16 %v3559, %v3550
    %v3668 = vpack.c.b16 %v3560, %v3551
    %v3669 = vpack.c.b16 %v3561, %v3552
    %v3670 = vpack.c.b16 %v3562, %v3553
    %v3671 = vpack.c.b16 %v3563, %v3554
    %v3672 = vpack.c.b16 %v3573, %v3564
    %v3673 = vpack.c.b16 %v3574, %v3565
    %v3674 = vpack.c.b16 %v3575, %v3566
    %v3675 = vpack.c.b16 %v3576, %v3567
    %v3676 = vpack.c.b16 %v3577, %v3568
    %v3677 = vpack.c.b16 %v3578, %v3569
    %v3678 = vpack.c.b16 %v3579, %v3570
    %v3679 = vpack.c.b16 %v3580, %v3571
    %v3680 = vpack.c.b16 %v3581, %v3572
    %v3681 = vpack.c.b16 %v3591, %v3582
    %v3682 = vpack.c.b16 %v3592, %v3583
    %v3683 = vpack.c.b16 %v3593, %v3584
    %v3684 = vpack.c.b16 %v3594, %v3585
    %v3685 = vpack.c.b16 %v3595, %v3586
    %v3686 = vpack.c.b16 %v3596, %v3587
    %v3687 = vpack.c.b16 %v3597, %v3588
    %v3688 = vpack.c.b16 %v3598, %v3589
    %v3689 = vpack.c.b16 %v3599, %v3590
    %v3690 = vpack.c.b16 %v3609, %v3600
    %v3691 = vpack.c.b16 %v3610, %v3601
    %v3692 = vpack.c.b16 %v3611, %v3602
    %v3693 = vpack.c.b16 %v3612, %v3603
    %v3694 = vpack.c.b16 %v3613, %v3604
    %v3695 = vpack.c.b16 %v3614, %v3605
    %v3696 = vpack.c.b16 %v3615, %v3606
    %v3697 = vpack.c.b16 %v3616, %v3607
    %v3698 = vpack.c.b16 %v3617, %v3608
    %v3699 = vpack.c.b16 %v3627, %v3618
    %v3700 = vpack.c.b16 %v3628, %v3619
    %v3701 = vpack.c.b16 %v3629, %v3620
    %v3702 = vpack.c.b16 %v3630, %v3621
    %v3703 = vpack.c.b16 %v3631, %v3622
    %v3704 = vpack.c.b16 %v3632, %v3623
    %v3705 = vpack.c.b16 %v3633, %v3624
    %v3706 = vpack.c.b16 %v3634, %v3625
    %v3707 = vpack.c.b16 %v3635, %v3626
    %vm3772 = vcmask 785408
    %v3774 = vsel %vm3772, %v3644, 0
    %v3777 = vsel %vm3772, %v3653, 0
    %v3780 = vsel %vm3772, %v3662, 0
    %v3783 = vsel %vm3772, %v3671, 0
    %v3786 = vsel %vm3772, %v3680, 0
    %v3789 = vsel %vm3772, %v3689, 0
    %v3792 = vsel %vm3772, %v3698, 0
    %v3795 = vsel %vm3772, %v3707, 0
    %3797 = vmatprep.subr.bf16.mxu0 0
    %3798 = vmatpush1.bf16.msra.mxu0 %v3246
    %3799 = vmatprep.subr.bf16.mxu0 0
    %3800 = vmatpush1.bf16.msra.mxu0 %v3247
    %3801 = vmatprep.subr.bf16.mxu0 0
    %3802 = vmatpush1.bf16.msra.mxu0 %v3248
    %3803 = vmatprep.subr.bf16.mxu0 0
    %3804 = vmatpush1.bf16.msra.mxu0 %v3249
    %3805 = vmatprep.subr.bf16.mxu0 0
    %3806 = vmatpush1.bf16.msra.mxu0 %v3250
    %3807 = vmatprep.subr.bf16.mxu0 0
    %3808 = vmatpush1.bf16.msra.mxu0 %v3251
    %3809 = vmatprep.subr.bf16.mxu0 0
    %3810 = vmatpush1.bf16.msra.mxu0 %v3252
    %3811 = vmatprep.subr.bf16.mxu0 0
    %3812 = vmatpush1.bf16.msra.mxu0 %v3253
    %3813 = vmatprep.subr.bf16.mxu0 0
    %3814 = vmatpush1.bf16.msra.mxu0 %v3254
    %3815 = vmatprep.subr.bf16.mxu0 0
    %3816 = vmatpush1.bf16.msra.mxu0 %v3255
    %3817 = vmatprep.subr.bf16.mxu0 0
    %3818 = vmatpush1.bf16.msra.mxu0 %v3256
    %3819 = vmatprep.subr.bf16.mxu0 0
    %3820 = vmatpush1.bf16.msra.mxu0 %v3257
    %3821 = vmatprep.subr.bf16.mxu0 0
    %3822 = vmatpush1.bf16.msra.mxu0 %v3258
    %3823 = vmatprep.subr.bf16.mxu0 0
    %3824 = vmatpush1.bf16.msra.mxu0 %v3259
    %3825 = vmatprep.subr.bf16.mxu0 0
    %3826 = vmatpush1.bf16.msra.mxu0 %v3260
    %3827 = vmatprep.subr.bf16.mxu0 0
    %3828 = vmatpush1.bf16.msra.mxu0 %v3261
    %3829 = vmatprep.mubr.bf16.mxu0 %v3637
    %3830 = vmatmul.mubr.bf16.gmra.mrb[0].mxu0 %v3636
    %v3831 = vpop.f32.mrb[0].mxu0
    %v3832 = vadd.f32 %v3335, %v3831
    %v3833 = vpop.f32.mrb[0].mxu0
    %v3834 = vpop.f32.mrb[0].mxu0
    %v3835 = vadd.f32 %v3340, %v3834
    %v3836 = vpop.f32.mrb[0].mxu0
    %3837 = vmatprep.mubr.bf16.mxu0 %v3646
    %3838 = vmatmul.mubr.bf16.gmra.mrb[0].mxu0 %v3645
    %v3839 = vpop.f32.mrb[0].mxu0
    %v3840 = vadd.f32 %v3345, %v3839
    %v3841 = vpop.f32.mrb[0].mxu0
    %v3842 = vpop.f32.mrb[0].mxu0
    %v3843 = vadd.f32 %v3350, %v3842
    %v3844 = vpop.f32.mrb[0].mxu0
    %3845 = vmatprep.mubr.bf16.mxu0 %v3655
    %3846 = vmatmul.mubr.bf16.gmra.mrb[0].mxu0 %v3654
    %v3847 = vpop.f32.mrb[0].mxu0
    %v3848 = vadd.f32 %v3355, %v3847
    %v3849 = vpop.f32.mrb[0].mxu0
    %v3850 = vpop.f32.mrb[0].mxu0
    %v3851 = vadd.f32 %v3360, %v3850
    %v3852 = vpop.f32.mrb[0].mxu0
    %3853 = vmatprep.mubr.bf16.mxu0 %v3664
    %3854 = vmatmul.mubr.bf16.gmra.mrb[0].mxu0 %v3663
    %v3855 = vpop.f32.mrb[0].mxu0
    %v3856 = vadd.f32 %v3365, %v3855
    %v3857 = vpop.f32.mrb[0].mxu0
    %v3858 = vpop.f32.mrb[0].mxu0
    %v3859 = vadd.f32 %v3370, %v3858
    %v3860 = vpop.f32.mrb[0].mxu0
    %3861 = vmatprep.mubr.bf16.mxu0 %v3673
    %3862 = vmatmul.mubr.bf16.gmra.mrb[0].mxu0 %v3672
    %v3863 = vpop.f32.mrb[0].mxu0
    %v3864 = vadd.f32 %v3375, %v3863
    %v3865 = vpop.f32.mrb[0].mxu0
    %v3866 = vpop.f32.mrb[0].mxu0
    %v3867 = vadd.f32 %v3380, %v3866
    %v3868 = vpop.f32.mrb[0].mxu0
    %3869 = vmatprep.mubr.bf16.mxu0 %v3682
    %3870 = vmatmul.mubr.bf16.gmra.mrb[0].mxu0 %v3681
    %v3871 = vpop.f32.mrb[0].mxu0
    %v3872 = vadd.f32 %v3385, %v3871
    %v3873 = vpop.f32.mrb[0].mxu0
    %v3874 = vpop.f32.mrb[0].mxu0
    %v3875 = vadd.f32 %v3390, %v3874
    %v3876 = vpop.f32.mrb[0].mxu0
    %3877 = vmatprep.mubr.bf16.mxu0 %v3691
    %3878 = vmatmul.mubr.bf16.gmra.mrb[0].mxu0 %v3690
    %v3879 = vpop.f32.mrb[0].mxu0
    %v3880 = vadd.f32 %v3395, %v3879
    %v3881 = vpop.f32.mrb[0].mxu0
    %v3882 = vpop.f32.mrb[0].mxu0
    %v3883 = vadd.f32 %v3400, %v3882
    %v3884 = vpop.f32.mrb[0].mxu0
    %3885 = vmatprep.mubr.bf16.mxu0 %v3700
    %3886 = vmatmul.mubr.bf16.gmra.mrb[0].mxu0 %v3699
    %v3887 = vpop.f32.mrb[0].mxu0
    %v3888 = vadd.f32 %v3405, %v3887
    %v3889 = vpop.f32.mrb[0].mxu0
    %v3890 = vpop.f32.mrb[0].mxu0
    %v3891 = vadd.f32 %v3410, %v3890
    %v3892 = vpop.f32.mrb[0].mxu0
    %3893 = vdwg.mxu0
    %3894 = vmatprep.subr.bf16.mxu0 0
    %3895 = vmatpush1.bf16.msra.mxu0 %v3262
    %3896 = vmatprep.subr.bf16.mxu0 0
    %3897 = vmatpush1.bf16.msra.mxu0 %v3263
    %3898 = vmatprep.subr.bf16.mxu0 0
    %3899 = vmatpush1.bf16.msra.mxu0 %v3264
    %3900 = vmatprep.subr.bf16.mxu0 0
    %3901 = vmatpush1.bf16.msra.mxu0 %v3265
    %3902 = vmatprep.subr.bf16.mxu0 0
    %3903 = vmatpush1.bf16.msra.mxu0 %v3266
    %3904 = vmatprep.subr.bf16.mxu0 0
    %3905 = vmatpush1.bf16.msra.mxu0 %v3267
    %3906 = vmatprep.subr.bf16.mxu0 0
    %3907 = vmatpush1.bf16.msra.mxu0 %v3268
    %3908 = vmatprep.subr.bf16.mxu0 0
    %3909 = vmatpush1.bf16.msra.mxu0 %v3269
    %3910 = vmatprep.subr.bf16.mxu0 0
    %3911 = vmatpush1.bf16.msra.mxu0 %v3270
    %3912 = vmatprep.subr.bf16.mxu0 0
    %3913 = vmatpush1.bf16.msra.mxu0 %v3271
    %3914 = vmatprep.subr.bf16.mxu0 0
    %3915 = vmatpush1.bf16.msra.mxu0 %v3272
    %3916 = vmatprep.subr.bf16.mxu0 0
    %3917 = vmatpush1.bf16.msra.mxu0 %v3273
    %3918 = vmatprep.subr.bf16.mxu0 0
    %3919 = vmatpush1.bf16.msra.mxu0 %v3274
    %3920 = vmatprep.subr.bf16.mxu0 0
    %3921 = vmatpush1.bf16.msra.mxu0 %v3275
    %3922 = vmatprep.subr.bf16.mxu0 0
    %3923 = vmatpush1.bf16.msra.mxu0 %v3276
    %3924 = vmatprep.subr.bf16.mxu0 0
    %3925 = vmatpush1.bf16.msra.mxu0 %v3277
    %3926 = vmatprep.mubr.bf16.mxu0 %v3639
    %3927 = vmatmul.mubr.bf16.gmra.mrb[0].mxu0 %v3638
    %v3928 = vpop.f32.mrb[0].mxu0
    %v3929 = vadd.f32 %v3832, %v3928
    %v3930 = vpop.f32.mrb[0].mxu0
    %v3931 = vpop.f32.mrb[0].mxu0
    %v3932 = vadd.f32 %v3835, %v3931
    %v3933 = vpop.f32.mrb[0].mxu0
    %3934 = vmatprep.mubr.bf16.mxu0 %v3648
    %3935 = vmatmul.mubr.bf16.gmra.mrb[0].mxu0 %v3647
    %v3936 = vpop.f32.mrb[0].mxu0
    %v3937 = vadd.f32 %v3840, %v3936
    %v3938 = vpop.f32.mrb[0].mxu0
    %v3939 = vpop.f32.mrb[0].mxu0
    %v3940 = vadd.f32 %v3843, %v3939
    %v3941 = vpop.f32.mrb[0].mxu0
    %3942 = vmatprep.mubr.bf16.mxu0 %v3657
    %3943 = vmatmul.mubr.bf16.gmra.mrb[0].mxu0 %v3656
    %v3944 = vpop.f32.mrb[0].mxu0
    %v3945 = vadd.f32 %v3848, %v3944
    %v3946 = vpop.f32.mrb[0].mxu0
    %v3947 = vpop.f32.mrb[0].mxu0
    %v3948 = vadd.f32 %v3851, %v3947
    %v3949 = vpop.f32.mrb[0].mxu0
    %3950 = vmatprep.mubr.bf16.mxu0 %v3666
    %3951 = vmatmul.mubr.bf16.gmra.mrb[0].mxu0 %v3665
    %v3952 = vpop.f32.mrb[0].mxu0
    %v3953 = vadd.f32 %v3856, %v3952
    %v3954 = vpop.f32.mrb[0].mxu0
    %v3955 = vpop.f32.mrb[0].mxu0
    %v3956 = vadd.f32 %v3859, %v3955
    %v3957 = vpop.f32.mrb[0].mxu0
    %3958 = vmatprep.mubr.bf16.mxu0 %v3675
    %3959 = vmatmul.mubr.bf16.gmra.mrb[0].mxu0 %v3674
    %v3960 = vpop.f32.mrb[0].mxu0
    %v3961 = vadd.f32 %v3864, %v3960
    %v3962 = vpop.f32.mrb[0].mxu0
    %v3963 = vpop.f32.mrb[0].mxu0
    %v3964 = vadd.f32 %v3867, %v3963
    %v3965 = vpop.f32.mrb[0].mxu0
    %3966 = vmatprep.mubr.bf16.mxu0 %v3684
    %3967 = vmatmul.mubr.bf16.gmra.mrb[0].mxu0 %v3683
    %v3968 = vpop.f32.mrb[0].mxu0
    %v3969 = vadd.f32 %v3872, %v3968
    %v3970 = vpop.f32.mrb[0].mxu0
    %v3971 = vpop.f32.mrb[0].mxu0
    %v3972 = vadd.f32 %v3875, %v3971
    %v3973 = vpop.f32.mrb[0].mxu0
    %3974 = vmatprep.mubr.bf16.mxu0 %v3693
    %3975 = vmatmul.mubr.bf16.gmra.mrb[0].mxu0 %v3692
    %v3976 = vpop.f32.mrb[0].mxu0
    %v3977 = vadd.f32 %v3880, %v3976
    %v3978 = vpop.f32.mrb[0].mxu0
    %v3979 = vpop.f32.mrb[0].mxu0
    %v3980 = vadd.f32 %v3883, %v3979
    %v3981 = vpop.f32.mrb[0].mxu0
    %3982 = vmatprep.mubr.bf16.mxu0 %v3702
    %3983 = vmatmul.mubr.bf16.gmra.mrb[0].mxu0 %v3701
    %v3984 = vpop.f32.mrb[0].mxu0
    %v3985 = vadd.f32 %v3888, %v3984
    %v3986 = vpop.f32.mrb[0].mxu0
    %v3987 = vpop.f32.mrb[0].mxu0
    %v3988 = vadd.f32 %v3891, %v3987
    %v3989 = vpop.f32.mrb[0].mxu0
    %3990 = vdwg.mxu0
    %3991 = vmatprep.subr.bf16.mxu0 0
    %3992 = vmatpush1.bf16.msra.mxu0 %v3278
    %3993 = vmatprep.subr.bf16.mxu0 0
    %3994 = vmatpush1.bf16.msra.mxu0 %v3279
    %3995 = vmatprep.subr.bf16.mxu0 0
    %3996 = vmatpush1.bf16.msra.mxu0 %v3280
    %3997 = vmatprep.subr.bf16.mxu0 0
    %3998 = vmatpush1.bf16.msra.mxu0 %v3281
    %3999 = vmatprep.subr.bf16.mxu0 0
    %4000 = vmatpush1.bf16.msra.mxu0 %v3282
    %4001 = vmatprep.subr.bf16.mxu0 0
    %4002 = vmatpush1.bf16.msra.mxu0 %v3283
    %4003 = vmatprep.subr.bf16.mxu0 0
    %4004 = vmatpush1.bf16.msra.mxu0 %v3284
    %4005 = vmatprep.subr.bf16.mxu0 0
    %4006 = vmatpush1.bf16.msra.mxu0 %v3285
    %4007 = vmatprep.subr.bf16.mxu0 0
    %4008 = vmatpush1.bf16.msra.mxu0 %v3286
    %4009 = vmatprep.subr.bf16.mxu0 0
    %4010 = vmatpush1.bf16.msra.mxu0 %v3287
    %4011 = vmatprep.subr.bf16.mxu0 0
    %4012 = vmatpush1.bf16.msra.mxu0 %v3288
    %4013 = vmatprep.subr.bf16.mxu0 0
    %4014 = vmatpush1.bf16.msra.mxu0 %v3289
    %4015 = vmatprep.subr.bf16.mxu0 0
    %4016 = vmatpush1.bf16.msra.mxu0 %v3290
    %4017 = vmatprep.subr.bf16.mxu0 0
    %4018 = vmatpush1.bf16.msra.mxu0 %v3291
    %4019 = vmatprep.subr.bf16.mxu0 0
    %4020 = vmatpush1.bf16.msra.mxu0 %v3292
    %4021 = vmatprep.subr.bf16.mxu0 0
    %4022 = vmatpush1.bf16.msra.mxu0 %v3293
    %4023 = vmatprep.mubr.bf16.mxu0 %v3641
    %4024 = vmatmul.mubr.bf16.gmra.mrb[0].mxu0 %v3640
    %v4025 = vpop.f32.mrb[0].mxu0
    %v4026 = vadd.f32 %v3929, %v4025
    %v4027 = vpop.f32.mrb[0].mxu0
    %v4028 = vpop.f32.mrb[0].mxu0
    %v4029 = vadd.f32 %v3932, %v4028
    %v4030 = vpop.f32.mrb[0].mxu0
    %4031 = vmatprep.mubr.bf16.mxu0 %v3650
    %4032 = vmatmul.mubr.bf16.gmra.mrb[0].mxu0 %v3649
    %v4033 = vpop.f32.mrb[0].mxu0
    %v4034 = vadd.f32 %v3937, %v4033
    %v4035 = vpop.f32.mrb[0].mxu0
    %v4036 = vpop.f32.mrb[0].mxu0
    %v4037 = vadd.f32 %v3940, %v4036
    %v4038 = vpop.f32.mrb[0].mxu0
    %4039 = vmatprep.mubr.bf16.mxu0 %v3659
    %4040 = vmatmul.mubr.bf16.gmra.mrb[0].mxu0 %v3658
    %v4041 = vpop.f32.mrb[0].mxu0
    %v4042 = vadd.f32 %v3945, %v4041
    %v4043 = vpop.f32.mrb[0].mxu0
    %v4044 = vpop.f32.mrb[0].mxu0
    %v4045 = vadd.f32 %v3948, %v4044
    %v4046 = vpop.f32.mrb[0].mxu0
    %4047 = vmatprep.mubr.bf16.mxu0 %v3668
    %4048 = vmatmul.mubr.bf16.gmra.mrb[0].mxu0 %v3667
    %v4049 = vpop.f32.mrb[0].mxu0
    %v4050 = vadd.f32 %v3953, %v4049
    %v4051 = vpop.f32.mrb[0].mxu0
    %v4052 = vpop.f32.mrb[0].mxu0
    %v4053 = vadd.f32 %v3956, %v4052
    %v4054 = vpop.f32.mrb[0].mxu0
    %4055 = vmatprep.mubr.bf16.mxu0 %v3677
    %4056 = vmatmul.mubr.bf16.gmra.mrb[0].mxu0 %v3676
    %v4057 = vpop.f32.mrb[0].mxu0
    %v4058 = vadd.f32 %v3961, %v4057
    %v4059 = vpop.f32.mrb[0].mxu0
    %v4060 = vpop.f32.mrb[0].mxu0
    %v4061 = vadd.f32 %v3964, %v4060
    %v4062 = vpop.f32.mrb[0].mxu0
    %4063 = vmatprep.mubr.bf16.mxu0 %v3686
    %4064 = vmatmul.mubr.bf16.gmra.mrb[0].mxu0 %v3685
    %v4065 = vpop.f32.mrb[0].mxu0
    %v4066 = vadd.f32 %v3969, %v4065
    %v4067 = vpop.f32.mrb[0].mxu0
    %v4068 = vpop.f32.mrb[0].mxu0
    %v4069 = vadd.f32 %v3972, %v4068
    %v4070 = vpop.f32.mrb[0].mxu0
    %4071 = vmatprep.mubr.bf16.mxu0 %v3695
    %4072 = vmatmul.mubr.bf16.gmra.mrb[0].mxu0 %v3694
    %v4073 = vpop.f32.mrb[0].mxu0
    %v4074 = vadd.f32 %v3977, %v4073
    %v4075 = vpop.f32.mrb[0].mxu0
    %v4076 = vpop.f32.mrb[0].mxu0
    %v4077 = vadd.f32 %v3980, %v4076
    %v4078 = vpop.f32.mrb[0].mxu0
    %4079 = vmatprep.mubr.bf16.mxu0 %v3704
    %4080 = vmatmul.mubr.bf16.gmra.mrb[0].mxu0 %v3703
    %v4081 = vpop.f32.mrb[0].mxu0
    %v4082 = vadd.f32 %v3985, %v4081
    %v4083 = vpop.f32.mrb[0].mxu0
    %v4084 = vpop.f32.mrb[0].mxu0
    %v4085 = vadd.f32 %v3988, %v4084
    %v4086 = vpop.f32.mrb[0].mxu0
    %4087 = vdwg.mxu0
    %4088 = vmatprep.subr.bf16.mxu0 0
    %4089 = vmatpush1.bf16.msra.mxu0 %v3294
    %4090 = vmatprep.subr.bf16.mxu0 0
    %4091 = vmatpush1.bf16.msra.mxu0 %v3295
    %4092 = vmatprep.subr.bf16.mxu0 0
    %4093 = vmatpush1.bf16.msra.mxu0 %v3296
    %4094 = vmatprep.subr.bf16.mxu0 0
    %4095 = vmatpush1.bf16.msra.mxu0 %v3297
    %4096 = vmatprep.subr.bf16.mxu0 0
    %4097 = vmatpush1.bf16.msra.mxu0 %v3298
    %4098 = vmatprep.subr.bf16.mxu0 0
    %4099 = vmatpush1.bf16.msra.mxu0 %v3299
    %4100 = vmatprep.subr.bf16.mxu0 0
    %4101 = vmatpush1.bf16.msra.mxu0 %v3300
    %4102 = vmatprep.subr.bf16.mxu0 0
    %4103 = vmatpush1.bf16.msra.mxu0 %v3301
    %4104 = vmatprep.subr.bf16.mxu0 0
    %4105 = vmatpush1.bf16.msra.mxu0 %v3302
    %4106 = vmatprep.subr.bf16.mxu0 0
    %4107 = vmatpush1.bf16.msra.mxu0 %v3303
    %4108 = vmatprep.subr.bf16.mxu0 0
    %4109 = vmatpush1.bf16.msra.mxu0 %v3304
    %4110 = vmatprep.subr.bf16.mxu0 0
    %4111 = vmatpush1.bf16.msra.mxu0 %v3305
    %4112 = vmatprep.subr.bf16.mxu0 0
    %4113 = vmatpush1.bf16.msra.mxu0 %v3306
    %4114 = vmatprep.subr.bf16.mxu0 0
    %4115 = vmatpush1.bf16.msra.mxu0 %v3307
    %4116 = vmatprep.subr.bf16.mxu0 0
    %4117 = vmatpush1.bf16.msra.mxu0 %v3308
    %4118 = vmatprep.subr.bf16.mxu0 0
    %4119 = vmatpush1.bf16.msra.mxu0 %v3309
    %4120 = vmatprep.mubr.bf16.mxu0 %v3643
    %4121 = vmatmul.mubr.bf16.gmra.mrb[0].mxu0 %v3642
    %v4122 = vpop.f32.mrb[0].mxu0
    %v4123 = vadd.f32 %v4026, %v4122
    %v4124 = vpop.f32.mrb[0].mxu0
    %v4125 = vpop.f32.mrb[0].mxu0
    %v4126 = vadd.f32 %v4029, %v4125
    %v4127 = vpop.f32.mrb[0].mxu0
    %4128 = vmatprep.mubr.bf16.mxu0 %v3652
    %4129 = vmatmul.mubr.bf16.gmra.mrb[0].mxu0 %v3651
    %v4130 = vpop.f32.mrb[0].mxu0
    %v4131 = vadd.f32 %v4034, %v4130
    %v4132 = vpop.f32.mrb[0].mxu0
    %v4133 = vpop.f32.mrb[0].mxu0
    %v4134 = vadd.f32 %v4037, %v4133
    %v4135 = vpop.f32.mrb[0].mxu0
    %4136 = vmatprep.mubr.bf16.mxu0 %v3661
    %4137 = vmatmul.mubr.bf16.gmra.mrb[0].mxu0 %v3660
    %v4138 = vpop.f32.mrb[0].mxu0
    %v4139 = vadd.f32 %v4042, %v4138
    %v4140 = vpop.f32.mrb[0].mxu0
    %v4141 = vpop.f32.mrb[0].mxu0
    %v4142 = vadd.f32 %v4045, %v4141
    %v4143 = vpop.f32.mrb[0].mxu0
    %4144 = vmatprep.mubr.bf16.mxu0 %v3670
    %4145 = vmatmul.mubr.bf16.gmra.mrb[0].mxu0 %v3669
    %v4146 = vpop.f32.mrb[0].mxu0
    %v4147 = vadd.f32 %v4050, %v4146
    %v4148 = vpop.f32.mrb[0].mxu0
    %v4149 = vpop.f32.mrb[0].mxu0
    %v4150 = vadd.f32 %v4053, %v4149
    %v4151 = vpop.f32.mrb[0].mxu0
    %4152 = vmatprep.mubr.bf16.mxu0 %v3679
    %4153 = vmatmul.mubr.bf16.gmra.mrb[0].mxu0 %v3678
    %v4154 = vpop.f32.mrb[0].mxu0
    %v4155 = vadd.f32 %v4058, %v4154
    %v4156 = vpop.f32.mrb[0].mxu0
    %v4157 = vpop.f32.mrb[0].mxu0
    %v4158 = vadd.f32 %v4061, %v4157
    %v4159 = vpop.f32.mrb[0].mxu0
    %4160 = vmatprep.mubr.bf16.mxu0 %v3688
    %4161 = vmatmul.mubr.bf16.gmra.mrb[0].mxu0 %v3687
    %v4162 = vpop.f32.mrb[0].mxu0
    %v4163 = vadd.f32 %v4066, %v4162
    %v4164 = vpop.f32.mrb[0].mxu0
    %v4165 = vpop.f32.mrb[0].mxu0
    %v4166 = vadd.f32 %v4069, %v4165
    %v4167 = vpop.f32.mrb[0].mxu0
    %4168 = vmatprep.mubr.bf16.mxu0 %v3697
    %4169 = vmatmul.mubr.bf16.gmra.mrb[0].mxu0 %v3696
    %v4170 = vpop.f32.mrb[0].mxu0
    %v4171 = vadd.f32 %v4074, %v4170
    %v4172 = vpop.f32.mrb[0].mxu0
    %v4173 = vpop.f32.mrb[0].mxu0
    %v4174 = vadd.f32 %v4077, %v4173
    %v4175 = vpop.f32.mrb[0].mxu0
    %4176 = vmatprep.mubr.bf16.mxu0 %v3706
    %4177 = vmatmul.mubr.bf16.gmra.mrb[0].mxu0 %v3705
    %v4178 = vpop.f32.mrb[0].mxu0
    %v4179 = vadd.f32 %v4082, %v4178
    %v4180 = vpop.f32.mrb[0].mxu0
    %v4181 = vpop.f32.mrb[0].mxu0
    %v4182 = vadd.f32 %v4085, %v4181
    %v4183 = vpop.f32.mrb[0].mxu0
    %4184 = vdwg.mxu0
    %4185 = vmatprep.subr.bf16.mxu0 0
    %4186 = vmatpush1.bf16.msra.mxu0 %v3310
    %4187 = vmatprep.subr.bf16.mxu0 0
    %4188 = vmatpush1.bf16.msra.mxu0 %v3311
    %4189 = vmatprep.subr.bf16.mxu0 0
    %4190 = vmatpush1.bf16.msra.mxu0 %v3312
    %4191 = vmatprep.subr.bf16.mxu0 0
    %4192 = vmatpush1.bf16.msra.mxu0 %v3313
    %4193 = vmatprep.subr.bf16.mxu0 0
    %4194 = vmatpush1.bf16.msra.mxu0 %v3314
    %4195 = vmatprep.subr.bf16.mxu0 0
    %4196 = vmatpush1.bf16.msra.mxu0 %v3315
    %4197 = vmatprep.subr.bf16.mxu0 0
    %4198 = vmatpush1.bf16.msra.mxu0 0
    %4199 = vmatprep.subr.bf16.mxu0 0
    %4200 = vmatpush1.bf16.msra.mxu0 0
    %4201 = vmatprep.subr.bf16.mxu0 0
    %4202 = vmatpush1.bf16.msra.mxu0 0
    %4203 = vmatprep.subr.bf16.mxu0 0
    %4204 = vmatpush1.bf16.msra.mxu0 0
    %4205 = vmatprep.subr.bf16.mxu0 0
    %4206 = vmatpush1.bf16.msra.mxu0 0
    %4207 = vmatprep.subr.bf16.mxu0 0
    %4208 = vmatpush1.bf16.msra.mxu0 0
    %4209 = vmatprep.subr.bf16.mxu0 0
    %4210 = vmatpush1.bf16.msra.mxu0 0
    %4211 = vmatprep.subr.bf16.mxu0 0
    %4212 = vmatpush1.bf16.msra.mxu0 0
    %4213 = vmatprep.subr.bf16.mxu0 0
    %4214 = vmatpush1.bf16.msra.mxu0 0
    %4215 = vmatprep.subr.bf16.mxu0 0
    %4216 = vmatpush1.bf16.msra.mxu0 0
    %4217 = vmatprep.mubr.bf16.mxu0 0
    %4218 = vmatmul.mubr.bf16.gmra.mrb[0].mxu0 %v3774
    %v4219 = vpop.f32.mrb[0].mxu0
    %v4220 = vadd.f32 %v4123, %v4219
    %v4221 = vpop.f32.mrb[0].mxu0
    %v4222 = vpop.f32.mrb[0].mxu0
    %v4223 = vadd.f32 %v4126, %v4222
    %v4224 = vpop.f32.mrb[0].mxu0
    %4225 = vmatprep.mubr.bf16.mxu0 0
    %4226 = vmatmul.mubr.bf16.gmra.mrb[0].mxu0 %v3777
    %v4227 = vpop.f32.mrb[0].mxu0
    %v4228 = vadd.f32 %v4131, %v4227
    %v4229 = vpop.f32.mrb[0].mxu0
    %v4230 = vpop.f32.mrb[0].mxu0
    %v4231 = vadd.f32 %v4134, %v4230
    %v4232 = vpop.f32.mrb[0].mxu0
    %4233 = vmatprep.mubr.bf16.mxu0 0
    %4234 = vmatmul.mubr.bf16.gmra.mrb[0].mxu0 %v3780
    %v4235 = vpop.f32.mrb[0].mxu0
    %v4236 = vadd.f32 %v4139, %v4235
    %v4237 = vpop.f32.mrb[0].mxu0
    %v4238 = vpop.f32.mrb[0].mxu0
    %v4239 = vadd.f32 %v4142, %v4238
    %v4240 = vpop.f32.mrb[0].mxu0
    %4241 = vmatprep.mubr.bf16.mxu0 0
    %4242 = vmatmul.mubr.bf16.gmra.mrb[0].mxu0 %v3783
    %v4243 = vpop.f32.mrb[0].mxu0
    %v4244 = vadd.f32 %v4147, %v4243
    %v4245 = vpop.f32.mrb[0].mxu0
    %v4246 = vpop.f32.mrb[0].mxu0
    %v4247 = vadd.f32 %v4150, %v4246
    %v4248 = vpop.f32.mrb[0].mxu0
    %4249 = vmatprep.mubr.bf16.mxu0 0
    %4250 = vmatmul.mubr.bf16.gmra.mrb[0].mxu0 %v3786
    %v4251 = vpop.f32.mrb[0].mxu0
    %v4252 = vadd.f32 %v4155, %v4251
    %v4253 = vpop.f32.mrb[0].mxu0
    %v4254 = vpop.f32.mrb[0].mxu0
    %v4255 = vadd.f32 %v4158, %v4254
    %v4256 = vpop.f32.mrb[0].mxu0
    %4257 = vmatprep.mubr.bf16.mxu0 0
    %4258 = vmatmul.mubr.bf16.gmra.mrb[0].mxu0 %v3789
    %v4259 = vpop.f32.mrb[0].mxu0
    %v4260 = vadd.f32 %v4163, %v4259
    %v4261 = vpop.f32.mrb[0].mxu0
    %v4262 = vpop.f32.mrb[0].mxu0
    %v4263 = vadd.f32 %v4166, %v4262
    %v4264 = vpop.f32.mrb[0].mxu0
    %4265 = vmatprep.mubr.bf16.mxu0 0
    %4266 = vmatmul.mubr.bf16.gmra.mrb[0].mxu0 %v3792
    %v4267 = vpop.f32.mrb[0].mxu0
    %v4268 = vadd.f32 %v4171, %v4267
    %v4269 = vpop.f32.mrb[0].mxu0
    %v4270 = vpop.f32.mrb[0].mxu0
    %v4271 = vadd.f32 %v4174, %v4270
    %v4272 = vpop.f32.mrb[0].mxu0
    %4273 = vmatprep.mubr.bf16.mxu0 0
    %4274 = vmatmul.mubr.bf16.gmra.mrb[0].mxu0 %v3795
    %v4275 = vpop.f32.mrb[0].mxu0
    %v4276 = vadd.f32 %v4179, %v4275
    %v4277 = vpop.f32.mrb[0].mxu0
    %v4278 = vpop.f32.mrb[0].mxu0
    %v4279 = vadd.f32 %v4182, %v4278
    %v4280 = vpop.f32.mrb[0].mxu0
    %4281 = vdwg.mxu0
    %4282 = vst [vmem:[#allocation3] sm:$0xff] %v4220
    %4283 = vst [vmem:[#allocation3 + $0x8] sm:$0xff] %v4223
    %4284 = vst [vmem:[#allocation3 + $0x10] sm:$0xff] %v4228
    %4285 = vst [vmem:[#allocation3 + $0x18] sm:$0xff] %v4231
    %4286 = vst [vmem:[#allocation3 + $0x20] sm:$0xff] %v4236
    %4287 = vst [vmem:[#allocation3 + $0x28] sm:$0xff] %v4239
    %4288 = vst [vmem:[#allocation3 + $0x30] sm:$0xff] %v4244
    %4289 = vst [vmem:[#allocation3 + $0x38] sm:$0xff] %v4247
    %4290 = vst [vmem:[#allocation3 + $0x40] sm:$0xff] %v4252
    %4291 = vst [vmem:[#allocation3 + $0x48] sm:$0xff] %v4255
    %4292 = vst [vmem:[#allocation3 + $0x50] sm:$0xff] %v4260
    %4293 = vst [vmem:[#allocation3 + $0x58] sm:$0xff] %v4263
    %4294 = vst [vmem:[#allocation3 + $0x60] sm:$0xff] %v4268
    %4295 = vst [vmem:[#allocation3 + $0x68] sm:$0xff] %v4271
    %4296 = vst [vmem:[#allocation3 + $0x70] sm:$0xff] %v4276
    %4297 = vst [vmem:[#allocation3 + $0x78] sm:$0xff] %v4279
    // Predicated region
    $region30: #{tpu_custom_call.1} parent=1 // pred_check
      _
    $region31: #{tpu_custom_call.1} parent=1 // pred_check_branch
      %4299 = sbr.rel (0) target = $region33
    $region32: #{tpu_custom_call.1} parent=1 // pred_region
      %s4301 = ssub.s32 2048, 2048
      %4302 = vsyncadd [#allocation4], %s4301
      %s4303 = sshll.u32 [#allocation3], 4
      %s4304 = int_to_ptr.vmem [resolvable:$true] %s4303
      %4309 = dma.vmem_to_hbm [thread:$0]  %s4304, 2048, %s7, [#allocation4], 128, 128, 8
    $region33: #{tpu_custom_call.1} parent=1 // pred_fallthru
      _
    // Predicated region
    $region34: #{tpu_custom_call.1} parent=1 // pred_check
      _
    $region35: #{tpu_custom_call.1} parent=1 // pred_check_branch
      %4311 = sbr.rel (0) target = $region37
    $region36: #{tpu_custom_call.1} parent=1 // pred_region
      %4312 = dma.done [#allocation4], 2048
    $region37: #{tpu_custom_call.1} parent=1 // pred_fallthru
      _
    %4313 = vsyncpa [#allocation4], 1

</llo_original>
